<compile_context>
chip_gen: v7x
topology: tpu7x:2x2x1
jax: 0.10.0
libtpu: 0.0.40
codegen_flags: <defaults>
</compile_context>

<pallas_src>
import jax
import jax.numpy as jnp
from jax.experimental import pallas as pl
from jax.experimental.pallas import tpu as pltpu


SUB = 8  # conv-phase batch sub-chunk: one f32 sublane tile


# ----------------------------- Fused Pallas kernel -----------------------------

def fused_encoder_kernel(x_ref, wconv_ref, bconv_ref, w1_ref, b1_ref,
                         w2_ref, b2_ref, o_ref, conv_ref):
    # x_ref:     (Cin, tb, HW)  VMEM f32   channel-first input planes (state ++ action)
    # wconv_ref: (Cf*Cin,)      SMEM f32   1x1-conv weights (one scalar per (out,in) channel)
    # bconv_ref: (Cf,)          SMEM f32   1x1-conv bias
    # w1_ref:    (Cf*HW, E)     VMEM bf16  fc1 weight, torch channel-major flatten order
    # b1_ref:    (1, E)         VMEM f32
    # w2_ref:    (E, E)         VMEM bf16
    # b2_ref:    (1, E)         VMEM f32
    # o_ref:     (tb, E)        VMEM f32 -> HBM (lane-dense, E == 128)
    # conv_ref:  (tb, Cf*HW)    VMEM f32 scratch, conv+ReLU activation (channel-major)
    cin, tb, HW = x_ref.shape
    E = w1_ref.shape[1]
    Cf = w1_ref.shape[0] // HW

    # ---- Phase 1: 1x1 conv + ReLU into the channel-major scratch --------------
    # Each input plane is read exactly once per batch sub-chunk: all Cin planes of
    # a sub-chunk stay in vregs while every one of the Cf output channels is built.
    @pl.loop(0, tb // SUB)
    def _(s):
        r = pl.multiple_of(s * SUB, SUB)
        planes = [x_ref[c, pl.ds(r, SUB), :] for c in range(cin)]   # cin x (SUB, HW)
        for f in range(Cf):
            acc = planes[0] * wconv_ref[f * cin]                    # f32 VPU FMAs
            for c in range(1, cin):
                acc = acc + planes[c] * wconv_ref[f * cin + c]
            acc = jnp.maximum(acc + bconv_ref[f], 0.0)
            conv_ref[pl.ds(r, SUB), pl.ds(f * HW, HW)] = acc        # (8,128)-aligned store

    # ---- Phase 2: fc1 (single K = Cf*HW MXU matmul) -> ReLU -> fc2 -> ReLU ----
    lhs = conv_ref[...].astype(jnp.bfloat16)            # bf16 operands, f32 accumulation
    y1 = jnp.dot(lhs, w1_ref[...], preferred_element_type=jnp.float32)
    y1 = jnp.maximum(y1 + b1_ref[...], 0.0)
    y2 = jnp.dot(y1.astype(jnp.bfloat16), w2_ref[...],
                 preferred_element_type=jnp.float32) + b2_ref[...]
    o_ref[...] = jnp.maximum(y2, 0.0).astype(o_ref.dtype)           # lane-dense store


# ----------------------------- Parameter setup -----------------------------

def init_params(key, input_dim, action_size, nb_channels, embed_dim):
    """Deterministic synthetic parameters in PyTorch layout + kernel layout."""
    C, H, W = input_dim
    HW = H * W
    cin = C + action_size
    feat = HW * nb_channels
    ks = jax.random.split(key, 6)

    # PyTorch-layout params (as nn.Conv2d / nn.Linear store them).
    # TODO(synk): original module applies an undefined `weights_init`; we use a
    # deterministic normal init of the same shapes instead.
    conv_w = jax.random.normal(ks[0], (nb_channels, cin, 1, 1), jnp.float32) * 0.10
    conv_b = jax.random.normal(ks[1], (nb_channels,), jnp.float32) * 0.10
    fc1_w = jax.random.normal(ks[2], (embed_dim, feat), jnp.float32) * 0.02
    fc1_b = jax.random.normal(ks[3], (embed_dim,), jnp.float32) * 0.10
    fc2_w = jax.random.normal(ks[4], (embed_dim, embed_dim), jnp.float32) * 0.05
    fc2_b = jax.random.normal(ks[5], (embed_dim,), jnp.float32) * 0.10

    return {
        # PyTorch layout (for the pure-JAX f32 reference)
        "conv_w": conv_w, "conv_b": conv_b,
        "fc1_w": fc1_w, "fc1_b": fc1_b,
        "fc2_w": fc2_w, "fc2_b": fc2_b,
        # Kernel layout (one-time host-side transforms, no per-call glue)
        "conv_w_k": conv_w.reshape(nb_channels * cin),           # (Cf*Cin,) f32 -> SMEM
        "conv_b_k": conv_b,                                      # (Cf,)     f32 -> SMEM
        "fc1_w_k": fc1_w.T.astype(jnp.bfloat16),                 # (Cf*HW, E) bf16, torch flatten order
        "fc1_b_k": fc1_b.reshape(1, embed_dim),                  # (1, E) f32
        "fc2_w_k": fc2_w.T.astype(jnp.bfloat16),                 # (E, E) bf16
        "fc2_b_k": fc2_b.reshape(1, embed_dim),                  # (1, E) f32
    }


# ----------------------------- Forward (Pallas path) -----------------------------

def _round_up(x, m):
    return ((x + m - 1) // m) * m


def state_action_encoder_forward(params, state, action_2d, *, input_dim, tile_b=128):
    # tile_b=128 fills the v5e MXU and keeps VMEM small everywhere; 256 is better
    # on v6e/v7x (256-wide MXU) for large B — the demo batch never reaches it.
    C, H, W = input_dim
    HW = H * W
    state = state.reshape(-1, C, HW)            # torch .view(-1, C, H, W), free view
    B = state.shape[0]
    A = action_2d.shape[1]
    action = action_2d.reshape(B, A, HW)
    cin = C + A

    w1 = params["fc1_w_k"]                      # (Cf*HW, E) bf16
    Cf_HW, E = w1.shape
    Cf = Cf_HW // HW

    # Channel-first input planes (Cin, B, HW): tb sits on sublanes, HW on lanes
    # -> clean (8,128) tiles, no sublane padding from C=4, no strided channel loads.
    x = jnp.transpose(jnp.concatenate([state, action], axis=1), (1, 0, 2))

    # Batch tiling: round the tile up to a sublane multiple and zero-pad the batch
    # so every grid step sees a full tile (no M=2 matmuls / masked partial stores).
    tb = _round_up(min(tile_b, _round_up(B, SUB)), SUB)
    Bp = _round_up(B, tb)
    if Bp != B:
        x = jnp.pad(x, ((0, 0), (0, Bp - B), (0, 0)))

    out = pl.pallas_call(
        fused_encoder_kernel,
        out_shape=jax.ShapeDtypeStruct((Bp, E), jnp.float32),
        grid=(Bp // tb,),
        in_specs=[
            pl.BlockSpec((cin, tb, HW), lambda i: (0, i, 0)),      # input planes, batch-tiled
            pl.BlockSpec(memory_space=pltpu.MemorySpace.SMEM),     # 1x1-conv weight scalars
            pl.BlockSpec(memory_space=pltpu.MemorySpace.SMEM),     # 1x1-conv bias scalars
            pl.BlockSpec((Cf * HW, E), lambda i: (0, 0)),          # fc1 weight (VMEM resident)
            pl.BlockSpec((1, E), lambda i: (0, 0)),                # fc1 bias
            pl.BlockSpec((E, E), lambda i: (0, 0)),                # fc2 weight (VMEM resident)
            pl.BlockSpec((1, E), lambda i: (0, 0)),                # fc2 bias
        ],
        out_specs=pl.BlockSpec((tb, E), lambda i: (i, 0)),
        scratch_shapes=[pltpu.VMEM((tb, Cf * HW), jnp.float32)],   # channel-major conv scratch
        compiler_params=pltpu.CompilerParams(
            dimension_semantics=("parallel",),
            vmem_limit_bytes=32 * 1024 * 1024),
    )(x, params["conv_w_k"], params["conv_b_k"],
      w1, params["fc1_b_k"], params["fc2_w_k"], params["fc2_b_k"])
    return out[:B]


# ----------------------- Pure-JAX reference (PyTorch semantics, f32) -----------------------

def reference_forward(params, state, action_2d, *, input_dim):
    C, H, W = input_dim
    state = state.reshape(-1, C, H, W)
    B = state.shape[0]
    xa = jnp.concatenate([state, action_2d], axis=1)                       # NCHW concat
    cf = params["conv_w"].shape[0]
    wc = params["conv_w"].reshape(cf, -1)                                  # (Cf, C+A)
    conv = jnp.einsum("bchw,fc->bfhw", xa, wc) + params["conv_b"][None, :, None, None]
    conv = jnp.maximum(conv, 0.0)
    f = conv.reshape(B, -1)                                                # channel-major flatten
    y1 = jnp.maximum(f @ params["fc1_w"].T + params["fc1_b"], 0.0)
    y2 = jnp.maximum(y1 @ params["fc2_w"].T + params["fc2_b"], 0.0)
    return y2


# ----------------------------- Main -----------------------------

if __name__ == "__main__":
    input_dim = (4, 16, 16)      # (C, H, W)  -> HW = 256 (lane-dense multiple of 128)
    action_size = 4
    nb_channels = 32
    embed_dim = 128
    batch = 2

    key = jax.random.PRNGKey(0)
    kp, ks, ka = jax.random.split(key, 3)
    params = init_params(kp, input_dim, action_size, nb_channels, embed_dim)

    state = jax.random.normal(ks, (batch,) + input_dim, jnp.float32)
    action_2d = jax.random.normal(
        ka, (batch, action_size, input_dim[1], input_dim[2]), jnp.float32)

    out = state_action_encoder_forward(params, state, action_2d, input_dim=input_dim)
    out = jax.block_until_ready(out)

    ref = reference_forward(params, state, action_2d, input_dim=input_dim)
    assert out.shape == (batch, embed_dim), out.shape
    # bf16 MXU operands (f32 accumulation) -> looser tolerance than the pure-f32 path.
    max_err = float(jnp.max(jnp.abs(out - ref)))
    assert jnp.allclose(out, ref, rtol=3e-2, atol=3e-2), max_err

    print("KERNEL_OK")
</pallas_src>

<mosaic_0001>
module attributes {stable_mosaic.version = 11 : i64} {
  func.func @fused_encoder_kernel(%arg0: i32, %arg1: memref<8x8x256xf32, #tpu.memory_space<vmem>>, %arg2: memref<256xf32, #tpu.memory_space<smem>>, %arg3: memref<32xf32, #tpu.memory_space<smem>>, %arg4: memref<8192x128xbf16, #tpu.memory_space<vmem>>, %arg5: memref<1x128xf32, #tpu.memory_space<vmem>>, %arg6: memref<128x128xbf16, #tpu.memory_space<vmem>>, %arg7: memref<1x128xf32, #tpu.memory_space<vmem>>, %arg8: memref<8x128xf32, #tpu.memory_space<vmem>>, %arg9: memref<8x8192xf32, #tpu.memory_space<vmem>>) attributes {dimension_semantics = [#tpu.dimension_semantics<parallel>], iteration_bounds = array<i64: 1>, scalar_prefetch = 0 : i64, scratch_operands = 1 : i64, tpu.core_type = #tpu.core_type<tc>, window_params = [{transform_indices = @transform_0, window_bounds = array<i64: 8, 8, 256>}, {transform_indices = @transform_1, window_bounds = array<i64: 256>}, {transform_indices = @transform_2, window_bounds = array<i64: 32>}, {pipeline_mode = #tpu.pipeline_mode<synchronous>, transform_indices = @transform_3, window_bounds = array<i64: 8192, 128>}, {pipeline_mode = #tpu.pipeline_mode<synchronous>, transform_indices = @transform_4, window_bounds = array<i64: 1, 128>}, {pipeline_mode = #tpu.pipeline_mode<synchronous>, transform_indices = @transform_5, window_bounds = array<i64: 128, 128>}, {pipeline_mode = #tpu.pipeline_mode<synchronous>, transform_indices = @transform_6, window_bounds = array<i64: 1, 128>}, {transform_indices = @transform_7, window_bounds = array<i64: 8, 128>}]} {
    %c0_i32 = arith.constant 0 : i32
    %c1_i32 = arith.constant 1 : i32
    %0 = arith.muli %c0_i32, %c1_i32 : i32
    %c0_i32_0 = arith.constant 0 : i32
    %1 = arith.addi %c0_i32_0, %0 : i32
    %c8_i32 = arith.constant 8 : i32
    %2 = arith.muli %1, %c8_i32 : i32
    %3 = tpu.assume_multiple %2, 8 : i32
    %c0 = arith.constant 0 : index
    %4 = arith.index_cast %3 : i32 to index
    %c0_1 = arith.constant 0 : index
    %5 = vector.load %arg1[%c0, %4, %c0_1] : memref<8x8x256xf32, #tpu.memory_space<vmem>>, vector<1x8x256xf32>
    %6 = vector.shape_cast %5 : vector<1x8x256xf32> to vector<8x256xf32>
    %c1 = arith.constant 1 : index
    %7 = arith.index_cast %3 : i32 to index
    %c0_2 = arith.constant 0 : index
    %8 = vector.load %arg1[%c1, %7, %c0_2] : memref<8x8x256xf32, #tpu.memory_space<vmem>>, vector<1x8x256xf32>
    %9 = vector.shape_cast %8 : vector<1x8x256xf32> to vector<8x256xf32>
    %c2 = arith.constant 2 : index
    %10 = arith.index_cast %3 : i32 to index
    %c0_3 = arith.constant 0 : index
    %11 = vector.load %arg1[%c2, %10, %c0_3] : memref<8x8x256xf32, #tpu.memory_space<vmem>>, vector<1x8x256xf32>
    %12 = vector.shape_cast %11 : vector<1x8x256xf32> to vector<8x256xf32>
    %c3 = arith.constant 3 : index
    %13 = arith.index_cast %3 : i32 to index
    %c0_4 = arith.constant 0 : index
    %14 = vector.load %arg1[%c3, %13, %c0_4] : memref<8x8x256xf32, #tpu.memory_space<vmem>>, vector<1x8x256xf32>
    %15 = vector.shape_cast %14 : vector<1x8x256xf32> to vector<8x256xf32>
    %c4 = arith.constant 4 : index
    %16 = arith.index_cast %3 : i32 to index
    %c0_5 = arith.constant 0 : index
    %17 = vector.load %arg1[%c4, %16, %c0_5] : memref<8x8x256xf32, #tpu.memory_space<vmem>>, vector<1x8x256xf32>
    %18 = vector.shape_cast %17 : vector<1x8x256xf32> to vector<8x256xf32>
    %c5 = arith.constant 5 : index
    %19 = arith.index_cast %3 : i32 to index
    %c0_6 = arith.constant 0 : index
    %20 = vector.load %arg1[%c5, %19, %c0_6] : memref<8x8x256xf32, #tpu.memory_space<vmem>>, vector<1x8x256xf32>
    %21 = vector.shape_cast %20 : vector<1x8x256xf32> to vector<8x256xf32>
    %c6 = arith.constant 6 : index
    %22 = arith.index_cast %3 : i32 to index
    %c0_7 = arith.constant 0 : index
    %23 = vector.load %arg1[%c6, %22, %c0_7] : memref<8x8x256xf32, #tpu.memory_space<vmem>>, vector<1x8x256xf32>
    %24 = vector.shape_cast %23 : vector<1x8x256xf32> to vector<8x256xf32>
    %c7 = arith.constant 7 : index
    %25 = arith.index_cast %3 : i32 to index
    %c0_8 = arith.constant 0 : index
    %26 = vector.load %arg1[%c7, %25, %c0_8] : memref<8x8x256xf32, #tpu.memory_space<vmem>>, vector<1x8x256xf32>
    %27 = vector.shape_cast %26 : vector<1x8x256xf32> to vector<8x256xf32>
    %c0_9 = arith.constant 0 : index
    %28 = memref.load %arg2[%c0_9] : memref<256xf32, #tpu.memory_space<smem>>
    %29 = vector.broadcast %28 : f32 to vector<8x256xf32>
    %30 = arith.mulf %6, %29 : vector<8x256xf32>
    %c1_10 = arith.constant 1 : index
    %31 = memref.load %arg2[%c1_10] : memref<256xf32, #tpu.memory_space<smem>>
    %32 = vector.broadcast %31 : f32 to vector<8x256xf32>
    %33 = arith.mulf %9, %32 : vector<8x256xf32>
    %34 = arith.addf %30, %33 : vector<8x256xf32>
    %c2_11 = arith.constant 2 : index
    %35 = memref.load %arg2[%c2_11] : memref<256xf32, #tpu.memory_space<smem>>
    %36 = vector.broadcast %35 : f32 to vector<8x256xf32>
    %37 = arith.mulf %12, %36 : vector<8x256xf32>
    %38 = arith.addf %34, %37 : vector<8x256xf32>
    %c3_12 = arith.constant 3 : index
    %39 = memref.load %arg2[%c3_12] : memref<256xf32, #tpu.memory_space<smem>>
    %40 = vector.broadcast %39 : f32 to vector<8x256xf32>
    %41 = arith.mulf %15, %40 : vector<8x256xf32>
    %42 = arith.addf %38, %41 : vector<8x256xf32>
    %c4_13 = arith.constant 4 : index
    %43 = memref.load %arg2[%c4_13] : memref<256xf32, #tpu.memory_space<smem>>
    %44 = vector.broadcast %43 : f32 to vector<8x256xf32>
    %45 = arith.mulf %18, %44 : vector<8x256xf32>
    %46 = arith.addf %42, %45 : vector<8x256xf32>
    %c5_14 = arith.constant 5 : index
    %47 = memref.load %arg2[%c5_14] : memref<256xf32, #tpu.memory_space<smem>>
    %48 = vector.broadcast %47 : f32 to vector<8x256xf32>
    %49 = arith.mulf %21, %48 : vector<8x256xf32>
    %50 = arith.addf %46, %49 : vector<8x256xf32>
    %c6_15 = arith.constant 6 : index
    %51 = memref.load %arg2[%c6_15] : memref<256xf32, #tpu.memory_space<smem>>
    %52 = vector.broadcast %51 : f32 to vector<8x256xf32>
    %53 = arith.mulf %24, %52 : vector<8x256xf32>
    %54 = arith.addf %50, %53 : vector<8x256xf32>
    %c7_16 = arith.constant 7 : index
    %55 = memref.load %arg2[%c7_16] : memref<256xf32, #tpu.memory_space<smem>>
    %56 = vector.broadcast %55 : f32 to vector<8x256xf32>
    %57 = arith.mulf %27, %56 : vector<8x256xf32>
    %58 = arith.addf %54, %57 : vector<8x256xf32>
    %c0_17 = arith.constant 0 : index
    %59 = memref.load %arg3[%c0_17] : memref<32xf32, #tpu.memory_space<smem>>
    %60 = vector.broadcast %59 : f32 to vector<8x256xf32>
    %61 = arith.addf %58, %60 : vector<8x256xf32>
    %cst = arith.constant 0.000000e+00 : f32
    %62 = vector.broadcast %cst : f32 to vector<8x256xf32>
    %63 = arith.maximumf %61, %62 : vector<8x256xf32>
    %64 = arith.index_cast %3 : i32 to index
    %c0_18 = arith.constant 0 : index
    %65 = vector.load %arg9[%64, %c0_18] : memref<8x8192xf32, #tpu.memory_space<vmem>>, vector<8x256xf32>
    tpu.vector_store %arg9[%64, %c0_18], %63 {strides = array<i32>} : memref<8x8192xf32, #tpu.memory_space<vmem>>, vector<8x256xf32>,
    %c8 = arith.constant 8 : index
    %66 = memref.load %arg2[%c8] : memref<256xf32, #tpu.memory_space<smem>>
    %67 = vector.broadcast %66 : f32 to vector<8x256xf32>
    %68 = arith.mulf %6, %67 : vector<8x256xf32>
    %c9 = arith.constant 9 : index
    %69 = memref.load %arg2[%c9] : memref<256xf32, #tpu.memory_space<smem>>
    %70 = vector.broadcast %69 : f32 to vector<8x256xf32>
    %71 = arith.mulf %9, %70 : vector<8x256xf32>
    %72 = arith.addf %68, %71 : vector<8x256xf32>
    %c10 = arith.constant 10 : index
    %73 = memref.load %arg2[%c10] : memref<256xf32, #tpu.memory_space<smem>>
    %74 = vector.broadcast %73 : f32 to vector<8x256xf32>
    %75 = arith.mulf %12, %74 : vector<8x256xf32>
    %76 = arith.addf %72, %75 : vector<8x256xf32>
    %c11 = arith.constant 11 : index
    %77 = memref.load %arg2[%c11] : memref<256xf32, #tpu.memory_space<smem>>
    %78 = vector.broadcast %77 : f32 to vector<8x256xf32>
    %79 = arith.mulf %15, %78 : vector<8x256xf32>
    %80 = arith.addf %76, %79 : vector<8x256xf32>
    %c12 = arith.constant 12 : index
    %81 = memref.load %arg2[%c12] : memref<256xf32, #tpu.memory_space<smem>>
    %82 = vector.broadcast %81 : f32 to vector<8x256xf32>
    %83 = arith.mulf %18, %82 : vector<8x256xf32>
    %84 = arith.addf %80, %83 : vector<8x256xf32>
    %c13 = arith.constant 13 : index
    %85 = memref.load %arg2[%c13] : memref<256xf32, #tpu.memory_space<smem>>
    %86 = vector.broadcast %85 : f32 to vector<8x256xf32>
    %87 = arith.mulf %21, %86 : vector<8x256xf32>
    %88 = arith.addf %84, %87 : vector<8x256xf32>
    %c14 = arith.constant 14 : index
    %89 = memref.load %arg2[%c14] : memref<256xf32, #tpu.memory_space<smem>>
    %90 = vector.broadcast %89 : f32 to vector<8x256xf32>
    %91 = arith.mulf %24, %90 : vector<8x256xf32>
    %92 = arith.addf %88, %91 : vector<8x256xf32>
    %c15 = arith.constant 15 : index
    %93 = memref.load %arg2[%c15] : memref<256xf32, #tpu.memory_space<smem>>
    %94 = vector.broadcast %93 : f32 to vector<8x256xf32>
    %95 = arith.mulf %27, %94 : vector<8x256xf32>
    %96 = arith.addf %92, %95 : vector<8x256xf32>
    %c1_19 = arith.constant 1 : index
    %97 = memref.load %arg3[%c1_19] : memref<32xf32, #tpu.memory_space<smem>>
    %98 = vector.broadcast %97 : f32 to vector<8x256xf32>
    %99 = arith.addf %96, %98 : vector<8x256xf32>
    %cst_20 = arith.constant 0.000000e+00 : f32
    %100 = vector.broadcast %cst_20 : f32 to vector<8x256xf32>
    %101 = arith.maximumf %99, %100 : vector<8x256xf32>
    %102 = arith.index_cast %3 : i32 to index
    %c256 = arith.constant 256 : index
    %103 = vector.load %arg9[%102, %c256] : memref<8x8192xf32, #tpu.memory_space<vmem>>, vector<8x256xf32>
    tpu.vector_store %arg9[%102, %c256], %101 {strides = array<i32>} : memref<8x8192xf32, #tpu.memory_space<vmem>>, vector<8x256xf32>,
    %c16 = arith.constant 16 : index
    %104 = memref.load %arg2[%c16] : memref<256xf32, #tpu.memory_space<smem>>
    %105 = vector.broadcast %104 : f32 to vector<8x256xf32>
    %106 = arith.mulf %6, %105 : vector<8x256xf32>
    %c17 = arith.constant 17 : index
    %107 = memref.load %arg2[%c17] : memref<256xf32, #tpu.memory_space<smem>>
    %108 = vector.broadcast %107 : f32 to vector<8x256xf32>
    %109 = arith.mulf %9, %108 : vector<8x256xf32>
    %110 = arith.addf %106, %109 : vector<8x256xf32>
    %c18 = arith.constant 18 : index
    %111 = memref.load %arg2[%c18] : memref<256xf32, #tpu.memory_space<smem>>
    %112 = vector.broadcast %111 : f32 to vector<8x256xf32>
    %113 = arith.mulf %12, %112 : vector<8x256xf32>
    %114 = arith.addf %110, %113 : vector<8x256xf32>
    %c19 = arith.constant 19 : index
    %115 = memref.load %arg2[%c19] : memref<256xf32, #tpu.memory_space<smem>>
    %116 = vector.broadcast %115 : f32 to vector<8x256xf32>
    %117 = arith.mulf %15, %116 : vector<8x256xf32>
    %118 = arith.addf %114, %117 : vector<8x256xf32>
    %c20 = arith.constant 20 : index
    %119 = memref.load %arg2[%c20] : memref<256xf32, #tpu.memory_space<smem>>
    %120 = vector.broadcast %119 : f32 to vector<8x256xf32>
    %121 = arith.mulf %18, %120 : vector<8x256xf32>
    %122 = arith.addf %118, %121 : vector<8x256xf32>
    %c21 = arith.constant 21 : index
    %123 = memref.load %arg2[%c21] : memref<256xf32, #tpu.memory_space<smem>>
    %124 = vector.broadcast %123 : f32 to vector<8x256xf32>
    %125 = arith.mulf %21, %124 : vector<8x256xf32>
    %126 = arith.addf %122, %125 : vector<8x256xf32>
    %c22 = arith.constant 22 : index
    %127 = memref.load %arg2[%c22] : memref<256xf32, #tpu.memory_space<smem>>
    %128 = vector.broadcast %127 : f32 to vector<8x256xf32>
    %129 = arith.mulf %24, %128 : vector<8x256xf32>
    %130 = arith.addf %126, %129 : vector<8x256xf32>
    %c23 = arith.constant 23 : index
    %131 = memref.load %arg2[%c23] : memref<256xf32, #tpu.memory_space<smem>>
    %132 = vector.broadcast %131 : f32 to vector<8x256xf32>
    %133 = arith.mulf %27, %132 : vector<8x256xf32>
    %134 = arith.addf %130, %133 : vector<8x256xf32>
    %c2_21 = arith.constant 2 : index
    %135 = memref.load %arg3[%c2_21] : memref<32xf32, #tpu.memory_space<smem>>
    %136 = vector.broadcast %135 : f32 to vector<8x256xf32>
    %137 = arith.addf %134, %136 : vector<8x256xf32>
    %cst_22 = arith.constant 0.000000e+00 : f32
    %138 = vector.broadcast %cst_22 : f32 to vector<8x256xf32>
    %139 = arith.maximumf %137, %138 : vector<8x256xf32>
    %140 = arith.index_cast %3 : i32 to index
    %c512 = arith.constant 512 : index
    %141 = vector.load %arg9[%140, %c512] : memref<8x8192xf32, #tpu.memory_space<vmem>>, vector<8x256xf32>
    tpu.vector_store %arg9[%140, %c512], %139 {strides = array<i32>} : memref<8x8192xf32, #tpu.memory_space<vmem>>, vector<8x256xf32>,
    %c24 = arith.constant 24 : index
    %142 = memref.load %arg2[%c24] : memref<256xf32, #tpu.memory_space<smem>>
    %143 = vector.broadcast %142 : f32 to vector<8x256xf32>
    %144 = arith.mulf %6, %143 : vector<8x256xf32>
    %c25 = arith.constant 25 : index
    %145 = memref.load %arg2[%c25] : memref<256xf32, #tpu.memory_space<smem>>
    %146 = vector.broadcast %145 : f32 to vector<8x256xf32>
    %147 = arith.mulf %9, %146 : vector<8x256xf32>
    %148 = arith.addf %144, %147 : vector<8x256xf32>
    %c26 = arith.constant 26 : index
    %149 = memref.load %arg2[%c26] : memref<256xf32, #tpu.memory_space<smem>>
    %150 = vector.broadcast %149 : f32 to vector<8x256xf32>
    %151 = arith.mulf %12, %150 : vector<8x256xf32>
    %152 = arith.addf %148, %151 : vector<8x256xf32>
    %c27 = arith.constant 27 : index
    %153 = memref.load %arg2[%c27] : memref<256xf32, #tpu.memory_space<smem>>
    %154 = vector.broadcast %153 : f32 to vector<8x256xf32>
    %155 = arith.mulf %15, %154 : vector<8x256xf32>
    %156 = arith.addf %152, %155 : vector<8x256xf32>
    %c28 = arith.constant 28 : index
    %157 = memref.load %arg2[%c28] : memref<256xf32, #tpu.memory_space<smem>>
    %158 = vector.broadcast %157 : f32 to vector<8x256xf32>
    %159 = arith.mulf %18, %158 : vector<8x256xf32>
    %160 = arith.addf %156, %159 : vector<8x256xf32>
    %c29 = arith.constant 29 : index
    %161 = memref.load %arg2[%c29] : memref<256xf32, #tpu.memory_space<smem>>
    %162 = vector.broadcast %161 : f32 to vector<8x256xf32>
    %163 = arith.mulf %21, %162 : vector<8x256xf32>
    %164 = arith.addf %160, %163 : vector<8x256xf32>
    %c30 = arith.constant 30 : index
    %165 = memref.load %arg2[%c30] : memref<256xf32, #tpu.memory_space<smem>>
    %166 = vector.broadcast %165 : f32 to vector<8x256xf32>
    %167 = arith.mulf %24, %166 : vector<8x256xf32>
    %168 = arith.addf %164, %167 : vector<8x256xf32>
    %c31 = arith.constant 31 : index
    %169 = memref.load %arg2[%c31] : memref<256xf32, #tpu.memory_space<smem>>
    %170 = vector.broadcast %169 : f32 to vector<8x256xf32>
    %171 = arith.mulf %27, %170 : vector<8x256xf32>
    %172 = arith.addf %168, %171 : vector<8x256xf32>
    %c3_23 = arith.constant 3 : index
    %173 = memref.load %arg3[%c3_23] : memref<32xf32, #tpu.memory_space<smem>>
    %174 = vector.broadcast %173 : f32 to vector<8x256xf32>
    %175 = arith.addf %172, %174 : vector<8x256xf32>
    %cst_24 = arith.constant 0.000000e+00 : f32
    %176 = vector.broadcast %cst_24 : f32 to vector<8x256xf32>
    %177 = arith.maximumf %175, %176 : vector<8x256xf32>
    %178 = arith.index_cast %3 : i32 to index
    %c768 = arith.constant 768 : index
    %179 = vector.load %arg9[%178, %c768] : memref<8x8192xf32, #tpu.memory_space<vmem>>, vector<8x256xf32>
    tpu.vector_store %arg9[%178, %c768], %177 {strides = array<i32>} : memref<8x8192xf32, #tpu.memory_space<vmem>>, vector<8x256xf32>,
    %c32 = arith.constant 32 : index
    %180 = memref.load %arg2[%c32] : memref<256xf32, #tpu.memory_space<smem>>
    %181 = vector.broadcast %180 : f32 to vector<8x256xf32>
    %182 = arith.mulf %6, %181 : vector<8x256xf32>
    %c33 = arith.constant 33 : index
    %183 = memref.load %arg2[%c33] : memref<256xf32, #tpu.memory_space<smem>>
    %184 = vector.broadcast %183 : f32 to vector<8x256xf32>
    %185 = arith.mulf %9, %184 : vector<8x256xf32>
    %186 = arith.addf %182, %185 : vector<8x256xf32>
    %c34 = arith.constant 34 : index
    %187 = memref.load %arg2[%c34] : memref<256xf32, #tpu.memory_space<smem>>
    %188 = vector.broadcast %187 : f32 to vector<8x256xf32>
    %189 = arith.mulf %12, %188 : vector<8x256xf32>
    %190 = arith.addf %186, %189 : vector<8x256xf32>
    %c35 = arith.constant 35 : index
    %191 = memref.load %arg2[%c35] : memref<256xf32, #tpu.memory_space<smem>>
    %192 = vector.broadcast %191 : f32 to vector<8x256xf32>
    %193 = arith.mulf %15, %192 : vector<8x256xf32>
    %194 = arith.addf %190, %193 : vector<8x256xf32>
    %c36 = arith.constant 36 : index
    %195 = memref.load %arg2[%c36] : memref<256xf32, #tpu.memory_space<smem>>
    %196 = vector.broadcast %195 : f32 to vector<8x256xf32>
    %197 = arith.mulf %18, %196 : vector<8x256xf32>
    %198 = arith.addf %194, %197 : vector<8x256xf32>
    %c37 = arith.constant 37 : index
    %199 = memref.load %arg2[%c37] : memref<256xf32, #tpu.memory_space<smem>>
    %200 = vector.broadcast %199 : f32 to vector<8x256xf32>
    %201 = arith.mulf %21, %200 : vector<8x256xf32>
    %202 = arith.addf %198, %201 : vector<8x256xf32>
    %c38 = arith.constant 38 : index
    %203 = memref.load %arg2[%c38] : memref<256xf32, #tpu.memory_space<smem>>
    %204 = vector.broadcast %203 : f32 to vector<8x256xf32>
    %205 = arith.mulf %24, %204 : vector<8x256xf32>
    %206 = arith.addf %202, %205 : vector<8x256xf32>
    %c39 = arith.constant 39 : index
    %207 = memref.load %arg2[%c39] : memref<256xf32, #tpu.memory_space<smem>>
    %208 = vector.broadcast %207 : f32 to vector<8x256xf32>
    %209 = arith.mulf %27, %208 : vector<8x256xf32>
    %210 = arith.addf %206, %209 : vector<8x256xf32>
    %c4_25 = arith.constant 4 : index
    %211 = memref.load %arg3[%c4_25] : memref<32xf32, #tpu.memory_space<smem>>
    %212 = vector.broadcast %211 : f32 to vector<8x256xf32>
    %213 = arith.addf %210, %212 : vector<8x256xf32>
    %cst_26 = arith.constant 0.000000e+00 : f32
    %214 = vector.broadcast %cst_26 : f32 to vector<8x256xf32>
    %215 = arith.maximumf %213, %214 : vector<8x256xf32>
    %216 = arith.index_cast %3 : i32 to index
    %c1024 = arith.constant 1024 : index
    %217 = vector.load %arg9[%216, %c1024] : memref<8x8192xf32, #tpu.memory_space<vmem>>, vector<8x256xf32>
    tpu.vector_store %arg9[%216, %c1024], %215 {strides = array<i32>} : memref<8x8192xf32, #tpu.memory_space<vmem>>, vector<8x256xf32>,
    %c40 = arith.constant 40 : index
    %218 = memref.load %arg2[%c40] : memref<256xf32, #tpu.memory_space<smem>>
    %219 = vector.broadcast %218 : f32 to vector<8x256xf32>
    %220 = arith.mulf %6, %219 : vector<8x256xf32>
    %c41 = arith.constant 41 : index
    %221 = memref.load %arg2[%c41] : memref<256xf32, #tpu.memory_space<smem>>
    %222 = vector.broadcast %221 : f32 to vector<8x256xf32>
    %223 = arith.mulf %9, %222 : vector<8x256xf32>
    %224 = arith.addf %220, %223 : vector<8x256xf32>
    %c42 = arith.constant 42 : index
    %225 = memref.load %arg2[%c42] : memref<256xf32, #tpu.memory_space<smem>>
    %226 = vector.broadcast %225 : f32 to vector<8x256xf32>
    %227 = arith.mulf %12, %226 : vector<8x256xf32>
    %228 = arith.addf %224, %227 : vector<8x256xf32>
    %c43 = arith.constant 43 : index
    %229 = memref.load %arg2[%c43] : memref<256xf32, #tpu.memory_space<smem>>
    %230 = vector.broadcast %229 : f32 to vector<8x256xf32>
    %231 = arith.mulf %15, %230 : vector<8x256xf32>
    %232 = arith.addf %228, %231 : vector<8x256xf32>
    %c44 = arith.constant 44 : index
    %233 = memref.load %arg2[%c44] : memref<256xf32, #tpu.memory_space<smem>>
    %234 = vector.broadcast %233 : f32 to vector<8x256xf32>
    %235 = arith.mulf %18, %234 : vector<8x256xf32>
    %236 = arith.addf %232, %235 : vector<8x256xf32>
    %c45 = arith.constant 45 : index
    %237 = memref.load %arg2[%c45] : memref<256xf32, #tpu.memory_space<smem>>
    %238 = vector.broadcast %237 : f32 to vector<8x256xf32>
    %239 = arith.mulf %21, %238 : vector<8x256xf32>
    %240 = arith.addf %236, %239 : vector<8x256xf32>
    %c46 = arith.constant 46 : index
    %241 = memref.load %arg2[%c46] : memref<256xf32, #tpu.memory_space<smem>>
    %242 = vector.broadcast %241 : f32 to vector<8x256xf32>
    %243 = arith.mulf %24, %242 : vector<8x256xf32>
    %244 = arith.addf %240, %243 : vector<8x256xf32>
    %c47 = arith.constant 47 : index
    %245 = memref.load %arg2[%c47] : memref<256xf32, #tpu.memory_space<smem>>
    %246 = vector.broadcast %245 : f32 to vector<8x256xf32>
    %247 = arith.mulf %27, %246 : vector<8x256xf32>
    %248 = arith.addf %244, %247 : vector<8x256xf32>
    %c5_27 = arith.constant 5 : index
    %249 = memref.load %arg3[%c5_27] : memref<32xf32, #tpu.memory_space<smem>>
    %250 = vector.broadcast %249 : f32 to vector<8x256xf32>
    %251 = arith.addf %248, %250 : vector<8x256xf32>
    %cst_28 = arith.constant 0.000000e+00 : f32
    %252 = vector.broadcast %cst_28 : f32 to vector<8x256xf32>
    %253 = arith.maximumf %251, %252 : vector<8x256xf32>
    %254 = arith.index_cast %3 : i32 to index
    %c1280 = arith.constant 1280 : index
    %255 = vector.load %arg9[%254, %c1280] : memref<8x8192xf32, #tpu.memory_space<vmem>>, vector<8x256xf32>
    tpu.vector_store %arg9[%254, %c1280], %253 {strides = array<i32>} : memref<8x8192xf32, #tpu.memory_space<vmem>>, vector<8x256xf32>,
    %c48 = arith.constant 48 : index
    %256 = memref.load %arg2[%c48] : memref<256xf32, #tpu.memory_space<smem>>
    %257 = vector.broadcast %256 : f32 to vector<8x256xf32>
    %258 = arith.mulf %6, %257 : vector<8x256xf32>
    %c49 = arith.constant 49 : index
    %259 = memref.load %arg2[%c49] : memref<256xf32, #tpu.memory_space<smem>>
    %260 = vector.broadcast %259 : f32 to vector<8x256xf32>
    %261 = arith.mulf %9, %260 : vector<8x256xf32>
    %262 = arith.addf %258, %261 : vector<8x256xf32>
    %c50 = arith.constant 50 : index
    %263 = memref.load %arg2[%c50] : memref<256xf32, #tpu.memory_space<smem>>
    %264 = vector.broadcast %263 : f32 to vector<8x256xf32>
    %265 = arith.mulf %12, %264 : vector<8x256xf32>
    %266 = arith.addf %262, %265 : vector<8x256xf32>
    %c51 = arith.constant 51 : index
    %267 = memref.load %arg2[%c51] : memref<256xf32, #tpu.memory_space<smem>>
    %268 = vector.broadcast %267 : f32 to vector<8x256xf32>
    %269 = arith.mulf %15, %268 : vector<8x256xf32>
    %270 = arith.addf %266, %269 : vector<8x256xf32>
    %c52 = arith.constant 52 : index
    %271 = memref.load %arg2[%c52] : memref<256xf32, #tpu.memory_space<smem>>
    %272 = vector.broadcast %271 : f32 to vector<8x256xf32>
    %273 = arith.mulf %18, %272 : vector<8x256xf32>
    %274 = arith.addf %270, %273 : vector<8x256xf32>
    %c53 = arith.constant 53 : index
    %275 = memref.load %arg2[%c53] : memref<256xf32, #tpu.memory_space<smem>>
    %276 = vector.broadcast %275 : f32 to vector<8x256xf32>
    %277 = arith.mulf %21, %276 : vector<8x256xf32>
    %278 = arith.addf %274, %277 : vector<8x256xf32>
    %c54 = arith.constant 54 : index
    %279 = memref.load %arg2[%c54] : memref<256xf32, #tpu.memory_space<smem>>
    %280 = vector.broadcast %279 : f32 to vector<8x256xf32>
    %281 = arith.mulf %24, %280 : vector<8x256xf32>
    %282 = arith.addf %278, %281 : vector<8x256xf32>
    %c55 = arith.constant 55 : index
    %283 = memref.load %arg2[%c55] : memref<256xf32, #tpu.memory_space<smem>>
    %284 = vector.broadcast %283 : f32 to vector<8x256xf32>
    %285 = arith.mulf %27, %284 : vector<8x256xf32>
    %286 = arith.addf %282, %285 : vector<8x256xf32>
    %c6_29 = arith.constant 6 : index
    %287 = memref.load %arg3[%c6_29] : memref<32xf32, #tpu.memory_space<smem>>
    %288 = vector.broadcast %287 : f32 to vector<8x256xf32>
    %289 = arith.addf %286, %288 : vector<8x256xf32>
    %cst_30 = arith.constant 0.000000e+00 : f32
    %290 = vector.broadcast %cst_30 : f32 to vector<8x256xf32>
    %291 = arith.maximumf %289, %290 : vector<8x256xf32>
    %292 = arith.index_cast %3 : i32 to index
    %c1536 = arith.constant 1536 : index
    %293 = vector.load %arg9[%292, %c1536] : memref<8x8192xf32, #tpu.memory_space<vmem>>, vector<8x256xf32>
    tpu.vector_store %arg9[%292, %c1536], %291 {strides = array<i32>} : memref<8x8192xf32, #tpu.memory_space<vmem>>, vector<8x256xf32>,
    %c56 = arith.constant 56 : index
    %294 = memref.load %arg2[%c56] : memref<256xf32, #tpu.memory_space<smem>>
    %295 = vector.broadcast %294 : f32 to vector<8x256xf32>
    %296 = arith.mulf %6, %295 : vector<8x256xf32>
    %c57 = arith.constant 57 : index
    %297 = memref.load %arg2[%c57] : memref<256xf32, #tpu.memory_space<smem>>
    %298 = vector.broadcast %297 : f32 to vector<8x256xf32>
    %299 = arith.mulf %9, %298 : vector<8x256xf32>
    %300 = arith.addf %296, %299 : vector<8x256xf32>
    %c58 = arith.constant 58 : index
    %301 = memref.load %arg2[%c58] : memref<256xf32, #tpu.memory_space<smem>>
    %302 = vector.broadcast %301 : f32 to vector<8x256xf32>
    %303 = arith.mulf %12, %302 : vector<8x256xf32>
    %304 = arith.addf %300, %303 : vector<8x256xf32>
    %c59 = arith.constant 59 : index
    %305 = memref.load %arg2[%c59] : memref<256xf32, #tpu.memory_space<smem>>
    %306 = vector.broadcast %305 : f32 to vector<8x256xf32>
    %307 = arith.mulf %15, %306 : vector<8x256xf32>
    %308 = arith.addf %304, %307 : vector<8x256xf32>
    %c60 = arith.constant 60 : index
    %309 = memref.load %arg2[%c60] : memref<256xf32, #tpu.memory_space<smem>>
    %310 = vector.broadcast %309 : f32 to vector<8x256xf32>
    %311 = arith.mulf %18, %310 : vector<8x256xf32>
    %312 = arith.addf %308, %311 : vector<8x256xf32>
    %c61 = arith.constant 61 : index
    %313 = memref.load %arg2[%c61] : memref<256xf32, #tpu.memory_space<smem>>
    %314 = vector.broadcast %313 : f32 to vector<8x256xf32>
    %315 = arith.mulf %21, %314 : vector<8x256xf32>
    %316 = arith.addf %312, %315 : vector<8x256xf32>
    %c62 = arith.constant 62 : index
    %317 = memref.load %arg2[%c62] : memref<256xf32, #tpu.memory_space<smem>>
    %318 = vector.broadcast %317 : f32 to vector<8x256xf32>
    %319 = arith.mulf %24, %318 : vector<8x256xf32>
    %320 = arith.addf %316, %319 : vector<8x256xf32>
    %c63 = arith.constant 63 : index
    %321 = memref.load %arg2[%c63] : memref<256xf32, #tpu.memory_space<smem>>
    %322 = vector.broadcast %321 : f32 to vector<8x256xf32>
    %323 = arith.mulf %27, %322 : vector<8x256xf32>
    %324 = arith.addf %320, %323 : vector<8x256xf32>
    %c7_31 = arith.constant 7 : index
    %325 = memref.load %arg3[%c7_31] : memref<32xf32, #tpu.memory_space<smem>>
    %326 = vector.broadcast %325 : f32 to vector<8x256xf32>
    %327 = arith.addf %324, %326 : vector<8x256xf32>
    %cst_32 = arith.constant 0.000000e+00 : f32
    %328 = vector.broadcast %cst_32 : f32 to vector<8x256xf32>
    %329 = arith.maximumf %327, %328 : vector<8x256xf32>
    %330 = arith.index_cast %3 : i32 to index
    %c1792 = arith.constant 1792 : index
    %331 = vector.load %arg9[%330, %c1792] : memref<8x8192xf32, #tpu.memory_space<vmem>>, vector<8x256xf32>
    tpu.vector_store %arg9[%330, %c1792], %329 {strides = array<i32>} : memref<8x8192xf32, #tpu.memory_space<vmem>>, vector<8x256xf32>,
    %c64 = arith.constant 64 : index
    %332 = memref.load %arg2[%c64] : memref<256xf32, #tpu.memory_space<smem>>
    %333 = vector.broadcast %332 : f32 to vector<8x256xf32>
    %334 = arith.mulf %6, %333 : vector<8x256xf32>
    %c65 = arith.constant 65 : index
    %335 = memref.load %arg2[%c65] : memref<256xf32, #tpu.memory_space<smem>>
    %336 = vector.broadcast %335 : f32 to vector<8x256xf32>
    %337 = arith.mulf %9, %336 : vector<8x256xf32>
    %338 = arith.addf %334, %337 : vector<8x256xf32>
    %c66 = arith.constant 66 : index
    %339 = memref.load %arg2[%c66] : memref<256xf32, #tpu.memory_space<smem>>
    %340 = vector.broadcast %339 : f32 to vector<8x256xf32>
    %341 = arith.mulf %12, %340 : vector<8x256xf32>
    %342 = arith.addf %338, %341 : vector<8x256xf32>
    %c67 = arith.constant 67 : index
    %343 = memref.load %arg2[%c67] : memref<256xf32, #tpu.memory_space<smem>>
    %344 = vector.broadcast %343 : f32 to vector<8x256xf32>
    %345 = arith.mulf %15, %344 : vector<8x256xf32>
    %346 = arith.addf %342, %345 : vector<8x256xf32>
    %c68 = arith.constant 68 : index
    %347 = memref.load %arg2[%c68] : memref<256xf32, #tpu.memory_space<smem>>
    %348 = vector.broadcast %347 : f32 to vector<8x256xf32>
    %349 = arith.mulf %18, %348 : vector<8x256xf32>
    %350 = arith.addf %346, %349 : vector<8x256xf32>
    %c69 = arith.constant 69 : index
    %351 = memref.load %arg2[%c69] : memref<256xf32, #tpu.memory_space<smem>>
    %352 = vector.broadcast %351 : f32 to vector<8x256xf32>
    %353 = arith.mulf %21, %352 : vector<8x256xf32>
    %354 = arith.addf %350, %353 : vector<8x256xf32>
    %c70 = arith.constant 70 : index
    %355 = memref.load %arg2[%c70] : memref<256xf32, #tpu.memory_space<smem>>
    %356 = vector.broadcast %355 : f32 to vector<8x256xf32>
    %357 = arith.mulf %24, %356 : vector<8x256xf32>
    %358 = arith.addf %354, %357 : vector<8x256xf32>
    %c71 = arith.constant 71 : index
    %359 = memref.load %arg2[%c71] : memref<256xf32, #tpu.memory_space<smem>>
    %360 = vector.broadcast %359 : f32 to vector<8x256xf32>
    %361 = arith.mulf %27, %360 : vector<8x256xf32>
    %362 = arith.addf %358, %361 : vector<8x256xf32>
    %c8_33 = arith.constant 8 : index
    %363 = memref.load %arg3[%c8_33] : memref<32xf32, #tpu.memory_space<smem>>
    %364 = vector.broadcast %363 : f32 to vector<8x256xf32>
    %365 = arith.addf %362, %364 : vector<8x256xf32>
    %cst_34 = arith.constant 0.000000e+00 : f32
    %366 = vector.broadcast %cst_34 : f32 to vector<8x256xf32>
    %367 = arith.maximumf %365, %366 : vector<8x256xf32>
    %368 = arith.index_cast %3 : i32 to index
    %c2048 = arith.constant 2048 : index
    %369 = vector.load %arg9[%368, %c2048] : memref<8x8192xf32, #tpu.memory_space<vmem>>, vector<8x256xf32>
    tpu.vector_store %arg9[%368, %c2048], %367 {strides = array<i32>} : memref<8x8192xf32, #tpu.memory_space<vmem>>, vector<8x256xf32>,
    %c72 = arith.constant 72 : index
    %370 = memref.load %arg2[%c72] : memref<256xf32, #tpu.memory_space<smem>>
    %371 = vector.broadcast %370 : f32 to vector<8x256xf32>
    %372 = arith.mulf %6, %371 : vector<8x256xf32>
    %c73 = arith.constant 73 : index
    %373 = memref.load %arg2[%c73] : memref<256xf32, #tpu.memory_space<smem>>
    %374 = vector.broadcast %373 : f32 to vector<8x256xf32>
    %375 = arith.mulf %9, %374 : vector<8x256xf32>
    %376 = arith.addf %372, %375 : vector<8x256xf32>
    %c74 = arith.constant 74 : index
    %377 = memref.load %arg2[%c74] : memref<256xf32, #tpu.memory_space<smem>>
    %378 = vector.broadcast %377 : f32 to vector<8x256xf32>
    %379 = arith.mulf %12, %378 : vector<8x256xf32>
    %380 = arith.addf %376, %379 : vector<8x256xf32>
    %c75 = arith.constant 75 : index
    %381 = memref.load %arg2[%c75] : memref<256xf32, #tpu.memory_space<smem>>
    %382 = vector.broadcast %381 : f32 to vector<8x256xf32>
    %383 = arith.mulf %15, %382 : vector<8x256xf32>
    %384 = arith.addf %380, %383 : vector<8x256xf32>
    %c76 = arith.constant 76 : index
    %385 = memref.load %arg2[%c76] : memref<256xf32, #tpu.memory_space<smem>>
    %386 = vector.broadcast %385 : f32 to vector<8x256xf32>
    %387 = arith.mulf %18, %386 : vector<8x256xf32>
    %388 = arith.addf %384, %387 : vector<8x256xf32>
    %c77 = arith.constant 77 : index
    %389 = memref.load %arg2[%c77] : memref<256xf32, #tpu.memory_space<smem>>
    %390 = vector.broadcast %389 : f32 to vector<8x256xf32>
    %391 = arith.mulf %21, %390 : vector<8x256xf32>
    %392 = arith.addf %388, %391 : vector<8x256xf32>
    %c78 = arith.constant 78 : index
    %393 = memref.load %arg2[%c78] : memref<256xf32, #tpu.memory_space<smem>>
    %394 = vector.broadcast %393 : f32 to vector<8x256xf32>
    %395 = arith.mulf %24, %394 : vector<8x256xf32>
    %396 = arith.addf %392, %395 : vector<8x256xf32>
    %c79 = arith.constant 79 : index
    %397 = memref.load %arg2[%c79] : memref<256xf32, #tpu.memory_space<smem>>
    %398 = vector.broadcast %397 : f32 to vector<8x256xf32>
    %399 = arith.mulf %27, %398 : vector<8x256xf32>
    %400 = arith.addf %396, %399 : vector<8x256xf32>
    %c9_35 = arith.constant 9 : index
    %401 = memref.load %arg3[%c9_35] : memref<32xf32, #tpu.memory_space<smem>>
    %402 = vector.broadcast %401 : f32 to vector<8x256xf32>
    %403 = arith.addf %400, %402 : vector<8x256xf32>
    %cst_36 = arith.constant 0.000000e+00 : f32
    %404 = vector.broadcast %cst_36 : f32 to vector<8x256xf32>
    %405 = arith.maximumf %403, %404 : vector<8x256xf32>
    %406 = arith.index_cast %3 : i32 to index
    %c2304 = arith.constant 2304 : index
    %407 = vector.load %arg9[%406, %c2304] : memref<8x8192xf32, #tpu.memory_space<vmem>>, vector<8x256xf32>
    tpu.vector_store %arg9[%406, %c2304], %405 {strides = array<i32>} : memref<8x8192xf32, #tpu.memory_space<vmem>>, vector<8x256xf32>,
    %c80 = arith.constant 80 : index
    %408 = memref.load %arg2[%c80] : memref<256xf32, #tpu.memory_space<smem>>
    %409 = vector.broadcast %408 : f32 to vector<8x256xf32>
    %410 = arith.mulf %6, %409 : vector<8x256xf32>
    %c81 = arith.constant 81 : index
    %411 = memref.load %arg2[%c81] : memref<256xf32, #tpu.memory_space<smem>>
    %412 = vector.broadcast %411 : f32 to vector<8x256xf32>
    %413 = arith.mulf %9, %412 : vector<8x256xf32>
    %414 = arith.addf %410, %413 : vector<8x256xf32>
    %c82 = arith.constant 82 : index
    %415 = memref.load %arg2[%c82] : memref<256xf32, #tpu.memory_space<smem>>
    %416 = vector.broadcast %415 : f32 to vector<8x256xf32>
    %417 = arith.mulf %12, %416 : vector<8x256xf32>
    %418 = arith.addf %414, %417 : vector<8x256xf32>
    %c83 = arith.constant 83 : index
    %419 = memref.load %arg2[%c83] : memref<256xf32, #tpu.memory_space<smem>>
    %420 = vector.broadcast %419 : f32 to vector<8x256xf32>
    %421 = arith.mulf %15, %420 : vector<8x256xf32>
    %422 = arith.addf %418, %421 : vector<8x256xf32>
    %c84 = arith.constant 84 : index
    %423 = memref.load %arg2[%c84] : memref<256xf32, #tpu.memory_space<smem>>
    %424 = vector.broadcast %423 : f32 to vector<8x256xf32>
    %425 = arith.mulf %18, %424 : vector<8x256xf32>
    %426 = arith.addf %422, %425 : vector<8x256xf32>
    %c85 = arith.constant 85 : index
    %427 = memref.load %arg2[%c85] : memref<256xf32, #tpu.memory_space<smem>>
    %428 = vector.broadcast %427 : f32 to vector<8x256xf32>
    %429 = arith.mulf %21, %428 : vector<8x256xf32>
    %430 = arith.addf %426, %429 : vector<8x256xf32>
    %c86 = arith.constant 86 : index
    %431 = memref.load %arg2[%c86] : memref<256xf32, #tpu.memory_space<smem>>
    %432 = vector.broadcast %431 : f32 to vector<8x256xf32>
    %433 = arith.mulf %24, %432 : vector<8x256xf32>
    %434 = arith.addf %430, %433 : vector<8x256xf32>
    %c87 = arith.constant 87 : index
    %435 = memref.load %arg2[%c87] : memref<256xf32, #tpu.memory_space<smem>>
    %436 = vector.broadcast %435 : f32 to vector<8x256xf32>
    %437 = arith.mulf %27, %436 : vector<8x256xf32>
    %438 = arith.addf %434, %437 : vector<8x256xf32>
    %c10_37 = arith.constant 10 : index
    %439 = memref.load %arg3[%c10_37] : memref<32xf32, #tpu.memory_space<smem>>
    %440 = vector.broadcast %439 : f32 to vector<8x256xf32>
    %441 = arith.addf %438, %440 : vector<8x256xf32>
    %cst_38 = arith.constant 0.000000e+00 : f32
    %442 = vector.broadcast %cst_38 : f32 to vector<8x256xf32>
    %443 = arith.maximumf %441, %442 : vector<8x256xf32>
    %444 = arith.index_cast %3 : i32 to index
    %c2560 = arith.constant 2560 : index
    %445 = vector.load %arg9[%444, %c2560] : memref<8x8192xf32, #tpu.memory_space<vmem>>, vector<8x256xf32>
    tpu.vector_store %arg9[%444, %c2560], %443 {strides = array<i32>} : memref<8x8192xf32, #tpu.memory_space<vmem>>, vector<8x256xf32>,
    %c88 = arith.constant 88 : index
    %446 = memref.load %arg2[%c88] : memref<256xf32, #tpu.memory_space<smem>>
    %447 = vector.broadcast %446 : f32 to vector<8x256xf32>
    %448 = arith.mulf %6, %447 : vector<8x256xf32>
    %c89 = arith.constant 89 : index
    %449 = memref.load %arg2[%c89] : memref<256xf32, #tpu.memory_space<smem>>
    %450 = vector.broadcast %449 : f32 to vector<8x256xf32>
    %451 = arith.mulf %9, %450 : vector<8x256xf32>
    %452 = arith.addf %448, %451 : vector<8x256xf32>
    %c90 = arith.constant 90 : index
    %453 = memref.load %arg2[%c90] : memref<256xf32, #tpu.memory_space<smem>>
    %454 = vector.broadcast %453 : f32 to vector<8x256xf32>
    %455 = arith.mulf %12, %454 : vector<8x256xf32>
    %456 = arith.addf %452, %455 : vector<8x256xf32>
    %c91 = arith.constant 91 : index
    %457 = memref.load %arg2[%c91] : memref<256xf32, #tpu.memory_space<smem>>
    %458 = vector.broadcast %457 : f32 to vector<8x256xf32>
    %459 = arith.mulf %15, %458 : vector<8x256xf32>
    %460 = arith.addf %456, %459 : vector<8x256xf32>
    %c92 = arith.constant 92 : index
    %461 = memref.load %arg2[%c92] : memref<256xf32, #tpu.memory_space<smem>>
    %462 = vector.broadcast %461 : f32 to vector<8x256xf32>
    %463 = arith.mulf %18, %462 : vector<8x256xf32>
    %464 = arith.addf %460, %463 : vector<8x256xf32>
    %c93 = arith.constant 93 : index
    %465 = memref.load %arg2[%c93] : memref<256xf32, #tpu.memory_space<smem>>
    %466 = vector.broadcast %465 : f32 to vector<8x256xf32>
    %467 = arith.mulf %21, %466 : vector<8x256xf32>
    %468 = arith.addf %464, %467 : vector<8x256xf32>
    %c94 = arith.constant 94 : index
    %469 = memref.load %arg2[%c94] : memref<256xf32, #tpu.memory_space<smem>>
    %470 = vector.broadcast %469 : f32 to vector<8x256xf32>
    %471 = arith.mulf %24, %470 : vector<8x256xf32>
    %472 = arith.addf %468, %471 : vector<8x256xf32>
    %c95 = arith.constant 95 : index
    %473 = memref.load %arg2[%c95] : memref<256xf32, #tpu.memory_space<smem>>
    %474 = vector.broadcast %473 : f32 to vector<8x256xf32>
    %475 = arith.mulf %27, %474 : vector<8x256xf32>
    %476 = arith.addf %472, %475 : vector<8x256xf32>
    %c11_39 = arith.constant 11 : index
    %477 = memref.load %arg3[%c11_39] : memref<32xf32, #tpu.memory_space<smem>>
    %478 = vector.broadcast %477 : f32 to vector<8x256xf32>
    %479 = arith.addf %476, %478 : vector<8x256xf32>
    %cst_40 = arith.constant 0.000000e+00 : f32
    %480 = vector.broadcast %cst_40 : f32 to vector<8x256xf32>
    %481 = arith.maximumf %479, %480 : vector<8x256xf32>
    %482 = arith.index_cast %3 : i32 to index
    %c2816 = arith.constant 2816 : index
    %483 = vector.load %arg9[%482, %c2816] : memref<8x8192xf32, #tpu.memory_space<vmem>>, vector<8x256xf32>
    tpu.vector_store %arg9[%482, %c2816], %481 {strides = array<i32>} : memref<8x8192xf32, #tpu.memory_space<vmem>>, vector<8x256xf32>,
    %c96 = arith.constant 96 : index
    %484 = memref.load %arg2[%c96] : memref<256xf32, #tpu.memory_space<smem>>
    %485 = vector.broadcast %484 : f32 to vector<8x256xf32>
    %486 = arith.mulf %6, %485 : vector<8x256xf32>
    %c97 = arith.constant 97 : index
    %487 = memref.load %arg2[%c97] : memref<256xf32, #tpu.memory_space<smem>>
    %488 = vector.broadcast %487 : f32 to vector<8x256xf32>
    %489 = arith.mulf %9, %488 : vector<8x256xf32>
    %490 = arith.addf %486, %489 : vector<8x256xf32>
    %c98 = arith.constant 98 : index
    %491 = memref.load %arg2[%c98] : memref<256xf32, #tpu.memory_space<smem>>
    %492 = vector.broadcast %491 : f32 to vector<8x256xf32>
    %493 = arith.mulf %12, %492 : vector<8x256xf32>
    %494 = arith.addf %490, %493 : vector<8x256xf32>
    %c99 = arith.constant 99 : index
    %495 = memref.load %arg2[%c99] : memref<256xf32, #tpu.memory_space<smem>>
    %496 = vector.broadcast %495 : f32 to vector<8x256xf32>
    %497 = arith.mulf %15, %496 : vector<8x256xf32>
    %498 = arith.addf %494, %497 : vector<8x256xf32>
    %c100 = arith.constant 100 : index
    %499 = memref.load %arg2[%c100] : memref<256xf32, #tpu.memory_space<smem>>
    %500 = vector.broadcast %499 : f32 to vector<8x256xf32>
    %501 = arith.mulf %18, %500 : vector<8x256xf32>
    %502 = arith.addf %498, %501 : vector<8x256xf32>
    %c101 = arith.constant 101 : index
    %503 = memref.load %arg2[%c101] : memref<256xf32, #tpu.memory_space<smem>>
    %504 = vector.broadcast %503 : f32 to vector<8x256xf32>
    %505 = arith.mulf %21, %504 : vector<8x256xf32>
    %506 = arith.addf %502, %505 : vector<8x256xf32>
    %c102 = arith.constant 102 : index
    %507 = memref.load %arg2[%c102] : memref<256xf32, #tpu.memory_space<smem>>
    %508 = vector.broadcast %507 : f32 to vector<8x256xf32>
    %509 = arith.mulf %24, %508 : vector<8x256xf32>
    %510 = arith.addf %506, %509 : vector<8x256xf32>
    %c103 = arith.constant 103 : index
    %511 = memref.load %arg2[%c103] : memref<256xf32, #tpu.memory_space<smem>>
    %512 = vector.broadcast %511 : f32 to vector<8x256xf32>
    %513 = arith.mulf %27, %512 : vector<8x256xf32>
    %514 = arith.addf %510, %513 : vector<8x256xf32>
    %c12_41 = arith.constant 12 : index
    %515 = memref.load %arg3[%c12_41] : memref<32xf32, #tpu.memory_space<smem>>
    %516 = vector.broadcast %515 : f32 to vector<8x256xf32>
    %517 = arith.addf %514, %516 : vector<8x256xf32>
    %cst_42 = arith.constant 0.000000e+00 : f32
    %518 = vector.broadcast %cst_42 : f32 to vector<8x256xf32>
    %519 = arith.maximumf %517, %518 : vector<8x256xf32>
    %520 = arith.index_cast %3 : i32 to index
    %c3072 = arith.constant 3072 : index
    %521 = vector.load %arg9[%520, %c3072] : memref<8x8192xf32, #tpu.memory_space<vmem>>, vector<8x256xf32>
    tpu.vector_store %arg9[%520, %c3072], %519 {strides = array<i32>} : memref<8x8192xf32, #tpu.memory_space<vmem>>, vector<8x256xf32>,
    %c104 = arith.constant 104 : index
    %522 = memref.load %arg2[%c104] : memref<256xf32, #tpu.memory_space<smem>>
    %523 = vector.broadcast %522 : f32 to vector<8x256xf32>
    %524 = arith.mulf %6, %523 : vector<8x256xf32>
    %c105 = arith.constant 105 : index
    %525 = memref.load %arg2[%c105] : memref<256xf32, #tpu.memory_space<smem>>
    %526 = vector.broadcast %525 : f32 to vector<8x256xf32>
    %527 = arith.mulf %9, %526 : vector<8x256xf32>
    %528 = arith.addf %524, %527 : vector<8x256xf32>
    %c106 = arith.constant 106 : index
    %529 = memref.load %arg2[%c106] : memref<256xf32, #tpu.memory_space<smem>>
    %530 = vector.broadcast %529 : f32 to vector<8x256xf32>
    %531 = arith.mulf %12, %530 : vector<8x256xf32>
    %532 = arith.addf %528, %531 : vector<8x256xf32>
    %c107 = arith.constant 107 : index
    %533 = memref.load %arg2[%c107] : memref<256xf32, #tpu.memory_space<smem>>
    %534 = vector.broadcast %533 : f32 to vector<8x256xf32>
    %535 = arith.mulf %15, %534 : vector<8x256xf32>
    %536 = arith.addf %532, %535 : vector<8x256xf32>
    %c108 = arith.constant 108 : index
    %537 = memref.load %arg2[%c108] : memref<256xf32, #tpu.memory_space<smem>>
    %538 = vector.broadcast %537 : f32 to vector<8x256xf32>
    %539 = arith.mulf %18, %538 : vector<8x256xf32>
    %540 = arith.addf %536, %539 : vector<8x256xf32>
    %c109 = arith.constant 109 : index
    %541 = memref.load %arg2[%c109] : memref<256xf32, #tpu.memory_space<smem>>
    %542 = vector.broadcast %541 : f32 to vector<8x256xf32>
    %543 = arith.mulf %21, %542 : vector<8x256xf32>
    %544 = arith.addf %540, %543 : vector<8x256xf32>
    %c110 = arith.constant 110 : index
    %545 = memref.load %arg2[%c110] : memref<256xf32, #tpu.memory_space<smem>>
    %546 = vector.broadcast %545 : f32 to vector<8x256xf32>
    %547 = arith.mulf %24, %546 : vector<8x256xf32>
    %548 = arith.addf %544, %547 : vector<8x256xf32>
    %c111 = arith.constant 111 : index
    %549 = memref.load %arg2[%c111] : memref<256xf32, #tpu.memory_space<smem>>
    %550 = vector.broadcast %549 : f32 to vector<8x256xf32>
    %551 = arith.mulf %27, %550 : vector<8x256xf32>
    %552 = arith.addf %548, %551 : vector<8x256xf32>
    %c13_43 = arith.constant 13 : index
    %553 = memref.load %arg3[%c13_43] : memref<32xf32, #tpu.memory_space<smem>>
    %554 = vector.broadcast %553 : f32 to vector<8x256xf32>
    %555 = arith.addf %552, %554 : vector<8x256xf32>
    %cst_44 = arith.constant 0.000000e+00 : f32
    %556 = vector.broadcast %cst_44 : f32 to vector<8x256xf32>
    %557 = arith.maximumf %555, %556 : vector<8x256xf32>
    %558 = arith.index_cast %3 : i32 to index
    %c3328 = arith.constant 3328 : index
    %559 = vector.load %arg9[%558, %c3328] : memref<8x8192xf32, #tpu.memory_space<vmem>>, vector<8x256xf32>
    tpu.vector_store %arg9[%558, %c3328], %557 {strides = array<i32>} : memref<8x8192xf32, #tpu.memory_space<vmem>>, vector<8x256xf32>,
    %c112 = arith.constant 112 : index
    %560 = memref.load %arg2[%c112] : memref<256xf32, #tpu.memory_space<smem>>
    %561 = vector.broadcast %560 : f32 to vector<8x256xf32>
    %562 = arith.mulf %6, %561 : vector<8x256xf32>
    %c113 = arith.constant 113 : index
    %563 = memref.load %arg2[%c113] : memref<256xf32, #tpu.memory_space<smem>>
    %564 = vector.broadcast %563 : f32 to vector<8x256xf32>
    %565 = arith.mulf %9, %564 : vector<8x256xf32>
    %566 = arith.addf %562, %565 : vector<8x256xf32>
    %c114 = arith.constant 114 : index
    %567 = memref.load %arg2[%c114] : memref<256xf32, #tpu.memory_space<smem>>
    %568 = vector.broadcast %567 : f32 to vector<8x256xf32>
    %569 = arith.mulf %12, %568 : vector<8x256xf32>
    %570 = arith.addf %566, %569 : vector<8x256xf32>
    %c115 = arith.constant 115 : index
    %571 = memref.load %arg2[%c115] : memref<256xf32, #tpu.memory_space<smem>>
    %572 = vector.broadcast %571 : f32 to vector<8x256xf32>
    %573 = arith.mulf %15, %572 : vector<8x256xf32>
    %574 = arith.addf %570, %573 : vector<8x256xf32>
    %c116 = arith.constant 116 : index
    %575 = memref.load %arg2[%c116] : memref<256xf32, #tpu.memory_space<smem>>
    %576 = vector.broadcast %575 : f32 to vector<8x256xf32>
    %577 = arith.mulf %18, %576 : vector<8x256xf32>
    %578 = arith.addf %574, %577 : vector<8x256xf32>
    %c117 = arith.constant 117 : index
    %579 = memref.load %arg2[%c117] : memref<256xf32, #tpu.memory_space<smem>>
    %580 = vector.broadcast %579 : f32 to vector<8x256xf32>
    %581 = arith.mulf %21, %580 : vector<8x256xf32>
    %582 = arith.addf %578, %581 : vector<8x256xf32>
    %c118 = arith.constant 118 : index
    %583 = memref.load %arg2[%c118] : memref<256xf32, #tpu.memory_space<smem>>
    %584 = vector.broadcast %583 : f32 to vector<8x256xf32>
    %585 = arith.mulf %24, %584 : vector<8x256xf32>
    %586 = arith.addf %582, %585 : vector<8x256xf32>
    %c119 = arith.constant 119 : index
    %587 = memref.load %arg2[%c119] : memref<256xf32, #tpu.memory_space<smem>>
    %588 = vector.broadcast %587 : f32 to vector<8x256xf32>
    %589 = arith.mulf %27, %588 : vector<8x256xf32>
    %590 = arith.addf %586, %589 : vector<8x256xf32>
    %c14_45 = arith.constant 14 : index
    %591 = memref.load %arg3[%c14_45] : memref<32xf32, #tpu.memory_space<smem>>
    %592 = vector.broadcast %591 : f32 to vector<8x256xf32>
    %593 = arith.addf %590, %592 : vector<8x256xf32>
    %cst_46 = arith.constant 0.000000e+00 : f32
    %594 = vector.broadcast %cst_46 : f32 to vector<8x256xf32>
    %595 = arith.maximumf %593, %594 : vector<8x256xf32>
    %596 = arith.index_cast %3 : i32 to index
    %c3584 = arith.constant 3584 : index
    %597 = vector.load %arg9[%596, %c3584] : memref<8x8192xf32, #tpu.memory_space<vmem>>, vector<8x256xf32>
    tpu.vector_store %arg9[%596, %c3584], %595 {strides = array<i32>} : memref<8x8192xf32, #tpu.memory_space<vmem>>, vector<8x256xf32>,
    %c120 = arith.constant 120 : index
    %598 = memref.load %arg2[%c120] : memref<256xf32, #tpu.memory_space<smem>>
    %599 = vector.broadcast %598 : f32 to vector<8x256xf32>
    %600 = arith.mulf %6, %599 : vector<8x256xf32>
    %c121 = arith.constant 121 : index
    %601 = memref.load %arg2[%c121] : memref<256xf32, #tpu.memory_space<smem>>
    %602 = vector.broadcast %601 : f32 to vector<8x256xf32>
    %603 = arith.mulf %9, %602 : vector<8x256xf32>
    %604 = arith.addf %600, %603 : vector<8x256xf32>
    %c122 = arith.constant 122 : index
    %605 = memref.load %arg2[%c122] : memref<256xf32, #tpu.memory_space<smem>>
    %606 = vector.broadcast %605 : f32 to vector<8x256xf32>
    %607 = arith.mulf %12, %606 : vector<8x256xf32>
    %608 = arith.addf %604, %607 : vector<8x256xf32>
    %c123 = arith.constant 123 : index
    %609 = memref.load %arg2[%c123] : memref<256xf32, #tpu.memory_space<smem>>
    %610 = vector.broadcast %609 : f32 to vector<8x256xf32>
    %611 = arith.mulf %15, %610 : vector<8x256xf32>
    %612 = arith.addf %608, %611 : vector<8x256xf32>
    %c124 = arith.constant 124 : index
    %613 = memref.load %arg2[%c124] : memref<256xf32, #tpu.memory_space<smem>>
    %614 = vector.broadcast %613 : f32 to vector<8x256xf32>
    %615 = arith.mulf %18, %614 : vector<8x256xf32>
    %616 = arith.addf %612, %615 : vector<8x256xf32>
    %c125 = arith.constant 125 : index
    %617 = memref.load %arg2[%c125] : memref<256xf32, #tpu.memory_space<smem>>
    %618 = vector.broadcast %617 : f32 to vector<8x256xf32>
    %619 = arith.mulf %21, %618 : vector<8x256xf32>
    %620 = arith.addf %616, %619 : vector<8x256xf32>
    %c126 = arith.constant 126 : index
    %621 = memref.load %arg2[%c126] : memref<256xf32, #tpu.memory_space<smem>>
    %622 = vector.broadcast %621 : f32 to vector<8x256xf32>
    %623 = arith.mulf %24, %622 : vector<8x256xf32>
    %624 = arith.addf %620, %623 : vector<8x256xf32>
    %c127 = arith.constant 127 : index
    %625 = memref.load %arg2[%c127] : memref<256xf32, #tpu.memory_space<smem>>
    %626 = vector.broadcast %625 : f32 to vector<8x256xf32>
    %627 = arith.mulf %27, %626 : vector<8x256xf32>
    %628 = arith.addf %624, %627 : vector<8x256xf32>
    %c15_47 = arith.constant 15 : index
    %629 = memref.load %arg3[%c15_47] : memref<32xf32, #tpu.memory_space<smem>>
    %630 = vector.broadcast %629 : f32 to vector<8x256xf32>
    %631 = arith.addf %628, %630 : vector<8x256xf32>
    %cst_48 = arith.constant 0.000000e+00 : f32
    %632 = vector.broadcast %cst_48 : f32 to vector<8x256xf32>
    %633 = arith.maximumf %631, %632 : vector<8x256xf32>
    %634 = arith.index_cast %3 : i32 to index
    %c3840 = arith.constant 3840 : index
    %635 = vector.load %arg9[%634, %c3840] : memref<8x8192xf32, #tpu.memory_space<vmem>>, vector<8x256xf32>
    tpu.vector_store %arg9[%634, %c3840], %633 {strides = array<i32>} : memref<8x8192xf32, #tpu.memory_space<vmem>>, vector<8x256xf32>,
    %c128 = arith.constant 128 : index
    %636 = memref.load %arg2[%c128] : memref<256xf32, #tpu.memory_space<smem>>
    %637 = vector.broadcast %636 : f32 to vector<8x256xf32>
    %638 = arith.mulf %6, %637 : vector<8x256xf32>
    %c129 = arith.constant 129 : index
    %639 = memref.load %arg2[%c129] : memref<256xf32, #tpu.memory_space<smem>>
    %640 = vector.broadcast %639 : f32 to vector<8x256xf32>
    %641 = arith.mulf %9, %640 : vector<8x256xf32>
    %642 = arith.addf %638, %641 : vector<8x256xf32>
    %c130 = arith.constant 130 : index
    %643 = memref.load %arg2[%c130] : memref<256xf32, #tpu.memory_space<smem>>
    %644 = vector.broadcast %643 : f32 to vector<8x256xf32>
    %645 = arith.mulf %12, %644 : vector<8x256xf32>
    %646 = arith.addf %642, %645 : vector<8x256xf32>
    %c131 = arith.constant 131 : index
    %647 = memref.load %arg2[%c131] : memref<256xf32, #tpu.memory_space<smem>>
    %648 = vector.broadcast %647 : f32 to vector<8x256xf32>
    %649 = arith.mulf %15, %648 : vector<8x256xf32>
    %650 = arith.addf %646, %649 : vector<8x256xf32>
    %c132 = arith.constant 132 : index
    %651 = memref.load %arg2[%c132] : memref<256xf32, #tpu.memory_space<smem>>
    %652 = vector.broadcast %651 : f32 to vector<8x256xf32>
    %653 = arith.mulf %18, %652 : vector<8x256xf32>
    %654 = arith.addf %650, %653 : vector<8x256xf32>
    %c133 = arith.constant 133 : index
    %655 = memref.load %arg2[%c133] : memref<256xf32, #tpu.memory_space<smem>>
    %656 = vector.broadcast %655 : f32 to vector<8x256xf32>
    %657 = arith.mulf %21, %656 : vector<8x256xf32>
    %658 = arith.addf %654, %657 : vector<8x256xf32>
    %c134 = arith.constant 134 : index
    %659 = memref.load %arg2[%c134] : memref<256xf32, #tpu.memory_space<smem>>
    %660 = vector.broadcast %659 : f32 to vector<8x256xf32>
    %661 = arith.mulf %24, %660 : vector<8x256xf32>
    %662 = arith.addf %658, %661 : vector<8x256xf32>
    %c135 = arith.constant 135 : index
    %663 = memref.load %arg2[%c135] : memref<256xf32, #tpu.memory_space<smem>>
    %664 = vector.broadcast %663 : f32 to vector<8x256xf32>
    %665 = arith.mulf %27, %664 : vector<8x256xf32>
    %666 = arith.addf %662, %665 : vector<8x256xf32>
    %c16_49 = arith.constant 16 : index
    %667 = memref.load %arg3[%c16_49] : memref<32xf32, #tpu.memory_space<smem>>
    %668 = vector.broadcast %667 : f32 to vector<8x256xf32>
    %669 = arith.addf %666, %668 : vector<8x256xf32>
    %cst_50 = arith.constant 0.000000e+00 : f32
    %670 = vector.broadcast %cst_50 : f32 to vector<8x256xf32>
    %671 = arith.maximumf %669, %670 : vector<8x256xf32>
    %672 = arith.index_cast %3 : i32 to index
    %c4096 = arith.constant 4096 : index
    %673 = vector.load %arg9[%672, %c4096] : memref<8x8192xf32, #tpu.memory_space<vmem>>, vector<8x256xf32>
    tpu.vector_store %arg9[%672, %c4096], %671 {strides = array<i32>} : memref<8x8192xf32, #tpu.memory_space<vmem>>, vector<8x256xf32>,
    %c136 = arith.constant 136 : index
    %674 = memref.load %arg2[%c136] : memref<256xf32, #tpu.memory_space<smem>>
    %675 = vector.broadcast %674 : f32 to vector<8x256xf32>
    %676 = arith.mulf %6, %675 : vector<8x256xf32>
    %c137 = arith.constant 137 : index
    %677 = memref.load %arg2[%c137] : memref<256xf32, #tpu.memory_space<smem>>
    %678 = vector.broadcast %677 : f32 to vector<8x256xf32>
    %679 = arith.mulf %9, %678 : vector<8x256xf32>
    %680 = arith.addf %676, %679 : vector<8x256xf32>
    %c138 = arith.constant 138 : index
    %681 = memref.load %arg2[%c138] : memref<256xf32, #tpu.memory_space<smem>>
    %682 = vector.broadcast %681 : f32 to vector<8x256xf32>
    %683 = arith.mulf %12, %682 : vector<8x256xf32>
    %684 = arith.addf %680, %683 : vector<8x256xf32>
    %c139 = arith.constant 139 : index
    %685 = memref.load %arg2[%c139] : memref<256xf32, #tpu.memory_space<smem>>
    %686 = vector.broadcast %685 : f32 to vector<8x256xf32>
    %687 = arith.mulf %15, %686 : vector<8x256xf32>
    %688 = arith.addf %684, %687 : vector<8x256xf32>
    %c140 = arith.constant 140 : index
    %689 = memref.load %arg2[%c140] : memref<256xf32, #tpu.memory_space<smem>>
    %690 = vector.broadcast %689 : f32 to vector<8x256xf32>
    %691 = arith.mulf %18, %690 : vector<8x256xf32>
    %692 = arith.addf %688, %691 : vector<8x256xf32>
    %c141 = arith.constant 141 : index
    %693 = memref.load %arg2[%c141] : memref<256xf32, #tpu.memory_space<smem>>
    %694 = vector.broadcast %693 : f32 to vector<8x256xf32>
    %695 = arith.mulf %21, %694 : vector<8x256xf32>
    %696 = arith.addf %692, %695 : vector<8x256xf32>
    %c142 = arith.constant 142 : index
    %697 = memref.load %arg2[%c142] : memref<256xf32, #tpu.memory_space<smem>>
    %698 = vector.broadcast %697 : f32 to vector<8x256xf32>
    %699 = arith.mulf %24, %698 : vector<8x256xf32>
    %700 = arith.addf %696, %699 : vector<8x256xf32>
    %c143 = arith.constant 143 : index
    %701 = memref.load %arg2[%c143] : memref<256xf32, #tpu.memory_space<smem>>
    %702 = vector.broadcast %701 : f32 to vector<8x256xf32>
    %703 = arith.mulf %27, %702 : vector<8x256xf32>
    %704 = arith.addf %700, %703 : vector<8x256xf32>
    %c17_51 = arith.constant 17 : index
    %705 = memref.load %arg3[%c17_51] : memref<32xf32, #tpu.memory_space<smem>>
    %706 = vector.broadcast %705 : f32 to vector<8x256xf32>
    %707 = arith.addf %704, %706 : vector<8x256xf32>
    %cst_52 = arith.constant 0.000000e+00 : f32
    %708 = vector.broadcast %cst_52 : f32 to vector<8x256xf32>
    %709 = arith.maximumf %707, %708 : vector<8x256xf32>
    %710 = arith.index_cast %3 : i32 to index
    %c4352 = arith.constant 4352 : index
    %711 = vector.load %arg9[%710, %c4352] : memref<8x8192xf32, #tpu.memory_space<vmem>>, vector<8x256xf32>
    tpu.vector_store %arg9[%710, %c4352], %709 {strides = array<i32>} : memref<8x8192xf32, #tpu.memory_space<vmem>>, vector<8x256xf32>,
    %c144 = arith.constant 144 : index
    %712 = memref.load %arg2[%c144] : memref<256xf32, #tpu.memory_space<smem>>
    %713 = vector.broadcast %712 : f32 to vector<8x256xf32>
    %714 = arith.mulf %6, %713 : vector<8x256xf32>
    %c145 = arith.constant 145 : index
    %715 = memref.load %arg2[%c145] : memref<256xf32, #tpu.memory_space<smem>>
    %716 = vector.broadcast %715 : f32 to vector<8x256xf32>
    %717 = arith.mulf %9, %716 : vector<8x256xf32>
    %718 = arith.addf %714, %717 : vector<8x256xf32>
    %c146 = arith.constant 146 : index
    %719 = memref.load %arg2[%c146] : memref<256xf32, #tpu.memory_space<smem>>
    %720 = vector.broadcast %719 : f32 to vector<8x256xf32>
    %721 = arith.mulf %12, %720 : vector<8x256xf32>
    %722 = arith.addf %718, %721 : vector<8x256xf32>
    %c147 = arith.constant 147 : index
    %723 = memref.load %arg2[%c147] : memref<256xf32, #tpu.memory_space<smem>>
    %724 = vector.broadcast %723 : f32 to vector<8x256xf32>
    %725 = arith.mulf %15, %724 : vector<8x256xf32>
    %726 = arith.addf %722, %725 : vector<8x256xf32>
    %c148 = arith.constant 148 : index
    %727 = memref.load %arg2[%c148] : memref<256xf32, #tpu.memory_space<smem>>
    %728 = vector.broadcast %727 : f32 to vector<8x256xf32>
    %729 = arith.mulf %18, %728 : vector<8x256xf32>
    %730 = arith.addf %726, %729 : vector<8x256xf32>
    %c149 = arith.constant 149 : index
    %731 = memref.load %arg2[%c149] : memref<256xf32, #tpu.memory_space<smem>>
    %732 = vector.broadcast %731 : f32 to vector<8x256xf32>
    %733 = arith.mulf %21, %732 : vector<8x256xf32>
    %734 = arith.addf %730, %733 : vector<8x256xf32>
    %c150 = arith.constant 150 : index
    %735 = memref.load %arg2[%c150] : memref<256xf32, #tpu.memory_space<smem>>
    %736 = vector.broadcast %735 : f32 to vector<8x256xf32>
    %737 = arith.mulf %24, %736 : vector<8x256xf32>
    %738 = arith.addf %734, %737 : vector<8x256xf32>
    %c151 = arith.constant 151 : index
    %739 = memref.load %arg2[%c151] : memref<256xf32, #tpu.memory_space<smem>>
    %740 = vector.broadcast %739 : f32 to vector<8x256xf32>
    %741 = arith.mulf %27, %740 : vector<8x256xf32>
    %742 = arith.addf %738, %741 : vector<8x256xf32>
    %c18_53 = arith.constant 18 : index
    %743 = memref.load %arg3[%c18_53] : memref<32xf32, #tpu.memory_space<smem>>
    %744 = vector.broadcast %743 : f32 to vector<8x256xf32>
    %745 = arith.addf %742, %744 : vector<8x256xf32>
    %cst_54 = arith.constant 0.000000e+00 : f32
    %746 = vector.broadcast %cst_54 : f32 to vector<8x256xf32>
    %747 = arith.maximumf %745, %746 : vector<8x256xf32>
    %748 = arith.index_cast %3 : i32 to index
    %c4608 = arith.constant 4608 : index
    %749 = vector.load %arg9[%748, %c4608] : memref<8x8192xf32, #tpu.memory_space<vmem>>, vector<8x256xf32>
    tpu.vector_store %arg9[%748, %c4608], %747 {strides = array<i32>} : memref<8x8192xf32, #tpu.memory_space<vmem>>, vector<8x256xf32>,
    %c152 = arith.constant 152 : index
    %750 = memref.load %arg2[%c152] : memref<256xf32, #tpu.memory_space<smem>>
    %751 = vector.broadcast %750 : f32 to vector<8x256xf32>
    %752 = arith.mulf %6, %751 : vector<8x256xf32>
    %c153 = arith.constant 153 : index
    %753 = memref.load %arg2[%c153] : memref<256xf32, #tpu.memory_space<smem>>
    %754 = vector.broadcast %753 : f32 to vector<8x256xf32>
    %755 = arith.mulf %9, %754 : vector<8x256xf32>
    %756 = arith.addf %752, %755 : vector<8x256xf32>
    %c154 = arith.constant 154 : index
    %757 = memref.load %arg2[%c154] : memref<256xf32, #tpu.memory_space<smem>>
    %758 = vector.broadcast %757 : f32 to vector<8x256xf32>
    %759 = arith.mulf %12, %758 : vector<8x256xf32>
    %760 = arith.addf %756, %759 : vector<8x256xf32>
    %c155 = arith.constant 155 : index
    %761 = memref.load %arg2[%c155] : memref<256xf32, #tpu.memory_space<smem>>
    %762 = vector.broadcast %761 : f32 to vector<8x256xf32>
    %763 = arith.mulf %15, %762 : vector<8x256xf32>
    %764 = arith.addf %760, %763 : vector<8x256xf32>
    %c156 = arith.constant 156 : index
    %765 = memref.load %arg2[%c156] : memref<256xf32, #tpu.memory_space<smem>>
    %766 = vector.broadcast %765 : f32 to vector<8x256xf32>
    %767 = arith.mulf %18, %766 : vector<8x256xf32>
    %768 = arith.addf %764, %767 : vector<8x256xf32>
    %c157 = arith.constant 157 : index
    %769 = memref.load %arg2[%c157] : memref<256xf32, #tpu.memory_space<smem>>
    %770 = vector.broadcast %769 : f32 to vector<8x256xf32>
    %771 = arith.mulf %21, %770 : vector<8x256xf32>
    %772 = arith.addf %768, %771 : vector<8x256xf32>
    %c158 = arith.constant 158 : index
    %773 = memref.load %arg2[%c158] : memref<256xf32, #tpu.memory_space<smem>>
    %774 = vector.broadcast %773 : f32 to vector<8x256xf32>
    %775 = arith.mulf %24, %774 : vector<8x256xf32>
    %776 = arith.addf %772, %775 : vector<8x256xf32>
    %c159 = arith.constant 159 : index
    %777 = memref.load %arg2[%c159] : memref<256xf32, #tpu.memory_space<smem>>
    %778 = vector.broadcast %777 : f32 to vector<8x256xf32>
    %779 = arith.mulf %27, %778 : vector<8x256xf32>
    %780 = arith.addf %776, %779 : vector<8x256xf32>
    %c19_55 = arith.constant 19 : index
    %781 = memref.load %arg3[%c19_55] : memref<32xf32, #tpu.memory_space<smem>>
    %782 = vector.broadcast %781 : f32 to vector<8x256xf32>
    %783 = arith.addf %780, %782 : vector<8x256xf32>
    %cst_56 = arith.constant 0.000000e+00 : f32
    %784 = vector.broadcast %cst_56 : f32 to vector<8x256xf32>
    %785 = arith.maximumf %783, %784 : vector<8x256xf32>
    %786 = arith.index_cast %3 : i32 to index
    %c4864 = arith.constant 4864 : index
    %787 = vector.load %arg9[%786, %c4864] : memref<8x8192xf32, #tpu.memory_space<vmem>>, vector<8x256xf32>
    tpu.vector_store %arg9[%786, %c4864], %785 {strides = array<i32>} : memref<8x8192xf32, #tpu.memory_space<vmem>>, vector<8x256xf32>,
    %c160 = arith.constant 160 : index
    %788 = memref.load %arg2[%c160] : memref<256xf32, #tpu.memory_space<smem>>
    %789 = vector.broadcast %788 : f32 to vector<8x256xf32>
    %790 = arith.mulf %6, %789 : vector<8x256xf32>
    %c161 = arith.constant 161 : index
    %791 = memref.load %arg2[%c161] : memref<256xf32, #tpu.memory_space<smem>>
    %792 = vector.broadcast %791 : f32 to vector<8x256xf32>
    %793 = arith.mulf %9, %792 : vector<8x256xf32>
    %794 = arith.addf %790, %793 : vector<8x256xf32>
    %c162 = arith.constant 162 : index
    %795 = memref.load %arg2[%c162] : memref<256xf32, #tpu.memory_space<smem>>
    %796 = vector.broadcast %795 : f32 to vector<8x256xf32>
    %797 = arith.mulf %12, %796 : vector<8x256xf32>
    %798 = arith.addf %794, %797 : vector<8x256xf32>
    %c163 = arith.constant 163 : index
    %799 = memref.load %arg2[%c163] : memref<256xf32, #tpu.memory_space<smem>>
    %800 = vector.broadcast %799 : f32 to vector<8x256xf32>
    %801 = arith.mulf %15, %800 : vector<8x256xf32>
    %802 = arith.addf %798, %801 : vector<8x256xf32>
    %c164 = arith.constant 164 : index
    %803 = memref.load %arg2[%c164] : memref<256xf32, #tpu.memory_space<smem>>
    %804 = vector.broadcast %803 : f32 to vector<8x256xf32>
    %805 = arith.mulf %18, %804 : vector<8x256xf32>
    %806 = arith.addf %802, %805 : vector<8x256xf32>
    %c165 = arith.constant 165 : index
    %807 = memref.load %arg2[%c165] : memref<256xf32, #tpu.memory_space<smem>>
    %808 = vector.broadcast %807 : f32 to vector<8x256xf32>
    %809 = arith.mulf %21, %808 : vector<8x256xf32>
    %810 = arith.addf %806, %809 : vector<8x256xf32>
    %c166 = arith.constant 166 : index
    %811 = memref.load %arg2[%c166] : memref<256xf32, #tpu.memory_space<smem>>
    %812 = vector.broadcast %811 : f32 to vector<8x256xf32>
    %813 = arith.mulf %24, %812 : vector<8x256xf32>
    %814 = arith.addf %810, %813 : vector<8x256xf32>
    %c167 = arith.constant 167 : index
    %815 = memref.load %arg2[%c167] : memref<256xf32, #tpu.memory_space<smem>>
    %816 = vector.broadcast %815 : f32 to vector<8x256xf32>
    %817 = arith.mulf %27, %816 : vector<8x256xf32>
    %818 = arith.addf %814, %817 : vector<8x256xf32>
    %c20_57 = arith.constant 20 : index
    %819 = memref.load %arg3[%c20_57] : memref<32xf32, #tpu.memory_space<smem>>
    %820 = vector.broadcast %819 : f32 to vector<8x256xf32>
    %821 = arith.addf %818, %820 : vector<8x256xf32>
    %cst_58 = arith.constant 0.000000e+00 : f32
    %822 = vector.broadcast %cst_58 : f32 to vector<8x256xf32>
    %823 = arith.maximumf %821, %822 : vector<8x256xf32>
    %824 = arith.index_cast %3 : i32 to index
    %c5120 = arith.constant 5120 : index
    %825 = vector.load %arg9[%824, %c5120] : memref<8x8192xf32, #tpu.memory_space<vmem>>, vector<8x256xf32>
    tpu.vector_store %arg9[%824, %c5120], %823 {strides = array<i32>} : memref<8x8192xf32, #tpu.memory_space<vmem>>, vector<8x256xf32>,
    %c168 = arith.constant 168 : index
    %826 = memref.load %arg2[%c168] : memref<256xf32, #tpu.memory_space<smem>>
    %827 = vector.broadcast %826 : f32 to vector<8x256xf32>
    %828 = arith.mulf %6, %827 : vector<8x256xf32>
    %c169 = arith.constant 169 : index
    %829 = memref.load %arg2[%c169] : memref<256xf32, #tpu.memory_space<smem>>
    %830 = vector.broadcast %829 : f32 to vector<8x256xf32>
    %831 = arith.mulf %9, %830 : vector<8x256xf32>
    %832 = arith.addf %828, %831 : vector<8x256xf32>
    %c170 = arith.constant 170 : index
    %833 = memref.load %arg2[%c170] : memref<256xf32, #tpu.memory_space<smem>>
    %834 = vector.broadcast %833 : f32 to vector<8x256xf32>
    %835 = arith.mulf %12, %834 : vector<8x256xf32>
    %836 = arith.addf %832, %835 : vector<8x256xf32>
    %c171 = arith.constant 171 : index
    %837 = memref.load %arg2[%c171] : memref<256xf32, #tpu.memory_space<smem>>
    %838 = vector.broadcast %837 : f32 to vector<8x256xf32>
    %839 = arith.mulf %15, %838 : vector<8x256xf32>
    %840 = arith.addf %836, %839 : vector<8x256xf32>
    %c172 = arith.constant 172 : index
    %841 = memref.load %arg2[%c172] : memref<256xf32, #tpu.memory_space<smem>>
    %842 = vector.broadcast %841 : f32 to vector<8x256xf32>
    %843 = arith.mulf %18, %842 : vector<8x256xf32>
    %844 = arith.addf %840, %843 : vector<8x256xf32>
    %c173 = arith.constant 173 : index
    %845 = memref.load %arg2[%c173] : memref<256xf32, #tpu.memory_space<smem>>
    %846 = vector.broadcast %845 : f32 to vector<8x256xf32>
    %847 = arith.mulf %21, %846 : vector<8x256xf32>
    %848 = arith.addf %844, %847 : vector<8x256xf32>
    %c174 = arith.constant 174 : index
    %849 = memref.load %arg2[%c174] : memref<256xf32, #tpu.memory_space<smem>>
    %850 = vector.broadcast %849 : f32 to vector<8x256xf32>
    %851 = arith.mulf %24, %850 : vector<8x256xf32>
    %852 = arith.addf %848, %851 : vector<8x256xf32>
    %c175 = arith.constant 175 : index
    %853 = memref.load %arg2[%c175] : memref<256xf32, #tpu.memory_space<smem>>
    %854 = vector.broadcast %853 : f32 to vector<8x256xf32>
    %855 = arith.mulf %27, %854 : vector<8x256xf32>
    %856 = arith.addf %852, %855 : vector<8x256xf32>
    %c21_59 = arith.constant 21 : index
    %857 = memref.load %arg3[%c21_59] : memref<32xf32, #tpu.memory_space<smem>>
    %858 = vector.broadcast %857 : f32 to vector<8x256xf32>
    %859 = arith.addf %856, %858 : vector<8x256xf32>
    %cst_60 = arith.constant 0.000000e+00 : f32
    %860 = vector.broadcast %cst_60 : f32 to vector<8x256xf32>
    %861 = arith.maximumf %859, %860 : vector<8x256xf32>
    %862 = arith.index_cast %3 : i32 to index
    %c5376 = arith.constant 5376 : index
    %863 = vector.load %arg9[%862, %c5376] : memref<8x8192xf32, #tpu.memory_space<vmem>>, vector<8x256xf32>
    tpu.vector_store %arg9[%862, %c5376], %861 {strides = array<i32>} : memref<8x8192xf32, #tpu.memory_space<vmem>>, vector<8x256xf32>,
    %c176 = arith.constant 176 : index
    %864 = memref.load %arg2[%c176] : memref<256xf32, #tpu.memory_space<smem>>
    %865 = vector.broadcast %864 : f32 to vector<8x256xf32>
    %866 = arith.mulf %6, %865 : vector<8x256xf32>
    %c177 = arith.constant 177 : index
    %867 = memref.load %arg2[%c177] : memref<256xf32, #tpu.memory_space<smem>>
    %868 = vector.broadcast %867 : f32 to vector<8x256xf32>
    %869 = arith.mulf %9, %868 : vector<8x256xf32>
    %870 = arith.addf %866, %869 : vector<8x256xf32>
    %c178 = arith.constant 178 : index
    %871 = memref.load %arg2[%c178] : memref<256xf32, #tpu.memory_space<smem>>
    %872 = vector.broadcast %871 : f32 to vector<8x256xf32>
    %873 = arith.mulf %12, %872 : vector<8x256xf32>
    %874 = arith.addf %870, %873 : vector<8x256xf32>
    %c179 = arith.constant 179 : index
    %875 = memref.load %arg2[%c179] : memref<256xf32, #tpu.memory_space<smem>>
    %876 = vector.broadcast %875 : f32 to vector<8x256xf32>
    %877 = arith.mulf %15, %876 : vector<8x256xf32>
    %878 = arith.addf %874, %877 : vector<8x256xf32>
    %c180 = arith.constant 180 : index
    %879 = memref.load %arg2[%c180] : memref<256xf32, #tpu.memory_space<smem>>
    %880 = vector.broadcast %879 : f32 to vector<8x256xf32>
    %881 = arith.mulf %18, %880 : vector<8x256xf32>
    %882 = arith.addf %878, %881 : vector<8x256xf32>
    %c181 = arith.constant 181 : index
    %883 = memref.load %arg2[%c181] : memref<256xf32, #tpu.memory_space<smem>>
    %884 = vector.broadcast %883 : f32 to vector<8x256xf32>
    %885 = arith.mulf %21, %884 : vector<8x256xf32>
    %886 = arith.addf %882, %885 : vector<8x256xf32>
    %c182 = arith.constant 182 : index
    %887 = memref.load %arg2[%c182] : memref<256xf32, #tpu.memory_space<smem>>
    %888 = vector.broadcast %887 : f32 to vector<8x256xf32>
    %889 = arith.mulf %24, %888 : vector<8x256xf32>
    %890 = arith.addf %886, %889 : vector<8x256xf32>
    %c183 = arith.constant 183 : index
    %891 = memref.load %arg2[%c183] : memref<256xf32, #tpu.memory_space<smem>>
    %892 = vector.broadcast %891 : f32 to vector<8x256xf32>
    %893 = arith.mulf %27, %892 : vector<8x256xf32>
    %894 = arith.addf %890, %893 : vector<8x256xf32>
    %c22_61 = arith.constant 22 : index
    %895 = memref.load %arg3[%c22_61] : memref<32xf32, #tpu.memory_space<smem>>
    %896 = vector.broadcast %895 : f32 to vector<8x256xf32>
    %897 = arith.addf %894, %896 : vector<8x256xf32>
    %cst_62 = arith.constant 0.000000e+00 : f32
    %898 = vector.broadcast %cst_62 : f32 to vector<8x256xf32>
    %899 = arith.maximumf %897, %898 : vector<8x256xf32>
    %900 = arith.index_cast %3 : i32 to index
    %c5632 = arith.constant 5632 : index
    %901 = vector.load %arg9[%900, %c5632] : memref<8x8192xf32, #tpu.memory_space<vmem>>, vector<8x256xf32>
    tpu.vector_store %arg9[%900, %c5632], %899 {strides = array<i32>} : memref<8x8192xf32, #tpu.memory_space<vmem>>, vector<8x256xf32>,
    %c184 = arith.constant 184 : index
    %902 = memref.load %arg2[%c184] : memref<256xf32, #tpu.memory_space<smem>>
    %903 = vector.broadcast %902 : f32 to vector<8x256xf32>
    %904 = arith.mulf %6, %903 : vector<8x256xf32>
    %c185 = arith.constant 185 : index
    %905 = memref.load %arg2[%c185] : memref<256xf32, #tpu.memory_space<smem>>
    %906 = vector.broadcast %905 : f32 to vector<8x256xf32>
    %907 = arith.mulf %9, %906 : vector<8x256xf32>
    %908 = arith.addf %904, %907 : vector<8x256xf32>
    %c186 = arith.constant 186 : index
    %909 = memref.load %arg2[%c186] : memref<256xf32, #tpu.memory_space<smem>>
    %910 = vector.broadcast %909 : f32 to vector<8x256xf32>
    %911 = arith.mulf %12, %910 : vector<8x256xf32>
    %912 = arith.addf %908, %911 : vector<8x256xf32>
    %c187 = arith.constant 187 : index
    %913 = memref.load %arg2[%c187] : memref<256xf32, #tpu.memory_space<smem>>
    %914 = vector.broadcast %913 : f32 to vector<8x256xf32>
    %915 = arith.mulf %15, %914 : vector<8x256xf32>
    %916 = arith.addf %912, %915 : vector<8x256xf32>
    %c188 = arith.constant 188 : index
    %917 = memref.load %arg2[%c188] : memref<256xf32, #tpu.memory_space<smem>>
    %918 = vector.broadcast %917 : f32 to vector<8x256xf32>
    %919 = arith.mulf %18, %918 : vector<8x256xf32>
    %920 = arith.addf %916, %919 : vector<8x256xf32>
    %c189 = arith.constant 189 : index
    %921 = memref.load %arg2[%c189] : memref<256xf32, #tpu.memory_space<smem>>
    %922 = vector.broadcast %921 : f32 to vector<8x256xf32>
    %923 = arith.mulf %21, %922 : vector<8x256xf32>
    %924 = arith.addf %920, %923 : vector<8x256xf32>
    %c190 = arith.constant 190 : index
    %925 = memref.load %arg2[%c190] : memref<256xf32, #tpu.memory_space<smem>>
    %926 = vector.broadcast %925 : f32 to vector<8x256xf32>
    %927 = arith.mulf %24, %926 : vector<8x256xf32>
    %928 = arith.addf %924, %927 : vector<8x256xf32>
    %c191 = arith.constant 191 : index
    %929 = memref.load %arg2[%c191] : memref<256xf32, #tpu.memory_space<smem>>
    %930 = vector.broadcast %929 : f32 to vector<8x256xf32>
    %931 = arith.mulf %27, %930 : vector<8x256xf32>
    %932 = arith.addf %928, %931 : vector<8x256xf32>
    %c23_63 = arith.constant 23 : index
    %933 = memref.load %arg3[%c23_63] : memref<32xf32, #tpu.memory_space<smem>>
    %934 = vector.broadcast %933 : f32 to vector<8x256xf32>
    %935 = arith.addf %932, %934 : vector<8x256xf32>
    %cst_64 = arith.constant 0.000000e+00 : f32
    %936 = vector.broadcast %cst_64 : f32 to vector<8x256xf32>
    %937 = arith.maximumf %935, %936 : vector<8x256xf32>
    %938 = arith.index_cast %3 : i32 to index
    %c5888 = arith.constant 5888 : index
    %939 = vector.load %arg9[%938, %c5888] : memref<8x8192xf32, #tpu.memory_space<vmem>>, vector<8x256xf32>
    tpu.vector_store %arg9[%938, %c5888], %937 {strides = array<i32>} : memref<8x8192xf32, #tpu.memory_space<vmem>>, vector<8x256xf32>,
    %c192 = arith.constant 192 : index
    %940 = memref.load %arg2[%c192] : memref<256xf32, #tpu.memory_space<smem>>
    %941 = vector.broadcast %940 : f32 to vector<8x256xf32>
    %942 = arith.mulf %6, %941 : vector<8x256xf32>
    %c193 = arith.constant 193 : index
    %943 = memref.load %arg2[%c193] : memref<256xf32, #tpu.memory_space<smem>>
    %944 = vector.broadcast %943 : f32 to vector<8x256xf32>
    %945 = arith.mulf %9, %944 : vector<8x256xf32>
    %946 = arith.addf %942, %945 : vector<8x256xf32>
    %c194 = arith.constant 194 : index
    %947 = memref.load %arg2[%c194] : memref<256xf32, #tpu.memory_space<smem>>
    %948 = vector.broadcast %947 : f32 to vector<8x256xf32>
    %949 = arith.mulf %12, %948 : vector<8x256xf32>
    %950 = arith.addf %946, %949 : vector<8x256xf32>
    %c195 = arith.constant 195 : index
    %951 = memref.load %arg2[%c195] : memref<256xf32, #tpu.memory_space<smem>>
    %952 = vector.broadcast %951 : f32 to vector<8x256xf32>
    %953 = arith.mulf %15, %952 : vector<8x256xf32>
    %954 = arith.addf %950, %953 : vector<8x256xf32>
    %c196 = arith.constant 196 : index
    %955 = memref.load %arg2[%c196] : memref<256xf32, #tpu.memory_space<smem>>
    %956 = vector.broadcast %955 : f32 to vector<8x256xf32>
    %957 = arith.mulf %18, %956 : vector<8x256xf32>
    %958 = arith.addf %954, %957 : vector<8x256xf32>
    %c197 = arith.constant 197 : index
    %959 = memref.load %arg2[%c197] : memref<256xf32, #tpu.memory_space<smem>>
    %960 = vector.broadcast %959 : f32 to vector<8x256xf32>
    %961 = arith.mulf %21, %960 : vector<8x256xf32>
    %962 = arith.addf %958, %961 : vector<8x256xf32>
    %c198 = arith.constant 198 : index
    %963 = memref.load %arg2[%c198] : memref<256xf32, #tpu.memory_space<smem>>
    %964 = vector.broadcast %963 : f32 to vector<8x256xf32>
    %965 = arith.mulf %24, %964 : vector<8x256xf32>
    %966 = arith.addf %962, %965 : vector<8x256xf32>
    %c199 = arith.constant 199 : index
    %967 = memref.load %arg2[%c199] : memref<256xf32, #tpu.memory_space<smem>>
    %968 = vector.broadcast %967 : f32 to vector<8x256xf32>
    %969 = arith.mulf %27, %968 : vector<8x256xf32>
    %970 = arith.addf %966, %969 : vector<8x256xf32>
    %c24_65 = arith.constant 24 : index
    %971 = memref.load %arg3[%c24_65] : memref<32xf32, #tpu.memory_space<smem>>
    %972 = vector.broadcast %971 : f32 to vector<8x256xf32>
    %973 = arith.addf %970, %972 : vector<8x256xf32>
    %cst_66 = arith.constant 0.000000e+00 : f32
    %974 = vector.broadcast %cst_66 : f32 to vector<8x256xf32>
    %975 = arith.maximumf %973, %974 : vector<8x256xf32>
    %976 = arith.index_cast %3 : i32 to index
    %c6144 = arith.constant 6144 : index
    %977 = vector.load %arg9[%976, %c6144] : memref<8x8192xf32, #tpu.memory_space<vmem>>, vector<8x256xf32>
    tpu.vector_store %arg9[%976, %c6144], %975 {strides = array<i32>} : memref<8x8192xf32, #tpu.memory_space<vmem>>, vector<8x256xf32>,
    %c200 = arith.constant 200 : index
    %978 = memref.load %arg2[%c200] : memref<256xf32, #tpu.memory_space<smem>>
    %979 = vector.broadcast %978 : f32 to vector<8x256xf32>
    %980 = arith.mulf %6, %979 : vector<8x256xf32>
    %c201 = arith.constant 201 : index
    %981 = memref.load %arg2[%c201] : memref<256xf32, #tpu.memory_space<smem>>
    %982 = vector.broadcast %981 : f32 to vector<8x256xf32>
    %983 = arith.mulf %9, %982 : vector<8x256xf32>
    %984 = arith.addf %980, %983 : vector<8x256xf32>
    %c202 = arith.constant 202 : index
    %985 = memref.load %arg2[%c202] : memref<256xf32, #tpu.memory_space<smem>>
    %986 = vector.broadcast %985 : f32 to vector<8x256xf32>
    %987 = arith.mulf %12, %986 : vector<8x256xf32>
    %988 = arith.addf %984, %987 : vector<8x256xf32>
    %c203 = arith.constant 203 : index
    %989 = memref.load %arg2[%c203] : memref<256xf32, #tpu.memory_space<smem>>
    %990 = vector.broadcast %989 : f32 to vector<8x256xf32>
    %991 = arith.mulf %15, %990 : vector<8x256xf32>
    %992 = arith.addf %988, %991 : vector<8x256xf32>
    %c204 = arith.constant 204 : index
    %993 = memref.load %arg2[%c204] : memref<256xf32, #tpu.memory_space<smem>>
    %994 = vector.broadcast %993 : f32 to vector<8x256xf32>
    %995 = arith.mulf %18, %994 : vector<8x256xf32>
    %996 = arith.addf %992, %995 : vector<8x256xf32>
    %c205 = arith.constant 205 : index
    %997 = memref.load %arg2[%c205] : memref<256xf32, #tpu.memory_space<smem>>
    %998 = vector.broadcast %997 : f32 to vector<8x256xf32>
    %999 = arith.mulf %21, %998 : vector<8x256xf32>
    %1000 = arith.addf %996, %999 : vector<8x256xf32>
    %c206 = arith.constant 206 : index
    %1001 = memref.load %arg2[%c206] : memref<256xf32, #tpu.memory_space<smem>>
    %1002 = vector.broadcast %1001 : f32 to vector<8x256xf32>
    %1003 = arith.mulf %24, %1002 : vector<8x256xf32>
    %1004 = arith.addf %1000, %1003 : vector<8x256xf32>
    %c207 = arith.constant 207 : index
    %1005 = memref.load %arg2[%c207] : memref<256xf32, #tpu.memory_space<smem>>
    %1006 = vector.broadcast %1005 : f32 to vector<8x256xf32>
    %1007 = arith.mulf %27, %1006 : vector<8x256xf32>
    %1008 = arith.addf %1004, %1007 : vector<8x256xf32>
    %c25_67 = arith.constant 25 : index
    %1009 = memref.load %arg3[%c25_67] : memref<32xf32, #tpu.memory_space<smem>>
    %1010 = vector.broadcast %1009 : f32 to vector<8x256xf32>
    %1011 = arith.addf %1008, %1010 : vector<8x256xf32>
    %cst_68 = arith.constant 0.000000e+00 : f32
    %1012 = vector.broadcast %cst_68 : f32 to vector<8x256xf32>
    %1013 = arith.maximumf %1011, %1012 : vector<8x256xf32>
    %1014 = arith.index_cast %3 : i32 to index
    %c6400 = arith.constant 6400 : index
    %1015 = vector.load %arg9[%1014, %c6400] : memref<8x8192xf32, #tpu.memory_space<vmem>>, vector<8x256xf32>
    tpu.vector_store %arg9[%1014, %c6400], %1013 {strides = array<i32>} : memref<8x8192xf32, #tpu.memory_space<vmem>>, vector<8x256xf32>,
    %c208 = arith.constant 208 : index
    %1016 = memref.load %arg2[%c208] : memref<256xf32, #tpu.memory_space<smem>>
    %1017 = vector.broadcast %1016 : f32 to vector<8x256xf32>
    %1018 = arith.mulf %6, %1017 : vector<8x256xf32>
    %c209 = arith.constant 209 : index
    %1019 = memref.load %arg2[%c209] : memref<256xf32, #tpu.memory_space<smem>>
    %1020 = vector.broadcast %1019 : f32 to vector<8x256xf32>
    %1021 = arith.mulf %9, %1020 : vector<8x256xf32>
    %1022 = arith.addf %1018, %1021 : vector<8x256xf32>
    %c210 = arith.constant 210 : index
    %1023 = memref.load %arg2[%c210] : memref<256xf32, #tpu.memory_space<smem>>
    %1024 = vector.broadcast %1023 : f32 to vector<8x256xf32>
    %1025 = arith.mulf %12, %1024 : vector<8x256xf32>
    %1026 = arith.addf %1022, %1025 : vector<8x256xf32>
    %c211 = arith.constant 211 : index
    %1027 = memref.load %arg2[%c211] : memref<256xf32, #tpu.memory_space<smem>>
    %1028 = vector.broadcast %1027 : f32 to vector<8x256xf32>
    %1029 = arith.mulf %15, %1028 : vector<8x256xf32>
    %1030 = arith.addf %1026, %1029 : vector<8x256xf32>
    %c212 = arith.constant 212 : index
    %1031 = memref.load %arg2[%c212] : memref<256xf32, #tpu.memory_space<smem>>
    %1032 = vector.broadcast %1031 : f32 to vector<8x256xf32>
    %1033 = arith.mulf %18, %1032 : vector<8x256xf32>
    %1034 = arith.addf %1030, %1033 : vector<8x256xf32>
    %c213 = arith.constant 213 : index
    %1035 = memref.load %arg2[%c213] : memref<256xf32, #tpu.memory_space<smem>>
    %1036 = vector.broadcast %1035 : f32 to vector<8x256xf32>
    %1037 = arith.mulf %21, %1036 : vector<8x256xf32>
    %1038 = arith.addf %1034, %1037 : vector<8x256xf32>
    %c214 = arith.constant 214 : index
    %1039 = memref.load %arg2[%c214] : memref<256xf32, #tpu.memory_space<smem>>
    %1040 = vector.broadcast %1039 : f32 to vector<8x256xf32>
    %1041 = arith.mulf %24, %1040 : vector<8x256xf32>
    %1042 = arith.addf %1038, %1041 : vector<8x256xf32>
    %c215 = arith.constant 215 : index
    %1043 = memref.load %arg2[%c215] : memref<256xf32, #tpu.memory_space<smem>>
    %1044 = vector.broadcast %1043 : f32 to vector<8x256xf32>
    %1045 = arith.mulf %27, %1044 : vector<8x256xf32>
    %1046 = arith.addf %1042, %1045 : vector<8x256xf32>
    %c26_69 = arith.constant 26 : index
    %1047 = memref.load %arg3[%c26_69] : memref<32xf32, #tpu.memory_space<smem>>
    %1048 = vector.broadcast %1047 : f32 to vector<8x256xf32>
    %1049 = arith.addf %1046, %1048 : vector<8x256xf32>
    %cst_70 = arith.constant 0.000000e+00 : f32
    %1050 = vector.broadcast %cst_70 : f32 to vector<8x256xf32>
    %1051 = arith.maximumf %1049, %1050 : vector<8x256xf32>
    %1052 = arith.index_cast %3 : i32 to index
    %c6656 = arith.constant 6656 : index
    %1053 = vector.load %arg9[%1052, %c6656] : memref<8x8192xf32, #tpu.memory_space<vmem>>, vector<8x256xf32>
    tpu.vector_store %arg9[%1052, %c6656], %1051 {strides = array<i32>} : memref<8x8192xf32, #tpu.memory_space<vmem>>, vector<8x256xf32>,
    %c216 = arith.constant 216 : index
    %1054 = memref.load %arg2[%c216] : memref<256xf32, #tpu.memory_space<smem>>
    %1055 = vector.broadcast %1054 : f32 to vector<8x256xf32>
    %1056 = arith.mulf %6, %1055 : vector<8x256xf32>
    %c217 = arith.constant 217 : index
    %1057 = memref.load %arg2[%c217] : memref<256xf32, #tpu.memory_space<smem>>
    %1058 = vector.broadcast %1057 : f32 to vector<8x256xf32>
    %1059 = arith.mulf %9, %1058 : vector<8x256xf32>
    %1060 = arith.addf %1056, %1059 : vector<8x256xf32>
    %c218 = arith.constant 218 : index
    %1061 = memref.load %arg2[%c218] : memref<256xf32, #tpu.memory_space<smem>>
    %1062 = vector.broadcast %1061 : f32 to vector<8x256xf32>
    %1063 = arith.mulf %12, %1062 : vector<8x256xf32>
    %1064 = arith.addf %1060, %1063 : vector<8x256xf32>
    %c219 = arith.constant 219 : index
    %1065 = memref.load %arg2[%c219] : memref<256xf32, #tpu.memory_space<smem>>
    %1066 = vector.broadcast %1065 : f32 to vector<8x256xf32>
    %1067 = arith.mulf %15, %1066 : vector<8x256xf32>
    %1068 = arith.addf %1064, %1067 : vector<8x256xf32>
    %c220 = arith.constant 220 : index
    %1069 = memref.load %arg2[%c220] : memref<256xf32, #tpu.memory_space<smem>>
    %1070 = vector.broadcast %1069 : f32 to vector<8x256xf32>
    %1071 = arith.mulf %18, %1070 : vector<8x256xf32>
    %1072 = arith.addf %1068, %1071 : vector<8x256xf32>
    %c221 = arith.constant 221 : index
    %1073 = memref.load %arg2[%c221] : memref<256xf32, #tpu.memory_space<smem>>
    %1074 = vector.broadcast %1073 : f32 to vector<8x256xf32>
    %1075 = arith.mulf %21, %1074 : vector<8x256xf32>
    %1076 = arith.addf %1072, %1075 : vector<8x256xf32>
    %c222 = arith.constant 222 : index
    %1077 = memref.load %arg2[%c222] : memref<256xf32, #tpu.memory_space<smem>>
    %1078 = vector.broadcast %1077 : f32 to vector<8x256xf32>
    %1079 = arith.mulf %24, %1078 : vector<8x256xf32>
    %1080 = arith.addf %1076, %1079 : vector<8x256xf32>
    %c223 = arith.constant 223 : index
    %1081 = memref.load %arg2[%c223] : memref<256xf32, #tpu.memory_space<smem>>
    %1082 = vector.broadcast %1081 : f32 to vector<8x256xf32>
    %1083 = arith.mulf %27, %1082 : vector<8x256xf32>
    %1084 = arith.addf %1080, %1083 : vector<8x256xf32>
    %c27_71 = arith.constant 27 : index
    %1085 = memref.load %arg3[%c27_71] : memref<32xf32, #tpu.memory_space<smem>>
    %1086 = vector.broadcast %1085 : f32 to vector<8x256xf32>
    %1087 = arith.addf %1084, %1086 : vector<8x256xf32>
    %cst_72 = arith.constant 0.000000e+00 : f32
    %1088 = vector.broadcast %cst_72 : f32 to vector<8x256xf32>
    %1089 = arith.maximumf %1087, %1088 : vector<8x256xf32>
    %1090 = arith.index_cast %3 : i32 to index
    %c6912 = arith.constant 6912 : index
    %1091 = vector.load %arg9[%1090, %c6912] : memref<8x8192xf32, #tpu.memory_space<vmem>>, vector<8x256xf32>
    tpu.vector_store %arg9[%1090, %c6912], %1089 {strides = array<i32>} : memref<8x8192xf32, #tpu.memory_space<vmem>>, vector<8x256xf32>,
    %c224 = arith.constant 224 : index
    %1092 = memref.load %arg2[%c224] : memref<256xf32, #tpu.memory_space<smem>>
    %1093 = vector.broadcast %1092 : f32 to vector<8x256xf32>
    %1094 = arith.mulf %6, %1093 : vector<8x256xf32>
    %c225 = arith.constant 225 : index
    %1095 = memref.load %arg2[%c225] : memref<256xf32, #tpu.memory_space<smem>>
    %1096 = vector.broadcast %1095 : f32 to vector<8x256xf32>
    %1097 = arith.mulf %9, %1096 : vector<8x256xf32>
    %1098 = arith.addf %1094, %1097 : vector<8x256xf32>
    %c226 = arith.constant 226 : index
    %1099 = memref.load %arg2[%c226] : memref<256xf32, #tpu.memory_space<smem>>
    %1100 = vector.broadcast %1099 : f32 to vector<8x256xf32>
    %1101 = arith.mulf %12, %1100 : vector<8x256xf32>
    %1102 = arith.addf %1098, %1101 : vector<8x256xf32>
    %c227 = arith.constant 227 : index
    %1103 = memref.load %arg2[%c227] : memref<256xf32, #tpu.memory_space<smem>>
    %1104 = vector.broadcast %1103 : f32 to vector<8x256xf32>
    %1105 = arith.mulf %15, %1104 : vector<8x256xf32>
    %1106 = arith.addf %1102, %1105 : vector<8x256xf32>
    %c228 = arith.constant 228 : index
    %1107 = memref.load %arg2[%c228] : memref<256xf32, #tpu.memory_space<smem>>
    %1108 = vector.broadcast %1107 : f32 to vector<8x256xf32>
    %1109 = arith.mulf %18, %1108 : vector<8x256xf32>
    %1110 = arith.addf %1106, %1109 : vector<8x256xf32>
    %c229 = arith.constant 229 : index
    %1111 = memref.load %arg2[%c229] : memref<256xf32, #tpu.memory_space<smem>>
    %1112 = vector.broadcast %1111 : f32 to vector<8x256xf32>
    %1113 = arith.mulf %21, %1112 : vector<8x256xf32>
    %1114 = arith.addf %1110, %1113 : vector<8x256xf32>
    %c230 = arith.constant 230 : index
    %1115 = memref.load %arg2[%c230] : memref<256xf32, #tpu.memory_space<smem>>
    %1116 = vector.broadcast %1115 : f32 to vector<8x256xf32>
    %1117 = arith.mulf %24, %1116 : vector<8x256xf32>
    %1118 = arith.addf %1114, %1117 : vector<8x256xf32>
    %c231 = arith.constant 231 : index
    %1119 = memref.load %arg2[%c231] : memref<256xf32, #tpu.memory_space<smem>>
    %1120 = vector.broadcast %1119 : f32 to vector<8x256xf32>
    %1121 = arith.mulf %27, %1120 : vector<8x256xf32>
    %1122 = arith.addf %1118, %1121 : vector<8x256xf32>
    %c28_73 = arith.constant 28 : index
    %1123 = memref.load %arg3[%c28_73] : memref<32xf32, #tpu.memory_space<smem>>
    %1124 = vector.broadcast %1123 : f32 to vector<8x256xf32>
    %1125 = arith.addf %1122, %1124 : vector<8x256xf32>
    %cst_74 = arith.constant 0.000000e+00 : f32
    %1126 = vector.broadcast %cst_74 : f32 to vector<8x256xf32>
    %1127 = arith.maximumf %1125, %1126 : vector<8x256xf32>
    %1128 = arith.index_cast %3 : i32 to index
    %c7168 = arith.constant 7168 : index
    %1129 = vector.load %arg9[%1128, %c7168] : memref<8x8192xf32, #tpu.memory_space<vmem>>, vector<8x256xf32>
    tpu.vector_store %arg9[%1128, %c7168], %1127 {strides = array<i32>} : memref<8x8192xf32, #tpu.memory_space<vmem>>, vector<8x256xf32>,
    %c232 = arith.constant 232 : index
    %1130 = memref.load %arg2[%c232] : memref<256xf32, #tpu.memory_space<smem>>
    %1131 = vector.broadcast %1130 : f32 to vector<8x256xf32>
    %1132 = arith.mulf %6, %1131 : vector<8x256xf32>
    %c233 = arith.constant 233 : index
    %1133 = memref.load %arg2[%c233] : memref<256xf32, #tpu.memory_space<smem>>
    %1134 = vector.broadcast %1133 : f32 to vector<8x256xf32>
    %1135 = arith.mulf %9, %1134 : vector<8x256xf32>
    %1136 = arith.addf %1132, %1135 : vector<8x256xf32>
    %c234 = arith.constant 234 : index
    %1137 = memref.load %arg2[%c234] : memref<256xf32, #tpu.memory_space<smem>>
    %1138 = vector.broadcast %1137 : f32 to vector<8x256xf32>
    %1139 = arith.mulf %12, %1138 : vector<8x256xf32>
    %1140 = arith.addf %1136, %1139 : vector<8x256xf32>
    %c235 = arith.constant 235 : index
    %1141 = memref.load %arg2[%c235] : memref<256xf32, #tpu.memory_space<smem>>
    %1142 = vector.broadcast %1141 : f32 to vector<8x256xf32>
    %1143 = arith.mulf %15, %1142 : vector<8x256xf32>
    %1144 = arith.addf %1140, %1143 : vector<8x256xf32>
    %c236 = arith.constant 236 : index
    %1145 = memref.load %arg2[%c236] : memref<256xf32, #tpu.memory_space<smem>>
    %1146 = vector.broadcast %1145 : f32 to vector<8x256xf32>
    %1147 = arith.mulf %18, %1146 : vector<8x256xf32>
    %1148 = arith.addf %1144, %1147 : vector<8x256xf32>
    %c237 = arith.constant 237 : index
    %1149 = memref.load %arg2[%c237] : memref<256xf32, #tpu.memory_space<smem>>
    %1150 = vector.broadcast %1149 : f32 to vector<8x256xf32>
    %1151 = arith.mulf %21, %1150 : vector<8x256xf32>
    %1152 = arith.addf %1148, %1151 : vector<8x256xf32>
    %c238 = arith.constant 238 : index
    %1153 = memref.load %arg2[%c238] : memref<256xf32, #tpu.memory_space<smem>>
    %1154 = vector.broadcast %1153 : f32 to vector<8x256xf32>
    %1155 = arith.mulf %24, %1154 : vector<8x256xf32>
    %1156 = arith.addf %1152, %1155 : vector<8x256xf32>
    %c239 = arith.constant 239 : index
    %1157 = memref.load %arg2[%c239] : memref<256xf32, #tpu.memory_space<smem>>
    %1158 = vector.broadcast %1157 : f32 to vector<8x256xf32>
    %1159 = arith.mulf %27, %1158 : vector<8x256xf32>
    %1160 = arith.addf %1156, %1159 : vector<8x256xf32>
    %c29_75 = arith.constant 29 : index
    %1161 = memref.load %arg3[%c29_75] : memref<32xf32, #tpu.memory_space<smem>>
    %1162 = vector.broadcast %1161 : f32 to vector<8x256xf32>
    %1163 = arith.addf %1160, %1162 : vector<8x256xf32>
    %cst_76 = arith.constant 0.000000e+00 : f32
    %1164 = vector.broadcast %cst_76 : f32 to vector<8x256xf32>
    %1165 = arith.maximumf %1163, %1164 : vector<8x256xf32>
    %1166 = arith.index_cast %3 : i32 to index
    %c7424 = arith.constant 7424 : index
    %1167 = vector.load %arg9[%1166, %c7424] : memref<8x8192xf32, #tpu.memory_space<vmem>>, vector<8x256xf32>
    tpu.vector_store %arg9[%1166, %c7424], %1165 {strides = array<i32>} : memref<8x8192xf32, #tpu.memory_space<vmem>>, vector<8x256xf32>,
    %c240 = arith.constant 240 : index
    %1168 = memref.load %arg2[%c240] : memref<256xf32, #tpu.memory_space<smem>>
    %1169 = vector.broadcast %1168 : f32 to vector<8x256xf32>
    %1170 = arith.mulf %6, %1169 : vector<8x256xf32>
    %c241 = arith.constant 241 : index
    %1171 = memref.load %arg2[%c241] : memref<256xf32, #tpu.memory_space<smem>>
    %1172 = vector.broadcast %1171 : f32 to vector<8x256xf32>
    %1173 = arith.mulf %9, %1172 : vector<8x256xf32>
    %1174 = arith.addf %1170, %1173 : vector<8x256xf32>
    %c242 = arith.constant 242 : index
    %1175 = memref.load %arg2[%c242] : memref<256xf32, #tpu.memory_space<smem>>
    %1176 = vector.broadcast %1175 : f32 to vector<8x256xf32>
    %1177 = arith.mulf %12, %1176 : vector<8x256xf32>
    %1178 = arith.addf %1174, %1177 : vector<8x256xf32>
    %c243 = arith.constant 243 : index
    %1179 = memref.load %arg2[%c243] : memref<256xf32, #tpu.memory_space<smem>>
    %1180 = vector.broadcast %1179 : f32 to vector<8x256xf32>
    %1181 = arith.mulf %15, %1180 : vector<8x256xf32>
    %1182 = arith.addf %1178, %1181 : vector<8x256xf32>
    %c244 = arith.constant 244 : index
    %1183 = memref.load %arg2[%c244] : memref<256xf32, #tpu.memory_space<smem>>
    %1184 = vector.broadcast %1183 : f32 to vector<8x256xf32>
    %1185 = arith.mulf %18, %1184 : vector<8x256xf32>
    %1186 = arith.addf %1182, %1185 : vector<8x256xf32>
    %c245 = arith.constant 245 : index
    %1187 = memref.load %arg2[%c245] : memref<256xf32, #tpu.memory_space<smem>>
    %1188 = vector.broadcast %1187 : f32 to vector<8x256xf32>
    %1189 = arith.mulf %21, %1188 : vector<8x256xf32>
    %1190 = arith.addf %1186, %1189 : vector<8x256xf32>
    %c246 = arith.constant 246 : index
    %1191 = memref.load %arg2[%c246] : memref<256xf32, #tpu.memory_space<smem>>
    %1192 = vector.broadcast %1191 : f32 to vector<8x256xf32>
    %1193 = arith.mulf %24, %1192 : vector<8x256xf32>
    %1194 = arith.addf %1190, %1193 : vector<8x256xf32>
    %c247 = arith.constant 247 : index
    %1195 = memref.load %arg2[%c247] : memref<256xf32, #tpu.memory_space<smem>>
    %1196 = vector.broadcast %1195 : f32 to vector<8x256xf32>
    %1197 = arith.mulf %27, %1196 : vector<8x256xf32>
    %1198 = arith.addf %1194, %1197 : vector<8x256xf32>
    %c30_77 = arith.constant 30 : index
    %1199 = memref.load %arg3[%c30_77] : memref<32xf32, #tpu.memory_space<smem>>
    %1200 = vector.broadcast %1199 : f32 to vector<8x256xf32>
    %1201 = arith.addf %1198, %1200 : vector<8x256xf32>
    %cst_78 = arith.constant 0.000000e+00 : f32
    %1202 = vector.broadcast %cst_78 : f32 to vector<8x256xf32>
    %1203 = arith.maximumf %1201, %1202 : vector<8x256xf32>
    %1204 = arith.index_cast %3 : i32 to index
    %c7680 = arith.constant 7680 : index
    %1205 = vector.load %arg9[%1204, %c7680] : memref<8x8192xf32, #tpu.memory_space<vmem>>, vector<8x256xf32>
    tpu.vector_store %arg9[%1204, %c7680], %1203 {strides = array<i32>} : memref<8x8192xf32, #tpu.memory_space<vmem>>, vector<8x256xf32>,
    %c248 = arith.constant 248 : index
    %1206 = memref.load %arg2[%c248] : memref<256xf32, #tpu.memory_space<smem>>
    %1207 = vector.broadcast %1206 : f32 to vector<8x256xf32>
    %1208 = arith.mulf %6, %1207 : vector<8x256xf32>
    %c249 = arith.constant 249 : index
    %1209 = memref.load %arg2[%c249] : memref<256xf32, #tpu.memory_space<smem>>
    %1210 = vector.broadcast %1209 : f32 to vector<8x256xf32>
    %1211 = arith.mulf %9, %1210 : vector<8x256xf32>
    %1212 = arith.addf %1208, %1211 : vector<8x256xf32>
    %c250 = arith.constant 250 : index
    %1213 = memref.load %arg2[%c250] : memref<256xf32, #tpu.memory_space<smem>>
    %1214 = vector.broadcast %1213 : f32 to vector<8x256xf32>
    %1215 = arith.mulf %12, %1214 : vector<8x256xf32>
    %1216 = arith.addf %1212, %1215 : vector<8x256xf32>
    %c251 = arith.constant 251 : index
    %1217 = memref.load %arg2[%c251] : memref<256xf32, #tpu.memory_space<smem>>
    %1218 = vector.broadcast %1217 : f32 to vector<8x256xf32>
    %1219 = arith.mulf %15, %1218 : vector<8x256xf32>
    %1220 = arith.addf %1216, %1219 : vector<8x256xf32>
    %c252 = arith.constant 252 : index
    %1221 = memref.load %arg2[%c252] : memref<256xf32, #tpu.memory_space<smem>>
    %1222 = vector.broadcast %1221 : f32 to vector<8x256xf32>
    %1223 = arith.mulf %18, %1222 : vector<8x256xf32>
    %1224 = arith.addf %1220, %1223 : vector<8x256xf32>
    %c253 = arith.constant 253 : index
    %1225 = memref.load %arg2[%c253] : memref<256xf32, #tpu.memory_space<smem>>
    %1226 = vector.broadcast %1225 : f32 to vector<8x256xf32>
    %1227 = arith.mulf %21, %1226 : vector<8x256xf32>
    %1228 = arith.addf %1224, %1227 : vector<8x256xf32>
    %c254 = arith.constant 254 : index
    %1229 = memref.load %arg2[%c254] : memref<256xf32, #tpu.memory_space<smem>>
    %1230 = vector.broadcast %1229 : f32 to vector<8x256xf32>
    %1231 = arith.mulf %24, %1230 : vector<8x256xf32>
    %1232 = arith.addf %1228, %1231 : vector<8x256xf32>
    %c255 = arith.constant 255 : index
    %1233 = memref.load %arg2[%c255] : memref<256xf32, #tpu.memory_space<smem>>
    %1234 = vector.broadcast %1233 : f32 to vector<8x256xf32>
    %1235 = arith.mulf %27, %1234 : vector<8x256xf32>
    %1236 = arith.addf %1232, %1235 : vector<8x256xf32>
    %c31_79 = arith.constant 31 : index
    %1237 = memref.load %arg3[%c31_79] : memref<32xf32, #tpu.memory_space<smem>>
    %1238 = vector.broadcast %1237 : f32 to vector<8x256xf32>
    %1239 = arith.addf %1236, %1238 : vector<8x256xf32>
    %cst_80 = arith.constant 0.000000e+00 : f32
    %1240 = vector.broadcast %cst_80 : f32 to vector<8x256xf32>
    %1241 = arith.maximumf %1239, %1240 : vector<8x256xf32>
    %1242 = arith.index_cast %3 : i32 to index
    %c7936 = arith.constant 7936 : index
    %1243 = vector.load %arg9[%1242, %c7936] : memref<8x8192xf32, #tpu.memory_space<vmem>>, vector<8x256xf32>
    tpu.vector_store %arg9[%1242, %c7936], %1241 {strides = array<i32>} : memref<8x8192xf32, #tpu.memory_space<vmem>>, vector<8x256xf32>,
    %c1_i32_81 = arith.constant 1 : i32
    %c0_82 = arith.constant 0 : index
    %c0_83 = arith.constant 0 : index
    %1244 = vector.load %arg9[%c0_82, %c0_83] : memref<8x8192xf32, #tpu.memory_space<vmem>>, vector<8x8192xf32>
    %1245 = arith.truncf %1244 : vector<8x8192xf32> to vector<8x8192xbf16>
    %c0_84 = arith.constant 0 : index
    %c0_85 = arith.constant 0 : index
    %1246 = vector.load %arg4[%c0_84, %c0_85] : memref<8192x128xbf16, #tpu.memory_space<vmem>>, vector<8192x128xbf16>
    %cst_86 = arith.constant dense<0.000000e+00> : vector<8x128xf32>
    %1247 = tpu.matmul %1245, %1246, %cst_86 {dimension_numbers = #tpu.dot_dimension_numbers<[1], [0], [0], [1], [0, 0, 1, 1], [], []>} : vector<8x8192xbf16>, vector<8192x128xbf16>, vector<8x128xf32> -> vector<8x128xf32>
    %c0_87 = arith.constant 0 : index
    %c0_88 = arith.constant 0 : index
    %1248 = vector.load %arg5[%c0_87, %c0_88] : memref<1x128xf32, #tpu.memory_space<vmem>>, vector<1x128xf32>
    %1249 = vector.broadcast %1248 : vector<1x128xf32> to vector<8x128xf32>
    %1250 = arith.addf %1247, %1249 : vector<8x128xf32>
    %cst_89 = arith.constant 0.000000e+00 : f32
    %1251 = vector.broadcast %cst_89 : f32 to vector<8x128xf32>
    %1252 = arith.maximumf %1250, %1251 : vector<8x128xf32>
    %1253 = arith.truncf %1252 : vector<8x128xf32> to vector<8x128xbf16>
    %c0_90 = arith.constant 0 : index
    %c0_91 = arith.constant 0 : index
    %1254 = vector.load %arg6[%c0_90, %c0_91] : memref<128x128xbf16, #tpu.memory_space<vmem>>, vector<128x128xbf16>
    %cst_92 = arith.constant dense<0.000000e+00> : vector<8x128xf32>
    %1255 = tpu.matmul %1253, %1254, %cst_92 {dimension_numbers = #tpu.dot_dimension_numbers<[1], [0], [0], [1], [0, 0, 1, 1], [], []>} : vector<8x128xbf16>, vector<128x128xbf16>, vector<8x128xf32> -> vector<8x128xf32>
    %c0_93 = arith.constant 0 : index
    %c0_94 = arith.constant 0 : index
    %1256 = vector.load %arg7[%c0_93, %c0_94] : memref<1x128xf32, #tpu.memory_space<vmem>>, vector<1x128xf32>
    %1257 = vector.broadcast %1256 : vector<1x128xf32> to vector<8x128xf32>
    %1258 = arith.addf %1255, %1257 : vector<8x128xf32>
    %cst_95 = arith.constant 0.000000e+00 : f32
    %1259 = vector.broadcast %cst_95 : f32 to vector<8x128xf32>
    %1260 = arith.maximumf %1258, %1259 : vector<8x128xf32>
    %c0_96 = arith.constant 0 : index
    %c0_97 = arith.constant 0 : index
    %1261 = vector.load %arg8[%c0_96, %c0_97] : memref<8x128xf32, #tpu.memory_space<vmem>>, vector<8x128xf32>
    tpu.vector_store %arg8[%c0_96, %c0_97], %1260 {strides = array<i32>} : memref<8x128xf32, #tpu.memory_space<vmem>>, vector<8x128xf32>,
    return
  }
  func.func @transform_0(%arg0: i32) -> (i32, i32, i32) {
    %c0_i32 = arith.constant 0 : i32
    %c0_i32_0 = arith.constant 0 : i32
    %c0_i32_1 = arith.constant 0 : i32
    return %c0_i32, %arg0, %c0_i32_0 : i32, i32, i32
  }
  func.func @transform_1(%arg0: i32) -> i32 {
    %c0_i32 = arith.constant 0 : i32
    %c0_i32_0 = arith.constant 0 : i32
    return %c0_i32 : i32
  }
  func.func @transform_2(%arg0: i32) -> i32 {
    %c0_i32 = arith.constant 0 : i32
    %c0_i32_0 = arith.constant 0 : i32
    return %c0_i32 : i32
  }
  func.func @transform_3(%arg0: i32) -> (i32, i32) {
    %c0_i32 = arith.constant 0 : i32
    %c0_i32_0 = arith.constant 0 : i32
    %c0_i32_1 = arith.constant 0 : i32
    return %c0_i32, %c0_i32_0 : i32, i32
  }
  func.func @transform_4(%arg0: i32) -> (i32, i32) {
    %c0_i32 = arith.constant 0 : i32
    %c0_i32_0 = arith.constant 0 : i32
    %c0_i32_1 = arith.constant 0 : i32
    return %c0_i32, %c0_i32_0 : i32, i32
  }
  func.func @transform_5(%arg0: i32) -> (i32, i32) {
    %c0_i32 = arith.constant 0 : i32
    %c0_i32_0 = arith.constant 0 : i32
    %c0_i32_1 = arith.constant 0 : i32
    return %c0_i32, %c0_i32_0 : i32, i32
  }
  func.func @transform_6(%arg0: i32) -> (i32, i32) {
    %c0_i32 = arith.constant 0 : i32
    %c0_i32_0 = arith.constant 0 : i32
    %c0_i32_1 = arith.constant 0 : i32
    return %c0_i32, %c0_i32_0 : i32, i32
  }
  func.func @transform_7(%arg0: i32) -> (i32, i32) {
    %c0_i32 = arith.constant 0 : i32
    %c0_i32_0 = arith.constant 0 : i32
    return %arg0, %c0_i32 : i32, i32
  }
}

</mosaic_0001>

<llo_original>
// kernel: tpu_custom_call.1
$region0: #{tpu_custom_call.1}
  #allocation0 [shape = 'u32[]', space=smem, size = 0x4, offset = 0x4, fixed_abs, tag = 'smem constant byte address 0x4 - core index']
  #allocation1 [shape = 'u32[144,128]{1,0:T(1,128)}', space=vmem, size = 0x12000, scoped, tag = 'internal scratch']
  #allocation2 [shape = 'f32[8,8192]{1,0:T(8,128)}', space=vmem, size = 0x40000, scoped, tag = 'scratch operand']
  %s0 = inlined_call_operand.hbm [shape: f32[8,8,256], index: 0, kind: input, shape index: {}]
  %s1 = inlined_call_operand.hbm [shape: f32[256], index: 1, kind: input, shape index: {}]
  %s2 = inlined_call_operand.hbm [shape: f32[32], index: 2, kind: input, shape index: {}]
  %s3 = inlined_call_operand.hbm [shape: bf16[8192,128], index: 3, kind: input, shape index: {}]
  %s4 = inlined_call_operand.hbm [shape: f32[1,128], index: 4, kind: input, shape index: {}]
  %s5 = inlined_call_operand.hbm [shape: bf16[128,128], index: 5, kind: input, shape index: {}]
  %s6 = inlined_call_operand.hbm [shape: f32[1,128], index: 6, kind: input, shape index: {}]
  %s7 = inlined_call_operand.hbm [shape: f32[8,128], index: 7, kind: output, shape index: {}]
  %s8 = sld [smem:[#allocation0]]
  $region66: #{tpu_custom_call.1} parent=0
    _
  %s10 = ssub.s32 1, %s8
  %s11 = scalar_select 0, %s10, %s8
  $region1: #{tpu_custom_call.1} parent=0
    #allocation3 [shape = 'u8[65536]{0}', space=vmem, size = 0x10000, scoped, tag = 'input window, operand 0, single buffered']
    #allocation4 [shape = 's32[1]{0}', space=sflag, size = 0x4, scoped, tag = 'scoped memory for tpu_custom_call.1']
    #allocation5 [shape = 's32[1]{0}', space=sflag, size = 0x4, scoped, tag = 'scoped memory for tpu_custom_call.1']
    #allocation6 [shape = 's32[1]{0}', space=sflag, size = 0x4, scoped, tag = 'scoped memory for tpu_custom_call.1']
    #allocation7 [shape = 'u8[1024]{0}', space=smem, size = 0x400, scoped, tag = 'input window, operand 1, single buffered']
    #allocation8 [shape = 'u8[512]{0}', space=smem, size = 0x200, scoped, tag = 'input window, operand 2, single buffered']
    #allocation9 [shape = 's32[1]{0}', space=sflag, size = 0x4, scoped, tag = 'scoped memory for tpu_custom_call.1']
    #allocation10 [shape = 'u8[2097152]{0}', space=vmem, size = 0x200000, scoped, tag = 'input window, operand 3, single buffered']
    #allocation11 [shape = 's32[1]{0}', space=sflag, size = 0x4, scoped, tag = 'scoped memory for tpu_custom_call.1']
    #allocation12 [shape = 'u8[512]{0}', space=vmem, size = 0x400, scoped, tag = 'input window, operand 4, single buffered']
    #allocation13 [shape = 'u8[32768]{0}', space=vmem, size = 0x8000, scoped, tag = 'input window, operand 5, single buffered']
    #allocation14 [shape = 's32[1]{0}', space=sflag, size = 0x4, scoped, tag = 'scoped memory for tpu_custom_call.1']
    #allocation15 [shape = 'u8[512]{0}', space=vmem, size = 0x400, scoped, tag = 'input window, operand 6, single buffered']
    #allocation16 [shape = 'u8[4096]{0}', space=vmem, size = 0x1000, scoped, tag = 'output window, operand 0, single buffered']
    %12 = vsyncpa [#allocation4], 0
    %13 = vsyncpa [#allocation6], 0
    %14 = vsyncpa [#allocation9], 0
    %15 = vsyncpa [#allocation11], 0
    %16 = vsyncpa [#allocation14], 0
    %17 = vsyncpa [#allocation5], 0
    // Predicated region
    $region2: #{tpu_custom_call.1} parent=1 // pred_check
      _
    $region3: #{tpu_custom_call.1} parent=1 // pred_check_branch
      %19 = sbr.rel (0) target = $region5
    $region4: #{tpu_custom_call.1} parent=1 // pred_region
      %s21 = ssub.s32 2048, 2048
      %22 = vsyncadd [#allocation4], %s21
      %s23 = sshll.u32 [#allocation3], 4
      %s24 = int_to_ptr.vmem [resolvable:$true] %s23
      %29 = dma.hbm_to_vmem [thread:$0]  %s0, 2048, %s24, [#allocation4], 256, 256, 16
    $region5: #{tpu_custom_call.1} parent=1 // pred_fallthru
      _
    // Predicated region
    $region6: #{tpu_custom_call.1} parent=1 // pred_check
      _
    $region7: #{tpu_custom_call.1} parent=1 // pred_check_branch
      %31 = sbr.rel (0) target = $region9
    $region8: #{tpu_custom_call.1} parent=1 // pred_region
      %s33 = ssub.s32 32, 32
      %34 = vsyncadd [#allocation6], %s33
      %37 = dma.hbm_to_smem %s1, 32, [#allocation7], [#allocation6]
    $region9: #{tpu_custom_call.1} parent=1 // pred_fallthru
      _
    // Predicated region
    $region10: #{tpu_custom_call.1} parent=1 // pred_check
      _
    $region11: #{tpu_custom_call.1} parent=1 // pred_check_branch
      %39 = sbr.rel (0) target = $region13
    $region12: #{tpu_custom_call.1} parent=1 // pred_region
      %s41 = ssub.s32 16, 16
      %42 = vsyncadd [#allocation9], %s41
      %45 = dma.hbm_to_smem %s2, 16, [#allocation8], [#allocation9]
    $region13: #{tpu_custom_call.1} parent=1 // pred_fallthru
      _
    // Predicated region
    $region14: #{tpu_custom_call.1} parent=1 // pred_check
      _
    $region15: #{tpu_custom_call.1} parent=1 // pred_check_branch
      %47 = sbr.rel (0) target = $region17
    $region16: #{tpu_custom_call.1} parent=1 // pred_region
      %s49 = ssub.s32 65536, 65536
      %50 = vsyncadd [#allocation11], %s49
      %s51 = sshll.u32 [#allocation10], 4
      %s52 = int_to_ptr.vmem [resolvable:$true] %s51
      %57 = dma.hbm_to_vmem [thread:$0]  %s3, 65536, %s52, [#allocation11], 64, 64, 4
    $region17: #{tpu_custom_call.1} parent=1 // pred_fallthru
      _
    // Predicated region
    $region18: #{tpu_custom_call.1} parent=1 // pred_check
      _
    $region19: #{tpu_custom_call.1} parent=1 // pred_check_branch
      %59 = sbr.rel (0) target = $region21
    $region20: #{tpu_custom_call.1} parent=1 // pred_region
      %s61 = ssub.s32 16, 16
      %62 = vsyncadd [#allocation11], %s61
      %s64 = sshll.u32 [#allocation12], 4
      %s65 = int_to_ptr.vmem [resolvable:$true] %s64
      %67 = dma.hbm_to_vmem [thread:$0]  %s4, 16, %s65, [#allocation11]
    $region21: #{tpu_custom_call.1} parent=1 // pred_fallthru
      _
    // Predicated region
    $region22: #{tpu_custom_call.1} parent=1 // pred_check
      _
    $region23: #{tpu_custom_call.1} parent=1 // pred_check_branch
      %69 = sbr.rel (0) target = $region25
    $region24: #{tpu_custom_call.1} parent=1 // pred_region
      %s71 = ssub.s32 1024, 1024
      %72 = vsyncadd [#allocation14], %s71
      %s73 = sshll.u32 [#allocation13], 4
      %s74 = int_to_ptr.vmem [resolvable:$true] %s73
      %79 = dma.hbm_to_vmem [thread:$0]  %s5, 1024, %s74, [#allocation14], 64, 64, 4
    $region25: #{tpu_custom_call.1} parent=1 // pred_fallthru
      _
    // Predicated region
    $region26: #{tpu_custom_call.1} parent=1 // pred_check
      _
    $region27: #{tpu_custom_call.1} parent=1 // pred_check_branch
      %81 = sbr.rel (0) target = $region29
    $region28: #{tpu_custom_call.1} parent=1 // pred_region
      %s83 = ssub.s32 16, 16
      %84 = vsyncadd [#allocation14], %s83
      %s86 = sshll.u32 [#allocation15], 4
      %s87 = int_to_ptr.vmem [resolvable:$true] %s86
      %89 = dma.hbm_to_vmem [thread:$0]  %s6, 16, %s87, [#allocation14]
    $region29: #{tpu_custom_call.1} parent=1 // pred_fallthru
      _
    // Predicated region
    $region30: #{tpu_custom_call.1} parent=1 // pred_check
      _
    $region31: #{tpu_custom_call.1} parent=1 // pred_check_branch
      %91 = sbr.rel (0) target = $region33
    $region32: #{tpu_custom_call.1} parent=1 // pred_region
      %92 = dma.done [#allocation4], 2048
    $region33: #{tpu_custom_call.1} parent=1 // pred_fallthru
      _
    // Predicated region
    $region34: #{tpu_custom_call.1} parent=1 // pred_check
      _
    $region35: #{tpu_custom_call.1} parent=1 // pred_check_branch
      %94 = sbr.rel (0) target = $region37
    $region36: #{tpu_custom_call.1} parent=1 // pred_region
      %95 = dma.done [#allocation6], 32
    $region37: #{tpu_custom_call.1} parent=1 // pred_fallthru
      _
    // Predicated region
    $region38: #{tpu_custom_call.1} parent=1 // pred_check
      _
    $region39: #{tpu_custom_call.1} parent=1 // pred_check_branch
      %97 = sbr.rel (0) target = $region41
    $region40: #{tpu_custom_call.1} parent=1 // pred_region
      %98 = dma.done [#allocation9], 16
    $region41: #{tpu_custom_call.1} parent=1 // pred_fallthru
      _
    // Predicated region
    $region42: #{tpu_custom_call.1} parent=1 // pred_check
      _
    $region43: #{tpu_custom_call.1} parent=1 // pred_check_branch
      %100 = sbr.rel (0) target = $region45
    $region44: #{tpu_custom_call.1} parent=1 // pred_region
      %101 = dma.done [#allocation11], 65536
    $region45: #{tpu_custom_call.1} parent=1 // pred_fallthru
      _
    // Predicated region
    $region46: #{tpu_custom_call.1} parent=1 // pred_check
      _
    $region47: #{tpu_custom_call.1} parent=1 // pred_check_branch
      %103 = sbr.rel (0) target = $region49
    $region48: #{tpu_custom_call.1} parent=1 // pred_region
      %104 = dma.done [#allocation11], 16
    $region49: #{tpu_custom_call.1} parent=1 // pred_fallthru
      _
    // Predicated region
    $region50: #{tpu_custom_call.1} parent=1 // pred_check
      _
    $region51: #{tpu_custom_call.1} parent=1 // pred_check_branch
      %106 = sbr.rel (0) target = $region53
    $region52: #{tpu_custom_call.1} parent=1 // pred_region
      %107 = dma.done [#allocation14], 1024
    $region53: #{tpu_custom_call.1} parent=1 // pred_fallthru
      _
    // Predicated region
    $region54: #{tpu_custom_call.1} parent=1 // pred_check
      _
    $region55: #{tpu_custom_call.1} parent=1 // pred_check_branch
      %109 = sbr.rel (0) target = $region57
    $region56: #{tpu_custom_call.1} parent=1 // pred_region
      %110 = dma.done [#allocation14], 16
    $region57: #{tpu_custom_call.1} parent=1 // pred_fallthru
      _
    %111 = sfence
    %s113 = smul.u32 0, 2
    %s114 = smul.addr %s113, 8
    %s115 = scalar_lea.vmem [#allocation3], %s114
    %v116 = vld [vmem:[%s115] sm:$0xff]
    %v117 = vld [vmem:[%s115 + $0x8] sm:$0xff]
    %s118 = sadd.s32 %s113, 2
    %s119 = smul.addr %s118, 8
    %s120 = scalar_lea.vmem [#allocation3], %s119
    %v121 = vld [vmem:[%s120] sm:$0xff]
    %v122 = vld [vmem:[%s120 + $0x8] sm:$0xff]
    %s123 = sadd.s32 %s113, 4
    %s124 = smul.addr %s123, 8
    %s125 = scalar_lea.vmem [#allocation3], %s124
    %v126 = vld [vmem:[%s125] sm:$0xff]
    %v127 = vld [vmem:[%s125 + $0x8] sm:$0xff]
    %s128 = sadd.s32 %s113, 6
    %s129 = smul.addr %s128, 8
    %s130 = scalar_lea.vmem [#allocation3], %s129
    %v131 = vld [vmem:[%s130] sm:$0xff]
    %v132 = vld [vmem:[%s130 + $0x8] sm:$0xff]
    %s133 = sadd.s32 %s113, 8
    %s134 = smul.addr %s133, 8
    %s135 = scalar_lea.vmem [#allocation3], %s134
    %v136 = vld [vmem:[%s135] sm:$0xff]
    %v137 = vld [vmem:[%s135 + $0x8] sm:$0xff]
    %s138 = sadd.s32 %s113, 10
    %s139 = smul.addr %s138, 8
    %s140 = scalar_lea.vmem [#allocation3], %s139
    %v141 = vld [vmem:[%s140] sm:$0xff]
    %v142 = vld [vmem:[%s140 + $0x8] sm:$0xff]
    %s143 = sadd.s32 %s113, 12
    %s144 = smul.addr %s143, 8
    %s145 = scalar_lea.vmem [#allocation3], %s144
    %v146 = vld [vmem:[%s145] sm:$0xff]
    %v147 = vld [vmem:[%s145 + $0x8] sm:$0xff]
    %s148 = sadd.s32 %s113, 14
    %s149 = smul.addr %s148, 8
    %s150 = scalar_lea.vmem [#allocation3], %s149
    %v151 = vld [vmem:[%s150] sm:$0xff]
    %v152 = vld [vmem:[%s150 + $0x8] sm:$0xff]
    %s153 = sld [smem:[#allocation7]]
    %v154 = vstv %s153
    %v155 = vmul.f32 %v116, %v154
    %v156 = vmul.f32 %v117, %v154
    %s157 = sld [smem:[#allocation7 + $0x1]]
    %v158 = vstv %s157
    %v159 = vmul.f32 %v121, %v158
    %v160 = vmul.f32 %v122, %v158
    %v161 = vadd.f32 %v155, %v159
    %v162 = vadd.f32 %v156, %v160
    %s163 = sld [smem:[#allocation7 + $0x2]]
    %v164 = vstv %s163
    %v165 = vmul.f32 %v126, %v164
    %v166 = vmul.f32 %v127, %v164
    %v167 = vadd.f32 %v161, %v165
    %v168 = vadd.f32 %v162, %v166
    %s169 = sld [smem:[#allocation7 + $0x3]]
    %v170 = vstv %s169
    %v171 = vmul.f32 %v131, %v170
    %v172 = vmul.f32 %v132, %v170
    %v173 = vadd.f32 %v167, %v171
    %v174 = vadd.f32 %v168, %v172
    %s175 = sld [smem:[#allocation7 + $0x4]]
    %v176 = vstv %s175
    %v177 = vmul.f32 %v136, %v176
    %v178 = vmul.f32 %v137, %v176
    %v179 = vadd.f32 %v173, %v177
    %v180 = vadd.f32 %v174, %v178
    %s181 = sld [smem:[#allocation7 + $0x5]]
    %v182 = vstv %s181
    %v183 = vmul.f32 %v141, %v182
    %v184 = vmul.f32 %v142, %v182
    %v185 = vadd.f32 %v179, %v183
    %v186 = vadd.f32 %v180, %v184
    %s187 = sld [smem:[#allocation7 + $0x6]]
    %v188 = vstv %s187
    %v189 = vmul.f32 %v146, %v188
    %v190 = vmul.f32 %v147, %v188
    %v191 = vadd.f32 %v185, %v189
    %v192 = vadd.f32 %v186, %v190
    %s193 = sld [smem:[#allocation7 + $0x7]]
    %v194 = vstv %s193
    %v195 = vmul.f32 %v151, %v194
    %v196 = vmul.f32 %v152, %v194
    %v197 = vadd.f32 %v191, %v195
    %v198 = vadd.f32 %v192, %v196
    %s199 = sld [smem:[#allocation8]]
    %v200 = vstv %s199
    %v201 = vadd.f32 %v197, %v200
    %v202 = vadd.f32 %v198, %v200
    %v203 = vmax.f32 %v201, 0.0
    %v204 = vmax.f32 %v202, 0.0
    %s205 = smul.u32 0, 64
    %s206 = smul.addr %s205, 8
    %s207 = scalar_lea.vmem [#allocation2], %s206
    %208 = vst [vmem:[%s207] sm:$0xff] %v203
    %209 = vst [vmem:[%s207 + $0x8] sm:$0xff] %v204
    %s210 = sld [smem:[#allocation7 + $0x8]]
    %v211 = vstv %s210
    %v212 = vmul.f32 %v116, %v211
    %v213 = vmul.f32 %v117, %v211
    %s214 = sld [smem:[#allocation7 + $0x9]]
    %v215 = vstv %s214
    %v216 = vmul.f32 %v121, %v215
    %v217 = vmul.f32 %v122, %v215
    %v218 = vadd.f32 %v212, %v216
    %v219 = vadd.f32 %v213, %v217
    %s220 = sld [smem:[#allocation7 + $0xa]]
    %v221 = vstv %s220
    %v222 = vmul.f32 %v126, %v221
    %v223 = vmul.f32 %v127, %v221
    %v224 = vadd.f32 %v218, %v222
    %v225 = vadd.f32 %v219, %v223
    %s226 = sld [smem:[#allocation7 + $0xb]]
    %v227 = vstv %s226
    %v228 = vmul.f32 %v131, %v227
    %v229 = vmul.f32 %v132, %v227
    %v230 = vadd.f32 %v224, %v228
    %v231 = vadd.f32 %v225, %v229
    %s232 = sld [smem:[#allocation7 + $0xc]]
    %v233 = vstv %s232
    %v234 = vmul.f32 %v136, %v233
    %v235 = vmul.f32 %v137, %v233
    %v236 = vadd.f32 %v230, %v234
    %v237 = vadd.f32 %v231, %v235
    %s238 = sld [smem:[#allocation7 + $0xd]]
    %v239 = vstv %s238
    %v240 = vmul.f32 %v141, %v239
    %v241 = vmul.f32 %v142, %v239
    %v242 = vadd.f32 %v236, %v240
    %v243 = vadd.f32 %v237, %v241
    %s244 = sld [smem:[#allocation7 + $0xe]]
    %v245 = vstv %s244
    %v246 = vmul.f32 %v146, %v245
    %v247 = vmul.f32 %v147, %v245
    %v248 = vadd.f32 %v242, %v246
    %v249 = vadd.f32 %v243, %v247
    %s250 = sld [smem:[#allocation7 + $0xf]]
    %v251 = vstv %s250
    %v252 = vmul.f32 %v151, %v251
    %v253 = vmul.f32 %v152, %v251
    %v254 = vadd.f32 %v248, %v252
    %v255 = vadd.f32 %v249, %v253
    %s256 = sld [smem:[#allocation8 + $0x1]]
    %v257 = vstv %s256
    %v258 = vadd.f32 %v254, %v257
    %v259 = vadd.f32 %v255, %v257
    %v260 = vmax.f32 %v258, 0.0
    %v261 = vmax.f32 %v259, 0.0
    %262 = vst [vmem:[%s207 + $0x10] sm:$0xff] %v260
    %263 = vst [vmem:[%s207 + $0x18] sm:$0xff] %v261
    %s264 = sld [smem:[#allocation7 + $0x10]]
    %v265 = vstv %s264
    %v266 = vmul.f32 %v116, %v265
    %v267 = vmul.f32 %v117, %v265
    %s268 = sld [smem:[#allocation7 + $0x11]]
    %v269 = vstv %s268
    %v270 = vmul.f32 %v121, %v269
    %v271 = vmul.f32 %v122, %v269
    %v272 = vadd.f32 %v266, %v270
    %v273 = vadd.f32 %v267, %v271
    %s274 = sld [smem:[#allocation7 + $0x12]]
    %v275 = vstv %s274
    %v276 = vmul.f32 %v126, %v275
    %v277 = vmul.f32 %v127, %v275
    %v278 = vadd.f32 %v272, %v276
    %v279 = vadd.f32 %v273, %v277
    %s280 = sld [smem:[#allocation7 + $0x13]]
    %v281 = vstv %s280
    %v282 = vmul.f32 %v131, %v281
    %v283 = vmul.f32 %v132, %v281
    %v284 = vadd.f32 %v278, %v282
    %v285 = vadd.f32 %v279, %v283
    %s286 = sld [smem:[#allocation7 + $0x14]]
    %v287 = vstv %s286
    %v288 = vmul.f32 %v136, %v287
    %v289 = vmul.f32 %v137, %v287
    %v290 = vadd.f32 %v284, %v288
    %v291 = vadd.f32 %v285, %v289
    %s292 = sld [smem:[#allocation7 + $0x15]]
    %v293 = vstv %s292
    %v294 = vmul.f32 %v141, %v293
    %v295 = vmul.f32 %v142, %v293
    %v296 = vadd.f32 %v290, %v294
    %v297 = vadd.f32 %v291, %v295
    %s298 = sld [smem:[#allocation7 + $0x16]]
    %v299 = vstv %s298
    %v300 = vmul.f32 %v146, %v299
    %v301 = vmul.f32 %v147, %v299
    %v302 = vadd.f32 %v296, %v300
    %v303 = vadd.f32 %v297, %v301
    %s304 = sld [smem:[#allocation7 + $0x17]]
    %v305 = vstv %s304
    %v306 = vmul.f32 %v151, %v305
    %v307 = vmul.f32 %v152, %v305
    %v308 = vadd.f32 %v302, %v306
    %v309 = vadd.f32 %v303, %v307
    %s310 = sld [smem:[#allocation8 + $0x2]]
    %v311 = vstv %s310
    %v312 = vadd.f32 %v308, %v311
    %v313 = vadd.f32 %v309, %v311
    %v314 = vmax.f32 %v312, 0.0
    %v315 = vmax.f32 %v313, 0.0
    %316 = vst [vmem:[%s207 + $0x20] sm:$0xff] %v314
    %317 = vst [vmem:[%s207 + $0x28] sm:$0xff] %v315
    %s318 = sld [smem:[#allocation7 + $0x18]]
    %v319 = vstv %s318
    %v320 = vmul.f32 %v116, %v319
    %v321 = vmul.f32 %v117, %v319
    %s322 = sld [smem:[#allocation7 + $0x19]]
    %v323 = vstv %s322
    %v324 = vmul.f32 %v121, %v323
    %v325 = vmul.f32 %v122, %v323
    %v326 = vadd.f32 %v320, %v324
    %v327 = vadd.f32 %v321, %v325
    %s328 = sld [smem:[#allocation7 + $0x1a]]
    %v329 = vstv %s328
    %v330 = vmul.f32 %v126, %v329
    %v331 = vmul.f32 %v127, %v329
    %v332 = vadd.f32 %v326, %v330
    %v333 = vadd.f32 %v327, %v331
    %s334 = sld [smem:[#allocation7 + $0x1b]]
    %v335 = vstv %s334
    %v336 = vmul.f32 %v131, %v335
    %v337 = vmul.f32 %v132, %v335
    %v338 = vadd.f32 %v332, %v336
    %v339 = vadd.f32 %v333, %v337
    %s340 = sld [smem:[#allocation7 + $0x1c]]
    %v341 = vstv %s340
    %v342 = vmul.f32 %v136, %v341
    %v343 = vmul.f32 %v137, %v341
    %v344 = vadd.f32 %v338, %v342
    %v345 = vadd.f32 %v339, %v343
    %s346 = sld [smem:[#allocation7 + $0x1d]]
    %v347 = vstv %s346
    %v348 = vmul.f32 %v141, %v347
    %v349 = vmul.f32 %v142, %v347
    %v350 = vadd.f32 %v344, %v348
    %v351 = vadd.f32 %v345, %v349
    %s352 = sld [smem:[#allocation7 + $0x1e]]
    %v353 = vstv %s352
    %v354 = vmul.f32 %v146, %v353
    %v355 = vmul.f32 %v147, %v353
    %v356 = vadd.f32 %v350, %v354
    %v357 = vadd.f32 %v351, %v355
    %s358 = sld [smem:[#allocation7 + $0x1f]]
    %v359 = vstv %s358
    %v360 = vmul.f32 %v151, %v359
    %v361 = vmul.f32 %v152, %v359
    %v362 = vadd.f32 %v356, %v360
    %v363 = vadd.f32 %v357, %v361
    %s364 = sld [smem:[#allocation8 + $0x3]]
    %v365 = vstv %s364
    %v366 = vadd.f32 %v362, %v365
    %v367 = vadd.f32 %v363, %v365
    %v368 = vmax.f32 %v366, 0.0
    %v369 = vmax.f32 %v367, 0.0
    %370 = vst [vmem:[%s207 + $0x30] sm:$0xff] %v368
    %371 = vst [vmem:[%s207 + $0x38] sm:$0xff] %v369
    %s372 = sld [smem:[#allocation7 + $0x20]]
    %v373 = vstv %s372
    %v374 = vmul.f32 %v116, %v373
    %v375 = vmul.f32 %v117, %v373
    %s376 = sld [smem:[#allocation7 + $0x21]]
    %v377 = vstv %s376
    %v378 = vmul.f32 %v121, %v377
    %v379 = vmul.f32 %v122, %v377
    %v380 = vadd.f32 %v374, %v378
    %v381 = vadd.f32 %v375, %v379
    %s382 = sld [smem:[#allocation7 + $0x22]]
    %v383 = vstv %s382
    %v384 = vmul.f32 %v126, %v383
    %v385 = vmul.f32 %v127, %v383
    %v386 = vadd.f32 %v380, %v384
    %v387 = vadd.f32 %v381, %v385
    %s388 = sld [smem:[#allocation7 + $0x23]]
    %v389 = vstv %s388
    %v390 = vmul.f32 %v131, %v389
    %v391 = vmul.f32 %v132, %v389
    %v392 = vadd.f32 %v386, %v390
    %v393 = vadd.f32 %v387, %v391
    %s394 = sld [smem:[#allocation7 + $0x24]]
    %v395 = vstv %s394
    %v396 = vmul.f32 %v136, %v395
    %v397 = vmul.f32 %v137, %v395
    %v398 = vadd.f32 %v392, %v396
    %v399 = vadd.f32 %v393, %v397
    %s400 = sld [smem:[#allocation7 + $0x25]]
    %v401 = vstv %s400
    %v402 = vmul.f32 %v141, %v401
    %v403 = vmul.f32 %v142, %v401
    %v404 = vadd.f32 %v398, %v402
    %v405 = vadd.f32 %v399, %v403
    %s406 = sld [smem:[#allocation7 + $0x26]]
    %v407 = vstv %s406
    %v408 = vmul.f32 %v146, %v407
    %v409 = vmul.f32 %v147, %v407
    %v410 = vadd.f32 %v404, %v408
    %v411 = vadd.f32 %v405, %v409
    %s412 = sld [smem:[#allocation7 + $0x27]]
    %v413 = vstv %s412
    %v414 = vmul.f32 %v151, %v413
    %v415 = vmul.f32 %v152, %v413
    %v416 = vadd.f32 %v410, %v414
    %v417 = vadd.f32 %v411, %v415
    %s418 = sld [smem:[#allocation8 + $0x4]]
    %v419 = vstv %s418
    %v420 = vadd.f32 %v416, %v419
    %v421 = vadd.f32 %v417, %v419
    %v422 = vmax.f32 %v420, 0.0
    %v423 = vmax.f32 %v421, 0.0
    %424 = vst [vmem:[%s207 + $0x40] sm:$0xff] %v422
    %425 = vst [vmem:[%s207 + $0x48] sm:$0xff] %v423
    %s426 = sld [smem:[#allocation7 + $0x28]]
    %v427 = vstv %s426
    %v428 = vmul.f32 %v116, %v427
    %v429 = vmul.f32 %v117, %v427
    %s430 = sld [smem:[#allocation7 + $0x29]]
    %v431 = vstv %s430
    %v432 = vmul.f32 %v121, %v431
    %v433 = vmul.f32 %v122, %v431
    %v434 = vadd.f32 %v428, %v432
    %v435 = vadd.f32 %v429, %v433
    %s436 = sld [smem:[#allocation7 + $0x2a]]
    %v437 = vstv %s436
    %v438 = vmul.f32 %v126, %v437
    %v439 = vmul.f32 %v127, %v437
    %v440 = vadd.f32 %v434, %v438
    %v441 = vadd.f32 %v435, %v439
    %s442 = sld [smem:[#allocation7 + $0x2b]]
    %v443 = vstv %s442
    %v444 = vmul.f32 %v131, %v443
    %v445 = vmul.f32 %v132, %v443
    %v446 = vadd.f32 %v440, %v444
    %v447 = vadd.f32 %v441, %v445
    %s448 = sld [smem:[#allocation7 + $0x2c]]
    %v449 = vstv %s448
    %v450 = vmul.f32 %v136, %v449
    %v451 = vmul.f32 %v137, %v449
    %v452 = vadd.f32 %v446, %v450
    %v453 = vadd.f32 %v447, %v451
    %s454 = sld [smem:[#allocation7 + $0x2d]]
    %v455 = vstv %s454
    %v456 = vmul.f32 %v141, %v455
    %v457 = vmul.f32 %v142, %v455
    %v458 = vadd.f32 %v452, %v456
    %v459 = vadd.f32 %v453, %v457
    %s460 = sld [smem:[#allocation7 + $0x2e]]
    %v461 = vstv %s460
    %v462 = vmul.f32 %v146, %v461
    %v463 = vmul.f32 %v147, %v461
    %v464 = vadd.f32 %v458, %v462
    %v465 = vadd.f32 %v459, %v463
    %s466 = sld [smem:[#allocation7 + $0x2f]]
    %v467 = vstv %s466
    %v468 = vmul.f32 %v151, %v467
    %v469 = vmul.f32 %v152, %v467
    %v470 = vadd.f32 %v464, %v468
    %v471 = vadd.f32 %v465, %v469
    %s472 = sld [smem:[#allocation8 + $0x5]]
    %v473 = vstv %s472
    %v474 = vadd.f32 %v470, %v473
    %v475 = vadd.f32 %v471, %v473
    %v476 = vmax.f32 %v474, 0.0
    %v477 = vmax.f32 %v475, 0.0
    %478 = vst [vmem:[%s207 + $0x50] sm:$0xff] %v476
    %479 = vst [vmem:[%s207 + $0x58] sm:$0xff] %v477
    %s480 = sld [smem:[#allocation7 + $0x30]]
    %v481 = vstv %s480
    %v482 = vmul.f32 %v116, %v481
    %v483 = vmul.f32 %v117, %v481
    %s484 = sld [smem:[#allocation7 + $0x31]]
    %v485 = vstv %s484
    %v486 = vmul.f32 %v121, %v485
    %v487 = vmul.f32 %v122, %v485
    %v488 = vadd.f32 %v482, %v486
    %v489 = vadd.f32 %v483, %v487
    %s490 = sld [smem:[#allocation7 + $0x32]]
    %v491 = vstv %s490
    %v492 = vmul.f32 %v126, %v491
    %v493 = vmul.f32 %v127, %v491
    %v494 = vadd.f32 %v488, %v492
    %v495 = vadd.f32 %v489, %v493
    %s496 = sld [smem:[#allocation7 + $0x33]]
    %v497 = vstv %s496
    %v498 = vmul.f32 %v131, %v497
    %v499 = vmul.f32 %v132, %v497
    %v500 = vadd.f32 %v494, %v498
    %v501 = vadd.f32 %v495, %v499
    %s502 = sld [smem:[#allocation7 + $0x34]]
    %v503 = vstv %s502
    %v504 = vmul.f32 %v136, %v503
    %v505 = vmul.f32 %v137, %v503
    %v506 = vadd.f32 %v500, %v504
    %v507 = vadd.f32 %v501, %v505
    %s508 = sld [smem:[#allocation7 + $0x35]]
    %v509 = vstv %s508
    %v510 = vmul.f32 %v141, %v509
    %v511 = vmul.f32 %v142, %v509
    %v512 = vadd.f32 %v506, %v510
    %v513 = vadd.f32 %v507, %v511
    %s514 = sld [smem:[#allocation7 + $0x36]]
    %v515 = vstv %s514
    %v516 = vmul.f32 %v146, %v515
    %v517 = vmul.f32 %v147, %v515
    %v518 = vadd.f32 %v512, %v516
    %v519 = vadd.f32 %v513, %v517
    %s520 = sld [smem:[#allocation7 + $0x37]]
    %v521 = vstv %s520
    %v522 = vmul.f32 %v151, %v521
    %v523 = vmul.f32 %v152, %v521
    %v524 = vadd.f32 %v518, %v522
    %v525 = vadd.f32 %v519, %v523
    %s526 = sld [smem:[#allocation8 + $0x6]]
    %v527 = vstv %s526
    %v528 = vadd.f32 %v524, %v527
    %v529 = vadd.f32 %v525, %v527
    %v530 = vmax.f32 %v528, 0.0
    %v531 = vmax.f32 %v529, 0.0
    %532 = vst [vmem:[%s207 + $0x60] sm:$0xff] %v530
    %533 = vst [vmem:[%s207 + $0x68] sm:$0xff] %v531
    %s534 = sld [smem:[#allocation7 + $0x38]]
    %v535 = vstv %s534
    %v536 = vmul.f32 %v116, %v535
    %v537 = vmul.f32 %v117, %v535
    %s538 = sld [smem:[#allocation7 + $0x39]]
    %v539 = vstv %s538
    %v540 = vmul.f32 %v121, %v539
    %v541 = vmul.f32 %v122, %v539
    %v542 = vadd.f32 %v536, %v540
    %v543 = vadd.f32 %v537, %v541
    %s544 = sld [smem:[#allocation7 + $0x3a]]
    %v545 = vstv %s544
    %v546 = vmul.f32 %v126, %v545
    %v547 = vmul.f32 %v127, %v545
    %v548 = vadd.f32 %v542, %v546
    %v549 = vadd.f32 %v543, %v547
    %s550 = sld [smem:[#allocation7 + $0x3b]]
    %v551 = vstv %s550
    %v552 = vmul.f32 %v131, %v551
    %v553 = vmul.f32 %v132, %v551
    %v554 = vadd.f32 %v548, %v552
    %v555 = vadd.f32 %v549, %v553
    %s556 = sld [smem:[#allocation7 + $0x3c]]
    %v557 = vstv %s556
    %v558 = vmul.f32 %v136, %v557
    %v559 = vmul.f32 %v137, %v557
    %v560 = vadd.f32 %v554, %v558
    %v561 = vadd.f32 %v555, %v559
    %s562 = sld [smem:[#allocation7 + $0x3d]]
    %v563 = vstv %s562
    %v564 = vmul.f32 %v141, %v563
    %v565 = vmul.f32 %v142, %v563
    %v566 = vadd.f32 %v560, %v564
    %v567 = vadd.f32 %v561, %v565
    %s568 = sld [smem:[#allocation7 + $0x3e]]
    %v569 = vstv %s568
    %v570 = vmul.f32 %v146, %v569
    %v571 = vmul.f32 %v147, %v569
    %v572 = vadd.f32 %v566, %v570
    %v573 = vadd.f32 %v567, %v571
    %s574 = sld [smem:[#allocation7 + $0x3f]]
    %v575 = vstv %s574
    %v576 = vmul.f32 %v151, %v575
    %v577 = vmul.f32 %v152, %v575
    %v578 = vadd.f32 %v572, %v576
    %v579 = vadd.f32 %v573, %v577
    %s580 = sld [smem:[#allocation8 + $0x7]]
    %v581 = vstv %s580
    %v582 = vadd.f32 %v578, %v581
    %v583 = vadd.f32 %v579, %v581
    %v584 = vmax.f32 %v582, 0.0
    %v585 = vmax.f32 %v583, 0.0
    %586 = vst [vmem:[%s207 + $0x70] sm:$0xff] %v584
    %587 = vst [vmem:[%s207 + $0x78] sm:$0xff] %v585
    %s588 = sld [smem:[#allocation7 + $0x40]]
    %v589 = vstv %s588
    %v590 = vmul.f32 %v116, %v589
    %v591 = vmul.f32 %v117, %v589
    %s592 = sld [smem:[#allocation7 + $0x41]]
    %v593 = vstv %s592
    %v594 = vmul.f32 %v121, %v593
    %v595 = vmul.f32 %v122, %v593
    %v596 = vadd.f32 %v590, %v594
    %v597 = vadd.f32 %v591, %v595
    %s598 = sld [smem:[#allocation7 + $0x42]]
    %v599 = vstv %s598
    %v600 = vmul.f32 %v126, %v599
    %v601 = vmul.f32 %v127, %v599
    %v602 = vadd.f32 %v596, %v600
    %v603 = vadd.f32 %v597, %v601
    %s604 = sld [smem:[#allocation7 + $0x43]]
    %v605 = vstv %s604
    %v606 = vmul.f32 %v131, %v605
    %v607 = vmul.f32 %v132, %v605
    %v608 = vadd.f32 %v602, %v606
    %v609 = vadd.f32 %v603, %v607
    %s610 = sld [smem:[#allocation7 + $0x44]]
    %v611 = vstv %s610
    %v612 = vmul.f32 %v136, %v611
    %v613 = vmul.f32 %v137, %v611
    %v614 = vadd.f32 %v608, %v612
    %v615 = vadd.f32 %v609, %v613
    %s616 = sld [smem:[#allocation7 + $0x45]]
    %v617 = vstv %s616
    %v618 = vmul.f32 %v141, %v617
    %v619 = vmul.f32 %v142, %v617
    %v620 = vadd.f32 %v614, %v618
    %v621 = vadd.f32 %v615, %v619
    %s622 = sld [smem:[#allocation7 + $0x46]]
    %v623 = vstv %s622
    %v624 = vmul.f32 %v146, %v623
    %v625 = vmul.f32 %v147, %v623
    %v626 = vadd.f32 %v620, %v624
    %v627 = vadd.f32 %v621, %v625
    %s628 = sld [smem:[#allocation7 + $0x47]]
    %v629 = vstv %s628
    %v630 = vmul.f32 %v151, %v629
    %v631 = vmul.f32 %v152, %v629
    %v632 = vadd.f32 %v626, %v630
    %v633 = vadd.f32 %v627, %v631
    %s634 = sld [smem:[#allocation8 + $0x8]]
    %v635 = vstv %s634
    %v636 = vadd.f32 %v632, %v635
    %v637 = vadd.f32 %v633, %v635
    %v638 = vmax.f32 %v636, 0.0
    %v639 = vmax.f32 %v637, 0.0
    %640 = vst [vmem:[%s207 + $0x80] sm:$0xff] %v638
    %641 = vst [vmem:[%s207 + $0x88] sm:$0xff] %v639
    %s642 = sld [smem:[#allocation7 + $0x48]]
    %v643 = vstv %s642
    %v644 = vmul.f32 %v116, %v643
    %v645 = vmul.f32 %v117, %v643
    %s646 = sld [smem:[#allocation7 + $0x49]]
    %v647 = vstv %s646
    %v648 = vmul.f32 %v121, %v647
    %v649 = vmul.f32 %v122, %v647
    %v650 = vadd.f32 %v644, %v648
    %v651 = vadd.f32 %v645, %v649
    %s652 = sld [smem:[#allocation7 + $0x4a]]
    %v653 = vstv %s652
    %v654 = vmul.f32 %v126, %v653
    %v655 = vmul.f32 %v127, %v653
    %v656 = vadd.f32 %v650, %v654
    %v657 = vadd.f32 %v651, %v655
    %s658 = sld [smem:[#allocation7 + $0x4b]]
    %v659 = vstv %s658
    %v660 = vmul.f32 %v131, %v659
    %v661 = vmul.f32 %v132, %v659
    %v662 = vadd.f32 %v656, %v660
    %v663 = vadd.f32 %v657, %v661
    %s664 = sld [smem:[#allocation7 + $0x4c]]
    %v665 = vstv %s664
    %v666 = vmul.f32 %v136, %v665
    %v667 = vmul.f32 %v137, %v665
    %v668 = vadd.f32 %v662, %v666
    %v669 = vadd.f32 %v663, %v667
    %s670 = sld [smem:[#allocation7 + $0x4d]]
    %v671 = vstv %s670
    %v672 = vmul.f32 %v141, %v671
    %v673 = vmul.f32 %v142, %v671
    %v674 = vadd.f32 %v668, %v672
    %v675 = vadd.f32 %v669, %v673
    %s676 = sld [smem:[#allocation7 + $0x4e]]
    %v677 = vstv %s676
    %v678 = vmul.f32 %v146, %v677
    %v679 = vmul.f32 %v147, %v677
    %v680 = vadd.f32 %v674, %v678
    %v681 = vadd.f32 %v675, %v679
    %s682 = sld [smem:[#allocation7 + $0x4f]]
    %v683 = vstv %s682
    %v684 = vmul.f32 %v151, %v683
    %v685 = vmul.f32 %v152, %v683
    %v686 = vadd.f32 %v680, %v684
    %v687 = vadd.f32 %v681, %v685
    %s688 = sld [smem:[#allocation8 + $0x9]]
    %v689 = vstv %s688
    %v690 = vadd.f32 %v686, %v689
    %v691 = vadd.f32 %v687, %v689
    %v692 = vmax.f32 %v690, 0.0
    %v693 = vmax.f32 %v691, 0.0
    %694 = vst [vmem:[%s207 + $0x90] sm:$0xff] %v692
    %695 = vst [vmem:[%s207 + $0x98] sm:$0xff] %v693
    %s696 = sld [smem:[#allocation7 + $0x50]]
    %v697 = vstv %s696
    %v698 = vmul.f32 %v116, %v697
    %v699 = vmul.f32 %v117, %v697
    %s700 = sld [smem:[#allocation7 + $0x51]]
    %v701 = vstv %s700
    %v702 = vmul.f32 %v121, %v701
    %v703 = vmul.f32 %v122, %v701
    %v704 = vadd.f32 %v698, %v702
    %v705 = vadd.f32 %v699, %v703
    %s706 = sld [smem:[#allocation7 + $0x52]]
    %v707 = vstv %s706
    %v708 = vmul.f32 %v126, %v707
    %v709 = vmul.f32 %v127, %v707
    %v710 = vadd.f32 %v704, %v708
    %v711 = vadd.f32 %v705, %v709
    %s712 = sld [smem:[#allocation7 + $0x53]]
    %v713 = vstv %s712
    %v714 = vmul.f32 %v131, %v713
    %v715 = vmul.f32 %v132, %v713
    %v716 = vadd.f32 %v710, %v714
    %v717 = vadd.f32 %v711, %v715
    %s718 = sld [smem:[#allocation7 + $0x54]]
    %v719 = vstv %s718
    %v720 = vmul.f32 %v136, %v719
    %v721 = vmul.f32 %v137, %v719
    %v722 = vadd.f32 %v716, %v720
    %v723 = vadd.f32 %v717, %v721
    %s724 = sld [smem:[#allocation7 + $0x55]]
    %v725 = vstv %s724
    %v726 = vmul.f32 %v141, %v725
    %v727 = vmul.f32 %v142, %v725
    %v728 = vadd.f32 %v722, %v726
    %v729 = vadd.f32 %v723, %v727
    %s730 = sld [smem:[#allocation7 + $0x56]]
    %v731 = vstv %s730
    %v732 = vmul.f32 %v146, %v731
    %v733 = vmul.f32 %v147, %v731
    %v734 = vadd.f32 %v728, %v732
    %v735 = vadd.f32 %v729, %v733
    %s736 = sld [smem:[#allocation7 + $0x57]]
    %v737 = vstv %s736
    %v738 = vmul.f32 %v151, %v737
    %v739 = vmul.f32 %v152, %v737
    %v740 = vadd.f32 %v734, %v738
    %v741 = vadd.f32 %v735, %v739
    %s742 = sld [smem:[#allocation8 + $0xa]]
    %v743 = vstv %s742
    %v744 = vadd.f32 %v740, %v743
    %v745 = vadd.f32 %v741, %v743
    %v746 = vmax.f32 %v744, 0.0
    %v747 = vmax.f32 %v745, 0.0
    %748 = vst [vmem:[%s207 + $0xa0] sm:$0xff] %v746
    %749 = vst [vmem:[%s207 + $0xa8] sm:$0xff] %v747
    %s750 = sld [smem:[#allocation7 + $0x58]]
    %v751 = vstv %s750
    %v752 = vmul.f32 %v116, %v751
    %v753 = vmul.f32 %v117, %v751
    %s754 = sld [smem:[#allocation7 + $0x59]]
    %v755 = vstv %s754
    %v756 = vmul.f32 %v121, %v755
    %v757 = vmul.f32 %v122, %v755
    %v758 = vadd.f32 %v752, %v756
    %v759 = vadd.f32 %v753, %v757
    %s760 = sld [smem:[#allocation7 + $0x5a]]
    %v761 = vstv %s760
    %v762 = vmul.f32 %v126, %v761
    %v763 = vmul.f32 %v127, %v761
    %v764 = vadd.f32 %v758, %v762
    %v765 = vadd.f32 %v759, %v763
    %s766 = sld [smem:[#allocation7 + $0x5b]]
    %v767 = vstv %s766
    %v768 = vmul.f32 %v131, %v767
    %v769 = vmul.f32 %v132, %v767
    %v770 = vadd.f32 %v764, %v768
    %v771 = vadd.f32 %v765, %v769
    %s772 = sld [smem:[#allocation7 + $0x5c]]
    %v773 = vstv %s772
    %v774 = vmul.f32 %v136, %v773
    %v775 = vmul.f32 %v137, %v773
    %v776 = vadd.f32 %v770, %v774
    %v777 = vadd.f32 %v771, %v775
    %s778 = sld [smem:[#allocation7 + $0x5d]]
    %v779 = vstv %s778
    %v780 = vmul.f32 %v141, %v779
    %v781 = vmul.f32 %v142, %v779
    %v782 = vadd.f32 %v776, %v780
    %v783 = vadd.f32 %v777, %v781
    %s784 = sld [smem:[#allocation7 + $0x5e]]
    %v785 = vstv %s784
    %v786 = vmul.f32 %v146, %v785
    %v787 = vmul.f32 %v147, %v785
    %v788 = vadd.f32 %v782, %v786
    %v789 = vadd.f32 %v783, %v787
    %s790 = sld [smem:[#allocation7 + $0x5f]]
    %v791 = vstv %s790
    %v792 = vmul.f32 %v151, %v791
    %v793 = vmul.f32 %v152, %v791
    %v794 = vadd.f32 %v788, %v792
    %v795 = vadd.f32 %v789, %v793
    %s796 = sld [smem:[#allocation8 + $0xb]]
    %v797 = vstv %s796
    %v798 = vadd.f32 %v794, %v797
    %v799 = vadd.f32 %v795, %v797
    %v800 = vmax.f32 %v798, 0.0
    %v801 = vmax.f32 %v799, 0.0
    %802 = vst [vmem:[%s207 + $0xb0] sm:$0xff] %v800
    %803 = vst [vmem:[%s207 + $0xb8] sm:$0xff] %v801
    %s804 = sld [smem:[#allocation7 + $0x60]]
    %v805 = vstv %s804
    %v806 = vmul.f32 %v116, %v805
    %v807 = vmul.f32 %v117, %v805
    %s808 = sld [smem:[#allocation7 + $0x61]]
    %v809 = vstv %s808
    %v810 = vmul.f32 %v121, %v809
    %v811 = vmul.f32 %v122, %v809
    %v812 = vadd.f32 %v806, %v810
    %v813 = vadd.f32 %v807, %v811
    %s814 = sld [smem:[#allocation7 + $0x62]]
    %v815 = vstv %s814
    %v816 = vmul.f32 %v126, %v815
    %v817 = vmul.f32 %v127, %v815
    %v818 = vadd.f32 %v812, %v816
    %v819 = vadd.f32 %v813, %v817
    %s820 = sld [smem:[#allocation7 + $0x63]]
    %v821 = vstv %s820
    %v822 = vmul.f32 %v131, %v821
    %v823 = vmul.f32 %v132, %v821
    %v824 = vadd.f32 %v818, %v822
    %v825 = vadd.f32 %v819, %v823
    %s826 = sld [smem:[#allocation7 + $0x64]]
    %v827 = vstv %s826
    %v828 = vmul.f32 %v136, %v827
    %v829 = vmul.f32 %v137, %v827
    %v830 = vadd.f32 %v824, %v828
    %v831 = vadd.f32 %v825, %v829
    %s832 = sld [smem:[#allocation7 + $0x65]]
    %v833 = vstv %s832
    %v834 = vmul.f32 %v141, %v833
    %v835 = vmul.f32 %v142, %v833
    %v836 = vadd.f32 %v830, %v834
    %v837 = vadd.f32 %v831, %v835
    %s838 = sld [smem:[#allocation7 + $0x66]]
    %v839 = vstv %s838
    %v840 = vmul.f32 %v146, %v839
    %v841 = vmul.f32 %v147, %v839
    %v842 = vadd.f32 %v836, %v840
    %v843 = vadd.f32 %v837, %v841
    %s844 = sld [smem:[#allocation7 + $0x67]]
    %v845 = vstv %s844
    %v846 = vmul.f32 %v151, %v845
    %v847 = vmul.f32 %v152, %v845
    %v848 = vadd.f32 %v842, %v846
    %v849 = vadd.f32 %v843, %v847
    %s850 = sld [smem:[#allocation8 + $0xc]]
    %v851 = vstv %s850
    %v852 = vadd.f32 %v848, %v851
    %v853 = vadd.f32 %v849, %v851
    %v854 = vmax.f32 %v852, 0.0
    %v855 = vmax.f32 %v853, 0.0
    %856 = vst [vmem:[%s207 + $0xc0] sm:$0xff] %v854
    %857 = vst [vmem:[%s207 + $0xc8] sm:$0xff] %v855
    %s858 = sld [smem:[#allocation7 + $0x68]]
    %v859 = vstv %s858
    %v860 = vmul.f32 %v116, %v859
    %v861 = vmul.f32 %v117, %v859
    %s862 = sld [smem:[#allocation7 + $0x69]]
    %v863 = vstv %s862
    %v864 = vmul.f32 %v121, %v863
    %v865 = vmul.f32 %v122, %v863
    %v866 = vadd.f32 %v860, %v864
    %v867 = vadd.f32 %v861, %v865
    %s868 = sld [smem:[#allocation7 + $0x6a]]
    %v869 = vstv %s868
    %v870 = vmul.f32 %v126, %v869
    %v871 = vmul.f32 %v127, %v869
    %v872 = vadd.f32 %v866, %v870
    %v873 = vadd.f32 %v867, %v871
    %s874 = sld [smem:[#allocation7 + $0x6b]]
    %v875 = vstv %s874
    %v876 = vmul.f32 %v131, %v875
    %v877 = vmul.f32 %v132, %v875
    %v878 = vadd.f32 %v872, %v876
    %v879 = vadd.f32 %v873, %v877
    %s880 = sld [smem:[#allocation7 + $0x6c]]
    %v881 = vstv %s880
    %v882 = vmul.f32 %v136, %v881
    %v883 = vmul.f32 %v137, %v881
    %v884 = vadd.f32 %v878, %v882
    %v885 = vadd.f32 %v879, %v883
    %s886 = sld [smem:[#allocation7 + $0x6d]]
    %v887 = vstv %s886
    %v888 = vmul.f32 %v141, %v887
    %v889 = vmul.f32 %v142, %v887
    %v890 = vadd.f32 %v884, %v888
    %v891 = vadd.f32 %v885, %v889
    %s892 = sld [smem:[#allocation7 + $0x6e]]
    %v893 = vstv %s892
    %v894 = vmul.f32 %v146, %v893
    %v895 = vmul.f32 %v147, %v893
    %v896 = vadd.f32 %v890, %v894
    %v897 = vadd.f32 %v891, %v895
    %s898 = sld [smem:[#allocation7 + $0x6f]]
    %v899 = vstv %s898
    %v900 = vmul.f32 %v151, %v899
    %v901 = vmul.f32 %v152, %v899
    %v902 = vadd.f32 %v896, %v900
    %v903 = vadd.f32 %v897, %v901
    %s904 = sld [smem:[#allocation8 + $0xd]]
    %v905 = vstv %s904
    %v906 = vadd.f32 %v902, %v905
    %v907 = vadd.f32 %v903, %v905
    %v908 = vmax.f32 %v906, 0.0
    %v909 = vmax.f32 %v907, 0.0
    %910 = vst [vmem:[%s207 + $0xd0] sm:$0xff] %v908
    %911 = vst [vmem:[%s207 + $0xd8] sm:$0xff] %v909
    %s912 = sld [smem:[#allocation7 + $0x70]]
    %v913 = vstv %s912
    %v914 = vmul.f32 %v116, %v913
    %v915 = vmul.f32 %v117, %v913
    %s916 = sld [smem:[#allocation7 + $0x71]]
    %v917 = vstv %s916
    %v918 = vmul.f32 %v121, %v917
    %v919 = vmul.f32 %v122, %v917
    %v920 = vadd.f32 %v914, %v918
    %v921 = vadd.f32 %v915, %v919
    %s922 = sld [smem:[#allocation7 + $0x72]]
    %v923 = vstv %s922
    %v924 = vmul.f32 %v126, %v923
    %v925 = vmul.f32 %v127, %v923
    %v926 = vadd.f32 %v920, %v924
    %v927 = vadd.f32 %v921, %v925
    %s928 = sld [smem:[#allocation7 + $0x73]]
    %v929 = vstv %s928
    %v930 = vmul.f32 %v131, %v929
    %v931 = vmul.f32 %v132, %v929
    %v932 = vadd.f32 %v926, %v930
    %v933 = vadd.f32 %v927, %v931
    %s934 = sld [smem:[#allocation7 + $0x74]]
    %v935 = vstv %s934
    %v936 = vmul.f32 %v136, %v935
    %v937 = vmul.f32 %v137, %v935
    %v938 = vadd.f32 %v932, %v936
    %v939 = vadd.f32 %v933, %v937
    %s940 = sld [smem:[#allocation7 + $0x75]]
    %v941 = vstv %s940
    %v942 = vmul.f32 %v141, %v941
    %v943 = vmul.f32 %v142, %v941
    %v944 = vadd.f32 %v938, %v942
    %v945 = vadd.f32 %v939, %v943
    %s946 = sld [smem:[#allocation7 + $0x76]]
    %v947 = vstv %s946
    %v948 = vmul.f32 %v146, %v947
    %v949 = vmul.f32 %v147, %v947
    %v950 = vadd.f32 %v944, %v948
    %v951 = vadd.f32 %v945, %v949
    %s952 = sld [smem:[#allocation7 + $0x77]]
    %v953 = vstv %s952
    %v954 = vmul.f32 %v151, %v953
    %v955 = vmul.f32 %v152, %v953
    %v956 = vadd.f32 %v950, %v954
    %v957 = vadd.f32 %v951, %v955
    %s958 = sld [smem:[#allocation8 + $0xe]]
    %v959 = vstv %s958
    %v960 = vadd.f32 %v956, %v959
    %v961 = vadd.f32 %v957, %v959
    %v962 = vmax.f32 %v960, 0.0
    %v963 = vmax.f32 %v961, 0.0
    %964 = vst [vmem:[%s207 + $0xe0] sm:$0xff] %v962
    %965 = vst [vmem:[%s207 + $0xe8] sm:$0xff] %v963
    %s966 = sld [smem:[#allocation7 + $0x78]]
    %v967 = vstv %s966
    %v968 = vmul.f32 %v116, %v967
    %v969 = vmul.f32 %v117, %v967
    %s970 = sld [smem:[#allocation7 + $0x79]]
    %v971 = vstv %s970
    %v972 = vmul.f32 %v121, %v971
    %v973 = vmul.f32 %v122, %v971
    %v974 = vadd.f32 %v968, %v972
    %v975 = vadd.f32 %v969, %v973
    %s976 = sld [smem:[#allocation7 + $0x7a]]
    %v977 = vstv %s976
    %v978 = vmul.f32 %v126, %v977
    %v979 = vmul.f32 %v127, %v977
    %v980 = vadd.f32 %v974, %v978
    %v981 = vadd.f32 %v975, %v979
    %s982 = sld [smem:[#allocation7 + $0x7b]]
    %v983 = vstv %s982
    %v984 = vmul.f32 %v131, %v983
    %v985 = vmul.f32 %v132, %v983
    %v986 = vadd.f32 %v980, %v984
    %v987 = vadd.f32 %v981, %v985
    %s988 = sld [smem:[#allocation7 + $0x7c]]
    %v989 = vstv %s988
    %v990 = vmul.f32 %v136, %v989
    %v991 = vmul.f32 %v137, %v989
    %v992 = vadd.f32 %v986, %v990
    %v993 = vadd.f32 %v987, %v991
    %s994 = sld [smem:[#allocation7 + $0x7d]]
    %v995 = vstv %s994
    %v996 = vmul.f32 %v141, %v995
    %v997 = vmul.f32 %v142, %v995
    %v998 = vadd.f32 %v992, %v996
    %v999 = vadd.f32 %v993, %v997
    %s1000 = sld [smem:[#allocation7 + $0x7e]]
    %v1001 = vstv %s1000
    %v1002 = vmul.f32 %v146, %v1001
    %v1003 = vmul.f32 %v147, %v1001
    %v1004 = vadd.f32 %v998, %v1002
    %v1005 = vadd.f32 %v999, %v1003
    %s1006 = sld [smem:[#allocation7 + $0x7f]]
    %v1007 = vstv %s1006
    %v1008 = vmul.f32 %v151, %v1007
    %v1009 = vmul.f32 %v152, %v1007
    %v1010 = vadd.f32 %v1004, %v1008
    %v1011 = vadd.f32 %v1005, %v1009
    %s1012 = sld [smem:[#allocation8 + $0xf]]
    %v1013 = vstv %s1012
    %v1014 = vadd.f32 %v1010, %v1013
    %v1015 = vadd.f32 %v1011, %v1013
    %v1016 = vmax.f32 %v1014, 0.0
    %v1017 = vmax.f32 %v1015, 0.0
    %1018 = vst [vmem:[%s207 + $0xf0] sm:$0xff] %v1016
    %1019 = vst [vmem:[%s207 + $0xf8] sm:$0xff] %v1017
    %s1020 = sld [smem:[#allocation7 + $0x80]]
    %v1021 = vstv %s1020
    %v1022 = vmul.f32 %v116, %v1021
    %v1023 = vmul.f32 %v117, %v1021
    %s1024 = sld [smem:[#allocation7 + $0x81]]
    %v1025 = vstv %s1024
    %v1026 = vmul.f32 %v121, %v1025
    %v1027 = vmul.f32 %v122, %v1025
    %v1028 = vadd.f32 %v1022, %v1026
    %v1029 = vadd.f32 %v1023, %v1027
    %s1030 = sld [smem:[#allocation7 + $0x82]]
    %v1031 = vstv %s1030
    %v1032 = vmul.f32 %v126, %v1031
    %v1033 = vmul.f32 %v127, %v1031
    %v1034 = vadd.f32 %v1028, %v1032
    %v1035 = vadd.f32 %v1029, %v1033
    %s1036 = sld [smem:[#allocation7 + $0x83]]
    %v1037 = vstv %s1036
    %v1038 = vmul.f32 %v131, %v1037
    %v1039 = vmul.f32 %v132, %v1037
    %v1040 = vadd.f32 %v1034, %v1038
    %v1041 = vadd.f32 %v1035, %v1039
    %s1042 = sld [smem:[#allocation7 + $0x84]]
    %v1043 = vstv %s1042
    %v1044 = vmul.f32 %v136, %v1043
    %v1045 = vmul.f32 %v137, %v1043
    %v1046 = vadd.f32 %v1040, %v1044
    %v1047 = vadd.f32 %v1041, %v1045
    %s1048 = sld [smem:[#allocation7 + $0x85]]
    %v1049 = vstv %s1048
    %v1050 = vmul.f32 %v141, %v1049
    %v1051 = vmul.f32 %v142, %v1049
    %v1052 = vadd.f32 %v1046, %v1050
    %v1053 = vadd.f32 %v1047, %v1051
    %s1054 = sld [smem:[#allocation7 + $0x86]]
    %v1055 = vstv %s1054
    %v1056 = vmul.f32 %v146, %v1055
    %v1057 = vmul.f32 %v147, %v1055
    %v1058 = vadd.f32 %v1052, %v1056
    %v1059 = vadd.f32 %v1053, %v1057
    %s1060 = sld [smem:[#allocation7 + $0x87]]
    %v1061 = vstv %s1060
    %v1062 = vmul.f32 %v151, %v1061
    %v1063 = vmul.f32 %v152, %v1061
    %v1064 = vadd.f32 %v1058, %v1062
    %v1065 = vadd.f32 %v1059, %v1063
    %s1066 = sld [smem:[#allocation8 + $0x10]]
    %v1067 = vstv %s1066
    %v1068 = vadd.f32 %v1064, %v1067
    %v1069 = vadd.f32 %v1065, %v1067
    %v1070 = vmax.f32 %v1068, 0.0
    %v1071 = vmax.f32 %v1069, 0.0
    %1072 = vst [vmem:[%s207 + $0x100] sm:$0xff] %v1070
    %1073 = vst [vmem:[%s207 + $0x108] sm:$0xff] %v1071
    %s1074 = sld [smem:[#allocation7 + $0x88]]
    %v1075 = vstv %s1074
    %v1076 = vmul.f32 %v116, %v1075
    %v1077 = vmul.f32 %v117, %v1075
    %s1078 = sld [smem:[#allocation7 + $0x89]]
    %v1079 = vstv %s1078
    %v1080 = vmul.f32 %v121, %v1079
    %v1081 = vmul.f32 %v122, %v1079
    %v1082 = vadd.f32 %v1076, %v1080
    %v1083 = vadd.f32 %v1077, %v1081
    %s1084 = sld [smem:[#allocation7 + $0x8a]]
    %v1085 = vstv %s1084
    %v1086 = vmul.f32 %v126, %v1085
    %v1087 = vmul.f32 %v127, %v1085
    %v1088 = vadd.f32 %v1082, %v1086
    %v1089 = vadd.f32 %v1083, %v1087
    %s1090 = sld [smem:[#allocation7 + $0x8b]]
    %v1091 = vstv %s1090
    %v1092 = vmul.f32 %v131, %v1091
    %v1093 = vmul.f32 %v132, %v1091
    %v1094 = vadd.f32 %v1088, %v1092
    %v1095 = vadd.f32 %v1089, %v1093
    %s1096 = sld [smem:[#allocation7 + $0x8c]]
    %v1097 = vstv %s1096
    %v1098 = vmul.f32 %v136, %v1097
    %v1099 = vmul.f32 %v137, %v1097
    %v1100 = vadd.f32 %v1094, %v1098
    %v1101 = vadd.f32 %v1095, %v1099
    %s1102 = sld [smem:[#allocation7 + $0x8d]]
    %v1103 = vstv %s1102
    %v1104 = vmul.f32 %v141, %v1103
    %v1105 = vmul.f32 %v142, %v1103
    %v1106 = vadd.f32 %v1100, %v1104
    %v1107 = vadd.f32 %v1101, %v1105
    %s1108 = sld [smem:[#allocation7 + $0x8e]]
    %v1109 = vstv %s1108
    %v1110 = vmul.f32 %v146, %v1109
    %v1111 = vmul.f32 %v147, %v1109
    %v1112 = vadd.f32 %v1106, %v1110
    %v1113 = vadd.f32 %v1107, %v1111
    %s1114 = sld [smem:[#allocation7 + $0x8f]]
    %v1115 = vstv %s1114
    %v1116 = vmul.f32 %v151, %v1115
    %v1117 = vmul.f32 %v152, %v1115
    %v1118 = vadd.f32 %v1112, %v1116
    %v1119 = vadd.f32 %v1113, %v1117
    %s1120 = sld [smem:[#allocation8 + $0x11]]
    %v1121 = vstv %s1120
    %v1122 = vadd.f32 %v1118, %v1121
    %v1123 = vadd.f32 %v1119, %v1121
    %v1124 = vmax.f32 %v1122, 0.0
    %v1125 = vmax.f32 %v1123, 0.0
    %1126 = vst [vmem:[%s207 + $0x110] sm:$0xff] %v1124
    %1127 = vst [vmem:[%s207 + $0x118] sm:$0xff] %v1125
    %s1128 = sld [smem:[#allocation7 + $0x90]]
    %v1129 = vstv %s1128
    %v1130 = vmul.f32 %v116, %v1129
    %v1131 = vmul.f32 %v117, %v1129
    %s1132 = sld [smem:[#allocation7 + $0x91]]
    %v1133 = vstv %s1132
    %v1134 = vmul.f32 %v121, %v1133
    %v1135 = vmul.f32 %v122, %v1133
    %v1136 = vadd.f32 %v1130, %v1134
    %v1137 = vadd.f32 %v1131, %v1135
    %s1138 = sld [smem:[#allocation7 + $0x92]]
    %v1139 = vstv %s1138
    %v1140 = vmul.f32 %v126, %v1139
    %v1141 = vmul.f32 %v127, %v1139
    %v1142 = vadd.f32 %v1136, %v1140
    %v1143 = vadd.f32 %v1137, %v1141
    %s1144 = sld [smem:[#allocation7 + $0x93]]
    %v1145 = vstv %s1144
    %v1146 = vmul.f32 %v131, %v1145
    %v1147 = vmul.f32 %v132, %v1145
    %v1148 = vadd.f32 %v1142, %v1146
    %v1149 = vadd.f32 %v1143, %v1147
    %s1150 = sld [smem:[#allocation7 + $0x94]]
    %v1151 = vstv %s1150
    %v1152 = vmul.f32 %v136, %v1151
    %v1153 = vmul.f32 %v137, %v1151
    %v1154 = vadd.f32 %v1148, %v1152
    %v1155 = vadd.f32 %v1149, %v1153
    %s1156 = sld [smem:[#allocation7 + $0x95]]
    %v1157 = vstv %s1156
    %v1158 = vmul.f32 %v141, %v1157
    %v1159 = vmul.f32 %v142, %v1157
    %v1160 = vadd.f32 %v1154, %v1158
    %v1161 = vadd.f32 %v1155, %v1159
    %s1162 = sld [smem:[#allocation7 + $0x96]]
    %v1163 = vstv %s1162
    %v1164 = vmul.f32 %v146, %v1163
    %v1165 = vmul.f32 %v147, %v1163
    %v1166 = vadd.f32 %v1160, %v1164
    %v1167 = vadd.f32 %v1161, %v1165
    %s1168 = sld [smem:[#allocation7 + $0x97]]
    %v1169 = vstv %s1168
    %v1170 = vmul.f32 %v151, %v1169
    %v1171 = vmul.f32 %v152, %v1169
    %v1172 = vadd.f32 %v1166, %v1170
    %v1173 = vadd.f32 %v1167, %v1171
    %s1174 = sld [smem:[#allocation8 + $0x12]]
    %v1175 = vstv %s1174
    %v1176 = vadd.f32 %v1172, %v1175
    %v1177 = vadd.f32 %v1173, %v1175
    %v1178 = vmax.f32 %v1176, 0.0
    %v1179 = vmax.f32 %v1177, 0.0
    %1180 = vst [vmem:[%s207 + $0x120] sm:$0xff] %v1178
    %1181 = vst [vmem:[%s207 + $0x128] sm:$0xff] %v1179
    %s1182 = sld [smem:[#allocation7 + $0x98]]
    %v1183 = vstv %s1182
    %v1184 = vmul.f32 %v116, %v1183
    %v1185 = vmul.f32 %v117, %v1183
    %s1186 = sld [smem:[#allocation7 + $0x99]]
    %v1187 = vstv %s1186
    %v1188 = vmul.f32 %v121, %v1187
    %v1189 = vmul.f32 %v122, %v1187
    %v1190 = vadd.f32 %v1184, %v1188
    %v1191 = vadd.f32 %v1185, %v1189
    %s1192 = sld [smem:[#allocation7 + $0x9a]]
    %v1193 = vstv %s1192
    %v1194 = vmul.f32 %v126, %v1193
    %v1195 = vmul.f32 %v127, %v1193
    %v1196 = vadd.f32 %v1190, %v1194
    %v1197 = vadd.f32 %v1191, %v1195
    %s1198 = sld [smem:[#allocation7 + $0x9b]]
    %v1199 = vstv %s1198
    %v1200 = vmul.f32 %v131, %v1199
    %v1201 = vmul.f32 %v132, %v1199
    %v1202 = vadd.f32 %v1196, %v1200
    %v1203 = vadd.f32 %v1197, %v1201
    %s1204 = sld [smem:[#allocation7 + $0x9c]]
    %v1205 = vstv %s1204
    %v1206 = vmul.f32 %v136, %v1205
    %v1207 = vmul.f32 %v137, %v1205
    %v1208 = vadd.f32 %v1202, %v1206
    %v1209 = vadd.f32 %v1203, %v1207
    %s1210 = sld [smem:[#allocation7 + $0x9d]]
    %v1211 = vstv %s1210
    %v1212 = vmul.f32 %v141, %v1211
    %v1213 = vmul.f32 %v142, %v1211
    %v1214 = vadd.f32 %v1208, %v1212
    %v1215 = vadd.f32 %v1209, %v1213
    %s1216 = sld [smem:[#allocation7 + $0x9e]]
    %v1217 = vstv %s1216
    %v1218 = vmul.f32 %v146, %v1217
    %v1219 = vmul.f32 %v147, %v1217
    %v1220 = vadd.f32 %v1214, %v1218
    %v1221 = vadd.f32 %v1215, %v1219
    %s1222 = sld [smem:[#allocation7 + $0x9f]]
    %v1223 = vstv %s1222
    %v1224 = vmul.f32 %v151, %v1223
    %v1225 = vmul.f32 %v152, %v1223
    %v1226 = vadd.f32 %v1220, %v1224
    %v1227 = vadd.f32 %v1221, %v1225
    %s1228 = sld [smem:[#allocation8 + $0x13]]
    %v1229 = vstv %s1228
    %v1230 = vadd.f32 %v1226, %v1229
    %v1231 = vadd.f32 %v1227, %v1229
    %v1232 = vmax.f32 %v1230, 0.0
    %v1233 = vmax.f32 %v1231, 0.0
    %1234 = vst [vmem:[%s207 + $0x130] sm:$0xff] %v1232
    %1235 = vst [vmem:[%s207 + $0x138] sm:$0xff] %v1233
    %s1236 = sld [smem:[#allocation7 + $0xa0]]
    %v1237 = vstv %s1236
    %v1238 = vmul.f32 %v116, %v1237
    %v1239 = vmul.f32 %v117, %v1237
    %s1240 = sld [smem:[#allocation7 + $0xa1]]
    %v1241 = vstv %s1240
    %v1242 = vmul.f32 %v121, %v1241
    %v1243 = vmul.f32 %v122, %v1241
    %v1244 = vadd.f32 %v1238, %v1242
    %v1245 = vadd.f32 %v1239, %v1243
    %s1246 = sld [smem:[#allocation7 + $0xa2]]
    %v1247 = vstv %s1246
    %v1248 = vmul.f32 %v126, %v1247
    %v1249 = vmul.f32 %v127, %v1247
    %v1250 = vadd.f32 %v1244, %v1248
    %v1251 = vadd.f32 %v1245, %v1249
    %s1252 = sld [smem:[#allocation7 + $0xa3]]
    %v1253 = vstv %s1252
    %v1254 = vmul.f32 %v131, %v1253
    %v1255 = vmul.f32 %v132, %v1253
    %v1256 = vadd.f32 %v1250, %v1254
    %v1257 = vadd.f32 %v1251, %v1255
    %s1258 = sld [smem:[#allocation7 + $0xa4]]
    %v1259 = vstv %s1258
    %v1260 = vmul.f32 %v136, %v1259
    %v1261 = vmul.f32 %v137, %v1259
    %v1262 = vadd.f32 %v1256, %v1260
    %v1263 = vadd.f32 %v1257, %v1261
    %s1264 = sld [smem:[#allocation7 + $0xa5]]
    %v1265 = vstv %s1264
    %v1266 = vmul.f32 %v141, %v1265
    %v1267 = vmul.f32 %v142, %v1265
    %v1268 = vadd.f32 %v1262, %v1266
    %v1269 = vadd.f32 %v1263, %v1267
    %s1270 = sld [smem:[#allocation7 + $0xa6]]
    %v1271 = vstv %s1270
    %v1272 = vmul.f32 %v146, %v1271
    %v1273 = vmul.f32 %v147, %v1271
    %v1274 = vadd.f32 %v1268, %v1272
    %v1275 = vadd.f32 %v1269, %v1273
    %s1276 = sld [smem:[#allocation7 + $0xa7]]
    %v1277 = vstv %s1276
    %v1278 = vmul.f32 %v151, %v1277
    %v1279 = vmul.f32 %v152, %v1277
    %v1280 = vadd.f32 %v1274, %v1278
    %v1281 = vadd.f32 %v1275, %v1279
    %s1282 = sld [smem:[#allocation8 + $0x14]]
    %v1283 = vstv %s1282
    %v1284 = vadd.f32 %v1280, %v1283
    %v1285 = vadd.f32 %v1281, %v1283
    %v1286 = vmax.f32 %v1284, 0.0
    %v1287 = vmax.f32 %v1285, 0.0
    %1288 = vst [vmem:[%s207 + $0x140] sm:$0xff] %v1286
    %1289 = vst [vmem:[%s207 + $0x148] sm:$0xff] %v1287
    %s1290 = sld [smem:[#allocation7 + $0xa8]]
    %v1291 = vstv %s1290
    %v1292 = vmul.f32 %v116, %v1291
    %v1293 = vmul.f32 %v117, %v1291
    %s1294 = sld [smem:[#allocation7 + $0xa9]]
    %v1295 = vstv %s1294
    %v1296 = vmul.f32 %v121, %v1295
    %v1297 = vmul.f32 %v122, %v1295
    %v1298 = vadd.f32 %v1292, %v1296
    %v1299 = vadd.f32 %v1293, %v1297
    %s1300 = sld [smem:[#allocation7 + $0xaa]]
    %v1301 = vstv %s1300
    %v1302 = vmul.f32 %v126, %v1301
    %v1303 = vmul.f32 %v127, %v1301
    %v1304 = vadd.f32 %v1298, %v1302
    %v1305 = vadd.f32 %v1299, %v1303
    %s1306 = sld [smem:[#allocation7 + $0xab]]
    %v1307 = vstv %s1306
    %v1308 = vmul.f32 %v131, %v1307
    %v1309 = vmul.f32 %v132, %v1307
    %v1310 = vadd.f32 %v1304, %v1308
    %v1311 = vadd.f32 %v1305, %v1309
    %s1312 = sld [smem:[#allocation7 + $0xac]]
    %v1313 = vstv %s1312
    %v1314 = vmul.f32 %v136, %v1313
    %v1315 = vmul.f32 %v137, %v1313
    %v1316 = vadd.f32 %v1310, %v1314
    %v1317 = vadd.f32 %v1311, %v1315
    %s1318 = sld [smem:[#allocation7 + $0xad]]
    %v1319 = vstv %s1318
    %v1320 = vmul.f32 %v141, %v1319
    %v1321 = vmul.f32 %v142, %v1319
    %v1322 = vadd.f32 %v1316, %v1320
    %v1323 = vadd.f32 %v1317, %v1321
    %s1324 = sld [smem:[#allocation7 + $0xae]]
    %v1325 = vstv %s1324
    %v1326 = vmul.f32 %v146, %v1325
    %v1327 = vmul.f32 %v147, %v1325
    %v1328 = vadd.f32 %v1322, %v1326
    %v1329 = vadd.f32 %v1323, %v1327
    %s1330 = sld [smem:[#allocation7 + $0xaf]]
    %v1331 = vstv %s1330
    %v1332 = vmul.f32 %v151, %v1331
    %v1333 = vmul.f32 %v152, %v1331
    %v1334 = vadd.f32 %v1328, %v1332
    %v1335 = vadd.f32 %v1329, %v1333
    %s1336 = sld [smem:[#allocation8 + $0x15]]
    %v1337 = vstv %s1336
    %v1338 = vadd.f32 %v1334, %v1337
    %v1339 = vadd.f32 %v1335, %v1337
    %v1340 = vmax.f32 %v1338, 0.0
    %v1341 = vmax.f32 %v1339, 0.0
    %1342 = vst [vmem:[%s207 + $0x150] sm:$0xff] %v1340
    %1343 = vst [vmem:[%s207 + $0x158] sm:$0xff] %v1341
    %s1344 = sld [smem:[#allocation7 + $0xb0]]
    %v1345 = vstv %s1344
    %v1346 = vmul.f32 %v116, %v1345
    %v1347 = vmul.f32 %v117, %v1345
    %s1348 = sld [smem:[#allocation7 + $0xb1]]
    %v1349 = vstv %s1348
    %v1350 = vmul.f32 %v121, %v1349
    %v1351 = vmul.f32 %v122, %v1349
    %v1352 = vadd.f32 %v1346, %v1350
    %v1353 = vadd.f32 %v1347, %v1351
    %s1354 = sld [smem:[#allocation7 + $0xb2]]
    %v1355 = vstv %s1354
    %v1356 = vmul.f32 %v126, %v1355
    %v1357 = vmul.f32 %v127, %v1355
    %v1358 = vadd.f32 %v1352, %v1356
    %v1359 = vadd.f32 %v1353, %v1357
    %s1360 = sld [smem:[#allocation7 + $0xb3]]
    %v1361 = vstv %s1360
    %v1362 = vmul.f32 %v131, %v1361
    %v1363 = vmul.f32 %v132, %v1361
    %v1364 = vadd.f32 %v1358, %v1362
    %v1365 = vadd.f32 %v1359, %v1363
    %s1366 = sld [smem:[#allocation7 + $0xb4]]
    %v1367 = vstv %s1366
    %v1368 = vmul.f32 %v136, %v1367
    %v1369 = vmul.f32 %v137, %v1367
    %v1370 = vadd.f32 %v1364, %v1368
    %v1371 = vadd.f32 %v1365, %v1369
    %s1372 = sld [smem:[#allocation7 + $0xb5]]
    %v1373 = vstv %s1372
    %v1374 = vmul.f32 %v141, %v1373
    %v1375 = vmul.f32 %v142, %v1373
    %v1376 = vadd.f32 %v1370, %v1374
    %v1377 = vadd.f32 %v1371, %v1375
    %s1378 = sld [smem:[#allocation7 + $0xb6]]
    %v1379 = vstv %s1378
    %v1380 = vmul.f32 %v146, %v1379
    %v1381 = vmul.f32 %v147, %v1379
    %v1382 = vadd.f32 %v1376, %v1380
    %v1383 = vadd.f32 %v1377, %v1381
    %s1384 = sld [smem:[#allocation7 + $0xb7]]
    %v1385 = vstv %s1384
    %v1386 = vmul.f32 %v151, %v1385
    %v1387 = vmul.f32 %v152, %v1385
    %v1388 = vadd.f32 %v1382, %v1386
    %v1389 = vadd.f32 %v1383, %v1387
    %s1390 = sld [smem:[#allocation8 + $0x16]]
    %v1391 = vstv %s1390
    %v1392 = vadd.f32 %v1388, %v1391
    %v1393 = vadd.f32 %v1389, %v1391
    %v1394 = vmax.f32 %v1392, 0.0
    %v1395 = vmax.f32 %v1393, 0.0
    %1396 = vst [vmem:[%s207 + $0x160] sm:$0xff] %v1394
    %1397 = vst [vmem:[%s207 + $0x168] sm:$0xff] %v1395
    %s1398 = sld [smem:[#allocation7 + $0xb8]]
    %v1399 = vstv %s1398
    %v1400 = vmul.f32 %v116, %v1399
    %v1401 = vmul.f32 %v117, %v1399
    %s1402 = sld [smem:[#allocation7 + $0xb9]]
    %v1403 = vstv %s1402
    %v1404 = vmul.f32 %v121, %v1403
    %v1405 = vmul.f32 %v122, %v1403
    %v1406 = vadd.f32 %v1400, %v1404
    %v1407 = vadd.f32 %v1401, %v1405
    %s1408 = sld [smem:[#allocation7 + $0xba]]
    %v1409 = vstv %s1408
    %v1410 = vmul.f32 %v126, %v1409
    %v1411 = vmul.f32 %v127, %v1409
    %v1412 = vadd.f32 %v1406, %v1410
    %v1413 = vadd.f32 %v1407, %v1411
    %s1414 = sld [smem:[#allocation7 + $0xbb]]
    %v1415 = vstv %s1414
    %v1416 = vmul.f32 %v131, %v1415
    %v1417 = vmul.f32 %v132, %v1415
    %v1418 = vadd.f32 %v1412, %v1416
    %v1419 = vadd.f32 %v1413, %v1417
    %s1420 = sld [smem:[#allocation7 + $0xbc]]
    %v1421 = vstv %s1420
    %v1422 = vmul.f32 %v136, %v1421
    %v1423 = vmul.f32 %v137, %v1421
    %v1424 = vadd.f32 %v1418, %v1422
    %v1425 = vadd.f32 %v1419, %v1423
    %s1426 = sld [smem:[#allocation7 + $0xbd]]
    %v1427 = vstv %s1426
    %v1428 = vmul.f32 %v141, %v1427
    %v1429 = vmul.f32 %v142, %v1427
    %v1430 = vadd.f32 %v1424, %v1428
    %v1431 = vadd.f32 %v1425, %v1429
    %s1432 = sld [smem:[#allocation7 + $0xbe]]
    %v1433 = vstv %s1432
    %v1434 = vmul.f32 %v146, %v1433
    %v1435 = vmul.f32 %v147, %v1433
    %v1436 = vadd.f32 %v1430, %v1434
    %v1437 = vadd.f32 %v1431, %v1435
    %s1438 = sld [smem:[#allocation7 + $0xbf]]
    %v1439 = vstv %s1438
    %v1440 = vmul.f32 %v151, %v1439
    %v1441 = vmul.f32 %v152, %v1439
    %v1442 = vadd.f32 %v1436, %v1440
    %v1443 = vadd.f32 %v1437, %v1441
    %s1444 = sld [smem:[#allocation8 + $0x17]]
    %v1445 = vstv %s1444
    %v1446 = vadd.f32 %v1442, %v1445
    %v1447 = vadd.f32 %v1443, %v1445
    %v1448 = vmax.f32 %v1446, 0.0
    %v1449 = vmax.f32 %v1447, 0.0
    %1450 = vst [vmem:[%s207 + $0x170] sm:$0xff] %v1448
    %1451 = vst [vmem:[%s207 + $0x178] sm:$0xff] %v1449
    %s1452 = sld [smem:[#allocation7 + $0xc0]]
    %v1453 = vstv %s1452
    %v1454 = vmul.f32 %v116, %v1453
    %v1455 = vmul.f32 %v117, %v1453
    %s1456 = sld [smem:[#allocation7 + $0xc1]]
    %v1457 = vstv %s1456
    %v1458 = vmul.f32 %v121, %v1457
    %v1459 = vmul.f32 %v122, %v1457
    %v1460 = vadd.f32 %v1454, %v1458
    %v1461 = vadd.f32 %v1455, %v1459
    %s1462 = sld [smem:[#allocation7 + $0xc2]]
    %v1463 = vstv %s1462
    %v1464 = vmul.f32 %v126, %v1463
    %v1465 = vmul.f32 %v127, %v1463
    %v1466 = vadd.f32 %v1460, %v1464
    %v1467 = vadd.f32 %v1461, %v1465
    %s1468 = sld [smem:[#allocation7 + $0xc3]]
    %v1469 = vstv %s1468
    %v1470 = vmul.f32 %v131, %v1469
    %v1471 = vmul.f32 %v132, %v1469
    %v1472 = vadd.f32 %v1466, %v1470
    %v1473 = vadd.f32 %v1467, %v1471
    %s1474 = sld [smem:[#allocation7 + $0xc4]]
    %v1475 = vstv %s1474
    %v1476 = vmul.f32 %v136, %v1475
    %v1477 = vmul.f32 %v137, %v1475
    %v1478 = vadd.f32 %v1472, %v1476
    %v1479 = vadd.f32 %v1473, %v1477
    %s1480 = sld [smem:[#allocation7 + $0xc5]]
    %v1481 = vstv %s1480
    %v1482 = vmul.f32 %v141, %v1481
    %v1483 = vmul.f32 %v142, %v1481
    %v1484 = vadd.f32 %v1478, %v1482
    %v1485 = vadd.f32 %v1479, %v1483
    %s1486 = sld [smem:[#allocation7 + $0xc6]]
    %v1487 = vstv %s1486
    %v1488 = vmul.f32 %v146, %v1487
    %v1489 = vmul.f32 %v147, %v1487
    %v1490 = vadd.f32 %v1484, %v1488
    %v1491 = vadd.f32 %v1485, %v1489
    %s1492 = sld [smem:[#allocation7 + $0xc7]]
    %v1493 = vstv %s1492
    %v1494 = vmul.f32 %v151, %v1493
    %v1495 = vmul.f32 %v152, %v1493
    %v1496 = vadd.f32 %v1490, %v1494
    %v1497 = vadd.f32 %v1491, %v1495
    %s1498 = sld [smem:[#allocation8 + $0x18]]
    %v1499 = vstv %s1498
    %v1500 = vadd.f32 %v1496, %v1499
    %v1501 = vadd.f32 %v1497, %v1499
    %v1502 = vmax.f32 %v1500, 0.0
    %v1503 = vmax.f32 %v1501, 0.0
    %1504 = vst [vmem:[%s207 + $0x180] sm:$0xff] %v1502
    %1505 = vst [vmem:[%s207 + $0x188] sm:$0xff] %v1503
    %s1506 = sld [smem:[#allocation7 + $0xc8]]
    %v1507 = vstv %s1506
    %v1508 = vmul.f32 %v116, %v1507
    %v1509 = vmul.f32 %v117, %v1507
    %s1510 = sld [smem:[#allocation7 + $0xc9]]
    %v1511 = vstv %s1510
    %v1512 = vmul.f32 %v121, %v1511
    %v1513 = vmul.f32 %v122, %v1511
    %v1514 = vadd.f32 %v1508, %v1512
    %v1515 = vadd.f32 %v1509, %v1513
    %s1516 = sld [smem:[#allocation7 + $0xca]]
    %v1517 = vstv %s1516
    %v1518 = vmul.f32 %v126, %v1517
    %v1519 = vmul.f32 %v127, %v1517
    %v1520 = vadd.f32 %v1514, %v1518
    %v1521 = vadd.f32 %v1515, %v1519
    %s1522 = sld [smem:[#allocation7 + $0xcb]]
    %v1523 = vstv %s1522
    %v1524 = vmul.f32 %v131, %v1523
    %v1525 = vmul.f32 %v132, %v1523
    %v1526 = vadd.f32 %v1520, %v1524
    %v1527 = vadd.f32 %v1521, %v1525
    %s1528 = sld [smem:[#allocation7 + $0xcc]]
    %v1529 = vstv %s1528
    %v1530 = vmul.f32 %v136, %v1529
    %v1531 = vmul.f32 %v137, %v1529
    %v1532 = vadd.f32 %v1526, %v1530
    %v1533 = vadd.f32 %v1527, %v1531
    %s1534 = sld [smem:[#allocation7 + $0xcd]]
    %v1535 = vstv %s1534
    %v1536 = vmul.f32 %v141, %v1535
    %v1537 = vmul.f32 %v142, %v1535
    %v1538 = vadd.f32 %v1532, %v1536
    %v1539 = vadd.f32 %v1533, %v1537
    %s1540 = sld [smem:[#allocation7 + $0xce]]
    %v1541 = vstv %s1540
    %v1542 = vmul.f32 %v146, %v1541
    %v1543 = vmul.f32 %v147, %v1541
    %v1544 = vadd.f32 %v1538, %v1542
    %v1545 = vadd.f32 %v1539, %v1543
    %s1546 = sld [smem:[#allocation7 + $0xcf]]
    %v1547 = vstv %s1546
    %v1548 = vmul.f32 %v151, %v1547
    %v1549 = vmul.f32 %v152, %v1547
    %v1550 = vadd.f32 %v1544, %v1548
    %v1551 = vadd.f32 %v1545, %v1549
    %s1552 = sld [smem:[#allocation8 + $0x19]]
    %v1553 = vstv %s1552
    %v1554 = vadd.f32 %v1550, %v1553
    %v1555 = vadd.f32 %v1551, %v1553
    %v1556 = vmax.f32 %v1554, 0.0
    %v1557 = vmax.f32 %v1555, 0.0
    %1558 = vst [vmem:[%s207 + $0x190] sm:$0xff] %v1556
    %1559 = vst [vmem:[%s207 + $0x198] sm:$0xff] %v1557
    %s1560 = sld [smem:[#allocation7 + $0xd0]]
    %v1561 = vstv %s1560
    %v1562 = vmul.f32 %v116, %v1561
    %v1563 = vmul.f32 %v117, %v1561
    %s1564 = sld [smem:[#allocation7 + $0xd1]]
    %v1565 = vstv %s1564
    %v1566 = vmul.f32 %v121, %v1565
    %v1567 = vmul.f32 %v122, %v1565
    %v1568 = vadd.f32 %v1562, %v1566
    %v1569 = vadd.f32 %v1563, %v1567
    %s1570 = sld [smem:[#allocation7 + $0xd2]]
    %v1571 = vstv %s1570
    %v1572 = vmul.f32 %v126, %v1571
    %v1573 = vmul.f32 %v127, %v1571
    %v1574 = vadd.f32 %v1568, %v1572
    %v1575 = vadd.f32 %v1569, %v1573
    %s1576 = sld [smem:[#allocation7 + $0xd3]]
    %v1577 = vstv %s1576
    %v1578 = vmul.f32 %v131, %v1577
    %v1579 = vmul.f32 %v132, %v1577
    %v1580 = vadd.f32 %v1574, %v1578
    %v1581 = vadd.f32 %v1575, %v1579
    %s1582 = sld [smem:[#allocation7 + $0xd4]]
    %v1583 = vstv %s1582
    %v1584 = vmul.f32 %v136, %v1583
    %v1585 = vmul.f32 %v137, %v1583
    %v1586 = vadd.f32 %v1580, %v1584
    %v1587 = vadd.f32 %v1581, %v1585
    %s1588 = sld [smem:[#allocation7 + $0xd5]]
    %v1589 = vstv %s1588
    %v1590 = vmul.f32 %v141, %v1589
    %v1591 = vmul.f32 %v142, %v1589
    %v1592 = vadd.f32 %v1586, %v1590
    %v1593 = vadd.f32 %v1587, %v1591
    %s1594 = sld [smem:[#allocation7 + $0xd6]]
    %v1595 = vstv %s1594
    %v1596 = vmul.f32 %v146, %v1595
    %v1597 = vmul.f32 %v147, %v1595
    %v1598 = vadd.f32 %v1592, %v1596
    %v1599 = vadd.f32 %v1593, %v1597
    %s1600 = sld [smem:[#allocation7 + $0xd7]]
    %v1601 = vstv %s1600
    %v1602 = vmul.f32 %v151, %v1601
    %v1603 = vmul.f32 %v152, %v1601
    %v1604 = vadd.f32 %v1598, %v1602
    %v1605 = vadd.f32 %v1599, %v1603
    %s1606 = sld [smem:[#allocation8 + $0x1a]]
    %v1607 = vstv %s1606
    %v1608 = vadd.f32 %v1604, %v1607
    %v1609 = vadd.f32 %v1605, %v1607
    %v1610 = vmax.f32 %v1608, 0.0
    %v1611 = vmax.f32 %v1609, 0.0
    %1612 = vst [vmem:[%s207 + $0x1a0] sm:$0xff] %v1610
    %1613 = vst [vmem:[%s207 + $0x1a8] sm:$0xff] %v1611
    %s1614 = sld [smem:[#allocation7 + $0xd8]]
    %v1615 = vstv %s1614
    %v1616 = vmul.f32 %v116, %v1615
    %v1617 = vmul.f32 %v117, %v1615
    %s1618 = sld [smem:[#allocation7 + $0xd9]]
    %v1619 = vstv %s1618
    %v1620 = vmul.f32 %v121, %v1619
    %v1621 = vmul.f32 %v122, %v1619
    %v1622 = vadd.f32 %v1616, %v1620
    %v1623 = vadd.f32 %v1617, %v1621
    %s1624 = sld [smem:[#allocation7 + $0xda]]
    %v1625 = vstv %s1624
    %v1626 = vmul.f32 %v126, %v1625
    %v1627 = vmul.f32 %v127, %v1625
    %v1628 = vadd.f32 %v1622, %v1626
    %v1629 = vadd.f32 %v1623, %v1627
    %s1630 = sld [smem:[#allocation7 + $0xdb]]
    %v1631 = vstv %s1630
    %v1632 = vmul.f32 %v131, %v1631
    %v1633 = vmul.f32 %v132, %v1631
    %v1634 = vadd.f32 %v1628, %v1632
    %v1635 = vadd.f32 %v1629, %v1633
    %s1636 = sld [smem:[#allocation7 + $0xdc]]
    %v1637 = vstv %s1636
    %v1638 = vmul.f32 %v136, %v1637
    %v1639 = vmul.f32 %v137, %v1637
    %v1640 = vadd.f32 %v1634, %v1638
    %v1641 = vadd.f32 %v1635, %v1639
    %s1642 = sld [smem:[#allocation7 + $0xdd]]
    %v1643 = vstv %s1642
    %v1644 = vmul.f32 %v141, %v1643
    %v1645 = vmul.f32 %v142, %v1643
    %v1646 = vadd.f32 %v1640, %v1644
    %v1647 = vadd.f32 %v1641, %v1645
    %s1648 = sld [smem:[#allocation7 + $0xde]]
    %v1649 = vstv %s1648
    %v1650 = vmul.f32 %v146, %v1649
    %v1651 = vmul.f32 %v147, %v1649
    %v1652 = vadd.f32 %v1646, %v1650
    %v1653 = vadd.f32 %v1647, %v1651
    %s1654 = sld [smem:[#allocation7 + $0xdf]]
    %v1655 = vstv %s1654
    %v1656 = vmul.f32 %v151, %v1655
    %v1657 = vmul.f32 %v152, %v1655
    %v1658 = vadd.f32 %v1652, %v1656
    %v1659 = vadd.f32 %v1653, %v1657
    %s1660 = sld [smem:[#allocation8 + $0x1b]]
    %v1661 = vstv %s1660
    %v1662 = vadd.f32 %v1658, %v1661
    %v1663 = vadd.f32 %v1659, %v1661
    %v1664 = vmax.f32 %v1662, 0.0
    %v1665 = vmax.f32 %v1663, 0.0
    %1666 = vst [vmem:[%s207 + $0x1b0] sm:$0xff] %v1664
    %1667 = vst [vmem:[%s207 + $0x1b8] sm:$0xff] %v1665
    %s1668 = sld [smem:[#allocation7 + $0xe0]]
    %v1669 = vstv %s1668
    %v1670 = vmul.f32 %v116, %v1669
    %v1671 = vmul.f32 %v117, %v1669
    %s1672 = sld [smem:[#allocation7 + $0xe1]]
    %v1673 = vstv %s1672
    %v1674 = vmul.f32 %v121, %v1673
    %v1675 = vmul.f32 %v122, %v1673
    %v1676 = vadd.f32 %v1670, %v1674
    %v1677 = vadd.f32 %v1671, %v1675
    %s1678 = sld [smem:[#allocation7 + $0xe2]]
    %v1679 = vstv %s1678
    %v1680 = vmul.f32 %v126, %v1679
    %v1681 = vmul.f32 %v127, %v1679
    %v1682 = vadd.f32 %v1676, %v1680
    %v1683 = vadd.f32 %v1677, %v1681
    %s1684 = sld [smem:[#allocation7 + $0xe3]]
    %v1685 = vstv %s1684
    %v1686 = vmul.f32 %v131, %v1685
    %v1687 = vmul.f32 %v132, %v1685
    %v1688 = vadd.f32 %v1682, %v1686
    %v1689 = vadd.f32 %v1683, %v1687
    %s1690 = sld [smem:[#allocation7 + $0xe4]]
    %v1691 = vstv %s1690
    %v1692 = vmul.f32 %v136, %v1691
    %v1693 = vmul.f32 %v137, %v1691
    %v1694 = vadd.f32 %v1688, %v1692
    %v1695 = vadd.f32 %v1689, %v1693
    %s1696 = sld [smem:[#allocation7 + $0xe5]]
    %v1697 = vstv %s1696
    %v1698 = vmul.f32 %v141, %v1697
    %v1699 = vmul.f32 %v142, %v1697
    %v1700 = vadd.f32 %v1694, %v1698
    %v1701 = vadd.f32 %v1695, %v1699
    %s1702 = sld [smem:[#allocation7 + $0xe6]]
    %v1703 = vstv %s1702
    %v1704 = vmul.f32 %v146, %v1703
    %v1705 = vmul.f32 %v147, %v1703
    %v1706 = vadd.f32 %v1700, %v1704
    %v1707 = vadd.f32 %v1701, %v1705
    %s1708 = sld [smem:[#allocation7 + $0xe7]]
    %v1709 = vstv %s1708
    %v1710 = vmul.f32 %v151, %v1709
    %v1711 = vmul.f32 %v152, %v1709
    %v1712 = vadd.f32 %v1706, %v1710
    %v1713 = vadd.f32 %v1707, %v1711
    %s1714 = sld [smem:[#allocation8 + $0x1c]]
    %v1715 = vstv %s1714
    %v1716 = vadd.f32 %v1712, %v1715
    %v1717 = vadd.f32 %v1713, %v1715
    %v1718 = vmax.f32 %v1716, 0.0
    %v1719 = vmax.f32 %v1717, 0.0
    %1720 = vst [vmem:[%s207 + $0x1c0] sm:$0xff] %v1718
    %1721 = vst [vmem:[%s207 + $0x1c8] sm:$0xff] %v1719
    %s1722 = sld [smem:[#allocation7 + $0xe8]]
    %v1723 = vstv %s1722
    %v1724 = vmul.f32 %v116, %v1723
    %v1725 = vmul.f32 %v117, %v1723
    %s1726 = sld [smem:[#allocation7 + $0xe9]]
    %v1727 = vstv %s1726
    %v1728 = vmul.f32 %v121, %v1727
    %v1729 = vmul.f32 %v122, %v1727
    %v1730 = vadd.f32 %v1724, %v1728
    %v1731 = vadd.f32 %v1725, %v1729
    %s1732 = sld [smem:[#allocation7 + $0xea]]
    %v1733 = vstv %s1732
    %v1734 = vmul.f32 %v126, %v1733
    %v1735 = vmul.f32 %v127, %v1733
    %v1736 = vadd.f32 %v1730, %v1734
    %v1737 = vadd.f32 %v1731, %v1735
    %s1738 = sld [smem:[#allocation7 + $0xeb]]
    %v1739 = vstv %s1738
    %v1740 = vmul.f32 %v131, %v1739
    %v1741 = vmul.f32 %v132, %v1739
    %v1742 = vadd.f32 %v1736, %v1740
    %v1743 = vadd.f32 %v1737, %v1741
    %s1744 = sld [smem:[#allocation7 + $0xec]]
    %v1745 = vstv %s1744
    %v1746 = vmul.f32 %v136, %v1745
    %v1747 = vmul.f32 %v137, %v1745
    %v1748 = vadd.f32 %v1742, %v1746
    %v1749 = vadd.f32 %v1743, %v1747
    %s1750 = sld [smem:[#allocation7 + $0xed]]
    %v1751 = vstv %s1750
    %v1752 = vmul.f32 %v141, %v1751
    %v1753 = vmul.f32 %v142, %v1751
    %v1754 = vadd.f32 %v1748, %v1752
    %v1755 = vadd.f32 %v1749, %v1753
    %s1756 = sld [smem:[#allocation7 + $0xee]]
    %v1757 = vstv %s1756
    %v1758 = vmul.f32 %v146, %v1757
    %v1759 = vmul.f32 %v147, %v1757
    %v1760 = vadd.f32 %v1754, %v1758
    %v1761 = vadd.f32 %v1755, %v1759
    %s1762 = sld [smem:[#allocation7 + $0xef]]
    %v1763 = vstv %s1762
    %v1764 = vmul.f32 %v151, %v1763
    %v1765 = vmul.f32 %v152, %v1763
    %v1766 = vadd.f32 %v1760, %v1764
    %v1767 = vadd.f32 %v1761, %v1765
    %s1768 = sld [smem:[#allocation8 + $0x1d]]
    %v1769 = vstv %s1768
    %v1770 = vadd.f32 %v1766, %v1769
    %v1771 = vadd.f32 %v1767, %v1769
    %v1772 = vmax.f32 %v1770, 0.0
    %v1773 = vmax.f32 %v1771, 0.0
    %1774 = vst [vmem:[%s207 + $0x1d0] sm:$0xff] %v1772
    %1775 = vst [vmem:[%s207 + $0x1d8] sm:$0xff] %v1773
    %s1776 = sld [smem:[#allocation7 + $0xf0]]
    %v1777 = vstv %s1776
    %v1778 = vmul.f32 %v116, %v1777
    %v1779 = vmul.f32 %v117, %v1777
    %s1780 = sld [smem:[#allocation7 + $0xf1]]
    %v1781 = vstv %s1780
    %v1782 = vmul.f32 %v121, %v1781
    %v1783 = vmul.f32 %v122, %v1781
    %v1784 = vadd.f32 %v1778, %v1782
    %v1785 = vadd.f32 %v1779, %v1783
    %s1786 = sld [smem:[#allocation7 + $0xf2]]
    %v1787 = vstv %s1786
    %v1788 = vmul.f32 %v126, %v1787
    %v1789 = vmul.f32 %v127, %v1787
    %v1790 = vadd.f32 %v1784, %v1788
    %v1791 = vadd.f32 %v1785, %v1789
    %s1792 = sld [smem:[#allocation7 + $0xf3]]
    %v1793 = vstv %s1792
    %v1794 = vmul.f32 %v131, %v1793
    %v1795 = vmul.f32 %v132, %v1793
    %v1796 = vadd.f32 %v1790, %v1794
    %v1797 = vadd.f32 %v1791, %v1795
    %s1798 = sld [smem:[#allocation7 + $0xf4]]
    %v1799 = vstv %s1798
    %v1800 = vmul.f32 %v136, %v1799
    %v1801 = vmul.f32 %v137, %v1799
    %v1802 = vadd.f32 %v1796, %v1800
    %v1803 = vadd.f32 %v1797, %v1801
    %s1804 = sld [smem:[#allocation7 + $0xf5]]
    %v1805 = vstv %s1804
    %v1806 = vmul.f32 %v141, %v1805
    %v1807 = vmul.f32 %v142, %v1805
    %v1808 = vadd.f32 %v1802, %v1806
    %v1809 = vadd.f32 %v1803, %v1807
    %s1810 = sld [smem:[#allocation7 + $0xf6]]
    %v1811 = vstv %s1810
    %v1812 = vmul.f32 %v146, %v1811
    %v1813 = vmul.f32 %v147, %v1811
    %v1814 = vadd.f32 %v1808, %v1812
    %v1815 = vadd.f32 %v1809, %v1813
    %s1816 = sld [smem:[#allocation7 + $0xf7]]
    %v1817 = vstv %s1816
    %v1818 = vmul.f32 %v151, %v1817
    %v1819 = vmul.f32 %v152, %v1817
    %v1820 = vadd.f32 %v1814, %v1818
    %v1821 = vadd.f32 %v1815, %v1819
    %s1822 = sld [smem:[#allocation8 + $0x1e]]
    %v1823 = vstv %s1822
    %v1824 = vadd.f32 %v1820, %v1823
    %v1825 = vadd.f32 %v1821, %v1823
    %v1826 = vmax.f32 %v1824, 0.0
    %v1827 = vmax.f32 %v1825, 0.0
    %1828 = vst [vmem:[%s207 + $0x1e0] sm:$0xff] %v1826
    %1829 = vst [vmem:[%s207 + $0x1e8] sm:$0xff] %v1827
    %s1830 = sld [smem:[#allocation7 + $0xf8]]
    %v1831 = vstv %s1830
    %v1832 = vmul.f32 %v116, %v1831
    %v1833 = vmul.f32 %v117, %v1831
    %s1834 = sld [smem:[#allocation7 + $0xf9]]
    %v1835 = vstv %s1834
    %v1836 = vmul.f32 %v121, %v1835
    %v1837 = vmul.f32 %v122, %v1835
    %v1838 = vadd.f32 %v1832, %v1836
    %v1839 = vadd.f32 %v1833, %v1837
    %s1840 = sld [smem:[#allocation7 + $0xfa]]
    %v1841 = vstv %s1840
    %v1842 = vmul.f32 %v126, %v1841
    %v1843 = vmul.f32 %v127, %v1841
    %v1844 = vadd.f32 %v1838, %v1842
    %v1845 = vadd.f32 %v1839, %v1843
    %s1846 = sld [smem:[#allocation7 + $0xfb]]
    %v1847 = vstv %s1846
    %v1848 = vmul.f32 %v131, %v1847
    %v1849 = vmul.f32 %v132, %v1847
    %v1850 = vadd.f32 %v1844, %v1848
    %v1851 = vadd.f32 %v1845, %v1849
    %s1852 = sld [smem:[#allocation7 + $0xfc]]
    %v1853 = vstv %s1852
    %v1854 = vmul.f32 %v136, %v1853
    %v1855 = vmul.f32 %v137, %v1853
    %v1856 = vadd.f32 %v1850, %v1854
    %v1857 = vadd.f32 %v1851, %v1855
    %s1858 = sld [smem:[#allocation7 + $0xfd]]
    %v1859 = vstv %s1858
    %v1860 = vmul.f32 %v141, %v1859
    %v1861 = vmul.f32 %v142, %v1859
    %v1862 = vadd.f32 %v1856, %v1860
    %v1863 = vadd.f32 %v1857, %v1861
    %s1864 = sld [smem:[#allocation7 + $0xfe]]
    %v1865 = vstv %s1864
    %v1866 = vmul.f32 %v146, %v1865
    %v1867 = vmul.f32 %v147, %v1865
    %v1868 = vadd.f32 %v1862, %v1866
    %v1869 = vadd.f32 %v1863, %v1867
    %s1870 = sld [smem:[#allocation7 + $0xff]]
    %v1871 = vstv %s1870
    %v1872 = vmul.f32 %v151, %v1871
    %v1873 = vmul.f32 %v152, %v1871
    %v1874 = vadd.f32 %v1868, %v1872
    %v1875 = vadd.f32 %v1869, %v1873
    %s1876 = sld [smem:[#allocation8 + $0x1f]]
    %v1877 = vstv %s1876
    %v1878 = vadd.f32 %v1874, %v1877
    %v1879 = vadd.f32 %v1875, %v1877
    %v1880 = vmax.f32 %v1878, 0.0
    %v1881 = vmax.f32 %v1879, 0.0
    %1882 = vst [vmem:[%s207 + $0x1f0] sm:$0xff] %v1880
    %1883 = vst [vmem:[%s207 + $0x1f8] sm:$0xff] %v1881
    %v1884 = vld [vmem:[#allocation2] sm:$0xff]
    %v1885 = vld [vmem:[#allocation2 + $0x8] sm:$0xff]
    %v1886 = vld [vmem:[#allocation2 + $0x10] sm:$0xff]
    %v1887 = vld [vmem:[#allocation2 + $0x18] sm:$0xff]
    %v1888 = vld [vmem:[#allocation2 + $0x20] sm:$0xff]
    %v1889 = vld [vmem:[#allocation2 + $0x28] sm:$0xff]
    %v1890 = vld [vmem:[#allocation2 + $0x30] sm:$0xff]
    %v1891 = vld [vmem:[#allocation2 + $0x38] sm:$0xff]
    %v1892 = vld [vmem:[#allocation2 + $0x40] sm:$0xff]
    %v1893 = vld [vmem:[#allocation2 + $0x48] sm:$0xff]
    %v1894 = vld [vmem:[#allocation2 + $0x50] sm:$0xff]
    %v1895 = vld [vmem:[#allocation2 + $0x58] sm:$0xff]
    %v1896 = vld [vmem:[#allocation2 + $0x60] sm:$0xff]
    %v1897 = vld [vmem:[#allocation2 + $0x68] sm:$0xff]
    %v1898 = vld [vmem:[#allocation2 + $0x70] sm:$0xff]
    %v1899 = vld [vmem:[#allocation2 + $0x78] sm:$0xff]
    %v1900 = vld [vmem:[#allocation2 + $0x80] sm:$0xff]
    %v1901 = vld [vmem:[#allocation2 + $0x88] sm:$0xff]
    %v1902 = vld [vmem:[#allocation2 + $0x90] sm:$0xff]
    %v1903 = vld [vmem:[#allocation2 + $0x98] sm:$0xff]
    %v1904 = vld [vmem:[#allocation2 + $0xa0] sm:$0xff]
    %v1905 = vld [vmem:[#allocation2 + $0xa8] sm:$0xff]
    %v1906 = vld [vmem:[#allocation2 + $0xb0] sm:$0xff]
    %v1907 = vld [vmem:[#allocation2 + $0xb8] sm:$0xff]
    %v1908 = vld [vmem:[#allocation2 + $0xc0] sm:$0xff]
    %v1909 = vld [vmem:[#allocation2 + $0xc8] sm:$0xff]
    %v1910 = vld [vmem:[#allocation2 + $0xd0] sm:$0xff]
    %v1911 = vld [vmem:[#allocation2 + $0xd8] sm:$0xff]
    %v1912 = vld [vmem:[#allocation2 + $0xe0] sm:$0xff]
    %v1913 = vld [vmem:[#allocation2 + $0xe8] sm:$0xff]
    %v1914 = vld [vmem:[#allocation2 + $0xf0] sm:$0xff]
    %v1915 = vld [vmem:[#allocation2 + $0xf8] sm:$0xff]
    %v1916 = vld [vmem:[#allocation2 + $0x100] sm:$0xff]
    %v1917 = vld [vmem:[#allocation2 + $0x108] sm:$0xff]
    %v1918 = vld [vmem:[#allocation2 + $0x110] sm:$0xff]
    %v1919 = vld [vmem:[#allocation2 + $0x118] sm:$0xff]
    %v1920 = vld [vmem:[#allocation2 + $0x120] sm:$0xff]
    %v1921 = vld [vmem:[#allocation2 + $0x128] sm:$0xff]
    %v1922 = vld [vmem:[#allocation2 + $0x130] sm:$0xff]
    %v1923 = vld [vmem:[#allocation2 + $0x138] sm:$0xff]
    %v1924 = vld [vmem:[#allocation2 + $0x140] sm:$0xff]
    %v1925 = vld [vmem:[#allocation2 + $0x148] sm:$0xff]
    %v1926 = vld [vmem:[#allocation2 + $0x150] sm:$0xff]
    %v1927 = vld [vmem:[#allocation2 + $0x158] sm:$0xff]
    %v1928 = vld [vmem:[#allocation2 + $0x160] sm:$0xff]
    %v1929 = vld [vmem:[#allocation2 + $0x168] sm:$0xff]
    %v1930 = vld [vmem:[#allocation2 + $0x170] sm:$0xff]
    %v1931 = vld [vmem:[#allocation2 + $0x178] sm:$0xff]
    %v1932 = vld [vmem:[#allocation2 + $0x180] sm:$0xff]
    %v1933 = vld [vmem:[#allocation2 + $0x188] sm:$0xff]
    %v1934 = vld [vmem:[#allocation2 + $0x190] sm:$0xff]
    %v1935 = vld [vmem:[#allocation2 + $0x198] sm:$0xff]
    %v1936 = vld [vmem:[#allocation2 + $0x1a0] sm:$0xff]
    %v1937 = vld [vmem:[#allocation2 + $0x1a8] sm:$0xff]
    %v1938 = vld [vmem:[#allocation2 + $0x1b0] sm:$0xff]
    %v1939 = vld [vmem:[#allocation2 + $0x1b8] sm:$0xff]
    %v1940 = vld [vmem:[#allocation2 + $0x1c0] sm:$0xff]
    %v1941 = vld [vmem:[#allocation2 + $0x1c8] sm:$0xff]
    %v1942 = vld [vmem:[#allocation2 + $0x1d0] sm:$0xff]
    %v1943 = vld [vmem:[#allocation2 + $0x1d8] sm:$0xff]
    %v1944 = vld [vmem:[#allocation2 + $0x1e0] sm:$0xff]
    %v1945 = vld [vmem:[#allocation2 + $0x1e8] sm:$0xff]
    %v1946 = vld [vmem:[#allocation2 + $0x1f0] sm:$0xff]
    %v1947 = vld [vmem:[#allocation2 + $0x1f8] sm:$0xff]
    %v1948 = vpack.c.bf16 %v1884, %v1884
    %v1949 = vpack.c.bf16 %v1885, %v1885
    %v1950 = vpack.c.bf16 %v1886, %v1886
    %v1951 = vpack.c.bf16 %v1887, %v1887
    %v1952 = vpack.c.bf16 %v1888, %v1888
    %v1953 = vpack.c.bf16 %v1889, %v1889
    %v1954 = vpack.c.bf16 %v1890, %v1890
    %v1955 = vpack.c.bf16 %v1891, %v1891
    %v1956 = vpack.c.bf16 %v1892, %v1892
    %v1957 = vpack.c.bf16 %v1893, %v1893
    %v1958 = vpack.c.bf16 %v1894, %v1894
    %v1959 = vpack.c.bf16 %v1895, %v1895
    %v1960 = vpack.c.bf16 %v1896, %v1896
    %v1961 = vpack.c.bf16 %v1897, %v1897
    %v1962 = vpack.c.bf16 %v1898, %v1898
    %v1963 = vpack.c.bf16 %v1899, %v1899
    %v1964 = vpack.c.bf16 %v1900, %v1900
    %v1965 = vpack.c.bf16 %v1901, %v1901
    %v1966 = vpack.c.bf16 %v1902, %v1902
    %v1967 = vpack.c.bf16 %v1903, %v1903
    %v1968 = vpack.c.bf16 %v1904, %v1904
    %v1969 = vpack.c.bf16 %v1905, %v1905
    %v1970 = vpack.c.bf16 %v1906, %v1906
    %v1971 = vpack.c.bf16 %v1907, %v1907
    %v1972 = vpack.c.bf16 %v1908, %v1908
    %v1973 = vpack.c.bf16 %v1909, %v1909
    %v1974 = vpack.c.bf16 %v1910, %v1910
    %v1975 = vpack.c.bf16 %v1911, %v1911
    %v1976 = vpack.c.bf16 %v1912, %v1912
    %v1977 = vpack.c.bf16 %v1913, %v1913
    %v1978 = vpack.c.bf16 %v1914, %v1914
    %v1979 = vpack.c.bf16 %v1915, %v1915
    %v1980 = vpack.c.bf16 %v1916, %v1916
    %v1981 = vpack.c.bf16 %v1917, %v1917
    %v1982 = vpack.c.bf16 %v1918, %v1918
    %v1983 = vpack.c.bf16 %v1919, %v1919
    %v1984 = vpack.c.bf16 %v1920, %v1920
    %v1985 = vpack.c.bf16 %v1921, %v1921
    %v1986 = vpack.c.bf16 %v1922, %v1922
    %v1987 = vpack.c.bf16 %v1923, %v1923
    %v1988 = vpack.c.bf16 %v1924, %v1924
    %v1989 = vpack.c.bf16 %v1925, %v1925
    %v1990 = vpack.c.bf16 %v1926, %v1926
    %v1991 = vpack.c.bf16 %v1927, %v1927
    %v1992 = vpack.c.bf16 %v1928, %v1928
    %v1993 = vpack.c.bf16 %v1929, %v1929
    %v1994 = vpack.c.bf16 %v1930, %v1930
    %v1995 = vpack.c.bf16 %v1931, %v1931
    %v1996 = vpack.c.bf16 %v1932, %v1932
    %v1997 = vpack.c.bf16 %v1933, %v1933
    %v1998 = vpack.c.bf16 %v1934, %v1934
    %v1999 = vpack.c.bf16 %v1935, %v1935
    %v2000 = vpack.c.bf16 %v1936, %v1936
    %v2001 = vpack.c.bf16 %v1937, %v1937
    %v2002 = vpack.c.bf16 %v1938, %v1938
    %v2003 = vpack.c.bf16 %v1939, %v1939
    %v2004 = vpack.c.bf16 %v1940, %v1940
    %v2005 = vpack.c.bf16 %v1941, %v1941
    %v2006 = vpack.c.bf16 %v1942, %v1942
    %v2007 = vpack.c.bf16 %v1943, %v1943
    %v2008 = vpack.c.bf16 %v1944, %v1944
    %v2009 = vpack.c.bf16 %v1945, %v1945
    %v2010 = vpack.c.bf16 %v1946, %v1946
    %v2011 = vpack.c.bf16 %v1947, %v1947
    %v2012 = vld [vmem:[#allocation10] sm:$0xf]
    %v2013 = vld [vmem:[#allocation10 + $0x4] sm:$0xf]
    %v2014 = vld [vmem:[#allocation10 + $0x8] sm:$0xf]
    %v2015 = vld [vmem:[#allocation10 + $0xc] sm:$0xf]
    %v2016 = vld [vmem:[#allocation10 + $0x10] sm:$0xf]
    %v2017 = vld [vmem:[#allocation10 + $0x14] sm:$0xf]
    %v2018 = vld [vmem:[#allocation10 + $0x18] sm:$0xf]
    %v2019 = vld [vmem:[#allocation10 + $0x1c] sm:$0xf]
    %v2020 = vld [vmem:[#allocation10 + $0x20] sm:$0xf]
    %v2021 = vld [vmem:[#allocation10 + $0x24] sm:$0xf]
    %v2022 = vld [vmem:[#allocation10 + $0x28] sm:$0xf]
    %v2023 = vld [vmem:[#allocation10 + $0x2c] sm:$0xf]
    %v2024 = vld [vmem:[#allocation10 + $0x30] sm:$0xf]
    %v2025 = vld [vmem:[#allocation10 + $0x34] sm:$0xf]
    %v2026 = vld [vmem:[#allocation10 + $0x38] sm:$0xf]
    %v2027 = vld [vmem:[#allocation10 + $0x3c] sm:$0xf]
    %v2028 = vld [vmem:[#allocation10 + $0x40] sm:$0xf]
    %v2029 = vld [vmem:[#allocation10 + $0x44] sm:$0xf]
    %v2030 = vld [vmem:[#allocation10 + $0x48] sm:$0xf]
    %v2031 = vld [vmem:[#allocation10 + $0x4c] sm:$0xf]
    %v2032 = vld [vmem:[#allocation10 + $0x50] sm:$0xf]
    %v2033 = vld [vmem:[#allocation10 + $0x54] sm:$0xf]
    %v2034 = vld [vmem:[#allocation10 + $0x58] sm:$0xf]
    %v2035 = vld [vmem:[#allocation10 + $0x5c] sm:$0xf]
    %v2036 = vld [vmem:[#allocation10 + $0x60] sm:$0xf]
    %v2037 = vld [vmem:[#allocation10 + $0x64] sm:$0xf]
    %v2038 = vld [vmem:[#allocation10 + $0x68] sm:$0xf]
    %v2039 = vld [vmem:[#allocation10 + $0x6c] sm:$0xf]
    %v2040 = vld [vmem:[#allocation10 + $0x70] sm:$0xf]
    %v2041 = vld [vmem:[#allocation10 + $0x74] sm:$0xf]
    %v2042 = vld [vmem:[#allocation10 + $0x78] sm:$0xf]
    %v2043 = vld [vmem:[#allocation10 + $0x7c] sm:$0xf]
    %v2044 = vld [vmem:[#allocation10 + $0x80] sm:$0xf]
    %v2045 = vld [vmem:[#allocation10 + $0x84] sm:$0xf]
    %v2046 = vld [vmem:[#allocation10 + $0x88] sm:$0xf]
    %v2047 = vld [vmem:[#allocation10 + $0x8c] sm:$0xf]
    %v2048 = vld [vmem:[#allocation10 + $0x90] sm:$0xf]
    %v2049 = vld [vmem:[#allocation10 + $0x94] sm:$0xf]
    %v2050 = vld [vmem:[#allocation10 + $0x98] sm:$0xf]
    %v2051 = vld [vmem:[#allocation10 + $0x9c] sm:$0xf]
    %v2052 = vld [vmem:[#allocation10 + $0xa0] sm:$0xf]
    %v2053 = vld [vmem:[#allocation10 + $0xa4] sm:$0xf]
    %v2054 = vld [vmem:[#allocation10 + $0xa8] sm:$0xf]
    %v2055 = vld [vmem:[#allocation10 + $0xac] sm:$0xf]
    %v2056 = vld [vmem:[#allocation10 + $0xb0] sm:$0xf]
    %v2057 = vld [vmem:[#allocation10 + $0xb4] sm:$0xf]
    %v2058 = vld [vmem:[#allocation10 + $0xb8] sm:$0xf]
    %v2059 = vld [vmem:[#allocation10 + $0xbc] sm:$0xf]
    %v2060 = vld [vmem:[#allocation10 + $0xc0] sm:$0xf]
    %v2061 = vld [vmem:[#allocation10 + $0xc4] sm:$0xf]
    %v2062 = vld [vmem:[#allocation10 + $0xc8] sm:$0xf]
    %v2063 = vld [vmem:[#allocation10 + $0xcc] sm:$0xf]
    %v2064 = vld [vmem:[#allocation10 + $0xd0] sm:$0xf]
    %v2065 = vld [vmem:[#allocation10 + $0xd4] sm:$0xf]
    %v2066 = vld [vmem:[#allocation10 + $0xd8] sm:$0xf]
    %v2067 = vld [vmem:[#allocation10 + $0xdc] sm:$0xf]
    %v2068 = vld [vmem:[#allocation10 + $0xe0] sm:$0xf]
    %v2069 = vld [vmem:[#allocation10 + $0xe4] sm:$0xf]
    %v2070 = vld [vmem:[#allocation10 + $0xe8] sm:$0xf]
    %v2071 = vld [vmem:[#allocation10 + $0xec] sm:$0xf]
    %v2072 = vld [vmem:[#allocation10 + $0xf0] sm:$0xf]
    %v2073 = vld [vmem:[#allocation10 + $0xf4] sm:$0xf]
    %v2074 = vld [vmem:[#allocation10 + $0xf8] sm:$0xf]
    %v2075 = vld [vmem:[#allocation10 + $0xfc] sm:$0xf]
    %v2076 = vld [vmem:[#allocation10 + $0x100] sm:$0xf]
    %v2077 = vld [vmem:[#allocation10 + $0x104] sm:$0xf]
    %v2078 = vld [vmem:[#allocation10 + $0x108] sm:$0xf]
    %v2079 = vld [vmem:[#allocation10 + $0x10c] sm:$0xf]
    %v2080 = vld [vmem:[#allocation10 + $0x110] sm:$0xf]
    %v2081 = vld [vmem:[#allocation10 + $0x114] sm:$0xf]
    %v2082 = vld [vmem:[#allocation10 + $0x118] sm:$0xf]
    %v2083 = vld [vmem:[#allocation10 + $0x11c] sm:$0xf]
    %v2084 = vld [vmem:[#allocation10 + $0x120] sm:$0xf]
    %v2085 = vld [vmem:[#allocation10 + $0x124] sm:$0xf]
    %v2086 = vld [vmem:[#allocation10 + $0x128] sm:$0xf]
    %v2087 = vld [vmem:[#allocation10 + $0x12c] sm:$0xf]
    %v2088 = vld [vmem:[#allocation10 + $0x130] sm:$0xf]
    %v2089 = vld [vmem:[#allocation10 + $0x134] sm:$0xf]
    %v2090 = vld [vmem:[#allocation10 + $0x138] sm:$0xf]
    %v2091 = vld [vmem:[#allocation10 + $0x13c] sm:$0xf]
    %v2092 = vld [vmem:[#allocation10 + $0x140] sm:$0xf]
    %v2093 = vld [vmem:[#allocation10 + $0x144] sm:$0xf]
    %v2094 = vld [vmem:[#allocation10 + $0x148] sm:$0xf]
    %v2095 = vld [vmem:[#allocation10 + $0x14c] sm:$0xf]
    %v2096 = vld [vmem:[#allocation10 + $0x150] sm:$0xf]
    %v2097 = vld [vmem:[#allocation10 + $0x154] sm:$0xf]
    %v2098 = vld [vmem:[#allocation10 + $0x158] sm:$0xf]
    %v2099 = vld [vmem:[#allocation10 + $0x15c] sm:$0xf]
    %v2100 = vld [vmem:[#allocation10 + $0x160] sm:$0xf]
    %v2101 = vld [vmem:[#allocation10 + $0x164] sm:$0xf]
    %v2102 = vld [vmem:[#allocation10 + $0x168] sm:$0xf]
    %v2103 = vld [vmem:[#allocation10 + $0x16c] sm:$0xf]
    %v2104 = vld [vmem:[#allocation10 + $0x170] sm:$0xf]
    %v2105 = vld [vmem:[#allocation10 + $0x174] sm:$0xf]
    %v2106 = vld [vmem:[#allocation10 + $0x178] sm:$0xf]
    %v2107 = vld [vmem:[#allocation10 + $0x17c] sm:$0xf]
    %v2108 = vld [vmem:[#allocation10 + $0x180] sm:$0xf]
    %v2109 = vld [vmem:[#allocation10 + $0x184] sm:$0xf]
    %v2110 = vld [vmem:[#allocation10 + $0x188] sm:$0xf]
    %v2111 = vld [vmem:[#allocation10 + $0x18c] sm:$0xf]
    %v2112 = vld [vmem:[#allocation10 + $0x190] sm:$0xf]
    %v2113 = vld [vmem:[#allocation10 + $0x194] sm:$0xf]
    %v2114 = vld [vmem:[#allocation10 + $0x198] sm:$0xf]
    %v2115 = vld [vmem:[#allocation10 + $0x19c] sm:$0xf]
    %v2116 = vld [vmem:[#allocation10 + $0x1a0] sm:$0xf]
    %v2117 = vld [vmem:[#allocation10 + $0x1a4] sm:$0xf]
    %v2118 = vld [vmem:[#allocation10 + $0x1a8] sm:$0xf]
    %v2119 = vld [vmem:[#allocation10 + $0x1ac] sm:$0xf]
    %v2120 = vld [vmem:[#allocation10 + $0x1b0] sm:$0xf]
    %v2121 = vld [vmem:[#allocation10 + $0x1b4] sm:$0xf]
    %v2122 = vld [vmem:[#allocation10 + $0x1b8] sm:$0xf]
    %v2123 = vld [vmem:[#allocation10 + $0x1bc] sm:$0xf]
    %v2124 = vld [vmem:[#allocation10 + $0x1c0] sm:$0xf]
    %v2125 = vld [vmem:[#allocation10 + $0x1c4] sm:$0xf]
    %v2126 = vld [vmem:[#allocation10 + $0x1c8] sm:$0xf]
    %v2127 = vld [vmem:[#allocation10 + $0x1cc] sm:$0xf]
    %v2128 = vld [vmem:[#allocation10 + $0x1d0] sm:$0xf]
    %v2129 = vld [vmem:[#allocation10 + $0x1d4] sm:$0xf]
    %v2130 = vld [vmem:[#allocation10 + $0x1d8] sm:$0xf]
    %v2131 = vld [vmem:[#allocation10 + $0x1dc] sm:$0xf]
    %v2132 = vld [vmem:[#allocation10 + $0x1e0] sm:$0xf]
    %v2133 = vld [vmem:[#allocation10 + $0x1e4] sm:$0xf]
    %v2134 = vld [vmem:[#allocation10 + $0x1e8] sm:$0xf]
    %v2135 = vld [vmem:[#allocation10 + $0x1ec] sm:$0xf]
    %v2136 = vld [vmem:[#allocation10 + $0x1f0] sm:$0xf]
    %v2137 = vld [vmem:[#allocation10 + $0x1f4] sm:$0xf]
    %v2138 = vld [vmem:[#allocation10 + $0x1f8] sm:$0xf]
    %v2139 = vld [vmem:[#allocation10 + $0x1fc] sm:$0xf]
    %v2140 = vld [vmem:[#allocation10 + $0x200] sm:$0xf]
    %v2141 = vld [vmem:[#allocation10 + $0x204] sm:$0xf]
    %v2142 = vld [vmem:[#allocation10 + $0x208] sm:$0xf]
    %v2143 = vld [vmem:[#allocation10 + $0x20c] sm:$0xf]
    %v2144 = vld [vmem:[#allocation10 + $0x210] sm:$0xf]
    %v2145 = vld [vmem:[#allocation10 + $0x214] sm:$0xf]
    %v2146 = vld [vmem:[#allocation10 + $0x218] sm:$0xf]
    %v2147 = vld [vmem:[#allocation10 + $0x21c] sm:$0xf]
    %v2148 = vld [vmem:[#allocation10 + $0x220] sm:$0xf]
    %v2149 = vld [vmem:[#allocation10 + $0x224] sm:$0xf]
    %v2150 = vld [vmem:[#allocation10 + $0x228] sm:$0xf]
    %v2151 = vld [vmem:[#allocation10 + $0x22c] sm:$0xf]
    %v2152 = vld [vmem:[#allocation10 + $0x230] sm:$0xf]
    %v2153 = vld [vmem:[#allocation10 + $0x234] sm:$0xf]
    %v2154 = vld [vmem:[#allocation10 + $0x238] sm:$0xf]
    %v2155 = vld [vmem:[#allocation10 + $0x23c] sm:$0xf]
    %v2156 = vld [vmem:[#allocation10 + $0x240] sm:$0xf]
    %v2157 = vld [vmem:[#allocation10 + $0x244] sm:$0xf]
    %v2158 = vld [vmem:[#allocation10 + $0x248] sm:$0xf]
    %v2159 = vld [vmem:[#allocation10 + $0x24c] sm:$0xf]
    %v2160 = vld [vmem:[#allocation10 + $0x250] sm:$0xf]
    %v2161 = vld [vmem:[#allocation10 + $0x254] sm:$0xf]
    %v2162 = vld [vmem:[#allocation10 + $0x258] sm:$0xf]
    %v2163 = vld [vmem:[#allocation10 + $0x25c] sm:$0xf]
    %v2164 = vld [vmem:[#allocation10 + $0x260] sm:$0xf]
    %v2165 = vld [vmem:[#allocation10 + $0x264] sm:$0xf]
    %v2166 = vld [vmem:[#allocation10 + $0x268] sm:$0xf]
    %v2167 = vld [vmem:[#allocation10 + $0x26c] sm:$0xf]
    %v2168 = vld [vmem:[#allocation10 + $0x270] sm:$0xf]
    %v2169 = vld [vmem:[#allocation10 + $0x274] sm:$0xf]
    %v2170 = vld [vmem:[#allocation10 + $0x278] sm:$0xf]
    %v2171 = vld [vmem:[#allocation10 + $0x27c] sm:$0xf]
    %v2172 = vld [vmem:[#allocation10 + $0x280] sm:$0xf]
    %v2173 = vld [vmem:[#allocation10 + $0x284] sm:$0xf]
    %v2174 = vld [vmem:[#allocation10 + $0x288] sm:$0xf]
    %v2175 = vld [vmem:[#allocation10 + $0x28c] sm:$0xf]
    %v2176 = vld [vmem:[#allocation10 + $0x290] sm:$0xf]
    %v2177 = vld [vmem:[#allocation10 + $0x294] sm:$0xf]
    %v2178 = vld [vmem:[#allocation10 + $0x298] sm:$0xf]
    %v2179 = vld [vmem:[#allocation10 + $0x29c] sm:$0xf]
    %v2180 = vld [vmem:[#allocation10 + $0x2a0] sm:$0xf]
    %v2181 = vld [vmem:[#allocation10 + $0x2a4] sm:$0xf]
    %v2182 = vld [vmem:[#allocation10 + $0x2a8] sm:$0xf]
    %v2183 = vld [vmem:[#allocation10 + $0x2ac] sm:$0xf]
    %v2184 = vld [vmem:[#allocation10 + $0x2b0] sm:$0xf]
    %v2185 = vld [vmem:[#allocation10 + $0x2b4] sm:$0xf]
    %v2186 = vld [vmem:[#allocation10 + $0x2b8] sm:$0xf]
    %v2187 = vld [vmem:[#allocation10 + $0x2bc] sm:$0xf]
    %v2188 = vld [vmem:[#allocation10 + $0x2c0] sm:$0xf]
    %v2189 = vld [vmem:[#allocation10 + $0x2c4] sm:$0xf]
    %v2190 = vld [vmem:[#allocation10 + $0x2c8] sm:$0xf]
    %v2191 = vld [vmem:[#allocation10 + $0x2cc] sm:$0xf]
    %v2192 = vld [vmem:[#allocation10 + $0x2d0] sm:$0xf]
    %v2193 = vld [vmem:[#allocation10 + $0x2d4] sm:$0xf]
    %v2194 = vld [vmem:[#allocation10 + $0x2d8] sm:$0xf]
    %v2195 = vld [vmem:[#allocation10 + $0x2dc] sm:$0xf]
    %v2196 = vld [vmem:[#allocation10 + $0x2e0] sm:$0xf]
    %v2197 = vld [vmem:[#allocation10 + $0x2e4] sm:$0xf]
    %v2198 = vld [vmem:[#allocation10 + $0x2e8] sm:$0xf]
    %v2199 = vld [vmem:[#allocation10 + $0x2ec] sm:$0xf]
    %v2200 = vld [vmem:[#allocation10 + $0x2f0] sm:$0xf]
    %v2201 = vld [vmem:[#allocation10 + $0x2f4] sm:$0xf]
    %v2202 = vld [vmem:[#allocation10 + $0x2f8] sm:$0xf]
    %v2203 = vld [vmem:[#allocation10 + $0x2fc] sm:$0xf]
    %v2204 = vld [vmem:[#allocation10 + $0x300] sm:$0xf]
    %v2205 = vld [vmem:[#allocation10 + $0x304] sm:$0xf]
    %v2206 = vld [vmem:[#allocation10 + $0x308] sm:$0xf]
    %v2207 = vld [vmem:[#allocation10 + $0x30c] sm:$0xf]
    %v2208 = vld [vmem:[#allocation10 + $0x310] sm:$0xf]
    %v2209 = vld [vmem:[#allocation10 + $0x314] sm:$0xf]
    %v2210 = vld [vmem:[#allocation10 + $0x318] sm:$0xf]
    %v2211 = vld [vmem:[#allocation10 + $0x31c] sm:$0xf]
    %v2212 = vld [vmem:[#allocation10 + $0x320] sm:$0xf]
    %v2213 = vld [vmem:[#allocation10 + $0x324] sm:$0xf]
    %v2214 = vld [vmem:[#allocation10 + $0x328] sm:$0xf]
    %v2215 = vld [vmem:[#allocation10 + $0x32c] sm:$0xf]
    %v2216 = vld [vmem:[#allocation10 + $0x330] sm:$0xf]
    %v2217 = vld [vmem:[#allocation10 + $0x334] sm:$0xf]
    %v2218 = vld [vmem:[#allocation10 + $0x338] sm:$0xf]
    %v2219 = vld [vmem:[#allocation10 + $0x33c] sm:$0xf]
    %v2220 = vld [vmem:[#allocation10 + $0x340] sm:$0xf]
    %v2221 = vld [vmem:[#allocation10 + $0x344] sm:$0xf]
    %v2222 = vld [vmem:[#allocation10 + $0x348] sm:$0xf]
    %v2223 = vld [vmem:[#allocation10 + $0x34c] sm:$0xf]
    %v2224 = vld [vmem:[#allocation10 + $0x350] sm:$0xf]
    %v2225 = vld [vmem:[#allocation10 + $0x354] sm:$0xf]
    %v2226 = vld [vmem:[#allocation10 + $0x358] sm:$0xf]
    %v2227 = vld [vmem:[#allocation10 + $0x35c] sm:$0xf]
    %v2228 = vld [vmem:[#allocation10 + $0x360] sm:$0xf]
    %v2229 = vld [vmem:[#allocation10 + $0x364] sm:$0xf]
    %v2230 = vld [vmem:[#allocation10 + $0x368] sm:$0xf]
    %v2231 = vld [vmem:[#allocation10 + $0x36c] sm:$0xf]
    %v2232 = vld [vmem:[#allocation10 + $0x370] sm:$0xf]
    %v2233 = vld [vmem:[#allocation10 + $0x374] sm:$0xf]
    %v2234 = vld [vmem:[#allocation10 + $0x378] sm:$0xf]
    %v2235 = vld [vmem:[#allocation10 + $0x37c] sm:$0xf]
    %v2236 = vld [vmem:[#allocation10 + $0x380] sm:$0xf]
    %v2237 = vld [vmem:[#allocation10 + $0x384] sm:$0xf]
    %v2238 = vld [vmem:[#allocation10 + $0x388] sm:$0xf]
    %v2239 = vld [vmem:[#allocation10 + $0x38c] sm:$0xf]
    %v2240 = vld [vmem:[#allocation10 + $0x390] sm:$0xf]
    %v2241 = vld [vmem:[#allocation10 + $0x394] sm:$0xf]
    %v2242 = vld [vmem:[#allocation10 + $0x398] sm:$0xf]
    %v2243 = vld [vmem:[#allocation10 + $0x39c] sm:$0xf]
    %v2244 = vld [vmem:[#allocation10 + $0x3a0] sm:$0xf]
    %v2245 = vld [vmem:[#allocation10 + $0x3a4] sm:$0xf]
    %v2246 = vld [vmem:[#allocation10 + $0x3a8] sm:$0xf]
    %v2247 = vld [vmem:[#allocation10 + $0x3ac] sm:$0xf]
    %v2248 = vld [vmem:[#allocation10 + $0x3b0] sm:$0xf]
    %v2249 = vld [vmem:[#allocation10 + $0x3b4] sm:$0xf]
    %v2250 = vld [vmem:[#allocation10 + $0x3b8] sm:$0xf]
    %v2251 = vld [vmem:[#allocation10 + $0x3bc] sm:$0xf]
    %v2252 = vld [vmem:[#allocation10 + $0x3c0] sm:$0xf]
    %v2253 = vld [vmem:[#allocation10 + $0x3c4] sm:$0xf]
    %v2254 = vld [vmem:[#allocation10 + $0x3c8] sm:$0xf]
    %v2255 = vld [vmem:[#allocation10 + $0x3cc] sm:$0xf]
    %v2256 = vld [vmem:[#allocation10 + $0x3d0] sm:$0xf]
    %v2257 = vld [vmem:[#allocation10 + $0x3d4] sm:$0xf]
    %v2258 = vld [vmem:[#allocation10 + $0x3d8] sm:$0xf]
    %v2259 = vld [vmem:[#allocation10 + $0x3dc] sm:$0xf]
    %v2260 = vld [vmem:[#allocation10 + $0x3e0] sm:$0xf]
    %v2261 = vld [vmem:[#allocation10 + $0x3e4] sm:$0xf]
    %v2262 = vld [vmem:[#allocation10 + $0x3e8] sm:$0xf]
    %v2263 = vld [vmem:[#allocation10 + $0x3ec] sm:$0xf]
    %v2264 = vld [vmem:[#allocation10 + $0x3f0] sm:$0xf]
    %v2265 = vld [vmem:[#allocation10 + $0x3f4] sm:$0xf]
    %v2266 = vld [vmem:[#allocation10 + $0x3f8] sm:$0xf]
    %v2267 = vld [vmem:[#allocation10 + $0x3fc] sm:$0xf]
    %v2268 = vld [vmem:[#allocation10 + $0x400] sm:$0xf]
    %v2269 = vld [vmem:[#allocation10 + $0x404] sm:$0xf]
    %v2270 = vld [vmem:[#allocation10 + $0x408] sm:$0xf]
    %v2271 = vld [vmem:[#allocation10 + $0x40c] sm:$0xf]
    %v2272 = vld [vmem:[#allocation10 + $0x410] sm:$0xf]
    %v2273 = vld [vmem:[#allocation10 + $0x414] sm:$0xf]
    %v2274 = vld [vmem:[#allocation10 + $0x418] sm:$0xf]
    %v2275 = vld [vmem:[#allocation10 + $0x41c] sm:$0xf]
    %v2276 = vld [vmem:[#allocation10 + $0x420] sm:$0xf]
    %v2277 = vld [vmem:[#allocation10 + $0x424] sm:$0xf]
    %v2278 = vld [vmem:[#allocation10 + $0x428] sm:$0xf]
    %v2279 = vld [vmem:[#allocation10 + $0x42c] sm:$0xf]
    %v2280 = vld [vmem:[#allocation10 + $0x430] sm:$0xf]
    %v2281 = vld [vmem:[#allocation10 + $0x434] sm:$0xf]
    %v2282 = vld [vmem:[#allocation10 + $0x438] sm:$0xf]
    %v2283 = vld [vmem:[#allocation10 + $0x43c] sm:$0xf]
    %v2284 = vld [vmem:[#allocation10 + $0x440] sm:$0xf]
    %v2285 = vld [vmem:[#allocation10 + $0x444] sm:$0xf]
    %v2286 = vld [vmem:[#allocation10 + $0x448] sm:$0xf]
    %v2287 = vld [vmem:[#allocation10 + $0x44c] sm:$0xf]
    %v2288 = vld [vmem:[#allocation10 + $0x450] sm:$0xf]
    %v2289 = vld [vmem:[#allocation10 + $0x454] sm:$0xf]
    %v2290 = vld [vmem:[#allocation10 + $0x458] sm:$0xf]
    %v2291 = vld [vmem:[#allocation10 + $0x45c] sm:$0xf]
    %v2292 = vld [vmem:[#allocation10 + $0x460] sm:$0xf]
    %v2293 = vld [vmem:[#allocation10 + $0x464] sm:$0xf]
    %v2294 = vld [vmem:[#allocation10 + $0x468] sm:$0xf]
    %v2295 = vld [vmem:[#allocation10 + $0x46c] sm:$0xf]
    %v2296 = vld [vmem:[#allocation10 + $0x470] sm:$0xf]
    %v2297 = vld [vmem:[#allocation10 + $0x474] sm:$0xf]
    %v2298 = vld [vmem:[#allocation10 + $0x478] sm:$0xf]
    %v2299 = vld [vmem:[#allocation10 + $0x47c] sm:$0xf]
    %v2300 = vld [vmem:[#allocation10 + $0x480] sm:$0xf]
    %v2301 = vld [vmem:[#allocation10 + $0x484] sm:$0xf]
    %v2302 = vld [vmem:[#allocation10 + $0x488] sm:$0xf]
    %v2303 = vld [vmem:[#allocation10 + $0x48c] sm:$0xf]
    %v2304 = vld [vmem:[#allocation10 + $0x490] sm:$0xf]
    %v2305 = vld [vmem:[#allocation10 + $0x494] sm:$0xf]
    %v2306 = vld [vmem:[#allocation10 + $0x498] sm:$0xf]
    %v2307 = vld [vmem:[#allocation10 + $0x49c] sm:$0xf]
    %v2308 = vld [vmem:[#allocation10 + $0x4a0] sm:$0xf]
    %v2309 = vld [vmem:[#allocation10 + $0x4a4] sm:$0xf]
    %v2310 = vld [vmem:[#allocation10 + $0x4a8] sm:$0xf]
    %v2311 = vld [vmem:[#allocation10 + $0x4ac] sm:$0xf]
    %v2312 = vld [vmem:[#allocation10 + $0x4b0] sm:$0xf]
    %v2313 = vld [vmem:[#allocation10 + $0x4b4] sm:$0xf]
    %v2314 = vld [vmem:[#allocation10 + $0x4b8] sm:$0xf]
    %v2315 = vld [vmem:[#allocation10 + $0x4bc] sm:$0xf]
    %v2316 = vld [vmem:[#allocation10 + $0x4c0] sm:$0xf]
    %v2317 = vld [vmem:[#allocation10 + $0x4c4] sm:$0xf]
    %v2318 = vld [vmem:[#allocation10 + $0x4c8] sm:$0xf]
    %v2319 = vld [vmem:[#allocation10 + $0x4cc] sm:$0xf]
    %v2320 = vld [vmem:[#allocation10 + $0x4d0] sm:$0xf]
    %v2321 = vld [vmem:[#allocation10 + $0x4d4] sm:$0xf]
    %v2322 = vld [vmem:[#allocation10 + $0x4d8] sm:$0xf]
    %v2323 = vld [vmem:[#allocation10 + $0x4dc] sm:$0xf]
    %v2324 = vld [vmem:[#allocation10 + $0x4e0] sm:$0xf]
    %v2325 = vld [vmem:[#allocation10 + $0x4e4] sm:$0xf]
    %v2326 = vld [vmem:[#allocation10 + $0x4e8] sm:$0xf]
    %v2327 = vld [vmem:[#allocation10 + $0x4ec] sm:$0xf]
    %v2328 = vld [vmem:[#allocation10 + $0x4f0] sm:$0xf]
    %v2329 = vld [vmem:[#allocation10 + $0x4f4] sm:$0xf]
    %v2330 = vld [vmem:[#allocation10 + $0x4f8] sm:$0xf]
    %v2331 = vld [vmem:[#allocation10 + $0x4fc] sm:$0xf]
    %v2332 = vld [vmem:[#allocation10 + $0x500] sm:$0xf]
    %v2333 = vld [vmem:[#allocation10 + $0x504] sm:$0xf]
    %v2334 = vld [vmem:[#allocation10 + $0x508] sm:$0xf]
    %v2335 = vld [vmem:[#allocation10 + $0x50c] sm:$0xf]
    %v2336 = vld [vmem:[#allocation10 + $0x510] sm:$0xf]
    %v2337 = vld [vmem:[#allocation10 + $0x514] sm:$0xf]
    %v2338 = vld [vmem:[#allocation10 + $0x518] sm:$0xf]
    %v2339 = vld [vmem:[#allocation10 + $0x51c] sm:$0xf]
    %v2340 = vld [vmem:[#allocation10 + $0x520] sm:$0xf]
    %v2341 = vld [vmem:[#allocation10 + $0x524] sm:$0xf]
    %v2342 = vld [vmem:[#allocation10 + $0x528] sm:$0xf]
    %v2343 = vld [vmem:[#allocation10 + $0x52c] sm:$0xf]
    %v2344 = vld [vmem:[#allocation10 + $0x530] sm:$0xf]
    %v2345 = vld [vmem:[#allocation10 + $0x534] sm:$0xf]
    %v2346 = vld [vmem:[#allocation10 + $0x538] sm:$0xf]
    %v2347 = vld [vmem:[#allocation10 + $0x53c] sm:$0xf]
    %v2348 = vld [vmem:[#allocation10 + $0x540] sm:$0xf]
    %v2349 = vld [vmem:[#allocation10 + $0x544] sm:$0xf]
    %v2350 = vld [vmem:[#allocation10 + $0x548] sm:$0xf]
    %v2351 = vld [vmem:[#allocation10 + $0x54c] sm:$0xf]
    %v2352 = vld [vmem:[#allocation10 + $0x550] sm:$0xf]
    %v2353 = vld [vmem:[#allocation10 + $0x554] sm:$0xf]
    %v2354 = vld [vmem:[#allocation10 + $0x558] sm:$0xf]
    %v2355 = vld [vmem:[#allocation10 + $0x55c] sm:$0xf]
    %v2356 = vld [vmem:[#allocation10 + $0x560] sm:$0xf]
    %v2357 = vld [vmem:[#allocation10 + $0x564] sm:$0xf]
    %v2358 = vld [vmem:[#allocation10 + $0x568] sm:$0xf]
    %v2359 = vld [vmem:[#allocation10 + $0x56c] sm:$0xf]
    %v2360 = vld [vmem:[#allocation10 + $0x570] sm:$0xf]
    %v2361 = vld [vmem:[#allocation10 + $0x574] sm:$0xf]
    %v2362 = vld [vmem:[#allocation10 + $0x578] sm:$0xf]
    %v2363 = vld [vmem:[#allocation10 + $0x57c] sm:$0xf]
    %v2364 = vld [vmem:[#allocation10 + $0x580] sm:$0xf]
    %v2365 = vld [vmem:[#allocation10 + $0x584] sm:$0xf]
    %v2366 = vld [vmem:[#allocation10 + $0x588] sm:$0xf]
    %v2367 = vld [vmem:[#allocation10 + $0x58c] sm:$0xf]
    %v2368 = vld [vmem:[#allocation10 + $0x590] sm:$0xf]
    %v2369 = vld [vmem:[#allocation10 + $0x594] sm:$0xf]
    %v2370 = vld [vmem:[#allocation10 + $0x598] sm:$0xf]
    %v2371 = vld [vmem:[#allocation10 + $0x59c] sm:$0xf]
    %v2372 = vld [vmem:[#allocation10 + $0x5a0] sm:$0xf]
    %v2373 = vld [vmem:[#allocation10 + $0x5a4] sm:$0xf]
    %v2374 = vld [vmem:[#allocation10 + $0x5a8] sm:$0xf]
    %v2375 = vld [vmem:[#allocation10 + $0x5ac] sm:$0xf]
    %v2376 = vld [vmem:[#allocation10 + $0x5b0] sm:$0xf]
    %v2377 = vld [vmem:[#allocation10 + $0x5b4] sm:$0xf]
    %v2378 = vld [vmem:[#allocation10 + $0x5b8] sm:$0xf]
    %v2379 = vld [vmem:[#allocation10 + $0x5bc] sm:$0xf]
    %v2380 = vld [vmem:[#allocation10 + $0x5c0] sm:$0xf]
    %v2381 = vld [vmem:[#allocation10 + $0x5c4] sm:$0xf]
    %v2382 = vld [vmem:[#allocation10 + $0x5c8] sm:$0xf]
    %v2383 = vld [vmem:[#allocation10 + $0x5cc] sm:$0xf]
    %v2384 = vld [vmem:[#allocation10 + $0x5d0] sm:$0xf]
    %v2385 = vld [vmem:[#allocation10 + $0x5d4] sm:$0xf]
    %v2386 = vld [vmem:[#allocation10 + $0x5d8] sm:$0xf]
    %v2387 = vld [vmem:[#allocation10 + $0x5dc] sm:$0xf]
    %v2388 = vld [vmem:[#allocation10 + $0x5e0] sm:$0xf]
    %v2389 = vld [vmem:[#allocation10 + $0x5e4] sm:$0xf]
    %v2390 = vld [vmem:[#allocation10 + $0x5e8] sm:$0xf]
    %v2391 = vld [vmem:[#allocation10 + $0x5ec] sm:$0xf]
    %v2392 = vld [vmem:[#allocation10 + $0x5f0] sm:$0xf]
    %v2393 = vld [vmem:[#allocation10 + $0x5f4] sm:$0xf]
    %v2394 = vld [vmem:[#allocation10 + $0x5f8] sm:$0xf]
    %v2395 = vld [vmem:[#allocation10 + $0x5fc] sm:$0xf]
    %v2396 = vld [vmem:[#allocation10 + $0x600] sm:$0xf]
    %v2397 = vld [vmem:[#allocation10 + $0x604] sm:$0xf]
    %v2398 = vld [vmem:[#allocation10 + $0x608] sm:$0xf]
    %v2399 = vld [vmem:[#allocation10 + $0x60c] sm:$0xf]
    %v2400 = vld [vmem:[#allocation10 + $0x610] sm:$0xf]
    %v2401 = vld [vmem:[#allocation10 + $0x614] sm:$0xf]
    %v2402 = vld [vmem:[#allocation10 + $0x618] sm:$0xf]
    %v2403 = vld [vmem:[#allocation10 + $0x61c] sm:$0xf]
    %v2404 = vld [vmem:[#allocation10 + $0x620] sm:$0xf]
    %v2405 = vld [vmem:[#allocation10 + $0x624] sm:$0xf]
    %v2406 = vld [vmem:[#allocation10 + $0x628] sm:$0xf]
    %v2407 = vld [vmem:[#allocation10 + $0x62c] sm:$0xf]
    %v2408 = vld [vmem:[#allocation10 + $0x630] sm:$0xf]
    %v2409 = vld [vmem:[#allocation10 + $0x634] sm:$0xf]
    %v2410 = vld [vmem:[#allocation10 + $0x638] sm:$0xf]
    %v2411 = vld [vmem:[#allocation10 + $0x63c] sm:$0xf]
    %v2412 = vld [vmem:[#allocation10 + $0x640] sm:$0xf]
    %v2413 = vld [vmem:[#allocation10 + $0x644] sm:$0xf]
    %v2414 = vld [vmem:[#allocation10 + $0x648] sm:$0xf]
    %v2415 = vld [vmem:[#allocation10 + $0x64c] sm:$0xf]
    %v2416 = vld [vmem:[#allocation10 + $0x650] sm:$0xf]
    %v2417 = vld [vmem:[#allocation10 + $0x654] sm:$0xf]
    %v2418 = vld [vmem:[#allocation10 + $0x658] sm:$0xf]
    %v2419 = vld [vmem:[#allocation10 + $0x65c] sm:$0xf]
    %v2420 = vld [vmem:[#allocation10 + $0x660] sm:$0xf]
    %v2421 = vld [vmem:[#allocation10 + $0x664] sm:$0xf]
    %v2422 = vld [vmem:[#allocation10 + $0x668] sm:$0xf]
    %v2423 = vld [vmem:[#allocation10 + $0x66c] sm:$0xf]
    %v2424 = vld [vmem:[#allocation10 + $0x670] sm:$0xf]
    %v2425 = vld [vmem:[#allocation10 + $0x674] sm:$0xf]
    %v2426 = vld [vmem:[#allocation10 + $0x678] sm:$0xf]
    %v2427 = vld [vmem:[#allocation10 + $0x67c] sm:$0xf]
    %v2428 = vld [vmem:[#allocation10 + $0x680] sm:$0xf]
    %v2429 = vld [vmem:[#allocation10 + $0x684] sm:$0xf]
    %v2430 = vld [vmem:[#allocation10 + $0x688] sm:$0xf]
    %v2431 = vld [vmem:[#allocation10 + $0x68c] sm:$0xf]
    %v2432 = vld [vmem:[#allocation10 + $0x690] sm:$0xf]
    %v2433 = vld [vmem:[#allocation10 + $0x694] sm:$0xf]
    %v2434 = vld [vmem:[#allocation10 + $0x698] sm:$0xf]
    %v2435 = vld [vmem:[#allocation10 + $0x69c] sm:$0xf]
    %v2436 = vld [vmem:[#allocation10 + $0x6a0] sm:$0xf]
    %v2437 = vld [vmem:[#allocation10 + $0x6a4] sm:$0xf]
    %v2438 = vld [vmem:[#allocation10 + $0x6a8] sm:$0xf]
    %v2439 = vld [vmem:[#allocation10 + $0x6ac] sm:$0xf]
    %v2440 = vld [vmem:[#allocation10 + $0x6b0] sm:$0xf]
    %v2441 = vld [vmem:[#allocation10 + $0x6b4] sm:$0xf]
    %v2442 = vld [vmem:[#allocation10 + $0x6b8] sm:$0xf]
    %v2443 = vld [vmem:[#allocation10 + $0x6bc] sm:$0xf]
    %v2444 = vld [vmem:[#allocation10 + $0x6c0] sm:$0xf]
    %v2445 = vld [vmem:[#allocation10 + $0x6c4] sm:$0xf]
    %v2446 = vld [vmem:[#allocation10 + $0x6c8] sm:$0xf]
    %v2447 = vld [vmem:[#allocation10 + $0x6cc] sm:$0xf]
    %v2448 = vld [vmem:[#allocation10 + $0x6d0] sm:$0xf]
    %v2449 = vld [vmem:[#allocation10 + $0x6d4] sm:$0xf]
    %v2450 = vld [vmem:[#allocation10 + $0x6d8] sm:$0xf]
    %v2451 = vld [vmem:[#allocation10 + $0x6dc] sm:$0xf]
    %v2452 = vld [vmem:[#allocation10 + $0x6e0] sm:$0xf]
    %v2453 = vld [vmem:[#allocation10 + $0x6e4] sm:$0xf]
    %v2454 = vld [vmem:[#allocation10 + $0x6e8] sm:$0xf]
    %v2455 = vld [vmem:[#allocation10 + $0x6ec] sm:$0xf]
    %v2456 = vld [vmem:[#allocation10 + $0x6f0] sm:$0xf]
    %v2457 = vld [vmem:[#allocation10 + $0x6f4] sm:$0xf]
    %v2458 = vld [vmem:[#allocation10 + $0x6f8] sm:$0xf]
    %v2459 = vld [vmem:[#allocation10 + $0x6fc] sm:$0xf]
    %v2460 = vld [vmem:[#allocation10 + $0x700] sm:$0xf]
    %v2461 = vld [vmem:[#allocation10 + $0x704] sm:$0xf]
    %v2462 = vld [vmem:[#allocation10 + $0x708] sm:$0xf]
    %v2463 = vld [vmem:[#allocation10 + $0x70c] sm:$0xf]
    %v2464 = vld [vmem:[#allocation10 + $0x710] sm:$0xf]
    %v2465 = vld [vmem:[#allocation10 + $0x714] sm:$0xf]
    %v2466 = vld [vmem:[#allocation10 + $0x718] sm:$0xf]
    %v2467 = vld [vmem:[#allocation10 + $0x71c] sm:$0xf]
    %v2468 = vld [vmem:[#allocation10 + $0x720] sm:$0xf]
    %v2469 = vld [vmem:[#allocation10 + $0x724] sm:$0xf]
    %v2470 = vld [vmem:[#allocation10 + $0x728] sm:$0xf]
    %v2471 = vld [vmem:[#allocation10 + $0x72c] sm:$0xf]
    %v2472 = vld [vmem:[#allocation10 + $0x730] sm:$0xf]
    %v2473 = vld [vmem:[#allocation10 + $0x734] sm:$0xf]
    %v2474 = vld [vmem:[#allocation10 + $0x738] sm:$0xf]
    %v2475 = vld [vmem:[#allocation10 + $0x73c] sm:$0xf]
    %v2476 = vld [vmem:[#allocation10 + $0x740] sm:$0xf]
    %v2477 = vld [vmem:[#allocation10 + $0x744] sm:$0xf]
    %v2478 = vld [vmem:[#allocation10 + $0x748] sm:$0xf]
    %v2479 = vld [vmem:[#allocation10 + $0x74c] sm:$0xf]
    %v2480 = vld [vmem:[#allocation10 + $0x750] sm:$0xf]
    %v2481 = vld [vmem:[#allocation10 + $0x754] sm:$0xf]
    %v2482 = vld [vmem:[#allocation10 + $0x758] sm:$0xf]
    %v2483 = vld [vmem:[#allocation10 + $0x75c] sm:$0xf]
    %v2484 = vld [vmem:[#allocation10 + $0x760] sm:$0xf]
    %v2485 = vld [vmem:[#allocation10 + $0x764] sm:$0xf]
    %v2486 = vld [vmem:[#allocation10 + $0x768] sm:$0xf]
    %v2487 = vld [vmem:[#allocation10 + $0x76c] sm:$0xf]
    %v2488 = vld [vmem:[#allocation10 + $0x770] sm:$0xf]
    %v2489 = vld [vmem:[#allocation10 + $0x774] sm:$0xf]
    %v2490 = vld [vmem:[#allocation10 + $0x778] sm:$0xf]
    %v2491 = vld [vmem:[#allocation10 + $0x77c] sm:$0xf]
    %v2492 = vld [vmem:[#allocation10 + $0x780] sm:$0xf]
    %v2493 = vld [vmem:[#allocation10 + $0x784] sm:$0xf]
    %v2494 = vld [vmem:[#allocation10 + $0x788] sm:$0xf]
    %v2495 = vld [vmem:[#allocation10 + $0x78c] sm:$0xf]
    %v2496 = vld [vmem:[#allocation10 + $0x790] sm:$0xf]
    %v2497 = vld [vmem:[#allocation10 + $0x794] sm:$0xf]
    %v2498 = vld [vmem:[#allocation10 + $0x798] sm:$0xf]
    %v2499 = vld [vmem:[#allocation10 + $0x79c] sm:$0xf]
    %v2500 = vld [vmem:[#allocation10 + $0x7a0] sm:$0xf]
    %v2501 = vld [vmem:[#allocation10 + $0x7a4] sm:$0xf]
    %v2502 = vld [vmem:[#allocation10 + $0x7a8] sm:$0xf]
    %v2503 = vld [vmem:[#allocation10 + $0x7ac] sm:$0xf]
    %v2504 = vld [vmem:[#allocation10 + $0x7b0] sm:$0xf]
    %v2505 = vld [vmem:[#allocation10 + $0x7b4] sm:$0xf]
    %v2506 = vld [vmem:[#allocation10 + $0x7b8] sm:$0xf]
    %v2507 = vld [vmem:[#allocation10 + $0x7bc] sm:$0xf]
    %v2508 = vld [vmem:[#allocation10 + $0x7c0] sm:$0xf]
    %v2509 = vld [vmem:[#allocation10 + $0x7c4] sm:$0xf]
    %v2510 = vld [vmem:[#allocation10 + $0x7c8] sm:$0xf]
    %v2511 = vld [vmem:[#allocation10 + $0x7cc] sm:$0xf]
    %v2512 = vld [vmem:[#allocation10 + $0x7d0] sm:$0xf]
    %v2513 = vld [vmem:[#allocation10 + $0x7d4] sm:$0xf]
    %v2514 = vld [vmem:[#allocation10 + $0x7d8] sm:$0xf]
    %v2515 = vld [vmem:[#allocation10 + $0x7dc] sm:$0xf]
    %v2516 = vld [vmem:[#allocation10 + $0x7e0] sm:$0xf]
    %v2517 = vld [vmem:[#allocation10 + $0x7e4] sm:$0xf]
    %v2518 = vld [vmem:[#allocation10 + $0x7e8] sm:$0xf]
    %v2519 = vld [vmem:[#allocation10 + $0x7ec] sm:$0xf]
    %v2520 = vld [vmem:[#allocation10 + $0x7f0] sm:$0xf]
    %v2521 = vld [vmem:[#allocation10 + $0x7f4] sm:$0xf]
    %v2522 = vld [vmem:[#allocation10 + $0x7f8] sm:$0xf]
    %v2523 = vld [vmem:[#allocation10 + $0x7fc] sm:$0xf]
    %v2524 = vld [vmem:[#allocation10 + $0x800] sm:$0xf]
    %v2525 = vld [vmem:[#allocation10 + $0x804] sm:$0xf]
    %v2526 = vld [vmem:[#allocation10 + $0x808] sm:$0xf]
    %v2527 = vld [vmem:[#allocation10 + $0x80c] sm:$0xf]
    %v2528 = vld [vmem:[#allocation10 + $0x810] sm:$0xf]
    %v2529 = vld [vmem:[#allocation10 + $0x814] sm:$0xf]
    %v2530 = vld [vmem:[#allocation10 + $0x818] sm:$0xf]
    %v2531 = vld [vmem:[#allocation10 + $0x81c] sm:$0xf]
    %v2532 = vld [vmem:[#allocation10 + $0x820] sm:$0xf]
    %v2533 = vld [vmem:[#allocation10 + $0x824] sm:$0xf]
    %v2534 = vld [vmem:[#allocation10 + $0x828] sm:$0xf]
    %v2535 = vld [vmem:[#allocation10 + $0x82c] sm:$0xf]
    %v2536 = vld [vmem:[#allocation10 + $0x830] sm:$0xf]
    %v2537 = vld [vmem:[#allocation10 + $0x834] sm:$0xf]
    %v2538 = vld [vmem:[#allocation10 + $0x838] sm:$0xf]
    %v2539 = vld [vmem:[#allocation10 + $0x83c] sm:$0xf]
    %v2540 = vld [vmem:[#allocation10 + $0x840] sm:$0xf]
    %v2541 = vld [vmem:[#allocation10 + $0x844] sm:$0xf]
    %v2542 = vld [vmem:[#allocation10 + $0x848] sm:$0xf]
    %v2543 = vld [vmem:[#allocation10 + $0x84c] sm:$0xf]
    %v2544 = vld [vmem:[#allocation10 + $0x850] sm:$0xf]
    %v2545 = vld [vmem:[#allocation10 + $0x854] sm:$0xf]
    %v2546 = vld [vmem:[#allocation10 + $0x858] sm:$0xf]
    %v2547 = vld [vmem:[#allocation10 + $0x85c] sm:$0xf]
    %v2548 = vld [vmem:[#allocation10 + $0x860] sm:$0xf]
    %v2549 = vld [vmem:[#allocation10 + $0x864] sm:$0xf]
    %v2550 = vld [vmem:[#allocation10 + $0x868] sm:$0xf]
    %v2551 = vld [vmem:[#allocation10 + $0x86c] sm:$0xf]
    %v2552 = vld [vmem:[#allocation10 + $0x870] sm:$0xf]
    %v2553 = vld [vmem:[#allocation10 + $0x874] sm:$0xf]
    %v2554 = vld [vmem:[#allocation10 + $0x878] sm:$0xf]
    %v2555 = vld [vmem:[#allocation10 + $0x87c] sm:$0xf]
    %v2556 = vld [vmem:[#allocation10 + $0x880] sm:$0xf]
    %v2557 = vld [vmem:[#allocation10 + $0x884] sm:$0xf]
    %v2558 = vld [vmem:[#allocation10 + $0x888] sm:$0xf]
    %v2559 = vld [vmem:[#allocation10 + $0x88c] sm:$0xf]
    %v2560 = vld [vmem:[#allocation10 + $0x890] sm:$0xf]
    %v2561 = vld [vmem:[#allocation10 + $0x894] sm:$0xf]
    %v2562 = vld [vmem:[#allocation10 + $0x898] sm:$0xf]
    %v2563 = vld [vmem:[#allocation10 + $0x89c] sm:$0xf]
    %v2564 = vld [vmem:[#allocation10 + $0x8a0] sm:$0xf]
    %v2565 = vld [vmem:[#allocation10 + $0x8a4] sm:$0xf]
    %v2566 = vld [vmem:[#allocation10 + $0x8a8] sm:$0xf]
    %v2567 = vld [vmem:[#allocation10 + $0x8ac] sm:$0xf]
    %v2568 = vld [vmem:[#allocation10 + $0x8b0] sm:$0xf]
    %v2569 = vld [vmem:[#allocation10 + $0x8b4] sm:$0xf]
    %v2570 = vld [vmem:[#allocation10 + $0x8b8] sm:$0xf]
    %v2571 = vld [vmem:[#allocation10 + $0x8bc] sm:$0xf]
    %v2572 = vld [vmem:[#allocation10 + $0x8c0] sm:$0xf]
    %v2573 = vld [vmem:[#allocation10 + $0x8c4] sm:$0xf]
    %v2574 = vld [vmem:[#allocation10 + $0x8c8] sm:$0xf]
    %v2575 = vld [vmem:[#allocation10 + $0x8cc] sm:$0xf]
    %v2576 = vld [vmem:[#allocation10 + $0x8d0] sm:$0xf]
    %v2577 = vld [vmem:[#allocation10 + $0x8d4] sm:$0xf]
    %v2578 = vld [vmem:[#allocation10 + $0x8d8] sm:$0xf]
    %v2579 = vld [vmem:[#allocation10 + $0x8dc] sm:$0xf]
    %v2580 = vld [vmem:[#allocation10 + $0x8e0] sm:$0xf]
    %v2581 = vld [vmem:[#allocation10 + $0x8e4] sm:$0xf]
    %v2582 = vld [vmem:[#allocation10 + $0x8e8] sm:$0xf]
    %v2583 = vld [vmem:[#allocation10 + $0x8ec] sm:$0xf]
    %v2584 = vld [vmem:[#allocation10 + $0x8f0] sm:$0xf]
    %v2585 = vld [vmem:[#allocation10 + $0x8f4] sm:$0xf]
    %v2586 = vld [vmem:[#allocation10 + $0x8f8] sm:$0xf]
    %v2587 = vld [vmem:[#allocation10 + $0x8fc] sm:$0xf]
    %v2588 = vld [vmem:[#allocation10 + $0x900] sm:$0xf]
    %v2589 = vld [vmem:[#allocation10 + $0x904] sm:$0xf]
    %v2590 = vld [vmem:[#allocation10 + $0x908] sm:$0xf]
    %v2591 = vld [vmem:[#allocation10 + $0x90c] sm:$0xf]
    %v2592 = vld [vmem:[#allocation10 + $0x910] sm:$0xf]
    %v2593 = vld [vmem:[#allocation10 + $0x914] sm:$0xf]
    %v2594 = vld [vmem:[#allocation10 + $0x918] sm:$0xf]
    %v2595 = vld [vmem:[#allocation10 + $0x91c] sm:$0xf]
    %v2596 = vld [vmem:[#allocation10 + $0x920] sm:$0xf]
    %v2597 = vld [vmem:[#allocation10 + $0x924] sm:$0xf]
    %v2598 = vld [vmem:[#allocation10 + $0x928] sm:$0xf]
    %v2599 = vld [vmem:[#allocation10 + $0x92c] sm:$0xf]
    %v2600 = vld [vmem:[#allocation10 + $0x930] sm:$0xf]
    %v2601 = vld [vmem:[#allocation10 + $0x934] sm:$0xf]
    %v2602 = vld [vmem:[#allocation10 + $0x938] sm:$0xf]
    %v2603 = vld [vmem:[#allocation10 + $0x93c] sm:$0xf]
    %v2604 = vld [vmem:[#allocation10 + $0x940] sm:$0xf]
    %v2605 = vld [vmem:[#allocation10 + $0x944] sm:$0xf]
    %v2606 = vld [vmem:[#allocation10 + $0x948] sm:$0xf]
    %v2607 = vld [vmem:[#allocation10 + $0x94c] sm:$0xf]
    %v2608 = vld [vmem:[#allocation10 + $0x950] sm:$0xf]
    %v2609 = vld [vmem:[#allocation10 + $0x954] sm:$0xf]
    %v2610 = vld [vmem:[#allocation10 + $0x958] sm:$0xf]
    %v2611 = vld [vmem:[#allocation10 + $0x95c] sm:$0xf]
    %v2612 = vld [vmem:[#allocation10 + $0x960] sm:$0xf]
    %v2613 = vld [vmem:[#allocation10 + $0x964] sm:$0xf]
    %v2614 = vld [vmem:[#allocation10 + $0x968] sm:$0xf]
    %v2615 = vld [vmem:[#allocation10 + $0x96c] sm:$0xf]
    %v2616 = vld [vmem:[#allocation10 + $0x970] sm:$0xf]
    %v2617 = vld [vmem:[#allocation10 + $0x974] sm:$0xf]
    %v2618 = vld [vmem:[#allocation10 + $0x978] sm:$0xf]
    %v2619 = vld [vmem:[#allocation10 + $0x97c] sm:$0xf]
    %v2620 = vld [vmem:[#allocation10 + $0x980] sm:$0xf]
    %v2621 = vld [vmem:[#allocation10 + $0x984] sm:$0xf]
    %v2622 = vld [vmem:[#allocation10 + $0x988] sm:$0xf]
    %v2623 = vld [vmem:[#allocation10 + $0x98c] sm:$0xf]
    %v2624 = vld [vmem:[#allocation10 + $0x990] sm:$0xf]
    %v2625 = vld [vmem:[#allocation10 + $0x994] sm:$0xf]
    %v2626 = vld [vmem:[#allocation10 + $0x998] sm:$0xf]
    %v2627 = vld [vmem:[#allocation10 + $0x99c] sm:$0xf]
    %v2628 = vld [vmem:[#allocation10 + $0x9a0] sm:$0xf]
    %v2629 = vld [vmem:[#allocation10 + $0x9a4] sm:$0xf]
    %v2630 = vld [vmem:[#allocation10 + $0x9a8] sm:$0xf]
    %v2631 = vld [vmem:[#allocation10 + $0x9ac] sm:$0xf]
    %v2632 = vld [vmem:[#allocation10 + $0x9b0] sm:$0xf]
    %v2633 = vld [vmem:[#allocation10 + $0x9b4] sm:$0xf]
    %v2634 = vld [vmem:[#allocation10 + $0x9b8] sm:$0xf]
    %v2635 = vld [vmem:[#allocation10 + $0x9bc] sm:$0xf]
    %v2636 = vld [vmem:[#allocation10 + $0x9c0] sm:$0xf]
    %v2637 = vld [vmem:[#allocation10 + $0x9c4] sm:$0xf]
    %v2638 = vld [vmem:[#allocation10 + $0x9c8] sm:$0xf]
    %v2639 = vld [vmem:[#allocation10 + $0x9cc] sm:$0xf]
    %v2640 = vld [vmem:[#allocation10 + $0x9d0] sm:$0xf]
    %v2641 = vld [vmem:[#allocation10 + $0x9d4] sm:$0xf]
    %v2642 = vld [vmem:[#allocation10 + $0x9d8] sm:$0xf]
    %v2643 = vld [vmem:[#allocation10 + $0x9dc] sm:$0xf]
    %v2644 = vld [vmem:[#allocation10 + $0x9e0] sm:$0xf]
    %v2645 = vld [vmem:[#allocation10 + $0x9e4] sm:$0xf]
    %v2646 = vld [vmem:[#allocation10 + $0x9e8] sm:$0xf]
    %v2647 = vld [vmem:[#allocation10 + $0x9ec] sm:$0xf]
    %v2648 = vld [vmem:[#allocation10 + $0x9f0] sm:$0xf]
    %v2649 = vld [vmem:[#allocation10 + $0x9f4] sm:$0xf]
    %v2650 = vld [vmem:[#allocation10 + $0x9f8] sm:$0xf]
    %v2651 = vld [vmem:[#allocation10 + $0x9fc] sm:$0xf]
    %v2652 = vld [vmem:[#allocation10 + $0xa00] sm:$0xf]
    %v2653 = vld [vmem:[#allocation10 + $0xa04] sm:$0xf]
    %v2654 = vld [vmem:[#allocation10 + $0xa08] sm:$0xf]
    %v2655 = vld [vmem:[#allocation10 + $0xa0c] sm:$0xf]
    %v2656 = vld [vmem:[#allocation10 + $0xa10] sm:$0xf]
    %v2657 = vld [vmem:[#allocation10 + $0xa14] sm:$0xf]
    %v2658 = vld [vmem:[#allocation10 + $0xa18] sm:$0xf]
    %v2659 = vld [vmem:[#allocation10 + $0xa1c] sm:$0xf]
    %v2660 = vld [vmem:[#allocation10 + $0xa20] sm:$0xf]
    %v2661 = vld [vmem:[#allocation10 + $0xa24] sm:$0xf]
    %v2662 = vld [vmem:[#allocation10 + $0xa28] sm:$0xf]
    %v2663 = vld [vmem:[#allocation10 + $0xa2c] sm:$0xf]
    %v2664 = vld [vmem:[#allocation10 + $0xa30] sm:$0xf]
    %v2665 = vld [vmem:[#allocation10 + $0xa34] sm:$0xf]
    %v2666 = vld [vmem:[#allocation10 + $0xa38] sm:$0xf]
    %v2667 = vld [vmem:[#allocation10 + $0xa3c] sm:$0xf]
    %v2668 = vld [vmem:[#allocation10 + $0xa40] sm:$0xf]
    %v2669 = vld [vmem:[#allocation10 + $0xa44] sm:$0xf]
    %v2670 = vld [vmem:[#allocation10 + $0xa48] sm:$0xf]
    %v2671 = vld [vmem:[#allocation10 + $0xa4c] sm:$0xf]
    %v2672 = vld [vmem:[#allocation10 + $0xa50] sm:$0xf]
    %v2673 = vld [vmem:[#allocation10 + $0xa54] sm:$0xf]
    %v2674 = vld [vmem:[#allocation10 + $0xa58] sm:$0xf]
    %v2675 = vld [vmem:[#allocation10 + $0xa5c] sm:$0xf]
    %v2676 = vld [vmem:[#allocation10 + $0xa60] sm:$0xf]
    %v2677 = vld [vmem:[#allocation10 + $0xa64] sm:$0xf]
    %v2678 = vld [vmem:[#allocation10 + $0xa68] sm:$0xf]
    %v2679 = vld [vmem:[#allocation10 + $0xa6c] sm:$0xf]
    %v2680 = vld [vmem:[#allocation10 + $0xa70] sm:$0xf]
    %v2681 = vld [vmem:[#allocation10 + $0xa74] sm:$0xf]
    %v2682 = vld [vmem:[#allocation10 + $0xa78] sm:$0xf]
    %v2683 = vld [vmem:[#allocation10 + $0xa7c] sm:$0xf]
    %v2684 = vld [vmem:[#allocation10 + $0xa80] sm:$0xf]
    %v2685 = vld [vmem:[#allocation10 + $0xa84] sm:$0xf]
    %v2686 = vld [vmem:[#allocation10 + $0xa88] sm:$0xf]
    %v2687 = vld [vmem:[#allocation10 + $0xa8c] sm:$0xf]
    %v2688 = vld [vmem:[#allocation10 + $0xa90] sm:$0xf]
    %v2689 = vld [vmem:[#allocation10 + $0xa94] sm:$0xf]
    %v2690 = vld [vmem:[#allocation10 + $0xa98] sm:$0xf]
    %v2691 = vld [vmem:[#allocation10 + $0xa9c] sm:$0xf]
    %v2692 = vld [vmem:[#allocation10 + $0xaa0] sm:$0xf]
    %v2693 = vld [vmem:[#allocation10 + $0xaa4] sm:$0xf]
    %v2694 = vld [vmem:[#allocation10 + $0xaa8] sm:$0xf]
    %v2695 = vld [vmem:[#allocation10 + $0xaac] sm:$0xf]
    %v2696 = vld [vmem:[#allocation10 + $0xab0] sm:$0xf]
    %v2697 = vld [vmem:[#allocation10 + $0xab4] sm:$0xf]
    %v2698 = vld [vmem:[#allocation10 + $0xab8] sm:$0xf]
    %v2699 = vld [vmem:[#allocation10 + $0xabc] sm:$0xf]
    %v2700 = vld [vmem:[#allocation10 + $0xac0] sm:$0xf]
    %v2701 = vld [vmem:[#allocation10 + $0xac4] sm:$0xf]
    %v2702 = vld [vmem:[#allocation10 + $0xac8] sm:$0xf]
    %v2703 = vld [vmem:[#allocation10 + $0xacc] sm:$0xf]
    %v2704 = vld [vmem:[#allocation10 + $0xad0] sm:$0xf]
    %v2705 = vld [vmem:[#allocation10 + $0xad4] sm:$0xf]
    %v2706 = vld [vmem:[#allocation10 + $0xad8] sm:$0xf]
    %v2707 = vld [vmem:[#allocation10 + $0xadc] sm:$0xf]
    %v2708 = vld [vmem:[#allocation10 + $0xae0] sm:$0xf]
    %v2709 = vld [vmem:[#allocation10 + $0xae4] sm:$0xf]
    %v2710 = vld [vmem:[#allocation10 + $0xae8] sm:$0xf]
    %v2711 = vld [vmem:[#allocation10 + $0xaec] sm:$0xf]
    %v2712 = vld [vmem:[#allocation10 + $0xaf0] sm:$0xf]
    %v2713 = vld [vmem:[#allocation10 + $0xaf4] sm:$0xf]
    %v2714 = vld [vmem:[#allocation10 + $0xaf8] sm:$0xf]
    %v2715 = vld [vmem:[#allocation10 + $0xafc] sm:$0xf]
    %v2716 = vld [vmem:[#allocation10 + $0xb00] sm:$0xf]
    %v2717 = vld [vmem:[#allocation10 + $0xb04] sm:$0xf]
    %v2718 = vld [vmem:[#allocation10 + $0xb08] sm:$0xf]
    %v2719 = vld [vmem:[#allocation10 + $0xb0c] sm:$0xf]
    %v2720 = vld [vmem:[#allocation10 + $0xb10] sm:$0xf]
    %v2721 = vld [vmem:[#allocation10 + $0xb14] sm:$0xf]
    %v2722 = vld [vmem:[#allocation10 + $0xb18] sm:$0xf]
    %v2723 = vld [vmem:[#allocation10 + $0xb1c] sm:$0xf]
    %v2724 = vld [vmem:[#allocation10 + $0xb20] sm:$0xf]
    %v2725 = vld [vmem:[#allocation10 + $0xb24] sm:$0xf]
    %v2726 = vld [vmem:[#allocation10 + $0xb28] sm:$0xf]
    %v2727 = vld [vmem:[#allocation10 + $0xb2c] sm:$0xf]
    %v2728 = vld [vmem:[#allocation10 + $0xb30] sm:$0xf]
    %v2729 = vld [vmem:[#allocation10 + $0xb34] sm:$0xf]
    %v2730 = vld [vmem:[#allocation10 + $0xb38] sm:$0xf]
    %v2731 = vld [vmem:[#allocation10 + $0xb3c] sm:$0xf]
    %v2732 = vld [vmem:[#allocation10 + $0xb40] sm:$0xf]
    %v2733 = vld [vmem:[#allocation10 + $0xb44] sm:$0xf]
    %v2734 = vld [vmem:[#allocation10 + $0xb48] sm:$0xf]
    %v2735 = vld [vmem:[#allocation10 + $0xb4c] sm:$0xf]
    %v2736 = vld [vmem:[#allocation10 + $0xb50] sm:$0xf]
    %v2737 = vld [vmem:[#allocation10 + $0xb54] sm:$0xf]
    %v2738 = vld [vmem:[#allocation10 + $0xb58] sm:$0xf]
    %v2739 = vld [vmem:[#allocation10 + $0xb5c] sm:$0xf]
    %v2740 = vld [vmem:[#allocation10 + $0xb60] sm:$0xf]
    %v2741 = vld [vmem:[#allocation10 + $0xb64] sm:$0xf]
    %v2742 = vld [vmem:[#allocation10 + $0xb68] sm:$0xf]
    %v2743 = vld [vmem:[#allocation10 + $0xb6c] sm:$0xf]
    %v2744 = vld [vmem:[#allocation10 + $0xb70] sm:$0xf]
    %v2745 = vld [vmem:[#allocation10 + $0xb74] sm:$0xf]
    %v2746 = vld [vmem:[#allocation10 + $0xb78] sm:$0xf]
    %v2747 = vld [vmem:[#allocation10 + $0xb7c] sm:$0xf]
    %v2748 = vld [vmem:[#allocation10 + $0xb80] sm:$0xf]
    %v2749 = vld [vmem:[#allocation10 + $0xb84] sm:$0xf]
    %v2750 = vld [vmem:[#allocation10 + $0xb88] sm:$0xf]
    %v2751 = vld [vmem:[#allocation10 + $0xb8c] sm:$0xf]
    %v2752 = vld [vmem:[#allocation10 + $0xb90] sm:$0xf]
    %v2753 = vld [vmem:[#allocation10 + $0xb94] sm:$0xf]
    %v2754 = vld [vmem:[#allocation10 + $0xb98] sm:$0xf]
    %v2755 = vld [vmem:[#allocation10 + $0xb9c] sm:$0xf]
    %v2756 = vld [vmem:[#allocation10 + $0xba0] sm:$0xf]
    %v2757 = vld [vmem:[#allocation10 + $0xba4] sm:$0xf]
    %v2758 = vld [vmem:[#allocation10 + $0xba8] sm:$0xf]
    %v2759 = vld [vmem:[#allocation10 + $0xbac] sm:$0xf]
    %v2760 = vld [vmem:[#allocation10 + $0xbb0] sm:$0xf]
    %v2761 = vld [vmem:[#allocation10 + $0xbb4] sm:$0xf]
    %v2762 = vld [vmem:[#allocation10 + $0xbb8] sm:$0xf]
    %v2763 = vld [vmem:[#allocation10 + $0xbbc] sm:$0xf]
    %v2764 = vld [vmem:[#allocation10 + $0xbc0] sm:$0xf]
    %v2765 = vld [vmem:[#allocation10 + $0xbc4] sm:$0xf]
    %v2766 = vld [vmem:[#allocation10 + $0xbc8] sm:$0xf]
    %v2767 = vld [vmem:[#allocation10 + $0xbcc] sm:$0xf]
    %v2768 = vld [vmem:[#allocation10 + $0xbd0] sm:$0xf]
    %v2769 = vld [vmem:[#allocation10 + $0xbd4] sm:$0xf]
    %v2770 = vld [vmem:[#allocation10 + $0xbd8] sm:$0xf]
    %v2771 = vld [vmem:[#allocation10 + $0xbdc] sm:$0xf]
    %v2772 = vld [vmem:[#allocation10 + $0xbe0] sm:$0xf]
    %v2773 = vld [vmem:[#allocation10 + $0xbe4] sm:$0xf]
    %v2774 = vld [vmem:[#allocation10 + $0xbe8] sm:$0xf]
    %v2775 = vld [vmem:[#allocation10 + $0xbec] sm:$0xf]
    %v2776 = vld [vmem:[#allocation10 + $0xbf0] sm:$0xf]
    %v2777 = vld [vmem:[#allocation10 + $0xbf4] sm:$0xf]
    %v2778 = vld [vmem:[#allocation10 + $0xbf8] sm:$0xf]
    %v2779 = vld [vmem:[#allocation10 + $0xbfc] sm:$0xf]
    %v2780 = vld [vmem:[#allocation10 + $0xc00] sm:$0xf]
    %v2781 = vld [vmem:[#allocation10 + $0xc04] sm:$0xf]
    %v2782 = vld [vmem:[#allocation10 + $0xc08] sm:$0xf]
    %v2783 = vld [vmem:[#allocation10 + $0xc0c] sm:$0xf]
    %v2784 = vld [vmem:[#allocation10 + $0xc10] sm:$0xf]
    %v2785 = vld [vmem:[#allocation10 + $0xc14] sm:$0xf]
    %v2786 = vld [vmem:[#allocation10 + $0xc18] sm:$0xf]
    %v2787 = vld [vmem:[#allocation10 + $0xc1c] sm:$0xf]
    %v2788 = vld [vmem:[#allocation10 + $0xc20] sm:$0xf]
    %v2789 = vld [vmem:[#allocation10 + $0xc24] sm:$0xf]
    %v2790 = vld [vmem:[#allocation10 + $0xc28] sm:$0xf]
    %v2791 = vld [vmem:[#allocation10 + $0xc2c] sm:$0xf]
    %v2792 = vld [vmem:[#allocation10 + $0xc30] sm:$0xf]
    %v2793 = vld [vmem:[#allocation10 + $0xc34] sm:$0xf]
    %v2794 = vld [vmem:[#allocation10 + $0xc38] sm:$0xf]
    %v2795 = vld [vmem:[#allocation10 + $0xc3c] sm:$0xf]
    %v2796 = vld [vmem:[#allocation10 + $0xc40] sm:$0xf]
    %v2797 = vld [vmem:[#allocation10 + $0xc44] sm:$0xf]
    %v2798 = vld [vmem:[#allocation10 + $0xc48] sm:$0xf]
    %v2799 = vld [vmem:[#allocation10 + $0xc4c] sm:$0xf]
    %v2800 = vld [vmem:[#allocation10 + $0xc50] sm:$0xf]
    %v2801 = vld [vmem:[#allocation10 + $0xc54] sm:$0xf]
    %v2802 = vld [vmem:[#allocation10 + $0xc58] sm:$0xf]
    %v2803 = vld [vmem:[#allocation10 + $0xc5c] sm:$0xf]
    %v2804 = vld [vmem:[#allocation10 + $0xc60] sm:$0xf]
    %v2805 = vld [vmem:[#allocation10 + $0xc64] sm:$0xf]
    %v2806 = vld [vmem:[#allocation10 + $0xc68] sm:$0xf]
    %v2807 = vld [vmem:[#allocation10 + $0xc6c] sm:$0xf]
    %v2808 = vld [vmem:[#allocation10 + $0xc70] sm:$0xf]
    %v2809 = vld [vmem:[#allocation10 + $0xc74] sm:$0xf]
    %v2810 = vld [vmem:[#allocation10 + $0xc78] sm:$0xf]
    %v2811 = vld [vmem:[#allocation10 + $0xc7c] sm:$0xf]
    %v2812 = vld [vmem:[#allocation10 + $0xc80] sm:$0xf]
    %v2813 = vld [vmem:[#allocation10 + $0xc84] sm:$0xf]
    %v2814 = vld [vmem:[#allocation10 + $0xc88] sm:$0xf]
    %v2815 = vld [vmem:[#allocation10 + $0xc8c] sm:$0xf]
    %v2816 = vld [vmem:[#allocation10 + $0xc90] sm:$0xf]
    %v2817 = vld [vmem:[#allocation10 + $0xc94] sm:$0xf]
    %v2818 = vld [vmem:[#allocation10 + $0xc98] sm:$0xf]
    %v2819 = vld [vmem:[#allocation10 + $0xc9c] sm:$0xf]
    %v2820 = vld [vmem:[#allocation10 + $0xca0] sm:$0xf]
    %v2821 = vld [vmem:[#allocation10 + $0xca4] sm:$0xf]
    %v2822 = vld [vmem:[#allocation10 + $0xca8] sm:$0xf]
    %v2823 = vld [vmem:[#allocation10 + $0xcac] sm:$0xf]
    %v2824 = vld [vmem:[#allocation10 + $0xcb0] sm:$0xf]
    %v2825 = vld [vmem:[#allocation10 + $0xcb4] sm:$0xf]
    %v2826 = vld [vmem:[#allocation10 + $0xcb8] sm:$0xf]
    %v2827 = vld [vmem:[#allocation10 + $0xcbc] sm:$0xf]
    %v2828 = vld [vmem:[#allocation10 + $0xcc0] sm:$0xf]
    %v2829 = vld [vmem:[#allocation10 + $0xcc4] sm:$0xf]
    %v2830 = vld [vmem:[#allocation10 + $0xcc8] sm:$0xf]
    %v2831 = vld [vmem:[#allocation10 + $0xccc] sm:$0xf]
    %v2832 = vld [vmem:[#allocation10 + $0xcd0] sm:$0xf]
    %v2833 = vld [vmem:[#allocation10 + $0xcd4] sm:$0xf]
    %v2834 = vld [vmem:[#allocation10 + $0xcd8] sm:$0xf]
    %v2835 = vld [vmem:[#allocation10 + $0xcdc] sm:$0xf]
    %v2836 = vld [vmem:[#allocation10 + $0xce0] sm:$0xf]
    %v2837 = vld [vmem:[#allocation10 + $0xce4] sm:$0xf]
    %v2838 = vld [vmem:[#allocation10 + $0xce8] sm:$0xf]
    %v2839 = vld [vmem:[#allocation10 + $0xcec] sm:$0xf]
    %v2840 = vld [vmem:[#allocation10 + $0xcf0] sm:$0xf]
    %v2841 = vld [vmem:[#allocation10 + $0xcf4] sm:$0xf]
    %v2842 = vld [vmem:[#allocation10 + $0xcf8] sm:$0xf]
    %v2843 = vld [vmem:[#allocation10 + $0xcfc] sm:$0xf]
    %v2844 = vld [vmem:[#allocation10 + $0xd00] sm:$0xf]
    %v2845 = vld [vmem:[#allocation10 + $0xd04] sm:$0xf]
    %v2846 = vld [vmem:[#allocation10 + $0xd08] sm:$0xf]
    %v2847 = vld [vmem:[#allocation10 + $0xd0c] sm:$0xf]
    %v2848 = vld [vmem:[#allocation10 + $0xd10] sm:$0xf]
    %v2849 = vld [vmem:[#allocation10 + $0xd14] sm:$0xf]
    %v2850 = vld [vmem:[#allocation10 + $0xd18] sm:$0xf]
    %v2851 = vld [vmem:[#allocation10 + $0xd1c] sm:$0xf]
    %v2852 = vld [vmem:[#allocation10 + $0xd20] sm:$0xf]
    %v2853 = vld [vmem:[#allocation10 + $0xd24] sm:$0xf]
    %v2854 = vld [vmem:[#allocation10 + $0xd28] sm:$0xf]
    %v2855 = vld [vmem:[#allocation10 + $0xd2c] sm:$0xf]
    %v2856 = vld [vmem:[#allocation10 + $0xd30] sm:$0xf]
    %v2857 = vld [vmem:[#allocation10 + $0xd34] sm:$0xf]
    %v2858 = vld [vmem:[#allocation10 + $0xd38] sm:$0xf]
    %v2859 = vld [vmem:[#allocation10 + $0xd3c] sm:$0xf]
    %v2860 = vld [vmem:[#allocation10 + $0xd40] sm:$0xf]
    %v2861 = vld [vmem:[#allocation10 + $0xd44] sm:$0xf]
    %v2862 = vld [vmem:[#allocation10 + $0xd48] sm:$0xf]
    %v2863 = vld [vmem:[#allocation10 + $0xd4c] sm:$0xf]
    %v2864 = vld [vmem:[#allocation10 + $0xd50] sm:$0xf]
    %v2865 = vld [vmem:[#allocation10 + $0xd54] sm:$0xf]
    %v2866 = vld [vmem:[#allocation10 + $0xd58] sm:$0xf]
    %v2867 = vld [vmem:[#allocation10 + $0xd5c] sm:$0xf]
    %v2868 = vld [vmem:[#allocation10 + $0xd60] sm:$0xf]
    %v2869 = vld [vmem:[#allocation10 + $0xd64] sm:$0xf]
    %v2870 = vld [vmem:[#allocation10 + $0xd68] sm:$0xf]
    %v2871 = vld [vmem:[#allocation10 + $0xd6c] sm:$0xf]
    %v2872 = vld [vmem:[#allocation10 + $0xd70] sm:$0xf]
    %v2873 = vld [vmem:[#allocation10 + $0xd74] sm:$0xf]
    %v2874 = vld [vmem:[#allocation10 + $0xd78] sm:$0xf]
    %v2875 = vld [vmem:[#allocation10 + $0xd7c] sm:$0xf]
    %v2876 = vld [vmem:[#allocation10 + $0xd80] sm:$0xf]
    %v2877 = vld [vmem:[#allocation10 + $0xd84] sm:$0xf]
    %v2878 = vld [vmem:[#allocation10 + $0xd88] sm:$0xf]
    %v2879 = vld [vmem:[#allocation10 + $0xd8c] sm:$0xf]
    %v2880 = vld [vmem:[#allocation10 + $0xd90] sm:$0xf]
    %v2881 = vld [vmem:[#allocation10 + $0xd94] sm:$0xf]
    %v2882 = vld [vmem:[#allocation10 + $0xd98] sm:$0xf]
    %v2883 = vld [vmem:[#allocation10 + $0xd9c] sm:$0xf]
    %v2884 = vld [vmem:[#allocation10 + $0xda0] sm:$0xf]
    %v2885 = vld [vmem:[#allocation10 + $0xda4] sm:$0xf]
    %v2886 = vld [vmem:[#allocation10 + $0xda8] sm:$0xf]
    %v2887 = vld [vmem:[#allocation10 + $0xdac] sm:$0xf]
    %v2888 = vld [vmem:[#allocation10 + $0xdb0] sm:$0xf]
    %v2889 = vld [vmem:[#allocation10 + $0xdb4] sm:$0xf]
    %v2890 = vld [vmem:[#allocation10 + $0xdb8] sm:$0xf]
    %v2891 = vld [vmem:[#allocation10 + $0xdbc] sm:$0xf]
    %v2892 = vld [vmem:[#allocation10 + $0xdc0] sm:$0xf]
    %v2893 = vld [vmem:[#allocation10 + $0xdc4] sm:$0xf]
    %v2894 = vld [vmem:[#allocation10 + $0xdc8] sm:$0xf]
    %v2895 = vld [vmem:[#allocation10 + $0xdcc] sm:$0xf]
    %v2896 = vld [vmem:[#allocation10 + $0xdd0] sm:$0xf]
    %v2897 = vld [vmem:[#allocation10 + $0xdd4] sm:$0xf]
    %v2898 = vld [vmem:[#allocation10 + $0xdd8] sm:$0xf]
    %v2899 = vld [vmem:[#allocation10 + $0xddc] sm:$0xf]
    %v2900 = vld [vmem:[#allocation10 + $0xde0] sm:$0xf]
    %v2901 = vld [vmem:[#allocation10 + $0xde4] sm:$0xf]
    %v2902 = vld [vmem:[#allocation10 + $0xde8] sm:$0xf]
    %v2903 = vld [vmem:[#allocation10 + $0xdec] sm:$0xf]
    %v2904 = vld [vmem:[#allocation10 + $0xdf0] sm:$0xf]
    %v2905 = vld [vmem:[#allocation10 + $0xdf4] sm:$0xf]
    %v2906 = vld [vmem:[#allocation10 + $0xdf8] sm:$0xf]
    %v2907 = vld [vmem:[#allocation10 + $0xdfc] sm:$0xf]
    %v2908 = vld [vmem:[#allocation10 + $0xe00] sm:$0xf]
    %v2909 = vld [vmem:[#allocation10 + $0xe04] sm:$0xf]
    %v2910 = vld [vmem:[#allocation10 + $0xe08] sm:$0xf]
    %v2911 = vld [vmem:[#allocation10 + $0xe0c] sm:$0xf]
    %v2912 = vld [vmem:[#allocation10 + $0xe10] sm:$0xf]
    %v2913 = vld [vmem:[#allocation10 + $0xe14] sm:$0xf]
    %v2914 = vld [vmem:[#allocation10 + $0xe18] sm:$0xf]
    %v2915 = vld [vmem:[#allocation10 + $0xe1c] sm:$0xf]
    %v2916 = vld [vmem:[#allocation10 + $0xe20] sm:$0xf]
    %v2917 = vld [vmem:[#allocation10 + $0xe24] sm:$0xf]
    %v2918 = vld [vmem:[#allocation10 + $0xe28] sm:$0xf]
    %v2919 = vld [vmem:[#allocation10 + $0xe2c] sm:$0xf]
    %v2920 = vld [vmem:[#allocation10 + $0xe30] sm:$0xf]
    %v2921 = vld [vmem:[#allocation10 + $0xe34] sm:$0xf]
    %v2922 = vld [vmem:[#allocation10 + $0xe38] sm:$0xf]
    %v2923 = vld [vmem:[#allocation10 + $0xe3c] sm:$0xf]
    %v2924 = vld [vmem:[#allocation10 + $0xe40] sm:$0xf]
    %v2925 = vld [vmem:[#allocation10 + $0xe44] sm:$0xf]
    %v2926 = vld [vmem:[#allocation10 + $0xe48] sm:$0xf]
    %v2927 = vld [vmem:[#allocation10 + $0xe4c] sm:$0xf]
    %v2928 = vld [vmem:[#allocation10 + $0xe50] sm:$0xf]
    %v2929 = vld [vmem:[#allocation10 + $0xe54] sm:$0xf]
    %v2930 = vld [vmem:[#allocation10 + $0xe58] sm:$0xf]
    %v2931 = vld [vmem:[#allocation10 + $0xe5c] sm:$0xf]
    %v2932 = vld [vmem:[#allocation10 + $0xe60] sm:$0xf]
    %v2933 = vld [vmem:[#allocation10 + $0xe64] sm:$0xf]
    %v2934 = vld [vmem:[#allocation10 + $0xe68] sm:$0xf]
    %v2935 = vld [vmem:[#allocation10 + $0xe6c] sm:$0xf]
    %v2936 = vld [vmem:[#allocation10 + $0xe70] sm:$0xf]
    %v2937 = vld [vmem:[#allocation10 + $0xe74] sm:$0xf]
    %v2938 = vld [vmem:[#allocation10 + $0xe78] sm:$0xf]
    %v2939 = vld [vmem:[#allocation10 + $0xe7c] sm:$0xf]
    %v2940 = vld [vmem:[#allocation10 + $0xe80] sm:$0xf]
    %v2941 = vld [vmem:[#allocation10 + $0xe84] sm:$0xf]
    %v2942 = vld [vmem:[#allocation10 + $0xe88] sm:$0xf]
    %v2943 = vld [vmem:[#allocation10 + $0xe8c] sm:$0xf]
    %v2944 = vld [vmem:[#allocation10 + $0xe90] sm:$0xf]
    %v2945 = vld [vmem:[#allocation10 + $0xe94] sm:$0xf]
    %v2946 = vld [vmem:[#allocation10 + $0xe98] sm:$0xf]
    %v2947 = vld [vmem:[#allocation10 + $0xe9c] sm:$0xf]
    %v2948 = vld [vmem:[#allocation10 + $0xea0] sm:$0xf]
    %v2949 = vld [vmem:[#allocation10 + $0xea4] sm:$0xf]
    %v2950 = vld [vmem:[#allocation10 + $0xea8] sm:$0xf]
    %v2951 = vld [vmem:[#allocation10 + $0xeac] sm:$0xf]
    %v2952 = vld [vmem:[#allocation10 + $0xeb0] sm:$0xf]
    %v2953 = vld [vmem:[#allocation10 + $0xeb4] sm:$0xf]
    %v2954 = vld [vmem:[#allocation10 + $0xeb8] sm:$0xf]
    %v2955 = vld [vmem:[#allocation10 + $0xebc] sm:$0xf]
    %v2956 = vld [vmem:[#allocation10 + $0xec0] sm:$0xf]
    %v2957 = vld [vmem:[#allocation10 + $0xec4] sm:$0xf]
    %v2958 = vld [vmem:[#allocation10 + $0xec8] sm:$0xf]
    %v2959 = vld [vmem:[#allocation10 + $0xecc] sm:$0xf]
    %v2960 = vld [vmem:[#allocation10 + $0xed0] sm:$0xf]
    %v2961 = vld [vmem:[#allocation10 + $0xed4] sm:$0xf]
    %v2962 = vld [vmem:[#allocation10 + $0xed8] sm:$0xf]
    %v2963 = vld [vmem:[#allocation10 + $0xedc] sm:$0xf]
    %v2964 = vld [vmem:[#allocation10 + $0xee0] sm:$0xf]
    %v2965 = vld [vmem:[#allocation10 + $0xee4] sm:$0xf]
    %v2966 = vld [vmem:[#allocation10 + $0xee8] sm:$0xf]
    %v2967 = vld [vmem:[#allocation10 + $0xeec] sm:$0xf]
    %v2968 = vld [vmem:[#allocation10 + $0xef0] sm:$0xf]
    %v2969 = vld [vmem:[#allocation10 + $0xef4] sm:$0xf]
    %v2970 = vld [vmem:[#allocation10 + $0xef8] sm:$0xf]
    %v2971 = vld [vmem:[#allocation10 + $0xefc] sm:$0xf]
    %v2972 = vld [vmem:[#allocation10 + $0xf00] sm:$0xf]
    %v2973 = vld [vmem:[#allocation10 + $0xf04] sm:$0xf]
    %v2974 = vld [vmem:[#allocation10 + $0xf08] sm:$0xf]
    %v2975 = vld [vmem:[#allocation10 + $0xf0c] sm:$0xf]
    %v2976 = vld [vmem:[#allocation10 + $0xf10] sm:$0xf]
    %v2977 = vld [vmem:[#allocation10 + $0xf14] sm:$0xf]
    %v2978 = vld [vmem:[#allocation10 + $0xf18] sm:$0xf]
    %v2979 = vld [vmem:[#allocation10 + $0xf1c] sm:$0xf]
    %v2980 = vld [vmem:[#allocation10 + $0xf20] sm:$0xf]
    %v2981 = vld [vmem:[#allocation10 + $0xf24] sm:$0xf]
    %v2982 = vld [vmem:[#allocation10 + $0xf28] sm:$0xf]
    %v2983 = vld [vmem:[#allocation10 + $0xf2c] sm:$0xf]
    %v2984 = vld [vmem:[#allocation10 + $0xf30] sm:$0xf]
    %v2985 = vld [vmem:[#allocation10 + $0xf34] sm:$0xf]
    %v2986 = vld [vmem:[#allocation10 + $0xf38] sm:$0xf]
    %v2987 = vld [vmem:[#allocation10 + $0xf3c] sm:$0xf]
    %v2988 = vld [vmem:[#allocation10 + $0xf40] sm:$0xf]
    %v2989 = vld [vmem:[#allocation10 + $0xf44] sm:$0xf]
    %v2990 = vld [vmem:[#allocation10 + $0xf48] sm:$0xf]
    %v2991 = vld [vmem:[#allocation10 + $0xf4c] sm:$0xf]
    %v2992 = vld [vmem:[#allocation10 + $0xf50] sm:$0xf]
    %v2993 = vld [vmem:[#allocation10 + $0xf54] sm:$0xf]
    %v2994 = vld [vmem:[#allocation10 + $0xf58] sm:$0xf]
    %v2995 = vld [vmem:[#allocation10 + $0xf5c] sm:$0xf]
    %v2996 = vld [vmem:[#allocation10 + $0xf60] sm:$0xf]
    %v2997 = vld [vmem:[#allocation10 + $0xf64] sm:$0xf]
    %v2998 = vld [vmem:[#allocation10 + $0xf68] sm:$0xf]
    %v2999 = vld [vmem:[#allocation10 + $0xf6c] sm:$0xf]
    %v3000 = vld [vmem:[#allocation10 + $0xf70] sm:$0xf]
    %v3001 = vld [vmem:[#allocation10 + $0xf74] sm:$0xf]
    %v3002 = vld [vmem:[#allocation10 + $0xf78] sm:$0xf]
    %v3003 = vld [vmem:[#allocation10 + $0xf7c] sm:$0xf]
    %v3004 = vld [vmem:[#allocation10 + $0xf80] sm:$0xf]
    %v3005 = vld [vmem:[#allocation10 + $0xf84] sm:$0xf]
    %v3006 = vld [vmem:[#allocation10 + $0xf88] sm:$0xf]
    %v3007 = vld [vmem:[#allocation10 + $0xf8c] sm:$0xf]
    %v3008 = vld [vmem:[#allocation10 + $0xf90] sm:$0xf]
    %v3009 = vld [vmem:[#allocation10 + $0xf94] sm:$0xf]
    %v3010 = vld [vmem:[#allocation10 + $0xf98] sm:$0xf]
    %v3011 = vld [vmem:[#allocation10 + $0xf9c] sm:$0xf]
    %v3012 = vld [vmem:[#allocation10 + $0xfa0] sm:$0xf]
    %v3013 = vld [vmem:[#allocation10 + $0xfa4] sm:$0xf]
    %v3014 = vld [vmem:[#allocation10 + $0xfa8] sm:$0xf]
    %v3015 = vld [vmem:[#allocation10 + $0xfac] sm:$0xf]
    %v3016 = vld [vmem:[#allocation10 + $0xfb0] sm:$0xf]
    %v3017 = vld [vmem:[#allocation10 + $0xfb4] sm:$0xf]
    %v3018 = vld [vmem:[#allocation10 + $0xfb8] sm:$0xf]
    %v3019 = vld [vmem:[#allocation10 + $0xfbc] sm:$0xf]
    %v3020 = vld [vmem:[#allocation10 + $0xfc0] sm:$0xf]
    %v3021 = vld [vmem:[#allocation10 + $0xfc4] sm:$0xf]
    %v3022 = vld [vmem:[#allocation10 + $0xfc8] sm:$0xf]
    %v3023 = vld [vmem:[#allocation10 + $0xfcc] sm:$0xf]
    %v3024 = vld [vmem:[#allocation10 + $0xfd0] sm:$0xf]
    %v3025 = vld [vmem:[#allocation10 + $0xfd4] sm:$0xf]
    %v3026 = vld [vmem:[#allocation10 + $0xfd8] sm:$0xf]
    %v3027 = vld [vmem:[#allocation10 + $0xfdc] sm:$0xf]
    %v3028 = vld [vmem:[#allocation10 + $0xfe0] sm:$0xf]
    %v3029 = vld [vmem:[#allocation10 + $0xfe4] sm:$0xf]
    %v3030 = vld [vmem:[#allocation10 + $0xfe8] sm:$0xf]
    %v3031 = vld [vmem:[#allocation10 + $0xfec] sm:$0xf]
    %v3032 = vld [vmem:[#allocation10 + $0xff0] sm:$0xf]
    %v3033 = vld [vmem:[#allocation10 + $0xff4] sm:$0xf]
    %v3034 = vld [vmem:[#allocation10 + $0xff8] sm:$0xf]
    %v3035 = vld [vmem:[#allocation10 + $0xffc] sm:$0xf]
    %v3036 = vld [vmem:[#allocation12] sm:$0x1]
    %v3038 = vlaneseq
    %v3039 = vshrl.u32 %v3038, 7
    %v3040 = vsub.s32 0, %v3039
    %v3041 = vrot.slane %v3036, %v3040
    %v4067 = vunpack.c.l.b16 %v2012
    %v4068 = vunpack.c.l.b16 %v2013
    %v4069 = vunpack.c.l.b16 %v2014
    %v4070 = vunpack.c.l.b16 %v2015
    %v4071 = vunpack.c.l.b16 %v2016
    %v4072 = vunpack.c.l.b16 %v2017
    %v4073 = vunpack.c.l.b16 %v2018
    %v4074 = vunpack.c.l.b16 %v2019
    %v4075 = vunpack.c.l.b16 %v2020
    %v4076 = vunpack.c.l.b16 %v2021
    %v4077 = vunpack.c.l.b16 %v2022
    %v4078 = vunpack.c.l.b16 %v2023
    %v4079 = vunpack.c.l.b16 %v2024
    %v4080 = vunpack.c.l.b16 %v2025
    %v4081 = vunpack.c.l.b16 %v2026
    %v4082 = vunpack.c.l.b16 %v2027
    %v4083 = vunpack.c.l.b16 %v2028
    %v4084 = vunpack.c.l.b16 %v2029
    %v4085 = vunpack.c.l.b16 %v2030
    %v4086 = vunpack.c.l.b16 %v2031
    %v4087 = vunpack.c.l.b16 %v2032
    %v4088 = vunpack.c.l.b16 %v2033
    %v4089 = vunpack.c.l.b16 %v2034
    %v4090 = vunpack.c.l.b16 %v2035
    %v4091 = vunpack.c.l.b16 %v2036
    %v4092 = vunpack.c.l.b16 %v2037
    %v4093 = vunpack.c.l.b16 %v2038
    %v4094 = vunpack.c.l.b16 %v2039
    %v4095 = vunpack.c.l.b16 %v2040
    %v4096 = vunpack.c.l.b16 %v2041
    %v4097 = vunpack.c.l.b16 %v2042
    %v4098 = vunpack.c.l.b16 %v2043
    %v4099 = vunpack.c.l.b16 %v2044
    %v4100 = vunpack.c.l.b16 %v2045
    %v4101 = vunpack.c.l.b16 %v2046
    %v4102 = vunpack.c.l.b16 %v2047
    %v4103 = vunpack.c.l.b16 %v2048
    %v4104 = vunpack.c.l.b16 %v2049
    %v4105 = vunpack.c.l.b16 %v2050
    %v4106 = vunpack.c.l.b16 %v2051
    %v4107 = vunpack.c.l.b16 %v2052
    %v4108 = vunpack.c.l.b16 %v2053
    %v4109 = vunpack.c.l.b16 %v2054
    %v4110 = vunpack.c.l.b16 %v2055
    %v4111 = vunpack.c.l.b16 %v2056
    %v4112 = vunpack.c.l.b16 %v2057
    %v4113 = vunpack.c.l.b16 %v2058
    %v4114 = vunpack.c.l.b16 %v2059
    %v4115 = vunpack.c.l.b16 %v2060
    %v4116 = vunpack.c.l.b16 %v2061
    %v4117 = vunpack.c.l.b16 %v2062
    %v4118 = vunpack.c.l.b16 %v2063
    %v4119 = vunpack.c.l.b16 %v2064
    %v4120 = vunpack.c.l.b16 %v2065
    %v4121 = vunpack.c.l.b16 %v2066
    %v4122 = vunpack.c.l.b16 %v2067
    %v4123 = vunpack.c.l.b16 %v2068
    %v4124 = vunpack.c.l.b16 %v2069
    %v4125 = vunpack.c.l.b16 %v2070
    %v4126 = vunpack.c.l.b16 %v2071
    %v4127 = vunpack.c.l.b16 %v2072
    %v4128 = vunpack.c.l.b16 %v2073
    %v4129 = vunpack.c.l.b16 %v2074
    %v4130 = vunpack.c.l.b16 %v2075
    %v4131 = vunpack.c.l.b16 %v2076
    %v4132 = vunpack.c.l.b16 %v2077
    %v4133 = vunpack.c.l.b16 %v2078
    %v4134 = vunpack.c.l.b16 %v2079
    %v4135 = vunpack.c.l.b16 %v2080
    %v4136 = vunpack.c.l.b16 %v2081
    %v4137 = vunpack.c.l.b16 %v2082
    %v4138 = vunpack.c.l.b16 %v2083
    %v4139 = vunpack.c.l.b16 %v2084
    %v4140 = vunpack.c.l.b16 %v2085
    %v4141 = vunpack.c.l.b16 %v2086
    %v4142 = vunpack.c.l.b16 %v2087
    %v4143 = vunpack.c.l.b16 %v2088
    %v4144 = vunpack.c.l.b16 %v2089
    %v4145 = vunpack.c.l.b16 %v2090
    %v4146 = vunpack.c.l.b16 %v2091
    %v4147 = vunpack.c.l.b16 %v2092
    %v4148 = vunpack.c.l.b16 %v2093
    %v4149 = vunpack.c.l.b16 %v2094
    %v4150 = vunpack.c.l.b16 %v2095
    %v4151 = vunpack.c.l.b16 %v2096
    %v4152 = vunpack.c.l.b16 %v2097
    %v4153 = vunpack.c.l.b16 %v2098
    %v4154 = vunpack.c.l.b16 %v2099
    %v4155 = vunpack.c.l.b16 %v2100
    %v4156 = vunpack.c.l.b16 %v2101
    %v4157 = vunpack.c.l.b16 %v2102
    %v4158 = vunpack.c.l.b16 %v2103
    %v4159 = vunpack.c.l.b16 %v2104
    %v4160 = vunpack.c.l.b16 %v2105
    %v4161 = vunpack.c.l.b16 %v2106
    %v4162 = vunpack.c.l.b16 %v2107
    %v4163 = vunpack.c.l.b16 %v2108
    %v4164 = vunpack.c.l.b16 %v2109
    %v4165 = vunpack.c.l.b16 %v2110
    %v4166 = vunpack.c.l.b16 %v2111
    %v4167 = vunpack.c.l.b16 %v2112
    %v4168 = vunpack.c.l.b16 %v2113
    %v4169 = vunpack.c.l.b16 %v2114
    %v4170 = vunpack.c.l.b16 %v2115
    %v4171 = vunpack.c.l.b16 %v2116
    %v4172 = vunpack.c.l.b16 %v2117
    %v4173 = vunpack.c.l.b16 %v2118
    %v4174 = vunpack.c.l.b16 %v2119
    %v4175 = vunpack.c.l.b16 %v2120
    %v4176 = vunpack.c.l.b16 %v2121
    %v4177 = vunpack.c.l.b16 %v2122
    %v4178 = vunpack.c.l.b16 %v2123
    %v4179 = vunpack.c.l.b16 %v2124
    %v4180 = vunpack.c.l.b16 %v2125
    %v4181 = vunpack.c.l.b16 %v2126
    %v4182 = vunpack.c.l.b16 %v2127
    %v4183 = vunpack.c.l.b16 %v2128
    %v4184 = vunpack.c.l.b16 %v2129
    %v4185 = vunpack.c.l.b16 %v2130
    %v4186 = vunpack.c.l.b16 %v2131
    %v4187 = vunpack.c.l.b16 %v2132
    %v4188 = vunpack.c.l.b16 %v2133
    %v4189 = vunpack.c.l.b16 %v2134
    %v4190 = vunpack.c.l.b16 %v2135
    %v4191 = vunpack.c.l.b16 %v2136
    %v4192 = vunpack.c.l.b16 %v2137
    %v4193 = vunpack.c.l.b16 %v2138
    %v4194 = vunpack.c.l.b16 %v2139
    %v4195 = vunpack.c.l.b16 %v2140
    %v4196 = vunpack.c.l.b16 %v2141
    %v4197 = vunpack.c.l.b16 %v2142
    %v4198 = vunpack.c.l.b16 %v2143
    %v4199 = vunpack.c.l.b16 %v2144
    %v4200 = vunpack.c.l.b16 %v2145
    %v4201 = vunpack.c.l.b16 %v2146
    %v4202 = vunpack.c.l.b16 %v2147
    %v4203 = vunpack.c.l.b16 %v2148
    %v4204 = vunpack.c.l.b16 %v2149
    %v4205 = vunpack.c.l.b16 %v2150
    %v4206 = vunpack.c.l.b16 %v2151
    %v4207 = vunpack.c.l.b16 %v2152
    %v4208 = vunpack.c.l.b16 %v2153
    %v4209 = vunpack.c.l.b16 %v2154
    %v4210 = vunpack.c.l.b16 %v2155
    %v4211 = vunpack.c.l.b16 %v2156
    %v4212 = vunpack.c.l.b16 %v2157
    %v4213 = vunpack.c.l.b16 %v2158
    %v4214 = vunpack.c.l.b16 %v2159
    %v4215 = vunpack.c.l.b16 %v2160
    %v4216 = vunpack.c.l.b16 %v2161
    %v4217 = vunpack.c.l.b16 %v2162
    %v4218 = vunpack.c.l.b16 %v2163
    %v4219 = vunpack.c.l.b16 %v2164
    %v4220 = vunpack.c.l.b16 %v2165
    %v4221 = vunpack.c.l.b16 %v2166
    %v4222 = vunpack.c.l.b16 %v2167
    %v4223 = vunpack.c.l.b16 %v2168
    %v4224 = vunpack.c.l.b16 %v2169
    %v4225 = vunpack.c.l.b16 %v2170
    %v4226 = vunpack.c.l.b16 %v2171
    %v4227 = vunpack.c.l.b16 %v2172
    %v4228 = vunpack.c.l.b16 %v2173
    %v4229 = vunpack.c.l.b16 %v2174
    %v4230 = vunpack.c.l.b16 %v2175
    %v4231 = vunpack.c.l.b16 %v2176
    %v4232 = vunpack.c.l.b16 %v2177
    %v4233 = vunpack.c.l.b16 %v2178
    %v4234 = vunpack.c.l.b16 %v2179
    %v4235 = vunpack.c.l.b16 %v2180
    %v4236 = vunpack.c.l.b16 %v2181
    %v4237 = vunpack.c.l.b16 %v2182
    %v4238 = vunpack.c.l.b16 %v2183
    %v4239 = vunpack.c.l.b16 %v2184
    %v4240 = vunpack.c.l.b16 %v2185
    %v4241 = vunpack.c.l.b16 %v2186
    %v4242 = vunpack.c.l.b16 %v2187
    %v4243 = vunpack.c.l.b16 %v2188
    %v4244 = vunpack.c.l.b16 %v2189
    %v4245 = vunpack.c.l.b16 %v2190
    %v4246 = vunpack.c.l.b16 %v2191
    %v4247 = vunpack.c.l.b16 %v2192
    %v4248 = vunpack.c.l.b16 %v2193
    %v4249 = vunpack.c.l.b16 %v2194
    %v4250 = vunpack.c.l.b16 %v2195
    %v4251 = vunpack.c.l.b16 %v2196
    %v4252 = vunpack.c.l.b16 %v2197
    %v4253 = vunpack.c.l.b16 %v2198
    %v4254 = vunpack.c.l.b16 %v2199
    %v4255 = vunpack.c.l.b16 %v2200
    %v4256 = vunpack.c.l.b16 %v2201
    %v4257 = vunpack.c.l.b16 %v2202
    %v4258 = vunpack.c.l.b16 %v2203
    %v4259 = vunpack.c.l.b16 %v2204
    %v4260 = vunpack.c.l.b16 %v2205
    %v4261 = vunpack.c.l.b16 %v2206
    %v4262 = vunpack.c.l.b16 %v2207
    %v4263 = vunpack.c.l.b16 %v2208
    %v4264 = vunpack.c.l.b16 %v2209
    %v4265 = vunpack.c.l.b16 %v2210
    %v4266 = vunpack.c.l.b16 %v2211
    %v4267 = vunpack.c.l.b16 %v2212
    %v4268 = vunpack.c.l.b16 %v2213
    %v4269 = vunpack.c.l.b16 %v2214
    %v4270 = vunpack.c.l.b16 %v2215
    %v4271 = vunpack.c.l.b16 %v2216
    %v4272 = vunpack.c.l.b16 %v2217
    %v4273 = vunpack.c.l.b16 %v2218
    %v4274 = vunpack.c.l.b16 %v2219
    %v4275 = vunpack.c.l.b16 %v2220
    %v4276 = vunpack.c.l.b16 %v2221
    %v4277 = vunpack.c.l.b16 %v2222
    %v4278 = vunpack.c.l.b16 %v2223
    %v4279 = vunpack.c.l.b16 %v2224
    %v4280 = vunpack.c.l.b16 %v2225
    %v4281 = vunpack.c.l.b16 %v2226
    %v4282 = vunpack.c.l.b16 %v2227
    %v4283 = vunpack.c.l.b16 %v2228
    %v4284 = vunpack.c.l.b16 %v2229
    %v4285 = vunpack.c.l.b16 %v2230
    %v4286 = vunpack.c.l.b16 %v2231
    %v4287 = vunpack.c.l.b16 %v2232
    %v4288 = vunpack.c.l.b16 %v2233
    %v4289 = vunpack.c.l.b16 %v2234
    %v4290 = vunpack.c.l.b16 %v2235
    %v4291 = vunpack.c.l.b16 %v2236
    %v4292 = vunpack.c.l.b16 %v2237
    %v4293 = vunpack.c.l.b16 %v2238
    %v4294 = vunpack.c.l.b16 %v2239
    %v4295 = vunpack.c.l.b16 %v2240
    %v4296 = vunpack.c.l.b16 %v2241
    %v4297 = vunpack.c.l.b16 %v2242
    %v4298 = vunpack.c.l.b16 %v2243
    %v4299 = vunpack.c.l.b16 %v2244
    %v4300 = vunpack.c.l.b16 %v2245
    %v4301 = vunpack.c.l.b16 %v2246
    %v4302 = vunpack.c.l.b16 %v2247
    %v4303 = vunpack.c.l.b16 %v2248
    %v4304 = vunpack.c.l.b16 %v2249
    %v4305 = vunpack.c.l.b16 %v2250
    %v4306 = vunpack.c.l.b16 %v2251
    %v4307 = vunpack.c.l.b16 %v2252
    %v4308 = vunpack.c.l.b16 %v2253
    %v4309 = vunpack.c.l.b16 %v2254
    %v4310 = vunpack.c.l.b16 %v2255
    %v4311 = vunpack.c.l.b16 %v2256
    %v4312 = vunpack.c.l.b16 %v2257
    %v4313 = vunpack.c.l.b16 %v2258
    %v4314 = vunpack.c.l.b16 %v2259
    %v4315 = vunpack.c.l.b16 %v2260
    %v4316 = vunpack.c.l.b16 %v2261
    %v4317 = vunpack.c.l.b16 %v2262
    %v4318 = vunpack.c.l.b16 %v2263
    %v4319 = vunpack.c.l.b16 %v2264
    %v4320 = vunpack.c.l.b16 %v2265
    %v4321 = vunpack.c.l.b16 %v2266
    %v4322 = vunpack.c.l.b16 %v2267
    %v4323 = vunpack.c.l.b16 %v2268
    %v4324 = vunpack.c.l.b16 %v2269
    %v4325 = vunpack.c.l.b16 %v2270
    %v4326 = vunpack.c.l.b16 %v2271
    %v4327 = vunpack.c.l.b16 %v2272
    %v4328 = vunpack.c.l.b16 %v2273
    %v4329 = vunpack.c.l.b16 %v2274
    %v4330 = vunpack.c.l.b16 %v2275
    %v4331 = vunpack.c.l.b16 %v2276
    %v4332 = vunpack.c.l.b16 %v2277
    %v4333 = vunpack.c.l.b16 %v2278
    %v4334 = vunpack.c.l.b16 %v2279
    %v4335 = vunpack.c.l.b16 %v2280
    %v4336 = vunpack.c.l.b16 %v2281
    %v4337 = vunpack.c.l.b16 %v2282
    %v4338 = vunpack.c.l.b16 %v2283
    %v4339 = vunpack.c.l.b16 %v2284
    %v4340 = vunpack.c.l.b16 %v2285
    %v4341 = vunpack.c.l.b16 %v2286
    %v4342 = vunpack.c.l.b16 %v2287
    %v4343 = vunpack.c.l.b16 %v2288
    %v4344 = vunpack.c.l.b16 %v2289
    %v4345 = vunpack.c.l.b16 %v2290
    %v4346 = vunpack.c.l.b16 %v2291
    %v4347 = vunpack.c.l.b16 %v2292
    %v4348 = vunpack.c.l.b16 %v2293
    %v4349 = vunpack.c.l.b16 %v2294
    %v4350 = vunpack.c.l.b16 %v2295
    %v4351 = vunpack.c.l.b16 %v2296
    %v4352 = vunpack.c.l.b16 %v2297
    %v4353 = vunpack.c.l.b16 %v2298
    %v4354 = vunpack.c.l.b16 %v2299
    %v4355 = vunpack.c.l.b16 %v2300
    %v4356 = vunpack.c.l.b16 %v2301
    %v4357 = vunpack.c.l.b16 %v2302
    %v4358 = vunpack.c.l.b16 %v2303
    %v4359 = vunpack.c.l.b16 %v2304
    %v4360 = vunpack.c.l.b16 %v2305
    %v4361 = vunpack.c.l.b16 %v2306
    %v4362 = vunpack.c.l.b16 %v2307
    %v4363 = vunpack.c.l.b16 %v2308
    %v4364 = vunpack.c.l.b16 %v2309
    %v4365 = vunpack.c.l.b16 %v2310
    %v4366 = vunpack.c.l.b16 %v2311
    %v4367 = vunpack.c.l.b16 %v2312
    %v4368 = vunpack.c.l.b16 %v2313
    %v4369 = vunpack.c.l.b16 %v2314
    %v4370 = vunpack.c.l.b16 %v2315
    %v4371 = vunpack.c.l.b16 %v2316
    %v4372 = vunpack.c.l.b16 %v2317
    %v4373 = vunpack.c.l.b16 %v2318
    %v4374 = vunpack.c.l.b16 %v2319
    %v4375 = vunpack.c.l.b16 %v2320
    %v4376 = vunpack.c.l.b16 %v2321
    %v4377 = vunpack.c.l.b16 %v2322
    %v4378 = vunpack.c.l.b16 %v2323
    %v4379 = vunpack.c.l.b16 %v2324
    %v4380 = vunpack.c.l.b16 %v2325
    %v4381 = vunpack.c.l.b16 %v2326
    %v4382 = vunpack.c.l.b16 %v2327
    %v4383 = vunpack.c.l.b16 %v2328
    %v4384 = vunpack.c.l.b16 %v2329
    %v4385 = vunpack.c.l.b16 %v2330
    %v4386 = vunpack.c.l.b16 %v2331
    %v4387 = vunpack.c.l.b16 %v2332
    %v4388 = vunpack.c.l.b16 %v2333
    %v4389 = vunpack.c.l.b16 %v2334
    %v4390 = vunpack.c.l.b16 %v2335
    %v4391 = vunpack.c.l.b16 %v2336
    %v4392 = vunpack.c.l.b16 %v2337
    %v4393 = vunpack.c.l.b16 %v2338
    %v4394 = vunpack.c.l.b16 %v2339
    %v4395 = vunpack.c.l.b16 %v2340
    %v4396 = vunpack.c.l.b16 %v2341
    %v4397 = vunpack.c.l.b16 %v2342
    %v4398 = vunpack.c.l.b16 %v2343
    %v4399 = vunpack.c.l.b16 %v2344
    %v4400 = vunpack.c.l.b16 %v2345
    %v4401 = vunpack.c.l.b16 %v2346
    %v4402 = vunpack.c.l.b16 %v2347
    %v4403 = vunpack.c.l.b16 %v2348
    %v4404 = vunpack.c.l.b16 %v2349
    %v4405 = vunpack.c.l.b16 %v2350
    %v4406 = vunpack.c.l.b16 %v2351
    %v4407 = vunpack.c.l.b16 %v2352
    %v4408 = vunpack.c.l.b16 %v2353
    %v4409 = vunpack.c.l.b16 %v2354
    %v4410 = vunpack.c.l.b16 %v2355
    %v4411 = vunpack.c.l.b16 %v2356
    %v4412 = vunpack.c.l.b16 %v2357
    %v4413 = vunpack.c.l.b16 %v2358
    %v4414 = vunpack.c.l.b16 %v2359
    %v4415 = vunpack.c.l.b16 %v2360
    %v4416 = vunpack.c.l.b16 %v2361
    %v4417 = vunpack.c.l.b16 %v2362
    %v4418 = vunpack.c.l.b16 %v2363
    %v4419 = vunpack.c.l.b16 %v2364
    %v4420 = vunpack.c.l.b16 %v2365
    %v4421 = vunpack.c.l.b16 %v2366
    %v4422 = vunpack.c.l.b16 %v2367
    %v4423 = vunpack.c.l.b16 %v2368
    %v4424 = vunpack.c.l.b16 %v2369
    %v4425 = vunpack.c.l.b16 %v2370
    %v4426 = vunpack.c.l.b16 %v2371
    %v4427 = vunpack.c.l.b16 %v2372
    %v4428 = vunpack.c.l.b16 %v2373
    %v4429 = vunpack.c.l.b16 %v2374
    %v4430 = vunpack.c.l.b16 %v2375
    %v4431 = vunpack.c.l.b16 %v2376
    %v4432 = vunpack.c.l.b16 %v2377
    %v4433 = vunpack.c.l.b16 %v2378
    %v4434 = vunpack.c.l.b16 %v2379
    %v4435 = vunpack.c.l.b16 %v2380
    %v4436 = vunpack.c.l.b16 %v2381
    %v4437 = vunpack.c.l.b16 %v2382
    %v4438 = vunpack.c.l.b16 %v2383
    %v4439 = vunpack.c.l.b16 %v2384
    %v4440 = vunpack.c.l.b16 %v2385
    %v4441 = vunpack.c.l.b16 %v2386
    %v4442 = vunpack.c.l.b16 %v2387
    %v4443 = vunpack.c.l.b16 %v2388
    %v4444 = vunpack.c.l.b16 %v2389
    %v4445 = vunpack.c.l.b16 %v2390
    %v4446 = vunpack.c.l.b16 %v2391
    %v4447 = vunpack.c.l.b16 %v2392
    %v4448 = vunpack.c.l.b16 %v2393
    %v4449 = vunpack.c.l.b16 %v2394
    %v4450 = vunpack.c.l.b16 %v2395
    %v4451 = vunpack.c.l.b16 %v2396
    %v4452 = vunpack.c.l.b16 %v2397
    %v4453 = vunpack.c.l.b16 %v2398
    %v4454 = vunpack.c.l.b16 %v2399
    %v4455 = vunpack.c.l.b16 %v2400
    %v4456 = vunpack.c.l.b16 %v2401
    %v4457 = vunpack.c.l.b16 %v2402
    %v4458 = vunpack.c.l.b16 %v2403
    %v4459 = vunpack.c.l.b16 %v2404
    %v4460 = vunpack.c.l.b16 %v2405
    %v4461 = vunpack.c.l.b16 %v2406
    %v4462 = vunpack.c.l.b16 %v2407
    %v4463 = vunpack.c.l.b16 %v2408
    %v4464 = vunpack.c.l.b16 %v2409
    %v4465 = vunpack.c.l.b16 %v2410
    %v4466 = vunpack.c.l.b16 %v2411
    %v4467 = vunpack.c.l.b16 %v2412
    %v4468 = vunpack.c.l.b16 %v2413
    %v4469 = vunpack.c.l.b16 %v2414
    %v4470 = vunpack.c.l.b16 %v2415
    %v4471 = vunpack.c.l.b16 %v2416
    %v4472 = vunpack.c.l.b16 %v2417
    %v4473 = vunpack.c.l.b16 %v2418
    %v4474 = vunpack.c.l.b16 %v2419
    %v4475 = vunpack.c.l.b16 %v2420
    %v4476 = vunpack.c.l.b16 %v2421
    %v4477 = vunpack.c.l.b16 %v2422
    %v4478 = vunpack.c.l.b16 %v2423
    %v4479 = vunpack.c.l.b16 %v2424
    %v4480 = vunpack.c.l.b16 %v2425
    %v4481 = vunpack.c.l.b16 %v2426
    %v4482 = vunpack.c.l.b16 %v2427
    %v4483 = vunpack.c.l.b16 %v2428
    %v4484 = vunpack.c.l.b16 %v2429
    %v4485 = vunpack.c.l.b16 %v2430
    %v4486 = vunpack.c.l.b16 %v2431
    %v4487 = vunpack.c.l.b16 %v2432
    %v4488 = vunpack.c.l.b16 %v2433
    %v4489 = vunpack.c.l.b16 %v2434
    %v4490 = vunpack.c.l.b16 %v2435
    %v4491 = vunpack.c.l.b16 %v2436
    %v4492 = vunpack.c.l.b16 %v2437
    %v4493 = vunpack.c.l.b16 %v2438
    %v4494 = vunpack.c.l.b16 %v2439
    %v4495 = vunpack.c.l.b16 %v2440
    %v4496 = vunpack.c.l.b16 %v2441
    %v4497 = vunpack.c.l.b16 %v2442
    %v4498 = vunpack.c.l.b16 %v2443
    %v4499 = vunpack.c.l.b16 %v2444
    %v4500 = vunpack.c.l.b16 %v2445
    %v4501 = vunpack.c.l.b16 %v2446
    %v4502 = vunpack.c.l.b16 %v2447
    %v4503 = vunpack.c.l.b16 %v2448
    %v4504 = vunpack.c.l.b16 %v2449
    %v4505 = vunpack.c.l.b16 %v2450
    %v4506 = vunpack.c.l.b16 %v2451
    %v4507 = vunpack.c.l.b16 %v2452
    %v4508 = vunpack.c.l.b16 %v2453
    %v4509 = vunpack.c.l.b16 %v2454
    %v4510 = vunpack.c.l.b16 %v2455
    %v4511 = vunpack.c.l.b16 %v2456
    %v4512 = vunpack.c.l.b16 %v2457
    %v4513 = vunpack.c.l.b16 %v2458
    %v4514 = vunpack.c.l.b16 %v2459
    %v4515 = vunpack.c.l.b16 %v2460
    %v4516 = vunpack.c.l.b16 %v2461
    %v4517 = vunpack.c.l.b16 %v2462
    %v4518 = vunpack.c.l.b16 %v2463
    %v4519 = vunpack.c.l.b16 %v2464
    %v4520 = vunpack.c.l.b16 %v2465
    %v4521 = vunpack.c.l.b16 %v2466
    %v4522 = vunpack.c.l.b16 %v2467
    %v4523 = vunpack.c.l.b16 %v2468
    %v4524 = vunpack.c.l.b16 %v2469
    %v4525 = vunpack.c.l.b16 %v2470
    %v4526 = vunpack.c.l.b16 %v2471
    %v4527 = vunpack.c.l.b16 %v2472
    %v4528 = vunpack.c.l.b16 %v2473
    %v4529 = vunpack.c.l.b16 %v2474
    %v4530 = vunpack.c.l.b16 %v2475
    %v4531 = vunpack.c.l.b16 %v2476
    %v4532 = vunpack.c.l.b16 %v2477
    %v4533 = vunpack.c.l.b16 %v2478
    %v4534 = vunpack.c.l.b16 %v2479
    %v4535 = vunpack.c.l.b16 %v2480
    %v4536 = vunpack.c.l.b16 %v2481
    %v4537 = vunpack.c.l.b16 %v2482
    %v4538 = vunpack.c.l.b16 %v2483
    %v4539 = vunpack.c.l.b16 %v2484
    %v4540 = vunpack.c.l.b16 %v2485
    %v4541 = vunpack.c.l.b16 %v2486
    %v4542 = vunpack.c.l.b16 %v2487
    %v4543 = vunpack.c.l.b16 %v2488
    %v4544 = vunpack.c.l.b16 %v2489
    %v4545 = vunpack.c.l.b16 %v2490
    %v4546 = vunpack.c.l.b16 %v2491
    %v4547 = vunpack.c.l.b16 %v2492
    %v4548 = vunpack.c.l.b16 %v2493
    %v4549 = vunpack.c.l.b16 %v2494
    %v4550 = vunpack.c.l.b16 %v2495
    %v4551 = vunpack.c.l.b16 %v2496
    %v4552 = vunpack.c.l.b16 %v2497
    %v4553 = vunpack.c.l.b16 %v2498
    %v4554 = vunpack.c.l.b16 %v2499
    %v4555 = vunpack.c.l.b16 %v2500
    %v4556 = vunpack.c.l.b16 %v2501
    %v4557 = vunpack.c.l.b16 %v2502
    %v4558 = vunpack.c.l.b16 %v2503
    %v4559 = vunpack.c.l.b16 %v2504
    %v4560 = vunpack.c.l.b16 %v2505
    %v4561 = vunpack.c.l.b16 %v2506
    %v4562 = vunpack.c.l.b16 %v2507
    %v4563 = vunpack.c.l.b16 %v2508
    %v4564 = vunpack.c.l.b16 %v2509
    %v4565 = vunpack.c.l.b16 %v2510
    %v4566 = vunpack.c.l.b16 %v2511
    %v4567 = vunpack.c.l.b16 %v2512
    %v4568 = vunpack.c.l.b16 %v2513
    %v4569 = vunpack.c.l.b16 %v2514
    %v4570 = vunpack.c.l.b16 %v2515
    %v4571 = vunpack.c.l.b16 %v2516
    %v4572 = vunpack.c.l.b16 %v2517
    %v4573 = vunpack.c.l.b16 %v2518
    %v4574 = vunpack.c.l.b16 %v2519
    %v4575 = vunpack.c.l.b16 %v2520
    %v4576 = vunpack.c.l.b16 %v2521
    %v4577 = vunpack.c.l.b16 %v2522
    %v4578 = vunpack.c.l.b16 %v2523
    %v4579 = vunpack.c.l.b16 %v2524
    %v4580 = vunpack.c.l.b16 %v2525
    %v4581 = vunpack.c.l.b16 %v2526
    %v4582 = vunpack.c.l.b16 %v2527
    %v4583 = vunpack.c.l.b16 %v2528
    %v4584 = vunpack.c.l.b16 %v2529
    %v4585 = vunpack.c.l.b16 %v2530
    %v4586 = vunpack.c.l.b16 %v2531
    %v4587 = vunpack.c.l.b16 %v2532
    %v4588 = vunpack.c.l.b16 %v2533
    %v4589 = vunpack.c.l.b16 %v2534
    %v4590 = vunpack.c.l.b16 %v2535
    %v4591 = vunpack.c.l.b16 %v2536
    %v4592 = vunpack.c.l.b16 %v2537
    %v4593 = vunpack.c.l.b16 %v2538
    %v4594 = vunpack.c.l.b16 %v2539
    %v4595 = vunpack.c.l.b16 %v2540
    %v4596 = vunpack.c.l.b16 %v2541
    %v4597 = vunpack.c.l.b16 %v2542
    %v4598 = vunpack.c.l.b16 %v2543
    %v4599 = vunpack.c.l.b16 %v2544
    %v4600 = vunpack.c.l.b16 %v2545
    %v4601 = vunpack.c.l.b16 %v2546
    %v4602 = vunpack.c.l.b16 %v2547
    %v4603 = vunpack.c.l.b16 %v2548
    %v4604 = vunpack.c.l.b16 %v2549
    %v4605 = vunpack.c.l.b16 %v2550
    %v4606 = vunpack.c.l.b16 %v2551
    %v4607 = vunpack.c.l.b16 %v2552
    %v4608 = vunpack.c.l.b16 %v2553
    %v4609 = vunpack.c.l.b16 %v2554
    %v4610 = vunpack.c.l.b16 %v2555
    %v4611 = vunpack.c.l.b16 %v2556
    %v4612 = vunpack.c.l.b16 %v2557
    %v4613 = vunpack.c.l.b16 %v2558
    %v4614 = vunpack.c.l.b16 %v2559
    %v4615 = vunpack.c.l.b16 %v2560
    %v4616 = vunpack.c.l.b16 %v2561
    %v4617 = vunpack.c.l.b16 %v2562
    %v4618 = vunpack.c.l.b16 %v2563
    %v4619 = vunpack.c.l.b16 %v2564
    %v4620 = vunpack.c.l.b16 %v2565
    %v4621 = vunpack.c.l.b16 %v2566
    %v4622 = vunpack.c.l.b16 %v2567
    %v4623 = vunpack.c.l.b16 %v2568
    %v4624 = vunpack.c.l.b16 %v2569
    %v4625 = vunpack.c.l.b16 %v2570
    %v4626 = vunpack.c.l.b16 %v2571
    %v4627 = vunpack.c.l.b16 %v2572
    %v4628 = vunpack.c.l.b16 %v2573
    %v4629 = vunpack.c.l.b16 %v2574
    %v4630 = vunpack.c.l.b16 %v2575
    %v4631 = vunpack.c.l.b16 %v2576
    %v4632 = vunpack.c.l.b16 %v2577
    %v4633 = vunpack.c.l.b16 %v2578
    %v4634 = vunpack.c.l.b16 %v2579
    %v4635 = vunpack.c.l.b16 %v2580
    %v4636 = vunpack.c.l.b16 %v2581
    %v4637 = vunpack.c.l.b16 %v2582
    %v4638 = vunpack.c.l.b16 %v2583
    %v4639 = vunpack.c.l.b16 %v2584
    %v4640 = vunpack.c.l.b16 %v2585
    %v4641 = vunpack.c.l.b16 %v2586
    %v4642 = vunpack.c.l.b16 %v2587
    %v4643 = vunpack.c.l.b16 %v2588
    %v4644 = vunpack.c.l.b16 %v2589
    %v4645 = vunpack.c.l.b16 %v2590
    %v4646 = vunpack.c.l.b16 %v2591
    %v4647 = vunpack.c.l.b16 %v2592
    %v4648 = vunpack.c.l.b16 %v2593
    %v4649 = vunpack.c.l.b16 %v2594
    %v4650 = vunpack.c.l.b16 %v2595
    %v4651 = vunpack.c.l.b16 %v2596
    %v4652 = vunpack.c.l.b16 %v2597
    %v4653 = vunpack.c.l.b16 %v2598
    %v4654 = vunpack.c.l.b16 %v2599
    %v4655 = vunpack.c.l.b16 %v2600
    %v4656 = vunpack.c.l.b16 %v2601
    %v4657 = vunpack.c.l.b16 %v2602
    %v4658 = vunpack.c.l.b16 %v2603
    %v4659 = vunpack.c.l.b16 %v2604
    %v4660 = vunpack.c.l.b16 %v2605
    %v4661 = vunpack.c.l.b16 %v2606
    %v4662 = vunpack.c.l.b16 %v2607
    %v4663 = vunpack.c.l.b16 %v2608
    %v4664 = vunpack.c.l.b16 %v2609
    %v4665 = vunpack.c.l.b16 %v2610
    %v4666 = vunpack.c.l.b16 %v2611
    %v4667 = vunpack.c.l.b16 %v2612
    %v4668 = vunpack.c.l.b16 %v2613
    %v4669 = vunpack.c.l.b16 %v2614
    %v4670 = vunpack.c.l.b16 %v2615
    %v4671 = vunpack.c.l.b16 %v2616
    %v4672 = vunpack.c.l.b16 %v2617
    %v4673 = vunpack.c.l.b16 %v2618
    %v4674 = vunpack.c.l.b16 %v2619
    %v4675 = vunpack.c.l.b16 %v2620
    %v4676 = vunpack.c.l.b16 %v2621
    %v4677 = vunpack.c.l.b16 %v2622
    %v4678 = vunpack.c.l.b16 %v2623
    %v4679 = vunpack.c.l.b16 %v2624
    %v4680 = vunpack.c.l.b16 %v2625
    %v4681 = vunpack.c.l.b16 %v2626
    %v4682 = vunpack.c.l.b16 %v2627
    %v4683 = vunpack.c.l.b16 %v2628
    %v4684 = vunpack.c.l.b16 %v2629
    %v4685 = vunpack.c.l.b16 %v2630
    %v4686 = vunpack.c.l.b16 %v2631
    %v4687 = vunpack.c.l.b16 %v2632
    %v4688 = vunpack.c.l.b16 %v2633
    %v4689 = vunpack.c.l.b16 %v2634
    %v4690 = vunpack.c.l.b16 %v2635
    %v4691 = vunpack.c.l.b16 %v2636
    %v4692 = vunpack.c.l.b16 %v2637
    %v4693 = vunpack.c.l.b16 %v2638
    %v4694 = vunpack.c.l.b16 %v2639
    %v4695 = vunpack.c.l.b16 %v2640
    %v4696 = vunpack.c.l.b16 %v2641
    %v4697 = vunpack.c.l.b16 %v2642
    %v4698 = vunpack.c.l.b16 %v2643
    %v4699 = vunpack.c.l.b16 %v2644
    %v4700 = vunpack.c.l.b16 %v2645
    %v4701 = vunpack.c.l.b16 %v2646
    %v4702 = vunpack.c.l.b16 %v2647
    %v4703 = vunpack.c.l.b16 %v2648
    %v4704 = vunpack.c.l.b16 %v2649
    %v4705 = vunpack.c.l.b16 %v2650
    %v4706 = vunpack.c.l.b16 %v2651
    %v4707 = vunpack.c.l.b16 %v2652
    %v4708 = vunpack.c.l.b16 %v2653
    %v4709 = vunpack.c.l.b16 %v2654
    %v4710 = vunpack.c.l.b16 %v2655
    %v4711 = vunpack.c.l.b16 %v2656
    %v4712 = vunpack.c.l.b16 %v2657
    %v4713 = vunpack.c.l.b16 %v2658
    %v4714 = vunpack.c.l.b16 %v2659
    %v4715 = vunpack.c.l.b16 %v2660
    %v4716 = vunpack.c.l.b16 %v2661
    %v4717 = vunpack.c.l.b16 %v2662
    %v4718 = vunpack.c.l.b16 %v2663
    %v4719 = vunpack.c.l.b16 %v2664
    %v4720 = vunpack.c.l.b16 %v2665
    %v4721 = vunpack.c.l.b16 %v2666
    %v4722 = vunpack.c.l.b16 %v2667
    %v4723 = vunpack.c.l.b16 %v2668
    %v4724 = vunpack.c.l.b16 %v2669
    %v4725 = vunpack.c.l.b16 %v2670
    %v4726 = vunpack.c.l.b16 %v2671
    %v4727 = vunpack.c.l.b16 %v2672
    %v4728 = vunpack.c.l.b16 %v2673
    %v4729 = vunpack.c.l.b16 %v2674
    %v4730 = vunpack.c.l.b16 %v2675
    %v4731 = vunpack.c.l.b16 %v2676
    %v4732 = vunpack.c.l.b16 %v2677
    %v4733 = vunpack.c.l.b16 %v2678
    %v4734 = vunpack.c.l.b16 %v2679
    %v4735 = vunpack.c.l.b16 %v2680
    %v4736 = vunpack.c.l.b16 %v2681
    %v4737 = vunpack.c.l.b16 %v2682
    %v4738 = vunpack.c.l.b16 %v2683
    %v4739 = vunpack.c.l.b16 %v2684
    %v4740 = vunpack.c.l.b16 %v2685
    %v4741 = vunpack.c.l.b16 %v2686
    %v4742 = vunpack.c.l.b16 %v2687
    %v4743 = vunpack.c.l.b16 %v2688
    %v4744 = vunpack.c.l.b16 %v2689
    %v4745 = vunpack.c.l.b16 %v2690
    %v4746 = vunpack.c.l.b16 %v2691
    %v4747 = vunpack.c.l.b16 %v2692
    %v4748 = vunpack.c.l.b16 %v2693
    %v4749 = vunpack.c.l.b16 %v2694
    %v4750 = vunpack.c.l.b16 %v2695
    %v4751 = vunpack.c.l.b16 %v2696
    %v4752 = vunpack.c.l.b16 %v2697
    %v4753 = vunpack.c.l.b16 %v2698
    %v4754 = vunpack.c.l.b16 %v2699
    %v4755 = vunpack.c.l.b16 %v2700
    %v4756 = vunpack.c.l.b16 %v2701
    %v4757 = vunpack.c.l.b16 %v2702
    %v4758 = vunpack.c.l.b16 %v2703
    %v4759 = vunpack.c.l.b16 %v2704
    %v4760 = vunpack.c.l.b16 %v2705
    %v4761 = vunpack.c.l.b16 %v2706
    %v4762 = vunpack.c.l.b16 %v2707
    %v4763 = vunpack.c.l.b16 %v2708
    %v4764 = vunpack.c.l.b16 %v2709
    %v4765 = vunpack.c.l.b16 %v2710
    %v4766 = vunpack.c.l.b16 %v2711
    %v4767 = vunpack.c.l.b16 %v2712
    %v4768 = vunpack.c.l.b16 %v2713
    %v4769 = vunpack.c.l.b16 %v2714
    %v4770 = vunpack.c.l.b16 %v2715
    %v4771 = vunpack.c.l.b16 %v2716
    %v4772 = vunpack.c.l.b16 %v2717
    %v4773 = vunpack.c.l.b16 %v2718
    %v4774 = vunpack.c.l.b16 %v2719
    %v4775 = vunpack.c.l.b16 %v2720
    %v4776 = vunpack.c.l.b16 %v2721
    %v4777 = vunpack.c.l.b16 %v2722
    %v4778 = vunpack.c.l.b16 %v2723
    %v4779 = vunpack.c.l.b16 %v2724
    %v4780 = vunpack.c.l.b16 %v2725
    %v4781 = vunpack.c.l.b16 %v2726
    %v4782 = vunpack.c.l.b16 %v2727
    %v4783 = vunpack.c.l.b16 %v2728
    %v4784 = vunpack.c.l.b16 %v2729
    %v4785 = vunpack.c.l.b16 %v2730
    %v4786 = vunpack.c.l.b16 %v2731
    %v4787 = vunpack.c.l.b16 %v2732
    %v4788 = vunpack.c.l.b16 %v2733
    %v4789 = vunpack.c.l.b16 %v2734
    %v4790 = vunpack.c.l.b16 %v2735
    %v4791 = vunpack.c.l.b16 %v2736
    %v4792 = vunpack.c.l.b16 %v2737
    %v4793 = vunpack.c.l.b16 %v2738
    %v4794 = vunpack.c.l.b16 %v2739
    %v4795 = vunpack.c.l.b16 %v2740
    %v4796 = vunpack.c.l.b16 %v2741
    %v4797 = vunpack.c.l.b16 %v2742
    %v4798 = vunpack.c.l.b16 %v2743
    %v4799 = vunpack.c.l.b16 %v2744
    %v4800 = vunpack.c.l.b16 %v2745
    %v4801 = vunpack.c.l.b16 %v2746
    %v4802 = vunpack.c.l.b16 %v2747
    %v4803 = vunpack.c.l.b16 %v2748
    %v4804 = vunpack.c.l.b16 %v2749
    %v4805 = vunpack.c.l.b16 %v2750
    %v4806 = vunpack.c.l.b16 %v2751
    %v4807 = vunpack.c.l.b16 %v2752
    %v4808 = vunpack.c.l.b16 %v2753
    %v4809 = vunpack.c.l.b16 %v2754
    %v4810 = vunpack.c.l.b16 %v2755
    %v4811 = vunpack.c.l.b16 %v2756
    %v4812 = vunpack.c.l.b16 %v2757
    %v4813 = vunpack.c.l.b16 %v2758
    %v4814 = vunpack.c.l.b16 %v2759
    %v4815 = vunpack.c.l.b16 %v2760
    %v4816 = vunpack.c.l.b16 %v2761
    %v4817 = vunpack.c.l.b16 %v2762
    %v4818 = vunpack.c.l.b16 %v2763
    %v4819 = vunpack.c.l.b16 %v2764
    %v4820 = vunpack.c.l.b16 %v2765
    %v4821 = vunpack.c.l.b16 %v2766
    %v4822 = vunpack.c.l.b16 %v2767
    %v4823 = vunpack.c.l.b16 %v2768
    %v4824 = vunpack.c.l.b16 %v2769
    %v4825 = vunpack.c.l.b16 %v2770
    %v4826 = vunpack.c.l.b16 %v2771
    %v4827 = vunpack.c.l.b16 %v2772
    %v4828 = vunpack.c.l.b16 %v2773
    %v4829 = vunpack.c.l.b16 %v2774
    %v4830 = vunpack.c.l.b16 %v2775
    %v4831 = vunpack.c.l.b16 %v2776
    %v4832 = vunpack.c.l.b16 %v2777
    %v4833 = vunpack.c.l.b16 %v2778
    %v4834 = vunpack.c.l.b16 %v2779
    %v4835 = vunpack.c.l.b16 %v2780
    %v4836 = vunpack.c.l.b16 %v2781
    %v4837 = vunpack.c.l.b16 %v2782
    %v4838 = vunpack.c.l.b16 %v2783
    %v4839 = vunpack.c.l.b16 %v2784
    %v4840 = vunpack.c.l.b16 %v2785
    %v4841 = vunpack.c.l.b16 %v2786
    %v4842 = vunpack.c.l.b16 %v2787
    %v4843 = vunpack.c.l.b16 %v2788
    %v4844 = vunpack.c.l.b16 %v2789
    %v4845 = vunpack.c.l.b16 %v2790
    %v4846 = vunpack.c.l.b16 %v2791
    %v4847 = vunpack.c.l.b16 %v2792
    %v4848 = vunpack.c.l.b16 %v2793
    %v4849 = vunpack.c.l.b16 %v2794
    %v4850 = vunpack.c.l.b16 %v2795
    %v4851 = vunpack.c.l.b16 %v2796
    %v4852 = vunpack.c.l.b16 %v2797
    %v4853 = vunpack.c.l.b16 %v2798
    %v4854 = vunpack.c.l.b16 %v2799
    %v4855 = vunpack.c.l.b16 %v2800
    %v4856 = vunpack.c.l.b16 %v2801
    %v4857 = vunpack.c.l.b16 %v2802
    %v4858 = vunpack.c.l.b16 %v2803
    %v4859 = vunpack.c.l.b16 %v2804
    %v4860 = vunpack.c.l.b16 %v2805
    %v4861 = vunpack.c.l.b16 %v2806
    %v4862 = vunpack.c.l.b16 %v2807
    %v4863 = vunpack.c.l.b16 %v2808
    %v4864 = vunpack.c.l.b16 %v2809
    %v4865 = vunpack.c.l.b16 %v2810
    %v4866 = vunpack.c.l.b16 %v2811
    %v4867 = vunpack.c.l.b16 %v2812
    %v4868 = vunpack.c.l.b16 %v2813
    %v4869 = vunpack.c.l.b16 %v2814
    %v4870 = vunpack.c.l.b16 %v2815
    %v4871 = vunpack.c.l.b16 %v2816
    %v4872 = vunpack.c.l.b16 %v2817
    %v4873 = vunpack.c.l.b16 %v2818
    %v4874 = vunpack.c.l.b16 %v2819
    %v4875 = vunpack.c.l.b16 %v2820
    %v4876 = vunpack.c.l.b16 %v2821
    %v4877 = vunpack.c.l.b16 %v2822
    %v4878 = vunpack.c.l.b16 %v2823
    %v4879 = vunpack.c.l.b16 %v2824
    %v4880 = vunpack.c.l.b16 %v2825
    %v4881 = vunpack.c.l.b16 %v2826
    %v4882 = vunpack.c.l.b16 %v2827
    %v4883 = vunpack.c.l.b16 %v2828
    %v4884 = vunpack.c.l.b16 %v2829
    %v4885 = vunpack.c.l.b16 %v2830
    %v4886 = vunpack.c.l.b16 %v2831
    %v4887 = vunpack.c.l.b16 %v2832
    %v4888 = vunpack.c.l.b16 %v2833
    %v4889 = vunpack.c.l.b16 %v2834
    %v4890 = vunpack.c.l.b16 %v2835
    %v4891 = vunpack.c.l.b16 %v2836
    %v4892 = vunpack.c.l.b16 %v2837
    %v4893 = vunpack.c.l.b16 %v2838
    %v4894 = vunpack.c.l.b16 %v2839
    %v4895 = vunpack.c.l.b16 %v2840
    %v4896 = vunpack.c.l.b16 %v2841
    %v4897 = vunpack.c.l.b16 %v2842
    %v4898 = vunpack.c.l.b16 %v2843
    %v4899 = vunpack.c.l.b16 %v2844
    %v4900 = vunpack.c.l.b16 %v2845
    %v4901 = vunpack.c.l.b16 %v2846
    %v4902 = vunpack.c.l.b16 %v2847
    %v4903 = vunpack.c.l.b16 %v2848
    %v4904 = vunpack.c.l.b16 %v2849
    %v4905 = vunpack.c.l.b16 %v2850
    %v4906 = vunpack.c.l.b16 %v2851
    %v4907 = vunpack.c.l.b16 %v2852
    %v4908 = vunpack.c.l.b16 %v2853
    %v4909 = vunpack.c.l.b16 %v2854
    %v4910 = vunpack.c.l.b16 %v2855
    %v4911 = vunpack.c.l.b16 %v2856
    %v4912 = vunpack.c.l.b16 %v2857
    %v4913 = vunpack.c.l.b16 %v2858
    %v4914 = vunpack.c.l.b16 %v2859
    %v4915 = vunpack.c.l.b16 %v2860
    %v4916 = vunpack.c.l.b16 %v2861
    %v4917 = vunpack.c.l.b16 %v2862
    %v4918 = vunpack.c.l.b16 %v2863
    %v4919 = vunpack.c.l.b16 %v2864
    %v4920 = vunpack.c.l.b16 %v2865
    %v4921 = vunpack.c.l.b16 %v2866
    %v4922 = vunpack.c.l.b16 %v2867
    %v4923 = vunpack.c.l.b16 %v2868
    %v4924 = vunpack.c.l.b16 %v2869
    %v4925 = vunpack.c.l.b16 %v2870
    %v4926 = vunpack.c.l.b16 %v2871
    %v4927 = vunpack.c.l.b16 %v2872
    %v4928 = vunpack.c.l.b16 %v2873
    %v4929 = vunpack.c.l.b16 %v2874
    %v4930 = vunpack.c.l.b16 %v2875
    %v4931 = vunpack.c.l.b16 %v2876
    %v4932 = vunpack.c.l.b16 %v2877
    %v4933 = vunpack.c.l.b16 %v2878
    %v4934 = vunpack.c.l.b16 %v2879
    %v4935 = vunpack.c.l.b16 %v2880
    %v4936 = vunpack.c.l.b16 %v2881
    %v4937 = vunpack.c.l.b16 %v2882
    %v4938 = vunpack.c.l.b16 %v2883
    %v4939 = vunpack.c.l.b16 %v2884
    %v4940 = vunpack.c.l.b16 %v2885
    %v4941 = vunpack.c.l.b16 %v2886
    %v4942 = vunpack.c.l.b16 %v2887
    %v4943 = vunpack.c.l.b16 %v2888
    %v4944 = vunpack.c.l.b16 %v2889
    %v4945 = vunpack.c.l.b16 %v2890
    %v4946 = vunpack.c.l.b16 %v2891
    %v4947 = vunpack.c.l.b16 %v2892
    %v4948 = vunpack.c.l.b16 %v2893
    %v4949 = vunpack.c.l.b16 %v2894
    %v4950 = vunpack.c.l.b16 %v2895
    %v4951 = vunpack.c.l.b16 %v2896
    %v4952 = vunpack.c.l.b16 %v2897
    %v4953 = vunpack.c.l.b16 %v2898
    %v4954 = vunpack.c.l.b16 %v2899
    %v4955 = vunpack.c.l.b16 %v2900
    %v4956 = vunpack.c.l.b16 %v2901
    %v4957 = vunpack.c.l.b16 %v2902
    %v4958 = vunpack.c.l.b16 %v2903
    %v4959 = vunpack.c.l.b16 %v2904
    %v4960 = vunpack.c.l.b16 %v2905
    %v4961 = vunpack.c.l.b16 %v2906
    %v4962 = vunpack.c.l.b16 %v2907
    %v4963 = vunpack.c.l.b16 %v2908
    %v4964 = vunpack.c.l.b16 %v2909
    %v4965 = vunpack.c.l.b16 %v2910
    %v4966 = vunpack.c.l.b16 %v2911
    %v4967 = vunpack.c.l.b16 %v2912
    %v4968 = vunpack.c.l.b16 %v2913
    %v4969 = vunpack.c.l.b16 %v2914
    %v4970 = vunpack.c.l.b16 %v2915
    %v4971 = vunpack.c.l.b16 %v2916
    %v4972 = vunpack.c.l.b16 %v2917
    %v4973 = vunpack.c.l.b16 %v2918
    %v4974 = vunpack.c.l.b16 %v2919
    %v4975 = vunpack.c.l.b16 %v2920
    %v4976 = vunpack.c.l.b16 %v2921
    %v4977 = vunpack.c.l.b16 %v2922
    %v4978 = vunpack.c.l.b16 %v2923
    %v4979 = vunpack.c.l.b16 %v2924
    %v4980 = vunpack.c.l.b16 %v2925
    %v4981 = vunpack.c.l.b16 %v2926
    %v4982 = vunpack.c.l.b16 %v2927
    %v4983 = vunpack.c.l.b16 %v2928
    %v4984 = vunpack.c.l.b16 %v2929
    %v4985 = vunpack.c.l.b16 %v2930
    %v4986 = vunpack.c.l.b16 %v2931
    %v4987 = vunpack.c.l.b16 %v2932
    %v4988 = vunpack.c.l.b16 %v2933
    %v4989 = vunpack.c.l.b16 %v2934
    %v4990 = vunpack.c.l.b16 %v2935
    %v4991 = vunpack.c.l.b16 %v2936
    %v4992 = vunpack.c.l.b16 %v2937
    %v4993 = vunpack.c.l.b16 %v2938
    %v4994 = vunpack.c.l.b16 %v2939
    %v4995 = vunpack.c.l.b16 %v2940
    %v4996 = vunpack.c.l.b16 %v2941
    %v4997 = vunpack.c.l.b16 %v2942
    %v4998 = vunpack.c.l.b16 %v2943
    %v4999 = vunpack.c.l.b16 %v2944
    %v5000 = vunpack.c.l.b16 %v2945
    %v5001 = vunpack.c.l.b16 %v2946
    %v5002 = vunpack.c.l.b16 %v2947
    %v5003 = vunpack.c.l.b16 %v2948
    %v5004 = vunpack.c.l.b16 %v2949
    %v5005 = vunpack.c.l.b16 %v2950
    %v5006 = vunpack.c.l.b16 %v2951
    %v5007 = vunpack.c.l.b16 %v2952
    %v5008 = vunpack.c.l.b16 %v2953
    %v5009 = vunpack.c.l.b16 %v2954
    %v5010 = vunpack.c.l.b16 %v2955
    %v5011 = vunpack.c.l.b16 %v2956
    %v5012 = vunpack.c.l.b16 %v2957
    %v5013 = vunpack.c.l.b16 %v2958
    %v5014 = vunpack.c.l.b16 %v2959
    %v5015 = vunpack.c.l.b16 %v2960
    %v5016 = vunpack.c.l.b16 %v2961
    %v5017 = vunpack.c.l.b16 %v2962
    %v5018 = vunpack.c.l.b16 %v2963
    %v5019 = vunpack.c.l.b16 %v2964
    %v5020 = vunpack.c.l.b16 %v2965
    %v5021 = vunpack.c.l.b16 %v2966
    %v5022 = vunpack.c.l.b16 %v2967
    %v5023 = vunpack.c.l.b16 %v2968
    %v5024 = vunpack.c.l.b16 %v2969
    %v5025 = vunpack.c.l.b16 %v2970
    %v5026 = vunpack.c.l.b16 %v2971
    %v5027 = vunpack.c.l.b16 %v2972
    %v5028 = vunpack.c.l.b16 %v2973
    %v5029 = vunpack.c.l.b16 %v2974
    %v5030 = vunpack.c.l.b16 %v2975
    %v5031 = vunpack.c.l.b16 %v2976
    %v5032 = vunpack.c.l.b16 %v2977
    %v5033 = vunpack.c.l.b16 %v2978
    %v5034 = vunpack.c.l.b16 %v2979
    %v5035 = vunpack.c.l.b16 %v2980
    %v5036 = vunpack.c.l.b16 %v2981
    %v5037 = vunpack.c.l.b16 %v2982
    %v5038 = vunpack.c.l.b16 %v2983
    %v5039 = vunpack.c.l.b16 %v2984
    %v5040 = vunpack.c.l.b16 %v2985
    %v5041 = vunpack.c.l.b16 %v2986
    %v5042 = vunpack.c.l.b16 %v2987
    %v5043 = vunpack.c.l.b16 %v2988
    %v5044 = vunpack.c.l.b16 %v2989
    %v5045 = vunpack.c.l.b16 %v2990
    %v5046 = vunpack.c.l.b16 %v2991
    %v5047 = vunpack.c.l.b16 %v2992
    %v5048 = vunpack.c.l.b16 %v2993
    %v5049 = vunpack.c.l.b16 %v2994
    %v5050 = vunpack.c.l.b16 %v2995
    %v5051 = vunpack.c.l.b16 %v2996
    %v5052 = vunpack.c.l.b16 %v2997
    %v5053 = vunpack.c.l.b16 %v2998
    %v5054 = vunpack.c.l.b16 %v2999
    %v5055 = vunpack.c.l.b16 %v3000
    %v5056 = vunpack.c.l.b16 %v3001
    %v5057 = vunpack.c.l.b16 %v3002
    %v5058 = vunpack.c.l.b16 %v3003
    %v5059 = vunpack.c.l.b16 %v3004
    %v5060 = vunpack.c.l.b16 %v3005
    %v5061 = vunpack.c.l.b16 %v3006
    %v5062 = vunpack.c.l.b16 %v3007
    %v5063 = vunpack.c.l.b16 %v3008
    %v5064 = vunpack.c.l.b16 %v3009
    %v5065 = vunpack.c.l.b16 %v3010
    %v5066 = vunpack.c.l.b16 %v3011
    %v5067 = vunpack.c.l.b16 %v3012
    %v5068 = vunpack.c.l.b16 %v3013
    %v5069 = vunpack.c.l.b16 %v3014
    %v5070 = vunpack.c.l.b16 %v3015
    %v5071 = vunpack.c.l.b16 %v3016
    %v5072 = vunpack.c.l.b16 %v3017
    %v5073 = vunpack.c.l.b16 %v3018
    %v5074 = vunpack.c.l.b16 %v3019
    %v5075 = vunpack.c.l.b16 %v3020
    %v5076 = vunpack.c.l.b16 %v3021
    %v5077 = vunpack.c.l.b16 %v3022
    %v5078 = vunpack.c.l.b16 %v3023
    %v5079 = vunpack.c.l.b16 %v3024
    %v5080 = vunpack.c.l.b16 %v3025
    %v5081 = vunpack.c.l.b16 %v3026
    %v5082 = vunpack.c.l.b16 %v3027
    %v5083 = vunpack.c.l.b16 %v3028
    %v5084 = vunpack.c.l.b16 %v3029
    %v5085 = vunpack.c.l.b16 %v3030
    %v5086 = vunpack.c.l.b16 %v3031
    %v5087 = vunpack.c.l.b16 %v3032
    %v5088 = vunpack.c.l.b16 %v3033
    %v5089 = vunpack.c.l.b16 %v3034
    %v5090 = vunpack.c.l.b16 %v3035
    %v5091 = vpack.c.b16 %v4068, %v4067
    %v5092 = vpack.c.b16 %v4070, %v4069
    %v5093 = vpack.c.b16 %v4072, %v4071
    %v5094 = vpack.c.b16 %v4074, %v4073
    %v5095 = vpack.c.b16 %v4076, %v4075
    %v5096 = vpack.c.b16 %v4078, %v4077
    %v5097 = vpack.c.b16 %v4080, %v4079
    %v5098 = vpack.c.b16 %v4082, %v4081
    %v5099 = vpack.c.b16 %v4084, %v4083
    %v5100 = vpack.c.b16 %v4086, %v4085
    %v5101 = vpack.c.b16 %v4088, %v4087
    %v5102 = vpack.c.b16 %v4090, %v4089
    %v5103 = vpack.c.b16 %v4092, %v4091
    %v5104 = vpack.c.b16 %v4094, %v4093
    %v5105 = vpack.c.b16 %v4096, %v4095
    %v5106 = vpack.c.b16 %v4098, %v4097
    %v5107 = vpack.c.b16 %v4100, %v4099
    %v5108 = vpack.c.b16 %v4102, %v4101
    %v5109 = vpack.c.b16 %v4104, %v4103
    %v5110 = vpack.c.b16 %v4106, %v4105
    %v5111 = vpack.c.b16 %v4108, %v4107
    %v5112 = vpack.c.b16 %v4110, %v4109
    %v5113 = vpack.c.b16 %v4112, %v4111
    %v5114 = vpack.c.b16 %v4114, %v4113
    %v5115 = vpack.c.b16 %v4116, %v4115
    %v5116 = vpack.c.b16 %v4118, %v4117
    %v5117 = vpack.c.b16 %v4120, %v4119
    %v5118 = vpack.c.b16 %v4122, %v4121
    %v5119 = vpack.c.b16 %v4124, %v4123
    %v5120 = vpack.c.b16 %v4126, %v4125
    %v5121 = vpack.c.b16 %v4128, %v4127
    %v5122 = vpack.c.b16 %v4130, %v4129
    %v5123 = vpack.c.b16 %v4132, %v4131
    %v5124 = vpack.c.b16 %v4134, %v4133
    %v5125 = vpack.c.b16 %v4136, %v4135
    %v5126 = vpack.c.b16 %v4138, %v4137
    %v5127 = vpack.c.b16 %v4140, %v4139
    %v5128 = vpack.c.b16 %v4142, %v4141
    %v5129 = vpack.c.b16 %v4144, %v4143
    %v5130 = vpack.c.b16 %v4146, %v4145
    %v5131 = vpack.c.b16 %v4148, %v4147
    %v5132 = vpack.c.b16 %v4150, %v4149
    %v5133 = vpack.c.b16 %v4152, %v4151
    %v5134 = vpack.c.b16 %v4154, %v4153
    %v5135 = vpack.c.b16 %v4156, %v4155
    %v5136 = vpack.c.b16 %v4158, %v4157
    %v5137 = vpack.c.b16 %v4160, %v4159
    %v5138 = vpack.c.b16 %v4162, %v4161
    %v5139 = vpack.c.b16 %v4164, %v4163
    %v5140 = vpack.c.b16 %v4166, %v4165
    %v5141 = vpack.c.b16 %v4168, %v4167
    %v5142 = vpack.c.b16 %v4170, %v4169
    %v5143 = vpack.c.b16 %v4172, %v4171
    %v5144 = vpack.c.b16 %v4174, %v4173
    %v5145 = vpack.c.b16 %v4176, %v4175
    %v5146 = vpack.c.b16 %v4178, %v4177
    %v5147 = vpack.c.b16 %v4180, %v4179
    %v5148 = vpack.c.b16 %v4182, %v4181
    %v5149 = vpack.c.b16 %v4184, %v4183
    %v5150 = vpack.c.b16 %v4186, %v4185
    %v5151 = vpack.c.b16 %v4188, %v4187
    %v5152 = vpack.c.b16 %v4190, %v4189
    %v5153 = vpack.c.b16 %v4192, %v4191
    %v5154 = vpack.c.b16 %v4194, %v4193
    %v5155 = vpack.c.b16 %v4196, %v4195
    %v5156 = vpack.c.b16 %v4198, %v4197
    %v5157 = vpack.c.b16 %v4200, %v4199
    %v5158 = vpack.c.b16 %v4202, %v4201
    %v5159 = vpack.c.b16 %v4204, %v4203
    %v5160 = vpack.c.b16 %v4206, %v4205
    %v5161 = vpack.c.b16 %v4208, %v4207
    %v5162 = vpack.c.b16 %v4210, %v4209
    %v5163 = vpack.c.b16 %v4212, %v4211
    %v5164 = vpack.c.b16 %v4214, %v4213
    %v5165 = vpack.c.b16 %v4216, %v4215
    %v5166 = vpack.c.b16 %v4218, %v4217
    %v5167 = vpack.c.b16 %v4220, %v4219
    %v5168 = vpack.c.b16 %v4222, %v4221
    %v5169 = vpack.c.b16 %v4224, %v4223
    %v5170 = vpack.c.b16 %v4226, %v4225
    %v5171 = vpack.c.b16 %v4228, %v4227
    %v5172 = vpack.c.b16 %v4230, %v4229
    %v5173 = vpack.c.b16 %v4232, %v4231
    %v5174 = vpack.c.b16 %v4234, %v4233
    %v5175 = vpack.c.b16 %v4236, %v4235
    %v5176 = vpack.c.b16 %v4238, %v4237
    %v5177 = vpack.c.b16 %v4240, %v4239
    %v5178 = vpack.c.b16 %v4242, %v4241
    %v5179 = vpack.c.b16 %v4244, %v4243
    %v5180 = vpack.c.b16 %v4246, %v4245
    %v5181 = vpack.c.b16 %v4248, %v4247
    %v5182 = vpack.c.b16 %v4250, %v4249
    %v5183 = vpack.c.b16 %v4252, %v4251
    %v5184 = vpack.c.b16 %v4254, %v4253
    %v5185 = vpack.c.b16 %v4256, %v4255
    %v5186 = vpack.c.b16 %v4258, %v4257
    %v5187 = vpack.c.b16 %v4260, %v4259
    %v5188 = vpack.c.b16 %v4262, %v4261
    %v5189 = vpack.c.b16 %v4264, %v4263
    %v5190 = vpack.c.b16 %v4266, %v4265
    %v5191 = vpack.c.b16 %v4268, %v4267
    %v5192 = vpack.c.b16 %v4270, %v4269
    %v5193 = vpack.c.b16 %v4272, %v4271
    %v5194 = vpack.c.b16 %v4274, %v4273
    %v5195 = vpack.c.b16 %v4276, %v4275
    %v5196 = vpack.c.b16 %v4278, %v4277
    %v5197 = vpack.c.b16 %v4280, %v4279
    %v5198 = vpack.c.b16 %v4282, %v4281
    %v5199 = vpack.c.b16 %v4284, %v4283
    %v5200 = vpack.c.b16 %v4286, %v4285
    %v5201 = vpack.c.b16 %v4288, %v4287
    %v5202 = vpack.c.b16 %v4290, %v4289
    %v5203 = vpack.c.b16 %v4292, %v4291
    %v5204 = vpack.c.b16 %v4294, %v4293
    %v5205 = vpack.c.b16 %v4296, %v4295
    %v5206 = vpack.c.b16 %v4298, %v4297
    %v5207 = vpack.c.b16 %v4300, %v4299
    %v5208 = vpack.c.b16 %v4302, %v4301
    %v5209 = vpack.c.b16 %v4304, %v4303
    %v5210 = vpack.c.b16 %v4306, %v4305
    %v5211 = vpack.c.b16 %v4308, %v4307
    %v5212 = vpack.c.b16 %v4310, %v4309
    %v5213 = vpack.c.b16 %v4312, %v4311
    %v5214 = vpack.c.b16 %v4314, %v4313
    %v5215 = vpack.c.b16 %v4316, %v4315
    %v5216 = vpack.c.b16 %v4318, %v4317
    %v5217 = vpack.c.b16 %v4320, %v4319
    %v5218 = vpack.c.b16 %v4322, %v4321
    %v5219 = vpack.c.b16 %v4324, %v4323
    %v5220 = vpack.c.b16 %v4326, %v4325
    %v5221 = vpack.c.b16 %v4328, %v4327
    %v5222 = vpack.c.b16 %v4330, %v4329
    %v5223 = vpack.c.b16 %v4332, %v4331
    %v5224 = vpack.c.b16 %v4334, %v4333
    %v5225 = vpack.c.b16 %v4336, %v4335
    %v5226 = vpack.c.b16 %v4338, %v4337
    %v5227 = vpack.c.b16 %v4340, %v4339
    %v5228 = vpack.c.b16 %v4342, %v4341
    %v5229 = vpack.c.b16 %v4344, %v4343
    %v5230 = vpack.c.b16 %v4346, %v4345
    %v5231 = vpack.c.b16 %v4348, %v4347
    %v5232 = vpack.c.b16 %v4350, %v4349
    %v5233 = vpack.c.b16 %v4352, %v4351
    %v5234 = vpack.c.b16 %v4354, %v4353
    %v5235 = vpack.c.b16 %v4356, %v4355
    %v5236 = vpack.c.b16 %v4358, %v4357
    %v5237 = vpack.c.b16 %v4360, %v4359
    %v5238 = vpack.c.b16 %v4362, %v4361
    %v5239 = vpack.c.b16 %v4364, %v4363
    %v5240 = vpack.c.b16 %v4366, %v4365
    %v5241 = vpack.c.b16 %v4368, %v4367
    %v5242 = vpack.c.b16 %v4370, %v4369
    %v5243 = vpack.c.b16 %v4372, %v4371
    %v5244 = vpack.c.b16 %v4374, %v4373
    %v5245 = vpack.c.b16 %v4376, %v4375
    %v5246 = vpack.c.b16 %v4378, %v4377
    %v5247 = vpack.c.b16 %v4380, %v4379
    %v5248 = vpack.c.b16 %v4382, %v4381
    %v5249 = vpack.c.b16 %v4384, %v4383
    %v5250 = vpack.c.b16 %v4386, %v4385
    %v5251 = vpack.c.b16 %v4388, %v4387
    %v5252 = vpack.c.b16 %v4390, %v4389
    %v5253 = vpack.c.b16 %v4392, %v4391
    %v5254 = vpack.c.b16 %v4394, %v4393
    %v5255 = vpack.c.b16 %v4396, %v4395
    %v5256 = vpack.c.b16 %v4398, %v4397
    %v5257 = vpack.c.b16 %v4400, %v4399
    %v5258 = vpack.c.b16 %v4402, %v4401
    %v5259 = vpack.c.b16 %v4404, %v4403
    %v5260 = vpack.c.b16 %v4406, %v4405
    %v5261 = vpack.c.b16 %v4408, %v4407
    %v5262 = vpack.c.b16 %v4410, %v4409
    %v5263 = vpack.c.b16 %v4412, %v4411
    %v5264 = vpack.c.b16 %v4414, %v4413
    %v5265 = vpack.c.b16 %v4416, %v4415
    %v5266 = vpack.c.b16 %v4418, %v4417
    %v5267 = vpack.c.b16 %v4420, %v4419
    %v5268 = vpack.c.b16 %v4422, %v4421
    %v5269 = vpack.c.b16 %v4424, %v4423
    %v5270 = vpack.c.b16 %v4426, %v4425
    %v5271 = vpack.c.b16 %v4428, %v4427
    %v5272 = vpack.c.b16 %v4430, %v4429
    %v5273 = vpack.c.b16 %v4432, %v4431
    %v5274 = vpack.c.b16 %v4434, %v4433
    %v5275 = vpack.c.b16 %v4436, %v4435
    %v5276 = vpack.c.b16 %v4438, %v4437
    %v5277 = vpack.c.b16 %v4440, %v4439
    %v5278 = vpack.c.b16 %v4442, %v4441
    %v5279 = vpack.c.b16 %v4444, %v4443
    %v5280 = vpack.c.b16 %v4446, %v4445
    %v5281 = vpack.c.b16 %v4448, %v4447
    %v5282 = vpack.c.b16 %v4450, %v4449
    %v5283 = vpack.c.b16 %v4452, %v4451
    %v5284 = vpack.c.b16 %v4454, %v4453
    %v5285 = vpack.c.b16 %v4456, %v4455
    %v5286 = vpack.c.b16 %v4458, %v4457
    %v5287 = vpack.c.b16 %v4460, %v4459
    %v5288 = vpack.c.b16 %v4462, %v4461
    %v5289 = vpack.c.b16 %v4464, %v4463
    %v5290 = vpack.c.b16 %v4466, %v4465
    %v5291 = vpack.c.b16 %v4468, %v4467
    %v5292 = vpack.c.b16 %v4470, %v4469
    %v5293 = vpack.c.b16 %v4472, %v4471
    %v5294 = vpack.c.b16 %v4474, %v4473
    %v5295 = vpack.c.b16 %v4476, %v4475
    %v5296 = vpack.c.b16 %v4478, %v4477
    %v5297 = vpack.c.b16 %v4480, %v4479
    %v5298 = vpack.c.b16 %v4482, %v4481
    %v5299 = vpack.c.b16 %v4484, %v4483
    %v5300 = vpack.c.b16 %v4486, %v4485
    %v5301 = vpack.c.b16 %v4488, %v4487
    %v5302 = vpack.c.b16 %v4490, %v4489
    %v5303 = vpack.c.b16 %v4492, %v4491
    %v5304 = vpack.c.b16 %v4494, %v4493
    %v5305 = vpack.c.b16 %v4496, %v4495
    %v5306 = vpack.c.b16 %v4498, %v4497
    %v5307 = vpack.c.b16 %v4500, %v4499
    %v5308 = vpack.c.b16 %v4502, %v4501
    %v5309 = vpack.c.b16 %v4504, %v4503
    %v5310 = vpack.c.b16 %v4506, %v4505
    %v5311 = vpack.c.b16 %v4508, %v4507
    %v5312 = vpack.c.b16 %v4510, %v4509
    %v5313 = vpack.c.b16 %v4512, %v4511
    %v5314 = vpack.c.b16 %v4514, %v4513
    %v5315 = vpack.c.b16 %v4516, %v4515
    %v5316 = vpack.c.b16 %v4518, %v4517
    %v5317 = vpack.c.b16 %v4520, %v4519
    %v5318 = vpack.c.b16 %v4522, %v4521
    %v5319 = vpack.c.b16 %v4524, %v4523
    %v5320 = vpack.c.b16 %v4526, %v4525
    %v5321 = vpack.c.b16 %v4528, %v4527
    %v5322 = vpack.c.b16 %v4530, %v4529
    %v5323 = vpack.c.b16 %v4532, %v4531
    %v5324 = vpack.c.b16 %v4534, %v4533
    %v5325 = vpack.c.b16 %v4536, %v4535
    %v5326 = vpack.c.b16 %v4538, %v4537
    %v5327 = vpack.c.b16 %v4540, %v4539
    %v5328 = vpack.c.b16 %v4542, %v4541
    %v5329 = vpack.c.b16 %v4544, %v4543
    %v5330 = vpack.c.b16 %v4546, %v4545
    %v5331 = vpack.c.b16 %v4548, %v4547
    %v5332 = vpack.c.b16 %v4550, %v4549
    %v5333 = vpack.c.b16 %v4552, %v4551
    %v5334 = vpack.c.b16 %v4554, %v4553
    %v5335 = vpack.c.b16 %v4556, %v4555
    %v5336 = vpack.c.b16 %v4558, %v4557
    %v5337 = vpack.c.b16 %v4560, %v4559
    %v5338 = vpack.c.b16 %v4562, %v4561
    %v5339 = vpack.c.b16 %v4564, %v4563
    %v5340 = vpack.c.b16 %v4566, %v4565
    %v5341 = vpack.c.b16 %v4568, %v4567
    %v5342 = vpack.c.b16 %v4570, %v4569
    %v5343 = vpack.c.b16 %v4572, %v4571
    %v5344 = vpack.c.b16 %v4574, %v4573
    %v5345 = vpack.c.b16 %v4576, %v4575
    %v5346 = vpack.c.b16 %v4578, %v4577
    %v5347 = vpack.c.b16 %v4580, %v4579
    %v5348 = vpack.c.b16 %v4582, %v4581
    %v5349 = vpack.c.b16 %v4584, %v4583
    %v5350 = vpack.c.b16 %v4586, %v4585
    %v5351 = vpack.c.b16 %v4588, %v4587
    %v5352 = vpack.c.b16 %v4590, %v4589
    %v5353 = vpack.c.b16 %v4592, %v4591
    %v5354 = vpack.c.b16 %v4594, %v4593
    %v5355 = vpack.c.b16 %v4596, %v4595
    %v5356 = vpack.c.b16 %v4598, %v4597
    %v5357 = vpack.c.b16 %v4600, %v4599
    %v5358 = vpack.c.b16 %v4602, %v4601
    %v5359 = vpack.c.b16 %v4604, %v4603
    %v5360 = vpack.c.b16 %v4606, %v4605
    %v5361 = vpack.c.b16 %v4608, %v4607
    %v5362 = vpack.c.b16 %v4610, %v4609
    %v5363 = vpack.c.b16 %v4612, %v4611
    %v5364 = vpack.c.b16 %v4614, %v4613
    %v5365 = vpack.c.b16 %v4616, %v4615
    %v5366 = vpack.c.b16 %v4618, %v4617
    %v5367 = vpack.c.b16 %v4620, %v4619
    %v5368 = vpack.c.b16 %v4622, %v4621
    %v5369 = vpack.c.b16 %v4624, %v4623
    %v5370 = vpack.c.b16 %v4626, %v4625
    %v5371 = vpack.c.b16 %v4628, %v4627
    %v5372 = vpack.c.b16 %v4630, %v4629
    %v5373 = vpack.c.b16 %v4632, %v4631
    %v5374 = vpack.c.b16 %v4634, %v4633
    %v5375 = vpack.c.b16 %v4636, %v4635
    %v5376 = vpack.c.b16 %v4638, %v4637
    %v5377 = vpack.c.b16 %v4640, %v4639
    %v5378 = vpack.c.b16 %v4642, %v4641
    %v5379 = vpack.c.b16 %v4644, %v4643
    %v5380 = vpack.c.b16 %v4646, %v4645
    %v5381 = vpack.c.b16 %v4648, %v4647
    %v5382 = vpack.c.b16 %v4650, %v4649
    %v5383 = vpack.c.b16 %v4652, %v4651
    %v5384 = vpack.c.b16 %v4654, %v4653
    %v5385 = vpack.c.b16 %v4656, %v4655
    %v5386 = vpack.c.b16 %v4658, %v4657
    %v5387 = vpack.c.b16 %v4660, %v4659
    %v5388 = vpack.c.b16 %v4662, %v4661
    %v5389 = vpack.c.b16 %v4664, %v4663
    %v5390 = vpack.c.b16 %v4666, %v4665
    %v5391 = vpack.c.b16 %v4668, %v4667
    %v5392 = vpack.c.b16 %v4670, %v4669
    %v5393 = vpack.c.b16 %v4672, %v4671
    %v5394 = vpack.c.b16 %v4674, %v4673
    %v5395 = vpack.c.b16 %v4676, %v4675
    %v5396 = vpack.c.b16 %v4678, %v4677
    %v5397 = vpack.c.b16 %v4680, %v4679
    %v5398 = vpack.c.b16 %v4682, %v4681
    %v5399 = vpack.c.b16 %v4684, %v4683
    %v5400 = vpack.c.b16 %v4686, %v4685
    %v5401 = vpack.c.b16 %v4688, %v4687
    %v5402 = vpack.c.b16 %v4690, %v4689
    %v5403 = vpack.c.b16 %v4692, %v4691
    %v5404 = vpack.c.b16 %v4694, %v4693
    %v5405 = vpack.c.b16 %v4696, %v4695
    %v5406 = vpack.c.b16 %v4698, %v4697
    %v5407 = vpack.c.b16 %v4700, %v4699
    %v5408 = vpack.c.b16 %v4702, %v4701
    %v5409 = vpack.c.b16 %v4704, %v4703
    %v5410 = vpack.c.b16 %v4706, %v4705
    %v5411 = vpack.c.b16 %v4708, %v4707
    %v5412 = vpack.c.b16 %v4710, %v4709
    %v5413 = vpack.c.b16 %v4712, %v4711
    %v5414 = vpack.c.b16 %v4714, %v4713
    %v5415 = vpack.c.b16 %v4716, %v4715
    %v5416 = vpack.c.b16 %v4718, %v4717
    %v5417 = vpack.c.b16 %v4720, %v4719
    %v5418 = vpack.c.b16 %v4722, %v4721
    %v5419 = vpack.c.b16 %v4724, %v4723
    %v5420 = vpack.c.b16 %v4726, %v4725
    %v5421 = vpack.c.b16 %v4728, %v4727
    %v5422 = vpack.c.b16 %v4730, %v4729
    %v5423 = vpack.c.b16 %v4732, %v4731
    %v5424 = vpack.c.b16 %v4734, %v4733
    %v5425 = vpack.c.b16 %v4736, %v4735
    %v5426 = vpack.c.b16 %v4738, %v4737
    %v5427 = vpack.c.b16 %v4740, %v4739
    %v5428 = vpack.c.b16 %v4742, %v4741
    %v5429 = vpack.c.b16 %v4744, %v4743
    %v5430 = vpack.c.b16 %v4746, %v4745
    %v5431 = vpack.c.b16 %v4748, %v4747
    %v5432 = vpack.c.b16 %v4750, %v4749
    %v5433 = vpack.c.b16 %v4752, %v4751
    %v5434 = vpack.c.b16 %v4754, %v4753
    %v5435 = vpack.c.b16 %v4756, %v4755
    %v5436 = vpack.c.b16 %v4758, %v4757
    %v5437 = vpack.c.b16 %v4760, %v4759
    %v5438 = vpack.c.b16 %v4762, %v4761
    %v5439 = vpack.c.b16 %v4764, %v4763
    %v5440 = vpack.c.b16 %v4766, %v4765
    %v5441 = vpack.c.b16 %v4768, %v4767
    %v5442 = vpack.c.b16 %v4770, %v4769
    %v5443 = vpack.c.b16 %v4772, %v4771
    %v5444 = vpack.c.b16 %v4774, %v4773
    %v5445 = vpack.c.b16 %v4776, %v4775
    %v5446 = vpack.c.b16 %v4778, %v4777
    %v5447 = vpack.c.b16 %v4780, %v4779
    %v5448 = vpack.c.b16 %v4782, %v4781
    %v5449 = vpack.c.b16 %v4784, %v4783
    %v5450 = vpack.c.b16 %v4786, %v4785
    %v5451 = vpack.c.b16 %v4788, %v4787
    %v5452 = vpack.c.b16 %v4790, %v4789
    %v5453 = vpack.c.b16 %v4792, %v4791
    %v5454 = vpack.c.b16 %v4794, %v4793
    %v5455 = vpack.c.b16 %v4796, %v4795
    %v5456 = vpack.c.b16 %v4798, %v4797
    %v5457 = vpack.c.b16 %v4800, %v4799
    %v5458 = vpack.c.b16 %v4802, %v4801
    %v5459 = vpack.c.b16 %v4804, %v4803
    %v5460 = vpack.c.b16 %v4806, %v4805
    %v5461 = vpack.c.b16 %v4808, %v4807
    %v5462 = vpack.c.b16 %v4810, %v4809
    %v5463 = vpack.c.b16 %v4812, %v4811
    %v5464 = vpack.c.b16 %v4814, %v4813
    %v5465 = vpack.c.b16 %v4816, %v4815
    %v5466 = vpack.c.b16 %v4818, %v4817
    %v5467 = vpack.c.b16 %v4820, %v4819
    %v5468 = vpack.c.b16 %v4822, %v4821
    %v5469 = vpack.c.b16 %v4824, %v4823
    %v5470 = vpack.c.b16 %v4826, %v4825
    %v5471 = vpack.c.b16 %v4828, %v4827
    %v5472 = vpack.c.b16 %v4830, %v4829
    %v5473 = vpack.c.b16 %v4832, %v4831
    %v5474 = vpack.c.b16 %v4834, %v4833
    %v5475 = vpack.c.b16 %v4836, %v4835
    %v5476 = vpack.c.b16 %v4838, %v4837
    %v5477 = vpack.c.b16 %v4840, %v4839
    %v5478 = vpack.c.b16 %v4842, %v4841
    %v5479 = vpack.c.b16 %v4844, %v4843
    %v5480 = vpack.c.b16 %v4846, %v4845
    %v5481 = vpack.c.b16 %v4848, %v4847
    %v5482 = vpack.c.b16 %v4850, %v4849
    %v5483 = vpack.c.b16 %v4852, %v4851
    %v5484 = vpack.c.b16 %v4854, %v4853
    %v5485 = vpack.c.b16 %v4856, %v4855
    %v5486 = vpack.c.b16 %v4858, %v4857
    %v5487 = vpack.c.b16 %v4860, %v4859
    %v5488 = vpack.c.b16 %v4862, %v4861
    %v5489 = vpack.c.b16 %v4864, %v4863
    %v5490 = vpack.c.b16 %v4866, %v4865
    %v5491 = vpack.c.b16 %v4868, %v4867
    %v5492 = vpack.c.b16 %v4870, %v4869
    %v5493 = vpack.c.b16 %v4872, %v4871
    %v5494 = vpack.c.b16 %v4874, %v4873
    %v5495 = vpack.c.b16 %v4876, %v4875
    %v5496 = vpack.c.b16 %v4878, %v4877
    %v5497 = vpack.c.b16 %v4880, %v4879
    %v5498 = vpack.c.b16 %v4882, %v4881
    %v5499 = vpack.c.b16 %v4884, %v4883
    %v5500 = vpack.c.b16 %v4886, %v4885
    %v5501 = vpack.c.b16 %v4888, %v4887
    %v5502 = vpack.c.b16 %v4890, %v4889
    %v5503 = vpack.c.b16 %v4892, %v4891
    %v5504 = vpack.c.b16 %v4894, %v4893
    %v5505 = vpack.c.b16 %v4896, %v4895
    %v5506 = vpack.c.b16 %v4898, %v4897
    %v5507 = vpack.c.b16 %v4900, %v4899
    %v5508 = vpack.c.b16 %v4902, %v4901
    %v5509 = vpack.c.b16 %v4904, %v4903
    %v5510 = vpack.c.b16 %v4906, %v4905
    %v5511 = vpack.c.b16 %v4908, %v4907
    %v5512 = vpack.c.b16 %v4910, %v4909
    %v5513 = vpack.c.b16 %v4912, %v4911
    %v5514 = vpack.c.b16 %v4914, %v4913
    %v5515 = vpack.c.b16 %v4916, %v4915
    %v5516 = vpack.c.b16 %v4918, %v4917
    %v5517 = vpack.c.b16 %v4920, %v4919
    %v5518 = vpack.c.b16 %v4922, %v4921
    %v5519 = vpack.c.b16 %v4924, %v4923
    %v5520 = vpack.c.b16 %v4926, %v4925
    %v5521 = vpack.c.b16 %v4928, %v4927
    %v5522 = vpack.c.b16 %v4930, %v4929
    %v5523 = vpack.c.b16 %v4932, %v4931
    %v5524 = vpack.c.b16 %v4934, %v4933
    %v5525 = vpack.c.b16 %v4936, %v4935
    %v5526 = vpack.c.b16 %v4938, %v4937
    %v5527 = vpack.c.b16 %v4940, %v4939
    %v5528 = vpack.c.b16 %v4942, %v4941
    %v5529 = vpack.c.b16 %v4944, %v4943
    %v5530 = vpack.c.b16 %v4946, %v4945
    %v5531 = vpack.c.b16 %v4948, %v4947
    %v5532 = vpack.c.b16 %v4950, %v4949
    %v5533 = vpack.c.b16 %v4952, %v4951
    %v5534 = vpack.c.b16 %v4954, %v4953
    %v5535 = vpack.c.b16 %v4956, %v4955
    %v5536 = vpack.c.b16 %v4958, %v4957
    %v5537 = vpack.c.b16 %v4960, %v4959
    %v5538 = vpack.c.b16 %v4962, %v4961
    %v5539 = vpack.c.b16 %v4964, %v4963
    %v5540 = vpack.c.b16 %v4966, %v4965
    %v5541 = vpack.c.b16 %v4968, %v4967
    %v5542 = vpack.c.b16 %v4970, %v4969
    %v5543 = vpack.c.b16 %v4972, %v4971
    %v5544 = vpack.c.b16 %v4974, %v4973
    %v5545 = vpack.c.b16 %v4976, %v4975
    %v5546 = vpack.c.b16 %v4978, %v4977
    %v5547 = vpack.c.b16 %v4980, %v4979
    %v5548 = vpack.c.b16 %v4982, %v4981
    %v5549 = vpack.c.b16 %v4984, %v4983
    %v5550 = vpack.c.b16 %v4986, %v4985
    %v5551 = vpack.c.b16 %v4988, %v4987
    %v5552 = vpack.c.b16 %v4990, %v4989
    %v5553 = vpack.c.b16 %v4992, %v4991
    %v5554 = vpack.c.b16 %v4994, %v4993
    %v5555 = vpack.c.b16 %v4996, %v4995
    %v5556 = vpack.c.b16 %v4998, %v4997
    %v5557 = vpack.c.b16 %v5000, %v4999
    %v5558 = vpack.c.b16 %v5002, %v5001
    %v5559 = vpack.c.b16 %v5004, %v5003
    %v5560 = vpack.c.b16 %v5006, %v5005
    %v5561 = vpack.c.b16 %v5008, %v5007
    %v5562 = vpack.c.b16 %v5010, %v5009
    %v5563 = vpack.c.b16 %v5012, %v5011
    %v5564 = vpack.c.b16 %v5014, %v5013
    %v5565 = vpack.c.b16 %v5016, %v5015
    %v5566 = vpack.c.b16 %v5018, %v5017
    %v5567 = vpack.c.b16 %v5020, %v5019
    %v5568 = vpack.c.b16 %v5022, %v5021
    %v5569 = vpack.c.b16 %v5024, %v5023
    %v5570 = vpack.c.b16 %v5026, %v5025
    %v5571 = vpack.c.b16 %v5028, %v5027
    %v5572 = vpack.c.b16 %v5030, %v5029
    %v5573 = vpack.c.b16 %v5032, %v5031
    %v5574 = vpack.c.b16 %v5034, %v5033
    %v5575 = vpack.c.b16 %v5036, %v5035
    %v5576 = vpack.c.b16 %v5038, %v5037
    %v5577 = vpack.c.b16 %v5040, %v5039
    %v5578 = vpack.c.b16 %v5042, %v5041
    %v5579 = vpack.c.b16 %v5044, %v5043
    %v5580 = vpack.c.b16 %v5046, %v5045
    %v5581 = vpack.c.b16 %v5048, %v5047
    %v5582 = vpack.c.b16 %v5050, %v5049
    %v5583 = vpack.c.b16 %v5052, %v5051
    %v5584 = vpack.c.b16 %v5054, %v5053
    %v5585 = vpack.c.b16 %v5056, %v5055
    %v5586 = vpack.c.b16 %v5058, %v5057
    %v5587 = vpack.c.b16 %v5060, %v5059
    %v5588 = vpack.c.b16 %v5062, %v5061
    %v5589 = vpack.c.b16 %v5064, %v5063
    %v5590 = vpack.c.b16 %v5066, %v5065
    %v5591 = vpack.c.b16 %v5068, %v5067
    %v5592 = vpack.c.b16 %v5070, %v5069
    %v5593 = vpack.c.b16 %v5072, %v5071
    %v5594 = vpack.c.b16 %v5074, %v5073
    %v5595 = vpack.c.b16 %v5076, %v5075
    %v5596 = vpack.c.b16 %v5078, %v5077
    %v5597 = vpack.c.b16 %v5080, %v5079
    %v5598 = vpack.c.b16 %v5082, %v5081
    %v5599 = vpack.c.b16 %v5084, %v5083
    %v5600 = vpack.c.b16 %v5086, %v5085
    %v5601 = vpack.c.b16 %v5088, %v5087
    %v5602 = vpack.c.b16 %v5090, %v5089
    %6115 = vmatprep.subr.bf16.mxu0 0
    %6116 = vmatpush1.bf16.msra.mxu0 %v5091
    %6117 = vmatprep.subr.bf16.mxu0 0
    %6118 = vmatpush1.bf16.msra.mxu0 %v5092
    %6119 = vmatprep.subr.bf16.mxu0 0
    %6120 = vmatpush1.bf16.msra.mxu0 %v5093
    %6121 = vmatprep.subr.bf16.mxu0 0
    %6122 = vmatpush1.bf16.msra.mxu0 %v5094
    %6123 = vmatprep.subr.bf16.mxu0 0
    %6124 = vmatpush1.bf16.msra.mxu0 %v5095
    %6125 = vmatprep.subr.bf16.mxu0 0
    %6126 = vmatpush1.bf16.msra.mxu0 %v5096
    %6127 = vmatprep.subr.bf16.mxu0 0
    %6128 = vmatpush1.bf16.msra.mxu0 %v5097
    %6129 = vmatprep.subr.bf16.mxu0 0
    %6130 = vmatpush1.bf16.msra.mxu0 %v5098
    %6131 = vmatprep.subr.bf16.mxu0 0
    %6132 = vmatpush1.bf16.msra.mxu0 %v5099
    %6133 = vmatprep.subr.bf16.mxu0 0
    %6134 = vmatpush1.bf16.msra.mxu0 %v5100
    %6135 = vmatprep.subr.bf16.mxu0 0
    %6136 = vmatpush1.bf16.msra.mxu0 %v5101
    %6137 = vmatprep.subr.bf16.mxu0 0
    %6138 = vmatpush1.bf16.msra.mxu0 %v5102
    %6139 = vmatprep.subr.bf16.mxu0 0
    %6140 = vmatpush1.bf16.msra.mxu0 %v5103
    %6141 = vmatprep.subr.bf16.mxu0 0
    %6142 = vmatpush1.bf16.msra.mxu0 %v5104
    %6143 = vmatprep.subr.bf16.mxu0 0
    %6144 = vmatpush1.bf16.msra.mxu0 %v5105
    %6145 = vmatprep.subr.bf16.mxu0 0
    %6146 = vmatpush1.bf16.msra.mxu0 %v5106
    %6147 = vmatprep.mubr.bf16.mxu0 %v1949
    %6148 = vmatmul.mubr.bf16.gmra.mrb[0].mxu0 %v1948
    %v6149 = vpop.f32.mrb[0].mxu0
    %v6150 = vadd.f32 %v3041, %v6149
    %v6151 = vpop.f32.mrb[0].mxu0
    %v6152 = vpop.f32.mrb[0].mxu0
    %v6153 = vpop.f32.mrb[0].mxu0
    %6154 = vdwg.mxu0
    %6155 = vmatprep.subr.bf16.mxu0 0
    %6156 = vmatpush1.bf16.msra.mxu0 %v5107
    %6157 = vmatprep.subr.bf16.mxu0 0
    %6158 = vmatpush1.bf16.msra.mxu0 %v5108
    %6159 = vmatprep.subr.bf16.mxu0 0
    %6160 = vmatpush1.bf16.msra.mxu0 %v5109
    %6161 = vmatprep.subr.bf16.mxu0 0
    %6162 = vmatpush1.bf16.msra.mxu0 %v5110
    %6163 = vmatprep.subr.bf16.mxu0 0
    %6164 = vmatpush1.bf16.msra.mxu0 %v5111
    %6165 = vmatprep.subr.bf16.mxu0 0
    %6166 = vmatpush1.bf16.msra.mxu0 %v5112
    %6167 = vmatprep.subr.bf16.mxu0 0
    %6168 = vmatpush1.bf16.msra.mxu0 %v5113
    %6169 = vmatprep.subr.bf16.mxu0 0
    %6170 = vmatpush1.bf16.msra.mxu0 %v5114
    %6171 = vmatprep.subr.bf16.mxu0 0
    %6172 = vmatpush1.bf16.msra.mxu0 %v5115
    %6173 = vmatprep.subr.bf16.mxu0 0
    %6174 = vmatpush1.bf16.msra.mxu0 %v5116
    %6175 = vmatprep.subr.bf16.mxu0 0
    %6176 = vmatpush1.bf16.msra.mxu0 %v5117
    %6177 = vmatprep.subr.bf16.mxu0 0
    %6178 = vmatpush1.bf16.msra.mxu0 %v5118
    %6179 = vmatprep.subr.bf16.mxu0 0
    %6180 = vmatpush1.bf16.msra.mxu0 %v5119
    %6181 = vmatprep.subr.bf16.mxu0 0
    %6182 = vmatpush1.bf16.msra.mxu0 %v5120
    %6183 = vmatprep.subr.bf16.mxu0 0
    %6184 = vmatpush1.bf16.msra.mxu0 %v5121
    %6185 = vmatprep.subr.bf16.mxu0 0
    %6186 = vmatpush1.bf16.msra.mxu0 %v5122
    %6187 = vmatprep.mubr.bf16.mxu0 %v1951
    %6188 = vmatmul.mubr.bf16.gmra.mrb[0].mxu0 %v1950
    %v6189 = vpop.f32.mrb[0].mxu0
    %v6190 = vadd.f32 %v6150, %v6189
    %v6191 = vpop.f32.mrb[0].mxu0
    %v6192 = vpop.f32.mrb[0].mxu0
    %v6193 = vpop.f32.mrb[0].mxu0
    %6194 = vdwg.mxu0
    %6195 = vmatprep.subr.bf16.mxu0 0
    %6196 = vmatpush1.bf16.msra.mxu0 %v5123
    %6197 = vmatprep.subr.bf16.mxu0 0
    %6198 = vmatpush1.bf16.msra.mxu0 %v5124
    %6199 = vmatprep.subr.bf16.mxu0 0
    %6200 = vmatpush1.bf16.msra.mxu0 %v5125
    %6201 = vmatprep.subr.bf16.mxu0 0
    %6202 = vmatpush1.bf16.msra.mxu0 %v5126
    %6203 = vmatprep.subr.bf16.mxu0 0
    %6204 = vmatpush1.bf16.msra.mxu0 %v5127
    %6205 = vmatprep.subr.bf16.mxu0 0
    %6206 = vmatpush1.bf16.msra.mxu0 %v5128
    %6207 = vmatprep.subr.bf16.mxu0 0
    %6208 = vmatpush1.bf16.msra.mxu0 %v5129
    %6209 = vmatprep.subr.bf16.mxu0 0
    %6210 = vmatpush1.bf16.msra.mxu0 %v5130
    %6211 = vmatprep.subr.bf16.mxu0 0
    %6212 = vmatpush1.bf16.msra.mxu0 %v5131
    %6213 = vmatprep.subr.bf16.mxu0 0
    %6214 = vmatpush1.bf16.msra.mxu0 %v5132
    %6215 = vmatprep.subr.bf16.mxu0 0
    %6216 = vmatpush1.bf16.msra.mxu0 %v5133
    %6217 = vmatprep.subr.bf16.mxu0 0
    %6218 = vmatpush1.bf16.msra.mxu0 %v5134
    %6219 = vmatprep.subr.bf16.mxu0 0
    %6220 = vmatpush1.bf16.msra.mxu0 %v5135
    %6221 = vmatprep.subr.bf16.mxu0 0
    %6222 = vmatpush1.bf16.msra.mxu0 %v5136
    %6223 = vmatprep.subr.bf16.mxu0 0
    %6224 = vmatpush1.bf16.msra.mxu0 %v5137
    %6225 = vmatprep.subr.bf16.mxu0 0
    %6226 = vmatpush1.bf16.msra.mxu0 %v5138
    %6227 = vmatprep.mubr.bf16.mxu0 %v1953
    %6228 = vmatmul.mubr.bf16.gmra.mrb[0].mxu0 %v1952
    %v6229 = vpop.f32.mrb[0].mxu0
    %v6230 = vadd.f32 %v6190, %v6229
    %v6231 = vpop.f32.mrb[0].mxu0
    %v6232 = vpop.f32.mrb[0].mxu0
    %v6233 = vpop.f32.mrb[0].mxu0
    %6234 = vdwg.mxu0
    %6235 = vmatprep.subr.bf16.mxu0 0
    %6236 = vmatpush1.bf16.msra.mxu0 %v5139
    %6237 = vmatprep.subr.bf16.mxu0 0
    %6238 = vmatpush1.bf16.msra.mxu0 %v5140
    %6239 = vmatprep.subr.bf16.mxu0 0
    %6240 = vmatpush1.bf16.msra.mxu0 %v5141
    %6241 = vmatprep.subr.bf16.mxu0 0
    %6242 = vmatpush1.bf16.msra.mxu0 %v5142
    %6243 = vmatprep.subr.bf16.mxu0 0
    %6244 = vmatpush1.bf16.msra.mxu0 %v5143
    %6245 = vmatprep.subr.bf16.mxu0 0
    %6246 = vmatpush1.bf16.msra.mxu0 %v5144
    %6247 = vmatprep.subr.bf16.mxu0 0
    %6248 = vmatpush1.bf16.msra.mxu0 %v5145
    %6249 = vmatprep.subr.bf16.mxu0 0
    %6250 = vmatpush1.bf16.msra.mxu0 %v5146
    %6251 = vmatprep.subr.bf16.mxu0 0
    %6252 = vmatpush1.bf16.msra.mxu0 %v5147
    %6253 = vmatprep.subr.bf16.mxu0 0
    %6254 = vmatpush1.bf16.msra.mxu0 %v5148
    %6255 = vmatprep.subr.bf16.mxu0 0
    %6256 = vmatpush1.bf16.msra.mxu0 %v5149
    %6257 = vmatprep.subr.bf16.mxu0 0
    %6258 = vmatpush1.bf16.msra.mxu0 %v5150
    %6259 = vmatprep.subr.bf16.mxu0 0
    %6260 = vmatpush1.bf16.msra.mxu0 %v5151
    %6261 = vmatprep.subr.bf16.mxu0 0
    %6262 = vmatpush1.bf16.msra.mxu0 %v5152
    %6263 = vmatprep.subr.bf16.mxu0 0
    %6264 = vmatpush1.bf16.msra.mxu0 %v5153
    %6265 = vmatprep.subr.bf16.mxu0 0
    %6266 = vmatpush1.bf16.msra.mxu0 %v5154
    %6267 = vmatprep.mubr.bf16.mxu0 %v1955
    %6268 = vmatmul.mubr.bf16.gmra.mrb[0].mxu0 %v1954
    %v6269 = vpop.f32.mrb[0].mxu0
    %v6270 = vadd.f32 %v6230, %v6269
    %v6271 = vpop.f32.mrb[0].mxu0
    %v6272 = vpop.f32.mrb[0].mxu0
    %v6273 = vpop.f32.mrb[0].mxu0
    %6274 = vdwg.mxu0
    %6275 = vmatprep.subr.bf16.mxu0 0
    %6276 = vmatpush1.bf16.msra.mxu0 %v5155
    %6277 = vmatprep.subr.bf16.mxu0 0
    %6278 = vmatpush1.bf16.msra.mxu0 %v5156
    %6279 = vmatprep.subr.bf16.mxu0 0
    %6280 = vmatpush1.bf16.msra.mxu0 %v5157
    %6281 = vmatprep.subr.bf16.mxu0 0
    %6282 = vmatpush1.bf16.msra.mxu0 %v5158
    %6283 = vmatprep.subr.bf16.mxu0 0
    %6284 = vmatpush1.bf16.msra.mxu0 %v5159
    %6285 = vmatprep.subr.bf16.mxu0 0
    %6286 = vmatpush1.bf16.msra.mxu0 %v5160
    %6287 = vmatprep.subr.bf16.mxu0 0
    %6288 = vmatpush1.bf16.msra.mxu0 %v5161
    %6289 = vmatprep.subr.bf16.mxu0 0
    %6290 = vmatpush1.bf16.msra.mxu0 %v5162
    %6291 = vmatprep.subr.bf16.mxu0 0
    %6292 = vmatpush1.bf16.msra.mxu0 %v5163
    %6293 = vmatprep.subr.bf16.mxu0 0
    %6294 = vmatpush1.bf16.msra.mxu0 %v5164
    %6295 = vmatprep.subr.bf16.mxu0 0
    %6296 = vmatpush1.bf16.msra.mxu0 %v5165
    %6297 = vmatprep.subr.bf16.mxu0 0
    %6298 = vmatpush1.bf16.msra.mxu0 %v5166
    %6299 = vmatprep.subr.bf16.mxu0 0
    %6300 = vmatpush1.bf16.msra.mxu0 %v5167
    %6301 = vmatprep.subr.bf16.mxu0 0
    %6302 = vmatpush1.bf16.msra.mxu0 %v5168
    %6303 = vmatprep.subr.bf16.mxu0 0
    %6304 = vmatpush1.bf16.msra.mxu0 %v5169
    %6305 = vmatprep.subr.bf16.mxu0 0
    %6306 = vmatpush1.bf16.msra.mxu0 %v5170
    %6307 = vmatprep.mubr.bf16.mxu0 %v1957
    %6308 = vmatmul.mubr.bf16.gmra.mrb[0].mxu0 %v1956
    %v6309 = vpop.f32.mrb[0].mxu0
    %v6310 = vadd.f32 %v6270, %v6309
    %v6311 = vpop.f32.mrb[0].mxu0
    %v6312 = vpop.f32.mrb[0].mxu0
    %v6313 = vpop.f32.mrb[0].mxu0
    %6314 = vdwg.mxu0
    %6315 = vmatprep.subr.bf16.mxu0 0
    %6316 = vmatpush1.bf16.msra.mxu0 %v5171
    %6317 = vmatprep.subr.bf16.mxu0 0
    %6318 = vmatpush1.bf16.msra.mxu0 %v5172
    %6319 = vmatprep.subr.bf16.mxu0 0
    %6320 = vmatpush1.bf16.msra.mxu0 %v5173
    %6321 = vmatprep.subr.bf16.mxu0 0
    %6322 = vmatpush1.bf16.msra.mxu0 %v5174
    %6323 = vmatprep.subr.bf16.mxu0 0
    %6324 = vmatpush1.bf16.msra.mxu0 %v5175
    %6325 = vmatprep.subr.bf16.mxu0 0
    %6326 = vmatpush1.bf16.msra.mxu0 %v5176
    %6327 = vmatprep.subr.bf16.mxu0 0
    %6328 = vmatpush1.bf16.msra.mxu0 %v5177
    %6329 = vmatprep.subr.bf16.mxu0 0
    %6330 = vmatpush1.bf16.msra.mxu0 %v5178
    %6331 = vmatprep.subr.bf16.mxu0 0
    %6332 = vmatpush1.bf16.msra.mxu0 %v5179
    %6333 = vmatprep.subr.bf16.mxu0 0
    %6334 = vmatpush1.bf16.msra.mxu0 %v5180
    %6335 = vmatprep.subr.bf16.mxu0 0
    %6336 = vmatpush1.bf16.msra.mxu0 %v5181
    %6337 = vmatprep.subr.bf16.mxu0 0
    %6338 = vmatpush1.bf16.msra.mxu0 %v5182
    %6339 = vmatprep.subr.bf16.mxu0 0
    %6340 = vmatpush1.bf16.msra.mxu0 %v5183
    %6341 = vmatprep.subr.bf16.mxu0 0
    %6342 = vmatpush1.bf16.msra.mxu0 %v5184
    %6343 = vmatprep.subr.bf16.mxu0 0
    %6344 = vmatpush1.bf16.msra.mxu0 %v5185
    %6345 = vmatprep.subr.bf16.mxu0 0
    %6346 = vmatpush1.bf16.msra.mxu0 %v5186
    %6347 = vmatprep.mubr.bf16.mxu0 %v1959
    %6348 = vmatmul.mubr.bf16.gmra.mrb[0].mxu0 %v1958
    %v6349 = vpop.f32.mrb[0].mxu0
    %v6350 = vadd.f32 %v6310, %v6349
    %v6351 = vpop.f32.mrb[0].mxu0
    %v6352 = vpop.f32.mrb[0].mxu0
    %v6353 = vpop.f32.mrb[0].mxu0
    %6354 = vdwg.mxu0
    %6355 = vmatprep.subr.bf16.mxu0 0
    %6356 = vmatpush1.bf16.msra.mxu0 %v5187
    %6357 = vmatprep.subr.bf16.mxu0 0
    %6358 = vmatpush1.bf16.msra.mxu0 %v5188
    %6359 = vmatprep.subr.bf16.mxu0 0
    %6360 = vmatpush1.bf16.msra.mxu0 %v5189
    %6361 = vmatprep.subr.bf16.mxu0 0
    %6362 = vmatpush1.bf16.msra.mxu0 %v5190
    %6363 = vmatprep.subr.bf16.mxu0 0
    %6364 = vmatpush1.bf16.msra.mxu0 %v5191
    %6365 = vmatprep.subr.bf16.mxu0 0
    %6366 = vmatpush1.bf16.msra.mxu0 %v5192
    %6367 = vmatprep.subr.bf16.mxu0 0
    %6368 = vmatpush1.bf16.msra.mxu0 %v5193
    %6369 = vmatprep.subr.bf16.mxu0 0
    %6370 = vmatpush1.bf16.msra.mxu0 %v5194
    %6371 = vmatprep.subr.bf16.mxu0 0
    %6372 = vmatpush1.bf16.msra.mxu0 %v5195
    %6373 = vmatprep.subr.bf16.mxu0 0
    %6374 = vmatpush1.bf16.msra.mxu0 %v5196
    %6375 = vmatprep.subr.bf16.mxu0 0
    %6376 = vmatpush1.bf16.msra.mxu0 %v5197
    %6377 = vmatprep.subr.bf16.mxu0 0
    %6378 = vmatpush1.bf16.msra.mxu0 %v5198
    %6379 = vmatprep.subr.bf16.mxu0 0
    %6380 = vmatpush1.bf16.msra.mxu0 %v5199
    %6381 = vmatprep.subr.bf16.mxu0 0
    %6382 = vmatpush1.bf16.msra.mxu0 %v5200
    %6383 = vmatprep.subr.bf16.mxu0 0
    %6384 = vmatpush1.bf16.msra.mxu0 %v5201
    %6385 = vmatprep.subr.bf16.mxu0 0
    %6386 = vmatpush1.bf16.msra.mxu0 %v5202
    %6387 = vmatprep.mubr.bf16.mxu0 %v1961
    %6388 = vmatmul.mubr.bf16.gmra.mrb[0].mxu0 %v1960
    %v6389 = vpop.f32.mrb[0].mxu0
    %v6390 = vadd.f32 %v6350, %v6389
    %v6391 = vpop.f32.mrb[0].mxu0
    %v6392 = vpop.f32.mrb[0].mxu0
    %v6393 = vpop.f32.mrb[0].mxu0
    %6394 = vdwg.mxu0
    %6395 = vmatprep.subr.bf16.mxu0 0
    %6396 = vmatpush1.bf16.msra.mxu0 %v5203
    %6397 = vmatprep.subr.bf16.mxu0 0
    %6398 = vmatpush1.bf16.msra.mxu0 %v5204
    %6399 = vmatprep.subr.bf16.mxu0 0
    %6400 = vmatpush1.bf16.msra.mxu0 %v5205
    %6401 = vmatprep.subr.bf16.mxu0 0
    %6402 = vmatpush1.bf16.msra.mxu0 %v5206
    %6403 = vmatprep.subr.bf16.mxu0 0
    %6404 = vmatpush1.bf16.msra.mxu0 %v5207
    %6405 = vmatprep.subr.bf16.mxu0 0
    %6406 = vmatpush1.bf16.msra.mxu0 %v5208
    %6407 = vmatprep.subr.bf16.mxu0 0
    %6408 = vmatpush1.bf16.msra.mxu0 %v5209
    %6409 = vmatprep.subr.bf16.mxu0 0
    %6410 = vmatpush1.bf16.msra.mxu0 %v5210
    %6411 = vmatprep.subr.bf16.mxu0 0
    %6412 = vmatpush1.bf16.msra.mxu0 %v5211
    %6413 = vmatprep.subr.bf16.mxu0 0
    %6414 = vmatpush1.bf16.msra.mxu0 %v5212
    %6415 = vmatprep.subr.bf16.mxu0 0
    %6416 = vmatpush1.bf16.msra.mxu0 %v5213
    %6417 = vmatprep.subr.bf16.mxu0 0
    %6418 = vmatpush1.bf16.msra.mxu0 %v5214
    %6419 = vmatprep.subr.bf16.mxu0 0
    %6420 = vmatpush1.bf16.msra.mxu0 %v5215
    %6421 = vmatprep.subr.bf16.mxu0 0
    %6422 = vmatpush1.bf16.msra.mxu0 %v5216
    %6423 = vmatprep.subr.bf16.mxu0 0
    %6424 = vmatpush1.bf16.msra.mxu0 %v5217
    %6425 = vmatprep.subr.bf16.mxu0 0
    %6426 = vmatpush1.bf16.msra.mxu0 %v5218
    %6427 = vmatprep.mubr.bf16.mxu0 %v1963
    %6428 = vmatmul.mubr.bf16.gmra.mrb[0].mxu0 %v1962
    %v6429 = vpop.f32.mrb[0].mxu0
    %v6430 = vadd.f32 %v6390, %v6429
    %v6431 = vpop.f32.mrb[0].mxu0
    %v6432 = vpop.f32.mrb[0].mxu0
    %v6433 = vpop.f32.mrb[0].mxu0
    %6434 = vdwg.mxu0
    %6435 = vmatprep.subr.bf16.mxu0 0
    %6436 = vmatpush1.bf16.msra.mxu0 %v5219
    %6437 = vmatprep.subr.bf16.mxu0 0
    %6438 = vmatpush1.bf16.msra.mxu0 %v5220
    %6439 = vmatprep.subr.bf16.mxu0 0
    %6440 = vmatpush1.bf16.msra.mxu0 %v5221
    %6441 = vmatprep.subr.bf16.mxu0 0
    %6442 = vmatpush1.bf16.msra.mxu0 %v5222
    %6443 = vmatprep.subr.bf16.mxu0 0
    %6444 = vmatpush1.bf16.msra.mxu0 %v5223
    %6445 = vmatprep.subr.bf16.mxu0 0
    %6446 = vmatpush1.bf16.msra.mxu0 %v5224
    %6447 = vmatprep.subr.bf16.mxu0 0
    %6448 = vmatpush1.bf16.msra.mxu0 %v5225
    %6449 = vmatprep.subr.bf16.mxu0 0
    %6450 = vmatpush1.bf16.msra.mxu0 %v5226
    %6451 = vmatprep.subr.bf16.mxu0 0
    %6452 = vmatpush1.bf16.msra.mxu0 %v5227
    %6453 = vmatprep.subr.bf16.mxu0 0
    %6454 = vmatpush1.bf16.msra.mxu0 %v5228
    %6455 = vmatprep.subr.bf16.mxu0 0
    %6456 = vmatpush1.bf16.msra.mxu0 %v5229
    %6457 = vmatprep.subr.bf16.mxu0 0
    %6458 = vmatpush1.bf16.msra.mxu0 %v5230
    %6459 = vmatprep.subr.bf16.mxu0 0
    %6460 = vmatpush1.bf16.msra.mxu0 %v5231
    %6461 = vmatprep.subr.bf16.mxu0 0
    %6462 = vmatpush1.bf16.msra.mxu0 %v5232
    %6463 = vmatprep.subr.bf16.mxu0 0
    %6464 = vmatpush1.bf16.msra.mxu0 %v5233
    %6465 = vmatprep.subr.bf16.mxu0 0
    %6466 = vmatpush1.bf16.msra.mxu0 %v5234
    %6467 = vmatprep.mubr.bf16.mxu0 %v1965
    %6468 = vmatmul.mubr.bf16.gmra.mrb[0].mxu0 %v1964
    %v6469 = vpop.f32.mrb[0].mxu0
    %v6470 = vadd.f32 %v6430, %v6469
    %v6471 = vpop.f32.mrb[0].mxu0
    %v6472 = vpop.f32.mrb[0].mxu0
    %v6473 = vpop.f32.mrb[0].mxu0
    %6474 = vdwg.mxu0
    %6475 = vmatprep.subr.bf16.mxu0 0
    %6476 = vmatpush1.bf16.msra.mxu0 %v5235
    %6477 = vmatprep.subr.bf16.mxu0 0
    %6478 = vmatpush1.bf16.msra.mxu0 %v5236
    %6479 = vmatprep.subr.bf16.mxu0 0
    %6480 = vmatpush1.bf16.msra.mxu0 %v5237
    %6481 = vmatprep.subr.bf16.mxu0 0
    %6482 = vmatpush1.bf16.msra.mxu0 %v5238
    %6483 = vmatprep.subr.bf16.mxu0 0
    %6484 = vmatpush1.bf16.msra.mxu0 %v5239
    %6485 = vmatprep.subr.bf16.mxu0 0
    %6486 = vmatpush1.bf16.msra.mxu0 %v5240
    %6487 = vmatprep.subr.bf16.mxu0 0
    %6488 = vmatpush1.bf16.msra.mxu0 %v5241
    %6489 = vmatprep.subr.bf16.mxu0 0
    %6490 = vmatpush1.bf16.msra.mxu0 %v5242
    %6491 = vmatprep.subr.bf16.mxu0 0
    %6492 = vmatpush1.bf16.msra.mxu0 %v5243
    %6493 = vmatprep.subr.bf16.mxu0 0
    %6494 = vmatpush1.bf16.msra.mxu0 %v5244
    %6495 = vmatprep.subr.bf16.mxu0 0
    %6496 = vmatpush1.bf16.msra.mxu0 %v5245
    %6497 = vmatprep.subr.bf16.mxu0 0
    %6498 = vmatpush1.bf16.msra.mxu0 %v5246
    %6499 = vmatprep.subr.bf16.mxu0 0
    %6500 = vmatpush1.bf16.msra.mxu0 %v5247
    %6501 = vmatprep.subr.bf16.mxu0 0
    %6502 = vmatpush1.bf16.msra.mxu0 %v5248
    %6503 = vmatprep.subr.bf16.mxu0 0
    %6504 = vmatpush1.bf16.msra.mxu0 %v5249
    %6505 = vmatprep.subr.bf16.mxu0 0
    %6506 = vmatpush1.bf16.msra.mxu0 %v5250
    %6507 = vmatprep.mubr.bf16.mxu0 %v1967
    %6508 = vmatmul.mubr.bf16.gmra.mrb[0].mxu0 %v1966
    %v6509 = vpop.f32.mrb[0].mxu0
    %v6510 = vadd.f32 %v6470, %v6509
    %v6511 = vpop.f32.mrb[0].mxu0
    %v6512 = vpop.f32.mrb[0].mxu0
    %v6513 = vpop.f32.mrb[0].mxu0
    %6514 = vdwg.mxu0
    %6515 = vmatprep.subr.bf16.mxu0 0
    %6516 = vmatpush1.bf16.msra.mxu0 %v5251
    %6517 = vmatprep.subr.bf16.mxu0 0
    %6518 = vmatpush1.bf16.msra.mxu0 %v5252
    %6519 = vmatprep.subr.bf16.mxu0 0
    %6520 = vmatpush1.bf16.msra.mxu0 %v5253
    %6521 = vmatprep.subr.bf16.mxu0 0
    %6522 = vmatpush1.bf16.msra.mxu0 %v5254
    %6523 = vmatprep.subr.bf16.mxu0 0
    %6524 = vmatpush1.bf16.msra.mxu0 %v5255
    %6525 = vmatprep.subr.bf16.mxu0 0
    %6526 = vmatpush1.bf16.msra.mxu0 %v5256
    %6527 = vmatprep.subr.bf16.mxu0 0
    %6528 = vmatpush1.bf16.msra.mxu0 %v5257
    %6529 = vmatprep.subr.bf16.mxu0 0
    %6530 = vmatpush1.bf16.msra.mxu0 %v5258
    %6531 = vmatprep.subr.bf16.mxu0 0
    %6532 = vmatpush1.bf16.msra.mxu0 %v5259
    %6533 = vmatprep.subr.bf16.mxu0 0
    %6534 = vmatpush1.bf16.msra.mxu0 %v5260
    %6535 = vmatprep.subr.bf16.mxu0 0
    %6536 = vmatpush1.bf16.msra.mxu0 %v5261
    %6537 = vmatprep.subr.bf16.mxu0 0
    %6538 = vmatpush1.bf16.msra.mxu0 %v5262
    %6539 = vmatprep.subr.bf16.mxu0 0
    %6540 = vmatpush1.bf16.msra.mxu0 %v5263
    %6541 = vmatprep.subr.bf16.mxu0 0
    %6542 = vmatpush1.bf16.msra.mxu0 %v5264
    %6543 = vmatprep.subr.bf16.mxu0 0
    %6544 = vmatpush1.bf16.msra.mxu0 %v5265
    %6545 = vmatprep.subr.bf16.mxu0 0
    %6546 = vmatpush1.bf16.msra.mxu0 %v5266
    %6547 = vmatprep.mubr.bf16.mxu0 %v1969
    %6548 = vmatmul.mubr.bf16.gmra.mrb[0].mxu0 %v1968
    %v6549 = vpop.f32.mrb[0].mxu0
    %v6550 = vadd.f32 %v6510, %v6549
    %v6551 = vpop.f32.mrb[0].mxu0
    %v6552 = vpop.f32.mrb[0].mxu0
    %v6553 = vpop.f32.mrb[0].mxu0
    %6554 = vdwg.mxu0
    %6555 = vmatprep.subr.bf16.mxu0 0
    %6556 = vmatpush1.bf16.msra.mxu0 %v5267
    %6557 = vmatprep.subr.bf16.mxu0 0
    %6558 = vmatpush1.bf16.msra.mxu0 %v5268
    %6559 = vmatprep.subr.bf16.mxu0 0
    %6560 = vmatpush1.bf16.msra.mxu0 %v5269
    %6561 = vmatprep.subr.bf16.mxu0 0
    %6562 = vmatpush1.bf16.msra.mxu0 %v5270
    %6563 = vmatprep.subr.bf16.mxu0 0
    %6564 = vmatpush1.bf16.msra.mxu0 %v5271
    %6565 = vmatprep.subr.bf16.mxu0 0
    %6566 = vmatpush1.bf16.msra.mxu0 %v5272
    %6567 = vmatprep.subr.bf16.mxu0 0
    %6568 = vmatpush1.bf16.msra.mxu0 %v5273
    %6569 = vmatprep.subr.bf16.mxu0 0
    %6570 = vmatpush1.bf16.msra.mxu0 %v5274
    %6571 = vmatprep.subr.bf16.mxu0 0
    %6572 = vmatpush1.bf16.msra.mxu0 %v5275
    %6573 = vmatprep.subr.bf16.mxu0 0
    %6574 = vmatpush1.bf16.msra.mxu0 %v5276
    %6575 = vmatprep.subr.bf16.mxu0 0
    %6576 = vmatpush1.bf16.msra.mxu0 %v5277
    %6577 = vmatprep.subr.bf16.mxu0 0
    %6578 = vmatpush1.bf16.msra.mxu0 %v5278
    %6579 = vmatprep.subr.bf16.mxu0 0
    %6580 = vmatpush1.bf16.msra.mxu0 %v5279
    %6581 = vmatprep.subr.bf16.mxu0 0
    %6582 = vmatpush1.bf16.msra.mxu0 %v5280
    %6583 = vmatprep.subr.bf16.mxu0 0
    %6584 = vmatpush1.bf16.msra.mxu0 %v5281
    %6585 = vmatprep.subr.bf16.mxu0 0
    %6586 = vmatpush1.bf16.msra.mxu0 %v5282
    %6587 = vmatprep.mubr.bf16.mxu0 %v1971
    %6588 = vmatmul.mubr.bf16.gmra.mrb[0].mxu0 %v1970
    %v6589 = vpop.f32.mrb[0].mxu0
    %v6590 = vadd.f32 %v6550, %v6589
    %v6591 = vpop.f32.mrb[0].mxu0
    %v6592 = vpop.f32.mrb[0].mxu0
    %v6593 = vpop.f32.mrb[0].mxu0
    %6594 = vdwg.mxu0
    %6595 = vmatprep.subr.bf16.mxu0 0
    %6596 = vmatpush1.bf16.msra.mxu0 %v5283
    %6597 = vmatprep.subr.bf16.mxu0 0
    %6598 = vmatpush1.bf16.msra.mxu0 %v5284
    %6599 = vmatprep.subr.bf16.mxu0 0
    %6600 = vmatpush1.bf16.msra.mxu0 %v5285
    %6601 = vmatprep.subr.bf16.mxu0 0
    %6602 = vmatpush1.bf16.msra.mxu0 %v5286
    %6603 = vmatprep.subr.bf16.mxu0 0
    %6604 = vmatpush1.bf16.msra.mxu0 %v5287
    %6605 = vmatprep.subr.bf16.mxu0 0
    %6606 = vmatpush1.bf16.msra.mxu0 %v5288
    %6607 = vmatprep.subr.bf16.mxu0 0
    %6608 = vmatpush1.bf16.msra.mxu0 %v5289
    %6609 = vmatprep.subr.bf16.mxu0 0
    %6610 = vmatpush1.bf16.msra.mxu0 %v5290
    %6611 = vmatprep.subr.bf16.mxu0 0
    %6612 = vmatpush1.bf16.msra.mxu0 %v5291
    %6613 = vmatprep.subr.bf16.mxu0 0
    %6614 = vmatpush1.bf16.msra.mxu0 %v5292
    %6615 = vmatprep.subr.bf16.mxu0 0
    %6616 = vmatpush1.bf16.msra.mxu0 %v5293
    %6617 = vmatprep.subr.bf16.mxu0 0
    %6618 = vmatpush1.bf16.msra.mxu0 %v5294
    %6619 = vmatprep.subr.bf16.mxu0 0
    %6620 = vmatpush1.bf16.msra.mxu0 %v5295
    %6621 = vmatprep.subr.bf16.mxu0 0
    %6622 = vmatpush1.bf16.msra.mxu0 %v5296
    %6623 = vmatprep.subr.bf16.mxu0 0
    %6624 = vmatpush1.bf16.msra.mxu0 %v5297
    %6625 = vmatprep.subr.bf16.mxu0 0
    %6626 = vmatpush1.bf16.msra.mxu0 %v5298
    %6627 = vmatprep.mubr.bf16.mxu0 %v1973
    %6628 = vmatmul.mubr.bf16.gmra.mrb[0].mxu0 %v1972
    %v6629 = vpop.f32.mrb[0].mxu0
    %v6630 = vadd.f32 %v6590, %v6629
    %v6631 = vpop.f32.mrb[0].mxu0
    %v6632 = vpop.f32.mrb[0].mxu0
    %v6633 = vpop.f32.mrb[0].mxu0
    %6634 = vdwg.mxu0
    %6635 = vmatprep.subr.bf16.mxu0 0
    %6636 = vmatpush1.bf16.msra.mxu0 %v5299
    %6637 = vmatprep.subr.bf16.mxu0 0
    %6638 = vmatpush1.bf16.msra.mxu0 %v5300
    %6639 = vmatprep.subr.bf16.mxu0 0
    %6640 = vmatpush1.bf16.msra.mxu0 %v5301
    %6641 = vmatprep.subr.bf16.mxu0 0
    %6642 = vmatpush1.bf16.msra.mxu0 %v5302
    %6643 = vmatprep.subr.bf16.mxu0 0
    %6644 = vmatpush1.bf16.msra.mxu0 %v5303
    %6645 = vmatprep.subr.bf16.mxu0 0
    %6646 = vmatpush1.bf16.msra.mxu0 %v5304
    %6647 = vmatprep.subr.bf16.mxu0 0
    %6648 = vmatpush1.bf16.msra.mxu0 %v5305
    %6649 = vmatprep.subr.bf16.mxu0 0
    %6650 = vmatpush1.bf16.msra.mxu0 %v5306
    %6651 = vmatprep.subr.bf16.mxu0 0
    %6652 = vmatpush1.bf16.msra.mxu0 %v5307
    %6653 = vmatprep.subr.bf16.mxu0 0
    %6654 = vmatpush1.bf16.msra.mxu0 %v5308
    %6655 = vmatprep.subr.bf16.mxu0 0
    %6656 = vmatpush1.bf16.msra.mxu0 %v5309
    %6657 = vmatprep.subr.bf16.mxu0 0
    %6658 = vmatpush1.bf16.msra.mxu0 %v5310
    %6659 = vmatprep.subr.bf16.mxu0 0
    %6660 = vmatpush1.bf16.msra.mxu0 %v5311
    %6661 = vmatprep.subr.bf16.mxu0 0
    %6662 = vmatpush1.bf16.msra.mxu0 %v5312
    %6663 = vmatprep.subr.bf16.mxu0 0
    %6664 = vmatpush1.bf16.msra.mxu0 %v5313
    %6665 = vmatprep.subr.bf16.mxu0 0
    %6666 = vmatpush1.bf16.msra.mxu0 %v5314
    %6667 = vmatprep.mubr.bf16.mxu0 %v1975
    %6668 = vmatmul.mubr.bf16.gmra.mrb[0].mxu0 %v1974
    %v6669 = vpop.f32.mrb[0].mxu0
    %v6670 = vadd.f32 %v6630, %v6669
    %v6671 = vpop.f32.mrb[0].mxu0
    %v6672 = vpop.f32.mrb[0].mxu0
    %v6673 = vpop.f32.mrb[0].mxu0
    %6674 = vdwg.mxu0
    %6675 = vmatprep.subr.bf16.mxu0 0
    %6676 = vmatpush1.bf16.msra.mxu0 %v5315
    %6677 = vmatprep.subr.bf16.mxu0 0
    %6678 = vmatpush1.bf16.msra.mxu0 %v5316
    %6679 = vmatprep.subr.bf16.mxu0 0
    %6680 = vmatpush1.bf16.msra.mxu0 %v5317
    %6681 = vmatprep.subr.bf16.mxu0 0
    %6682 = vmatpush1.bf16.msra.mxu0 %v5318
    %6683 = vmatprep.subr.bf16.mxu0 0
    %6684 = vmatpush1.bf16.msra.mxu0 %v5319
    %6685 = vmatprep.subr.bf16.mxu0 0
    %6686 = vmatpush1.bf16.msra.mxu0 %v5320
    %6687 = vmatprep.subr.bf16.mxu0 0
    %6688 = vmatpush1.bf16.msra.mxu0 %v5321
    %6689 = vmatprep.subr.bf16.mxu0 0
    %6690 = vmatpush1.bf16.msra.mxu0 %v5322
    %6691 = vmatprep.subr.bf16.mxu0 0
    %6692 = vmatpush1.bf16.msra.mxu0 %v5323
    %6693 = vmatprep.subr.bf16.mxu0 0
    %6694 = vmatpush1.bf16.msra.mxu0 %v5324
    %6695 = vmatprep.subr.bf16.mxu0 0
    %6696 = vmatpush1.bf16.msra.mxu0 %v5325
    %6697 = vmatprep.subr.bf16.mxu0 0
    %6698 = vmatpush1.bf16.msra.mxu0 %v5326
    %6699 = vmatprep.subr.bf16.mxu0 0
    %6700 = vmatpush1.bf16.msra.mxu0 %v5327
    %6701 = vmatprep.subr.bf16.mxu0 0
    %6702 = vmatpush1.bf16.msra.mxu0 %v5328
    %6703 = vmatprep.subr.bf16.mxu0 0
    %6704 = vmatpush1.bf16.msra.mxu0 %v5329
    %6705 = vmatprep.subr.bf16.mxu0 0
    %6706 = vmatpush1.bf16.msra.mxu0 %v5330
    %6707 = vmatprep.mubr.bf16.mxu0 %v1977
    %6708 = vmatmul.mubr.bf16.gmra.mrb[0].mxu0 %v1976
    %v6709 = vpop.f32.mrb[0].mxu0
    %v6710 = vadd.f32 %v6670, %v6709
    %v6711 = vpop.f32.mrb[0].mxu0
    %v6712 = vpop.f32.mrb[0].mxu0
    %v6713 = vpop.f32.mrb[0].mxu0
    %6714 = vdwg.mxu0
    %6715 = vmatprep.subr.bf16.mxu0 0
    %6716 = vmatpush1.bf16.msra.mxu0 %v5331
    %6717 = vmatprep.subr.bf16.mxu0 0
    %6718 = vmatpush1.bf16.msra.mxu0 %v5332
    %6719 = vmatprep.subr.bf16.mxu0 0
    %6720 = vmatpush1.bf16.msra.mxu0 %v5333
    %6721 = vmatprep.subr.bf16.mxu0 0
    %6722 = vmatpush1.bf16.msra.mxu0 %v5334
    %6723 = vmatprep.subr.bf16.mxu0 0
    %6724 = vmatpush1.bf16.msra.mxu0 %v5335
    %6725 = vmatprep.subr.bf16.mxu0 0
    %6726 = vmatpush1.bf16.msra.mxu0 %v5336
    %6727 = vmatprep.subr.bf16.mxu0 0
    %6728 = vmatpush1.bf16.msra.mxu0 %v5337
    %6729 = vmatprep.subr.bf16.mxu0 0
    %6730 = vmatpush1.bf16.msra.mxu0 %v5338
    %6731 = vmatprep.subr.bf16.mxu0 0
    %6732 = vmatpush1.bf16.msra.mxu0 %v5339
    %6733 = vmatprep.subr.bf16.mxu0 0
    %6734 = vmatpush1.bf16.msra.mxu0 %v5340
    %6735 = vmatprep.subr.bf16.mxu0 0
    %6736 = vmatpush1.bf16.msra.mxu0 %v5341
    %6737 = vmatprep.subr.bf16.mxu0 0
    %6738 = vmatpush1.bf16.msra.mxu0 %v5342
    %6739 = vmatprep.subr.bf16.mxu0 0
    %6740 = vmatpush1.bf16.msra.mxu0 %v5343
    %6741 = vmatprep.subr.bf16.mxu0 0
    %6742 = vmatpush1.bf16.msra.mxu0 %v5344
    %6743 = vmatprep.subr.bf16.mxu0 0
    %6744 = vmatpush1.bf16.msra.mxu0 %v5345
    %6745 = vmatprep.subr.bf16.mxu0 0
    %6746 = vmatpush1.bf16.msra.mxu0 %v5346
    %6747 = vmatprep.mubr.bf16.mxu0 %v1979
    %6748 = vmatmul.mubr.bf16.gmra.mrb[0].mxu0 %v1978
    %v6749 = vpop.f32.mrb[0].mxu0
    %v6750 = vadd.f32 %v6710, %v6749
    %v6751 = vpop.f32.mrb[0].mxu0
    %v6752 = vpop.f32.mrb[0].mxu0
    %v6753 = vpop.f32.mrb[0].mxu0
    %6754 = vdwg.mxu0
    %6755 = vmatprep.subr.bf16.mxu0 0
    %6756 = vmatpush1.bf16.msra.mxu0 %v5347
    %6757 = vmatprep.subr.bf16.mxu0 0
    %6758 = vmatpush1.bf16.msra.mxu0 %v5348
    %6759 = vmatprep.subr.bf16.mxu0 0
    %6760 = vmatpush1.bf16.msra.mxu0 %v5349
    %6761 = vmatprep.subr.bf16.mxu0 0
    %6762 = vmatpush1.bf16.msra.mxu0 %v5350
    %6763 = vmatprep.subr.bf16.mxu0 0
    %6764 = vmatpush1.bf16.msra.mxu0 %v5351
    %6765 = vmatprep.subr.bf16.mxu0 0
    %6766 = vmatpush1.bf16.msra.mxu0 %v5352
    %6767 = vmatprep.subr.bf16.mxu0 0
    %6768 = vmatpush1.bf16.msra.mxu0 %v5353
    %6769 = vmatprep.subr.bf16.mxu0 0
    %6770 = vmatpush1.bf16.msra.mxu0 %v5354
    %6771 = vmatprep.subr.bf16.mxu0 0
    %6772 = vmatpush1.bf16.msra.mxu0 %v5355
    %6773 = vmatprep.subr.bf16.mxu0 0
    %6774 = vmatpush1.bf16.msra.mxu0 %v5356
    %6775 = vmatprep.subr.bf16.mxu0 0
    %6776 = vmatpush1.bf16.msra.mxu0 %v5357
    %6777 = vmatprep.subr.bf16.mxu0 0
    %6778 = vmatpush1.bf16.msra.mxu0 %v5358
    %6779 = vmatprep.subr.bf16.mxu0 0
    %6780 = vmatpush1.bf16.msra.mxu0 %v5359
    %6781 = vmatprep.subr.bf16.mxu0 0
    %6782 = vmatpush1.bf16.msra.mxu0 %v5360
    %6783 = vmatprep.subr.bf16.mxu0 0
    %6784 = vmatpush1.bf16.msra.mxu0 %v5361
    %6785 = vmatprep.subr.bf16.mxu0 0
    %6786 = vmatpush1.bf16.msra.mxu0 %v5362
    %6787 = vmatprep.mubr.bf16.mxu0 %v1981
    %6788 = vmatmul.mubr.bf16.gmra.mrb[0].mxu0 %v1980
    %v6789 = vpop.f32.mrb[0].mxu0
    %v6790 = vadd.f32 %v6750, %v6789
    %v6791 = vpop.f32.mrb[0].mxu0
    %v6792 = vpop.f32.mrb[0].mxu0
    %v6793 = vpop.f32.mrb[0].mxu0
    %6794 = vdwg.mxu0
    %6795 = vmatprep.subr.bf16.mxu0 0
    %6796 = vmatpush1.bf16.msra.mxu0 %v5363
    %6797 = vmatprep.subr.bf16.mxu0 0
    %6798 = vmatpush1.bf16.msra.mxu0 %v5364
    %6799 = vmatprep.subr.bf16.mxu0 0
    %6800 = vmatpush1.bf16.msra.mxu0 %v5365
    %6801 = vmatprep.subr.bf16.mxu0 0
    %6802 = vmatpush1.bf16.msra.mxu0 %v5366
    %6803 = vmatprep.subr.bf16.mxu0 0
    %6804 = vmatpush1.bf16.msra.mxu0 %v5367
    %6805 = vmatprep.subr.bf16.mxu0 0
    %6806 = vmatpush1.bf16.msra.mxu0 %v5368
    %6807 = vmatprep.subr.bf16.mxu0 0
    %6808 = vmatpush1.bf16.msra.mxu0 %v5369
    %6809 = vmatprep.subr.bf16.mxu0 0
    %6810 = vmatpush1.bf16.msra.mxu0 %v5370
    %6811 = vmatprep.subr.bf16.mxu0 0
    %6812 = vmatpush1.bf16.msra.mxu0 %v5371
    %6813 = vmatprep.subr.bf16.mxu0 0
    %6814 = vmatpush1.bf16.msra.mxu0 %v5372
    %6815 = vmatprep.subr.bf16.mxu0 0
    %6816 = vmatpush1.bf16.msra.mxu0 %v5373
    %6817 = vmatprep.subr.bf16.mxu0 0
    %6818 = vmatpush1.bf16.msra.mxu0 %v5374
    %6819 = vmatprep.subr.bf16.mxu0 0
    %6820 = vmatpush1.bf16.msra.mxu0 %v5375
    %6821 = vmatprep.subr.bf16.mxu0 0
    %6822 = vmatpush1.bf16.msra.mxu0 %v5376
    %6823 = vmatprep.subr.bf16.mxu0 0
    %6824 = vmatpush1.bf16.msra.mxu0 %v5377
    %6825 = vmatprep.subr.bf16.mxu0 0
    %6826 = vmatpush1.bf16.msra.mxu0 %v5378
    %6827 = vmatprep.mubr.bf16.mxu0 %v1983
    %6828 = vmatmul.mubr.bf16.gmra.mrb[0].mxu0 %v1982
    %v6829 = vpop.f32.mrb[0].mxu0
    %v6830 = vadd.f32 %v6790, %v6829
    %v6831 = vpop.f32.mrb[0].mxu0
    %v6832 = vpop.f32.mrb[0].mxu0
    %v6833 = vpop.f32.mrb[0].mxu0
    %6834 = vdwg.mxu0
    %6835 = vmatprep.subr.bf16.mxu0 0
    %6836 = vmatpush1.bf16.msra.mxu0 %v5379
    %6837 = vmatprep.subr.bf16.mxu0 0
    %6838 = vmatpush1.bf16.msra.mxu0 %v5380
    %6839 = vmatprep.subr.bf16.mxu0 0
    %6840 = vmatpush1.bf16.msra.mxu0 %v5381
    %6841 = vmatprep.subr.bf16.mxu0 0
    %6842 = vmatpush1.bf16.msra.mxu0 %v5382
    %6843 = vmatprep.subr.bf16.mxu0 0
    %6844 = vmatpush1.bf16.msra.mxu0 %v5383
    %6845 = vmatprep.subr.bf16.mxu0 0
    %6846 = vmatpush1.bf16.msra.mxu0 %v5384
    %6847 = vmatprep.subr.bf16.mxu0 0
    %6848 = vmatpush1.bf16.msra.mxu0 %v5385
    %6849 = vmatprep.subr.bf16.mxu0 0
    %6850 = vmatpush1.bf16.msra.mxu0 %v5386
    %6851 = vmatprep.subr.bf16.mxu0 0
    %6852 = vmatpush1.bf16.msra.mxu0 %v5387
    %6853 = vmatprep.subr.bf16.mxu0 0
    %6854 = vmatpush1.bf16.msra.mxu0 %v5388
    %6855 = vmatprep.subr.bf16.mxu0 0
    %6856 = vmatpush1.bf16.msra.mxu0 %v5389
    %6857 = vmatprep.subr.bf16.mxu0 0
    %6858 = vmatpush1.bf16.msra.mxu0 %v5390
    %6859 = vmatprep.subr.bf16.mxu0 0
    %6860 = vmatpush1.bf16.msra.mxu0 %v5391
    %6861 = vmatprep.subr.bf16.mxu0 0
    %6862 = vmatpush1.bf16.msra.mxu0 %v5392
    %6863 = vmatprep.subr.bf16.mxu0 0
    %6864 = vmatpush1.bf16.msra.mxu0 %v5393
    %6865 = vmatprep.subr.bf16.mxu0 0
    %6866 = vmatpush1.bf16.msra.mxu0 %v5394
    %6867 = vmatprep.mubr.bf16.mxu0 %v1985
    %6868 = vmatmul.mubr.bf16.gmra.mrb[0].mxu0 %v1984
    %v6869 = vpop.f32.mrb[0].mxu0
    %v6870 = vadd.f32 %v6830, %v6869
    %v6871 = vpop.f32.mrb[0].mxu0
    %v6872 = vpop.f32.mrb[0].mxu0
    %v6873 = vpop.f32.mrb[0].mxu0
    %6874 = vdwg.mxu0
    %6875 = vmatprep.subr.bf16.mxu0 0
    %6876 = vmatpush1.bf16.msra.mxu0 %v5395
    %6877 = vmatprep.subr.bf16.mxu0 0
    %6878 = vmatpush1.bf16.msra.mxu0 %v5396
    %6879 = vmatprep.subr.bf16.mxu0 0
    %6880 = vmatpush1.bf16.msra.mxu0 %v5397
    %6881 = vmatprep.subr.bf16.mxu0 0
    %6882 = vmatpush1.bf16.msra.mxu0 %v5398
    %6883 = vmatprep.subr.bf16.mxu0 0
    %6884 = vmatpush1.bf16.msra.mxu0 %v5399
    %6885 = vmatprep.subr.bf16.mxu0 0
    %6886 = vmatpush1.bf16.msra.mxu0 %v5400
    %6887 = vmatprep.subr.bf16.mxu0 0
    %6888 = vmatpush1.bf16.msra.mxu0 %v5401
    %6889 = vmatprep.subr.bf16.mxu0 0
    %6890 = vmatpush1.bf16.msra.mxu0 %v5402
    %6891 = vmatprep.subr.bf16.mxu0 0
    %6892 = vmatpush1.bf16.msra.mxu0 %v5403
    %6893 = vmatprep.subr.bf16.mxu0 0
    %6894 = vmatpush1.bf16.msra.mxu0 %v5404
    %6895 = vmatprep.subr.bf16.mxu0 0
    %6896 = vmatpush1.bf16.msra.mxu0 %v5405
    %6897 = vmatprep.subr.bf16.mxu0 0
    %6898 = vmatpush1.bf16.msra.mxu0 %v5406
    %6899 = vmatprep.subr.bf16.mxu0 0
    %6900 = vmatpush1.bf16.msra.mxu0 %v5407
    %6901 = vmatprep.subr.bf16.mxu0 0
    %6902 = vmatpush1.bf16.msra.mxu0 %v5408
    %6903 = vmatprep.subr.bf16.mxu0 0
    %6904 = vmatpush1.bf16.msra.mxu0 %v5409
    %6905 = vmatprep.subr.bf16.mxu0 0
    %6906 = vmatpush1.bf16.msra.mxu0 %v5410
    %6907 = vmatprep.mubr.bf16.mxu0 %v1987
    %6908 = vmatmul.mubr.bf16.gmra.mrb[0].mxu0 %v1986
    %v6909 = vpop.f32.mrb[0].mxu0
    %v6910 = vadd.f32 %v6870, %v6909
    %v6911 = vpop.f32.mrb[0].mxu0
    %v6912 = vpop.f32.mrb[0].mxu0
    %v6913 = vpop.f32.mrb[0].mxu0
    %6914 = vdwg.mxu0
    %6915 = vmatprep.subr.bf16.mxu0 0
    %6916 = vmatpush1.bf16.msra.mxu0 %v5411
    %6917 = vmatprep.subr.bf16.mxu0 0
    %6918 = vmatpush1.bf16.msra.mxu0 %v5412
    %6919 = vmatprep.subr.bf16.mxu0 0
    %6920 = vmatpush1.bf16.msra.mxu0 %v5413
    %6921 = vmatprep.subr.bf16.mxu0 0
    %6922 = vmatpush1.bf16.msra.mxu0 %v5414
    %6923 = vmatprep.subr.bf16.mxu0 0
    %6924 = vmatpush1.bf16.msra.mxu0 %v5415
    %6925 = vmatprep.subr.bf16.mxu0 0
    %6926 = vmatpush1.bf16.msra.mxu0 %v5416
    %6927 = vmatprep.subr.bf16.mxu0 0
    %6928 = vmatpush1.bf16.msra.mxu0 %v5417
    %6929 = vmatprep.subr.bf16.mxu0 0
    %6930 = vmatpush1.bf16.msra.mxu0 %v5418
    %6931 = vmatprep.subr.bf16.mxu0 0
    %6932 = vmatpush1.bf16.msra.mxu0 %v5419
    %6933 = vmatprep.subr.bf16.mxu0 0
    %6934 = vmatpush1.bf16.msra.mxu0 %v5420
    %6935 = vmatprep.subr.bf16.mxu0 0
    %6936 = vmatpush1.bf16.msra.mxu0 %v5421
    %6937 = vmatprep.subr.bf16.mxu0 0
    %6938 = vmatpush1.bf16.msra.mxu0 %v5422
    %6939 = vmatprep.subr.bf16.mxu0 0
    %6940 = vmatpush1.bf16.msra.mxu0 %v5423
    %6941 = vmatprep.subr.bf16.mxu0 0
    %6942 = vmatpush1.bf16.msra.mxu0 %v5424
    %6943 = vmatprep.subr.bf16.mxu0 0
    %6944 = vmatpush1.bf16.msra.mxu0 %v5425
    %6945 = vmatprep.subr.bf16.mxu0 0
    %6946 = vmatpush1.bf16.msra.mxu0 %v5426
    %6947 = vmatprep.mubr.bf16.mxu0 %v1989
    %6948 = vmatmul.mubr.bf16.gmra.mrb[0].mxu0 %v1988
    %v6949 = vpop.f32.mrb[0].mxu0
    %v6950 = vadd.f32 %v6910, %v6949
    %v6951 = vpop.f32.mrb[0].mxu0
    %v6952 = vpop.f32.mrb[0].mxu0
    %v6953 = vpop.f32.mrb[0].mxu0
    %6954 = vdwg.mxu0
    %6955 = vmatprep.subr.bf16.mxu0 0
    %6956 = vmatpush1.bf16.msra.mxu0 %v5427
    %6957 = vmatprep.subr.bf16.mxu0 0
    %6958 = vmatpush1.bf16.msra.mxu0 %v5428
    %6959 = vmatprep.subr.bf16.mxu0 0
    %6960 = vmatpush1.bf16.msra.mxu0 %v5429
    %6961 = vmatprep.subr.bf16.mxu0 0
    %6962 = vmatpush1.bf16.msra.mxu0 %v5430
    %6963 = vmatprep.subr.bf16.mxu0 0
    %6964 = vmatpush1.bf16.msra.mxu0 %v5431
    %6965 = vmatprep.subr.bf16.mxu0 0
    %6966 = vmatpush1.bf16.msra.mxu0 %v5432
    %6967 = vmatprep.subr.bf16.mxu0 0
    %6968 = vmatpush1.bf16.msra.mxu0 %v5433
    %6969 = vmatprep.subr.bf16.mxu0 0
    %6970 = vmatpush1.bf16.msra.mxu0 %v5434
    %6971 = vmatprep.subr.bf16.mxu0 0
    %6972 = vmatpush1.bf16.msra.mxu0 %v5435
    %6973 = vmatprep.subr.bf16.mxu0 0
    %6974 = vmatpush1.bf16.msra.mxu0 %v5436
    %6975 = vmatprep.subr.bf16.mxu0 0
    %6976 = vmatpush1.bf16.msra.mxu0 %v5437
    %6977 = vmatprep.subr.bf16.mxu0 0
    %6978 = vmatpush1.bf16.msra.mxu0 %v5438
    %6979 = vmatprep.subr.bf16.mxu0 0
    %6980 = vmatpush1.bf16.msra.mxu0 %v5439
    %6981 = vmatprep.subr.bf16.mxu0 0
    %6982 = vmatpush1.bf16.msra.mxu0 %v5440
    %6983 = vmatprep.subr.bf16.mxu0 0
    %6984 = vmatpush1.bf16.msra.mxu0 %v5441
    %6985 = vmatprep.subr.bf16.mxu0 0
    %6986 = vmatpush1.bf16.msra.mxu0 %v5442
    %6987 = vmatprep.mubr.bf16.mxu0 %v1991
    %6988 = vmatmul.mubr.bf16.gmra.mrb[0].mxu0 %v1990
    %v6989 = vpop.f32.mrb[0].mxu0
    %v6990 = vadd.f32 %v6950, %v6989
    %v6991 = vpop.f32.mrb[0].mxu0
    %v6992 = vpop.f32.mrb[0].mxu0
    %v6993 = vpop.f32.mrb[0].mxu0
    %6994 = vdwg.mxu0
    %6995 = vmatprep.subr.bf16.mxu0 0
    %6996 = vmatpush1.bf16.msra.mxu0 %v5443
    %6997 = vmatprep.subr.bf16.mxu0 0
    %6998 = vmatpush1.bf16.msra.mxu0 %v5444
    %6999 = vmatprep.subr.bf16.mxu0 0
    %7000 = vmatpush1.bf16.msra.mxu0 %v5445
    %7001 = vmatprep.subr.bf16.mxu0 0
    %7002 = vmatpush1.bf16.msra.mxu0 %v5446
    %7003 = vmatprep.subr.bf16.mxu0 0
    %7004 = vmatpush1.bf16.msra.mxu0 %v5447
    %7005 = vmatprep.subr.bf16.mxu0 0
    %7006 = vmatpush1.bf16.msra.mxu0 %v5448
    %7007 = vmatprep.subr.bf16.mxu0 0
    %7008 = vmatpush1.bf16.msra.mxu0 %v5449
    %7009 = vmatprep.subr.bf16.mxu0 0
    %7010 = vmatpush1.bf16.msra.mxu0 %v5450
    %7011 = vmatprep.subr.bf16.mxu0 0
    %7012 = vmatpush1.bf16.msra.mxu0 %v5451
    %7013 = vmatprep.subr.bf16.mxu0 0
    %7014 = vmatpush1.bf16.msra.mxu0 %v5452
    %7015 = vmatprep.subr.bf16.mxu0 0
    %7016 = vmatpush1.bf16.msra.mxu0 %v5453
    %7017 = vmatprep.subr.bf16.mxu0 0
    %7018 = vmatpush1.bf16.msra.mxu0 %v5454
    %7019 = vmatprep.subr.bf16.mxu0 0
    %7020 = vmatpush1.bf16.msra.mxu0 %v5455
    %7021 = vmatprep.subr.bf16.mxu0 0
    %7022 = vmatpush1.bf16.msra.mxu0 %v5456
    %7023 = vmatprep.subr.bf16.mxu0 0
    %7024 = vmatpush1.bf16.msra.mxu0 %v5457
    %7025 = vmatprep.subr.bf16.mxu0 0
    %7026 = vmatpush1.bf16.msra.mxu0 %v5458
    %7027 = vmatprep.mubr.bf16.mxu0 %v1993
    %7028 = vmatmul.mubr.bf16.gmra.mrb[0].mxu0 %v1992
    %v7029 = vpop.f32.mrb[0].mxu0
    %v7030 = vadd.f32 %v6990, %v7029
    %v7031 = vpop.f32.mrb[0].mxu0
    %v7032 = vpop.f32.mrb[0].mxu0
    %v7033 = vpop.f32.mrb[0].mxu0
    %7034 = vdwg.mxu0
    %7035 = vmatprep.subr.bf16.mxu0 0
    %7036 = vmatpush1.bf16.msra.mxu0 %v5459
    %7037 = vmatprep.subr.bf16.mxu0 0
    %7038 = vmatpush1.bf16.msra.mxu0 %v5460
    %7039 = vmatprep.subr.bf16.mxu0 0
    %7040 = vmatpush1.bf16.msra.mxu0 %v5461
    %7041 = vmatprep.subr.bf16.mxu0 0
    %7042 = vmatpush1.bf16.msra.mxu0 %v5462
    %7043 = vmatprep.subr.bf16.mxu0 0
    %7044 = vmatpush1.bf16.msra.mxu0 %v5463
    %7045 = vmatprep.subr.bf16.mxu0 0
    %7046 = vmatpush1.bf16.msra.mxu0 %v5464
    %7047 = vmatprep.subr.bf16.mxu0 0
    %7048 = vmatpush1.bf16.msra.mxu0 %v5465
    %7049 = vmatprep.subr.bf16.mxu0 0
    %7050 = vmatpush1.bf16.msra.mxu0 %v5466
    %7051 = vmatprep.subr.bf16.mxu0 0
    %7052 = vmatpush1.bf16.msra.mxu0 %v5467
    %7053 = vmatprep.subr.bf16.mxu0 0
    %7054 = vmatpush1.bf16.msra.mxu0 %v5468
    %7055 = vmatprep.subr.bf16.mxu0 0
    %7056 = vmatpush1.bf16.msra.mxu0 %v5469
    %7057 = vmatprep.subr.bf16.mxu0 0
    %7058 = vmatpush1.bf16.msra.mxu0 %v5470
    %7059 = vmatprep.subr.bf16.mxu0 0
    %7060 = vmatpush1.bf16.msra.mxu0 %v5471
    %7061 = vmatprep.subr.bf16.mxu0 0
    %7062 = vmatpush1.bf16.msra.mxu0 %v5472
    %7063 = vmatprep.subr.bf16.mxu0 0
    %7064 = vmatpush1.bf16.msra.mxu0 %v5473
    %7065 = vmatprep.subr.bf16.mxu0 0
    %7066 = vmatpush1.bf16.msra.mxu0 %v5474
    %7067 = vmatprep.mubr.bf16.mxu0 %v1995
    %7068 = vmatmul.mubr.bf16.gmra.mrb[0].mxu0 %v1994
    %v7069 = vpop.f32.mrb[0].mxu0
    %v7070 = vadd.f32 %v7030, %v7069
    %v7071 = vpop.f32.mrb[0].mxu0
    %v7072 = vpop.f32.mrb[0].mxu0
    %v7073 = vpop.f32.mrb[0].mxu0
    %7074 = vdwg.mxu0
    %7075 = vmatprep.subr.bf16.mxu0 0
    %7076 = vmatpush1.bf16.msra.mxu0 %v5475
    %7077 = vmatprep.subr.bf16.mxu0 0
    %7078 = vmatpush1.bf16.msra.mxu0 %v5476
    %7079 = vmatprep.subr.bf16.mxu0 0
    %7080 = vmatpush1.bf16.msra.mxu0 %v5477
    %7081 = vmatprep.subr.bf16.mxu0 0
    %7082 = vmatpush1.bf16.msra.mxu0 %v5478
    %7083 = vmatprep.subr.bf16.mxu0 0
    %7084 = vmatpush1.bf16.msra.mxu0 %v5479
    %7085 = vmatprep.subr.bf16.mxu0 0
    %7086 = vmatpush1.bf16.msra.mxu0 %v5480
    %7087 = vmatprep.subr.bf16.mxu0 0
    %7088 = vmatpush1.bf16.msra.mxu0 %v5481
    %7089 = vmatprep.subr.bf16.mxu0 0
    %7090 = vmatpush1.bf16.msra.mxu0 %v5482
    %7091 = vmatprep.subr.bf16.mxu0 0
    %7092 = vmatpush1.bf16.msra.mxu0 %v5483
    %7093 = vmatprep.subr.bf16.mxu0 0
    %7094 = vmatpush1.bf16.msra.mxu0 %v5484
    %7095 = vmatprep.subr.bf16.mxu0 0
    %7096 = vmatpush1.bf16.msra.mxu0 %v5485
    %7097 = vmatprep.subr.bf16.mxu0 0
    %7098 = vmatpush1.bf16.msra.mxu0 %v5486
    %7099 = vmatprep.subr.bf16.mxu0 0
    %7100 = vmatpush1.bf16.msra.mxu0 %v5487
    %7101 = vmatprep.subr.bf16.mxu0 0
    %7102 = vmatpush1.bf16.msra.mxu0 %v5488
    %7103 = vmatprep.subr.bf16.mxu0 0
    %7104 = vmatpush1.bf16.msra.mxu0 %v5489
    %7105 = vmatprep.subr.bf16.mxu0 0
    %7106 = vmatpush1.bf16.msra.mxu0 %v5490
    %7107 = vmatprep.mubr.bf16.mxu0 %v1997
    %7108 = vmatmul.mubr.bf16.gmra.mrb[0].mxu0 %v1996
    %v7109 = vpop.f32.mrb[0].mxu0
    %v7110 = vadd.f32 %v7070, %v7109
    %v7111 = vpop.f32.mrb[0].mxu0
    %v7112 = vpop.f32.mrb[0].mxu0
    %v7113 = vpop.f32.mrb[0].mxu0
    %7114 = vdwg.mxu0
    %7115 = vmatprep.subr.bf16.mxu0 0
    %7116 = vmatpush1.bf16.msra.mxu0 %v5491
    %7117 = vmatprep.subr.bf16.mxu0 0
    %7118 = vmatpush1.bf16.msra.mxu0 %v5492
    %7119 = vmatprep.subr.bf16.mxu0 0
    %7120 = vmatpush1.bf16.msra.mxu0 %v5493
    %7121 = vmatprep.subr.bf16.mxu0 0
    %7122 = vmatpush1.bf16.msra.mxu0 %v5494
    %7123 = vmatprep.subr.bf16.mxu0 0
    %7124 = vmatpush1.bf16.msra.mxu0 %v5495
    %7125 = vmatprep.subr.bf16.mxu0 0
    %7126 = vmatpush1.bf16.msra.mxu0 %v5496
    %7127 = vmatprep.subr.bf16.mxu0 0
    %7128 = vmatpush1.bf16.msra.mxu0 %v5497
    %7129 = vmatprep.subr.bf16.mxu0 0
    %7130 = vmatpush1.bf16.msra.mxu0 %v5498
    %7131 = vmatprep.subr.bf16.mxu0 0
    %7132 = vmatpush1.bf16.msra.mxu0 %v5499
    %7133 = vmatprep.subr.bf16.mxu0 0
    %7134 = vmatpush1.bf16.msra.mxu0 %v5500
    %7135 = vmatprep.subr.bf16.mxu0 0
    %7136 = vmatpush1.bf16.msra.mxu0 %v5501
    %7137 = vmatprep.subr.bf16.mxu0 0
    %7138 = vmatpush1.bf16.msra.mxu0 %v5502
    %7139 = vmatprep.subr.bf16.mxu0 0
    %7140 = vmatpush1.bf16.msra.mxu0 %v5503
    %7141 = vmatprep.subr.bf16.mxu0 0
    %7142 = vmatpush1.bf16.msra.mxu0 %v5504
    %7143 = vmatprep.subr.bf16.mxu0 0
    %7144 = vmatpush1.bf16.msra.mxu0 %v5505
    %7145 = vmatprep.subr.bf16.mxu0 0
    %7146 = vmatpush1.bf16.msra.mxu0 %v5506
    %7147 = vmatprep.mubr.bf16.mxu0 %v1999
    %7148 = vmatmul.mubr.bf16.gmra.mrb[0].mxu0 %v1998
    %v7149 = vpop.f32.mrb[0].mxu0
    %v7150 = vadd.f32 %v7110, %v7149
    %v7151 = vpop.f32.mrb[0].mxu0
    %v7152 = vpop.f32.mrb[0].mxu0
    %v7153 = vpop.f32.mrb[0].mxu0
    %7154 = vdwg.mxu0
    %7155 = vmatprep.subr.bf16.mxu0 0
    %7156 = vmatpush1.bf16.msra.mxu0 %v5507
    %7157 = vmatprep.subr.bf16.mxu0 0
    %7158 = vmatpush1.bf16.msra.mxu0 %v5508
    %7159 = vmatprep.subr.bf16.mxu0 0
    %7160 = vmatpush1.bf16.msra.mxu0 %v5509
    %7161 = vmatprep.subr.bf16.mxu0 0
    %7162 = vmatpush1.bf16.msra.mxu0 %v5510
    %7163 = vmatprep.subr.bf16.mxu0 0
    %7164 = vmatpush1.bf16.msra.mxu0 %v5511
    %7165 = vmatprep.subr.bf16.mxu0 0
    %7166 = vmatpush1.bf16.msra.mxu0 %v5512
    %7167 = vmatprep.subr.bf16.mxu0 0
    %7168 = vmatpush1.bf16.msra.mxu0 %v5513
    %7169 = vmatprep.subr.bf16.mxu0 0
    %7170 = vmatpush1.bf16.msra.mxu0 %v5514
    %7171 = vmatprep.subr.bf16.mxu0 0
    %7172 = vmatpush1.bf16.msra.mxu0 %v5515
    %7173 = vmatprep.subr.bf16.mxu0 0
    %7174 = vmatpush1.bf16.msra.mxu0 %v5516
    %7175 = vmatprep.subr.bf16.mxu0 0
    %7176 = vmatpush1.bf16.msra.mxu0 %v5517
    %7177 = vmatprep.subr.bf16.mxu0 0
    %7178 = vmatpush1.bf16.msra.mxu0 %v5518
    %7179 = vmatprep.subr.bf16.mxu0 0
    %7180 = vmatpush1.bf16.msra.mxu0 %v5519
    %7181 = vmatprep.subr.bf16.mxu0 0
    %7182 = vmatpush1.bf16.msra.mxu0 %v5520
    %7183 = vmatprep.subr.bf16.mxu0 0
    %7184 = vmatpush1.bf16.msra.mxu0 %v5521
    %7185 = vmatprep.subr.bf16.mxu0 0
    %7186 = vmatpush1.bf16.msra.mxu0 %v5522
    %7187 = vmatprep.mubr.bf16.mxu0 %v2001
    %7188 = vmatmul.mubr.bf16.gmra.mrb[0].mxu0 %v2000
    %v7189 = vpop.f32.mrb[0].mxu0
    %v7190 = vadd.f32 %v7150, %v7189
    %v7191 = vpop.f32.mrb[0].mxu0
    %v7192 = vpop.f32.mrb[0].mxu0
    %v7193 = vpop.f32.mrb[0].mxu0
    %7194 = vdwg.mxu0
    %7195 = vmatprep.subr.bf16.mxu0 0
    %7196 = vmatpush1.bf16.msra.mxu0 %v5523
    %7197 = vmatprep.subr.bf16.mxu0 0
    %7198 = vmatpush1.bf16.msra.mxu0 %v5524
    %7199 = vmatprep.subr.bf16.mxu0 0
    %7200 = vmatpush1.bf16.msra.mxu0 %v5525
    %7201 = vmatprep.subr.bf16.mxu0 0
    %7202 = vmatpush1.bf16.msra.mxu0 %v5526
    %7203 = vmatprep.subr.bf16.mxu0 0
    %7204 = vmatpush1.bf16.msra.mxu0 %v5527
    %7205 = vmatprep.subr.bf16.mxu0 0
    %7206 = vmatpush1.bf16.msra.mxu0 %v5528
    %7207 = vmatprep.subr.bf16.mxu0 0
    %7208 = vmatpush1.bf16.msra.mxu0 %v5529
    %7209 = vmatprep.subr.bf16.mxu0 0
    %7210 = vmatpush1.bf16.msra.mxu0 %v5530
    %7211 = vmatprep.subr.bf16.mxu0 0
    %7212 = vmatpush1.bf16.msra.mxu0 %v5531
    %7213 = vmatprep.subr.bf16.mxu0 0
    %7214 = vmatpush1.bf16.msra.mxu0 %v5532
    %7215 = vmatprep.subr.bf16.mxu0 0
    %7216 = vmatpush1.bf16.msra.mxu0 %v5533
    %7217 = vmatprep.subr.bf16.mxu0 0
    %7218 = vmatpush1.bf16.msra.mxu0 %v5534
    %7219 = vmatprep.subr.bf16.mxu0 0
    %7220 = vmatpush1.bf16.msra.mxu0 %v5535
    %7221 = vmatprep.subr.bf16.mxu0 0
    %7222 = vmatpush1.bf16.msra.mxu0 %v5536
    %7223 = vmatprep.subr.bf16.mxu0 0
    %7224 = vmatpush1.bf16.msra.mxu0 %v5537
    %7225 = vmatprep.subr.bf16.mxu0 0
    %7226 = vmatpush1.bf16.msra.mxu0 %v5538
    %7227 = vmatprep.mubr.bf16.mxu0 %v2003
    %7228 = vmatmul.mubr.bf16.gmra.mrb[0].mxu0 %v2002
    %v7229 = vpop.f32.mrb[0].mxu0
    %v7230 = vadd.f32 %v7190, %v7229
    %v7231 = vpop.f32.mrb[0].mxu0
    %v7232 = vpop.f32.mrb[0].mxu0
    %v7233 = vpop.f32.mrb[0].mxu0
    %7234 = vdwg.mxu0
    %7235 = vmatprep.subr.bf16.mxu0 0
    %7236 = vmatpush1.bf16.msra.mxu0 %v5539
    %7237 = vmatprep.subr.bf16.mxu0 0
    %7238 = vmatpush1.bf16.msra.mxu0 %v5540
    %7239 = vmatprep.subr.bf16.mxu0 0
    %7240 = vmatpush1.bf16.msra.mxu0 %v5541
    %7241 = vmatprep.subr.bf16.mxu0 0
    %7242 = vmatpush1.bf16.msra.mxu0 %v5542
    %7243 = vmatprep.subr.bf16.mxu0 0
    %7244 = vmatpush1.bf16.msra.mxu0 %v5543
    %7245 = vmatprep.subr.bf16.mxu0 0
    %7246 = vmatpush1.bf16.msra.mxu0 %v5544
    %7247 = vmatprep.subr.bf16.mxu0 0
    %7248 = vmatpush1.bf16.msra.mxu0 %v5545
    %7249 = vmatprep.subr.bf16.mxu0 0
    %7250 = vmatpush1.bf16.msra.mxu0 %v5546
    %7251 = vmatprep.subr.bf16.mxu0 0
    %7252 = vmatpush1.bf16.msra.mxu0 %v5547
    %7253 = vmatprep.subr.bf16.mxu0 0
    %7254 = vmatpush1.bf16.msra.mxu0 %v5548
    %7255 = vmatprep.subr.bf16.mxu0 0
    %7256 = vmatpush1.bf16.msra.mxu0 %v5549
    %7257 = vmatprep.subr.bf16.mxu0 0
    %7258 = vmatpush1.bf16.msra.mxu0 %v5550
    %7259 = vmatprep.subr.bf16.mxu0 0
    %7260 = vmatpush1.bf16.msra.mxu0 %v5551
    %7261 = vmatprep.subr.bf16.mxu0 0
    %7262 = vmatpush1.bf16.msra.mxu0 %v5552
    %7263 = vmatprep.subr.bf16.mxu0 0
    %7264 = vmatpush1.bf16.msra.mxu0 %v5553
    %7265 = vmatprep.subr.bf16.mxu0 0
    %7266 = vmatpush1.bf16.msra.mxu0 %v5554
    %7267 = vmatprep.mubr.bf16.mxu0 %v2005
    %7268 = vmatmul.mubr.bf16.gmra.mrb[0].mxu0 %v2004
    %v7269 = vpop.f32.mrb[0].mxu0
    %v7270 = vadd.f32 %v7230, %v7269
    %v7271 = vpop.f32.mrb[0].mxu0
    %v7272 = vpop.f32.mrb[0].mxu0
    %v7273 = vpop.f32.mrb[0].mxu0
    %7274 = vdwg.mxu0
    %7275 = vmatprep.subr.bf16.mxu0 0
    %7276 = vmatpush1.bf16.msra.mxu0 %v5555
    %7277 = vmatprep.subr.bf16.mxu0 0
    %7278 = vmatpush1.bf16.msra.mxu0 %v5556
    %7279 = vmatprep.subr.bf16.mxu0 0
    %7280 = vmatpush1.bf16.msra.mxu0 %v5557
    %7281 = vmatprep.subr.bf16.mxu0 0
    %7282 = vmatpush1.bf16.msra.mxu0 %v5558
    %7283 = vmatprep.subr.bf16.mxu0 0
    %7284 = vmatpush1.bf16.msra.mxu0 %v5559
    %7285 = vmatprep.subr.bf16.mxu0 0
    %7286 = vmatpush1.bf16.msra.mxu0 %v5560
    %7287 = vmatprep.subr.bf16.mxu0 0
    %7288 = vmatpush1.bf16.msra.mxu0 %v5561
    %7289 = vmatprep.subr.bf16.mxu0 0
    %7290 = vmatpush1.bf16.msra.mxu0 %v5562
    %7291 = vmatprep.subr.bf16.mxu0 0
    %7292 = vmatpush1.bf16.msra.mxu0 %v5563
    %7293 = vmatprep.subr.bf16.mxu0 0
    %7294 = vmatpush1.bf16.msra.mxu0 %v5564
    %7295 = vmatprep.subr.bf16.mxu0 0
    %7296 = vmatpush1.bf16.msra.mxu0 %v5565
    %7297 = vmatprep.subr.bf16.mxu0 0
    %7298 = vmatpush1.bf16.msra.mxu0 %v5566
    %7299 = vmatprep.subr.bf16.mxu0 0
    %7300 = vmatpush1.bf16.msra.mxu0 %v5567
    %7301 = vmatprep.subr.bf16.mxu0 0
    %7302 = vmatpush1.bf16.msra.mxu0 %v5568
    %7303 = vmatprep.subr.bf16.mxu0 0
    %7304 = vmatpush1.bf16.msra.mxu0 %v5569
    %7305 = vmatprep.subr.bf16.mxu0 0
    %7306 = vmatpush1.bf16.msra.mxu0 %v5570
    %7307 = vmatprep.mubr.bf16.mxu0 %v2007
    %7308 = vmatmul.mubr.bf16.gmra.mrb[0].mxu0 %v2006
    %v7309 = vpop.f32.mrb[0].mxu0
    %v7310 = vadd.f32 %v7270, %v7309
    %v7311 = vpop.f32.mrb[0].mxu0
    %v7312 = vpop.f32.mrb[0].mxu0
    %v7313 = vpop.f32.mrb[0].mxu0
    %7314 = vdwg.mxu0
    %7315 = vmatprep.subr.bf16.mxu0 0
    %7316 = vmatpush1.bf16.msra.mxu0 %v5571
    %7317 = vmatprep.subr.bf16.mxu0 0
    %7318 = vmatpush1.bf16.msra.mxu0 %v5572
    %7319 = vmatprep.subr.bf16.mxu0 0
    %7320 = vmatpush1.bf16.msra.mxu0 %v5573
    %7321 = vmatprep.subr.bf16.mxu0 0
    %7322 = vmatpush1.bf16.msra.mxu0 %v5574
    %7323 = vmatprep.subr.bf16.mxu0 0
    %7324 = vmatpush1.bf16.msra.mxu0 %v5575
    %7325 = vmatprep.subr.bf16.mxu0 0
    %7326 = vmatpush1.bf16.msra.mxu0 %v5576
    %7327 = vmatprep.subr.bf16.mxu0 0
    %7328 = vmatpush1.bf16.msra.mxu0 %v5577
    %7329 = vmatprep.subr.bf16.mxu0 0
    %7330 = vmatpush1.bf16.msra.mxu0 %v5578
    %7331 = vmatprep.subr.bf16.mxu0 0
    %7332 = vmatpush1.bf16.msra.mxu0 %v5579
    %7333 = vmatprep.subr.bf16.mxu0 0
    %7334 = vmatpush1.bf16.msra.mxu0 %v5580
    %7335 = vmatprep.subr.bf16.mxu0 0
    %7336 = vmatpush1.bf16.msra.mxu0 %v5581
    %7337 = vmatprep.subr.bf16.mxu0 0
    %7338 = vmatpush1.bf16.msra.mxu0 %v5582
    %7339 = vmatprep.subr.bf16.mxu0 0
    %7340 = vmatpush1.bf16.msra.mxu0 %v5583
    %7341 = vmatprep.subr.bf16.mxu0 0
    %7342 = vmatpush1.bf16.msra.mxu0 %v5584
    %7343 = vmatprep.subr.bf16.mxu0 0
    %7344 = vmatpush1.bf16.msra.mxu0 %v5585
    %7345 = vmatprep.subr.bf16.mxu0 0
    %7346 = vmatpush1.bf16.msra.mxu0 %v5586
    %7347 = vmatprep.mubr.bf16.mxu0 %v2009
    %7348 = vmatmul.mubr.bf16.gmra.mrb[0].mxu0 %v2008
    %v7349 = vpop.f32.mrb[0].mxu0
    %v7350 = vadd.f32 %v7310, %v7349
    %v7351 = vpop.f32.mrb[0].mxu0
    %v7352 = vpop.f32.mrb[0].mxu0
    %v7353 = vpop.f32.mrb[0].mxu0
    %7354 = vdwg.mxu0
    %7355 = vmatprep.subr.bf16.mxu0 0
    %7356 = vmatpush1.bf16.msra.mxu0 %v5587
    %7357 = vmatprep.subr.bf16.mxu0 0
    %7358 = vmatpush1.bf16.msra.mxu0 %v5588
    %7359 = vmatprep.subr.bf16.mxu0 0
    %7360 = vmatpush1.bf16.msra.mxu0 %v5589
    %7361 = vmatprep.subr.bf16.mxu0 0
    %7362 = vmatpush1.bf16.msra.mxu0 %v5590
    %7363 = vmatprep.subr.bf16.mxu0 0
    %7364 = vmatpush1.bf16.msra.mxu0 %v5591
    %7365 = vmatprep.subr.bf16.mxu0 0
    %7366 = vmatpush1.bf16.msra.mxu0 %v5592
    %7367 = vmatprep.subr.bf16.mxu0 0
    %7368 = vmatpush1.bf16.msra.mxu0 %v5593
    %7369 = vmatprep.subr.bf16.mxu0 0
    %7370 = vmatpush1.bf16.msra.mxu0 %v5594
    %7371 = vmatprep.subr.bf16.mxu0 0
    %7372 = vmatpush1.bf16.msra.mxu0 %v5595
    %7373 = vmatprep.subr.bf16.mxu0 0
    %7374 = vmatpush1.bf16.msra.mxu0 %v5596
    %7375 = vmatprep.subr.bf16.mxu0 0
    %7376 = vmatpush1.bf16.msra.mxu0 %v5597
    %7377 = vmatprep.subr.bf16.mxu0 0
    %7378 = vmatpush1.bf16.msra.mxu0 %v5598
    %7379 = vmatprep.subr.bf16.mxu0 0
    %7380 = vmatpush1.bf16.msra.mxu0 %v5599
    %7381 = vmatprep.subr.bf16.mxu0 0
    %7382 = vmatpush1.bf16.msra.mxu0 %v5600
    %7383 = vmatprep.subr.bf16.mxu0 0
    %7384 = vmatpush1.bf16.msra.mxu0 %v5601
    %7385 = vmatprep.subr.bf16.mxu0 0
    %7386 = vmatpush1.bf16.msra.mxu0 %v5602
    %7387 = vmatprep.mubr.bf16.mxu0 %v2011
    %7388 = vmatmul.mubr.bf16.gmra.mrb[0].mxu0 %v2010
    %v7389 = vpop.f32.mrb[0].mxu0
    %v7390 = vadd.f32 %v7350, %v7389
    %v7391 = vpop.f32.mrb[0].mxu0
    %v7392 = vpop.f32.mrb[0].mxu0
    %v7393 = vpop.f32.mrb[0].mxu0
    %7394 = vdwg.mxu0
    %v7395 = vmax.f32 %v7390, 0.0
    %v7396 = vpack.c.bf16 %v7395, %v7395
    %v7397 = vld [vmem:[#allocation13] sm:$0xf]
    %v7398 = vld [vmem:[#allocation13 + $0x4] sm:$0xf]
    %v7399 = vld [vmem:[#allocation13 + $0x8] sm:$0xf]
    %v7400 = vld [vmem:[#allocation13 + $0xc] sm:$0xf]
    %v7401 = vld [vmem:[#allocation13 + $0x10] sm:$0xf]
    %v7402 = vld [vmem:[#allocation13 + $0x14] sm:$0xf]
    %v7403 = vld [vmem:[#allocation13 + $0x18] sm:$0xf]
    %v7404 = vld [vmem:[#allocation13 + $0x1c] sm:$0xf]
    %v7405 = vld [vmem:[#allocation13 + $0x20] sm:$0xf]
    %v7406 = vld [vmem:[#allocation13 + $0x24] sm:$0xf]
    %v7407 = vld [vmem:[#allocation13 + $0x28] sm:$0xf]
    %v7408 = vld [vmem:[#allocation13 + $0x2c] sm:$0xf]
    %v7409 = vld [vmem:[#allocation13 + $0x30] sm:$0xf]
    %v7410 = vld [vmem:[#allocation13 + $0x34] sm:$0xf]
    %v7411 = vld [vmem:[#allocation13 + $0x38] sm:$0xf]
    %v7412 = vld [vmem:[#allocation13 + $0x3c] sm:$0xf]
    %v7413 = vld [vmem:[#allocation15] sm:$0x1]
    %v7415 = vlaneseq
    %v7416 = vshrl.u32 %v7415, 7
    %v7417 = vsub.s32 0, %v7416
    %v7418 = vrot.slane %v7413, %v7417
    %v7436 = vunpack.c.l.b16 %v7397
    %v7437 = vunpack.c.l.b16 %v7398
    %v7438 = vunpack.c.l.b16 %v7399
    %v7439 = vunpack.c.l.b16 %v7400
    %v7440 = vunpack.c.l.b16 %v7401
    %v7441 = vunpack.c.l.b16 %v7402
    %v7442 = vunpack.c.l.b16 %v7403
    %v7443 = vunpack.c.l.b16 %v7404
    %v7444 = vunpack.c.l.b16 %v7405
    %v7445 = vunpack.c.l.b16 %v7406
    %v7446 = vunpack.c.l.b16 %v7407
    %v7447 = vunpack.c.l.b16 %v7408
    %v7448 = vunpack.c.l.b16 %v7409
    %v7449 = vunpack.c.l.b16 %v7410
    %v7450 = vunpack.c.l.b16 %v7411
    %v7451 = vunpack.c.l.b16 %v7412
    %v7452 = vpack.c.b16 %v7437, %v7436
    %v7453 = vpack.c.b16 %v7439, %v7438
    %v7454 = vpack.c.b16 %v7441, %v7440
    %v7455 = vpack.c.b16 %v7443, %v7442
    %v7456 = vpack.c.b16 %v7445, %v7444
    %v7457 = vpack.c.b16 %v7447, %v7446
    %v7458 = vpack.c.b16 %v7449, %v7448
    %v7459 = vpack.c.b16 %v7451, %v7450
    %7468 = vmatprep.subr.bf16.mxu0 0
    %7469 = vmatpush1.bf16.msra.mxu0 %v7452
    %7470 = vmatprep.subr.bf16.mxu0 0
    %7471 = vmatpush1.bf16.msra.mxu0 %v7453
    %7472 = vmatprep.subr.bf16.mxu0 0
    %7473 = vmatpush1.bf16.msra.mxu0 %v7454
    %7474 = vmatprep.subr.bf16.mxu0 0
    %7475 = vmatpush1.bf16.msra.mxu0 %v7455
    %7476 = vmatprep.subr.bf16.mxu0 0
    %7477 = vmatpush1.bf16.msra.mxu0 %v7456
    %7478 = vmatprep.subr.bf16.mxu0 0
    %7479 = vmatpush1.bf16.msra.mxu0 %v7457
    %7480 = vmatprep.subr.bf16.mxu0 0
    %7481 = vmatpush1.bf16.msra.mxu0 %v7458
    %7482 = vmatprep.subr.bf16.mxu0 0
    %7483 = vmatpush1.bf16.msra.mxu0 %v7459
    %7484 = vmatprep.subr.bf16.mxu0 0
    %7485 = vmatpush1.bf16.msra.mxu0 0
    %7486 = vmatprep.subr.bf16.mxu0 0
    %7487 = vmatpush1.bf16.msra.mxu0 0
    %7488 = vmatprep.subr.bf16.mxu0 0
    %7489 = vmatpush1.bf16.msra.mxu0 0
    %7490 = vmatprep.subr.bf16.mxu0 0
    %7491 = vmatpush1.bf16.msra.mxu0 0
    %7492 = vmatprep.subr.bf16.mxu0 0
    %7493 = vmatpush1.bf16.msra.mxu0 0
    %7494 = vmatprep.subr.bf16.mxu0 0
    %7495 = vmatpush1.bf16.msra.mxu0 0
    %7496 = vmatprep.subr.bf16.mxu0 0
    %7497 = vmatpush1.bf16.msra.mxu0 0
    %7498 = vmatprep.subr.bf16.mxu0 0
    %7499 = vmatpush1.bf16.msra.mxu0 0
    %7500 = vmatprep.mubr.bf16.mxu0 0
    %7501 = vmatmul.mubr.bf16.gmra.mrb[0].mxu0 %v7396
    %v7502 = vpop.f32.mrb[0].mxu0
    %v7503 = vadd.f32 %v7418, %v7502
    %v7504 = vpop.f32.mrb[0].mxu0
    %v7505 = vpop.f32.mrb[0].mxu0
    %v7506 = vpop.f32.mrb[0].mxu0
    %7507 = vdwg.mxu0
    %v7508 = vmax.f32 %v7503, 0.0
    %7509 = vst [vmem:[#allocation16] sm:$0xff] %v7508
    // Predicated region
    $region58: #{tpu_custom_call.1} parent=1 // pred_check
      _
    $region59: #{tpu_custom_call.1} parent=1 // pred_check_branch
      %7511 = sbr.rel (0) target = $region61
    $region60: #{tpu_custom_call.1} parent=1 // pred_region
      %s7513 = ssub.s32 128, 128
      %7514 = vsyncadd [#allocation5], %s7513
      %s7516 = sshll.u32 [#allocation16], 4
      %s7517 = int_to_ptr.vmem [resolvable:$true] %s7516
      %7519 = dma.vmem_to_hbm [thread:$0]  %s7517, 128, %s7, [#allocation5]
    $region61: #{tpu_custom_call.1} parent=1 // pred_fallthru
      _
    // Predicated region
    $region62: #{tpu_custom_call.1} parent=1 // pred_check
      _
    $region63: #{tpu_custom_call.1} parent=1 // pred_check_branch
      %7521 = sbr.rel (0) target = $region65
    $region64: #{tpu_custom_call.1} parent=1 // pred_region
      %7522 = dma.done [#allocation5], 128
    $region65: #{tpu_custom_call.1} parent=1 // pred_fallthru
      _
    %7523 = vsyncpa [#allocation4], 1
    %7524 = vsyncpa [#allocation11], 1
    %7525 = vsyncpa [#allocation14], 1
    %7526 = vsyncpa [#allocation5], 1
    %7527 = vsyncpa [#allocation6], 1
    %7528 = vsyncpa [#allocation9], 1

</llo_original>
